<compile_context>
chip_gen: v7x
topology: tpu7x:2x2x1
jax: 0.10.0
libtpu: 0.0.40
codegen_flags: <defaults>
</compile_context>

<pallas_src>
import functools

import numpy as np
import jax
import jax.numpy as jnp
from jax import lax
from jax.experimental import pallas as pl
from jax.experimental.pallas import tpu as pltpu


def _round_up(x, m):
    return (x + m - 1) // m * m


# ----------------------------------------------------------------------------
# coord_map (matches HoloEncoder3dLite.coord_map)
# ----------------------------------------------------------------------------
def coord_map(n, start=-1.0, end=1.0):
    row = jnp.linspace(start, end, n, dtype=jnp.float32)
    xc = jnp.broadcast_to(row[None, :], (n, n))   # ch0: x, varies along columns
    yc = jnp.broadcast_to(row[:, None], (n, n))   # ch1: y, varies along rows
    return jnp.stack([xc, yc], axis=0)            # (2, n, n)


# ----------------------------------------------------------------------------
# Static per-layer plan (Python ints only -- never traced)
# ----------------------------------------------------------------------------
def build_plan(input_nc, ngf, im_size, n_downsampling, vmem_budget=40 * 1024 * 1024):
    layers = [("pre", input_nc, ngf, 7, 3, 1, im_size)]
    for i in range(n_downsampling):
        mult = 2 ** i
        layers.append((f"enc{i}", ngf * mult, min(ngf * mult * 2, 2048),
                       3, 1, 2, im_size // mult))

    plan = []
    for name, cin, cout, k, pad, stride, H in layers:
        W = H
        if stride == 1:
            Ho, Wo = H, W
            Wrow = W + 2 * pad                       # "wide" row width
            n_ph = 1
            flat_len = (H + 2 * pad) * Wrow
            base_taps = [(0, dy * Wrow + dx, dy, dx)
                         for dy in range(k) for dx in range(k)]
        else:
            assert stride == 2 and k == 3 and H % 2 == 0
            Ho, Wo = H // 2, W // 2
            Wq = Wo + 1                              # space-to-depth phase width
            Wrow = Wq
            n_ph = 4
            flat_len = (Ho + 1) * Wq
            base_taps = [((dy % 2) * 2 + (dx % 2), (dy // 2) * Wq + (dx // 2), dy, dx)
                         for dy in range(3) for dx in range(3)]

        ctp = _round_up(cin, 16)                     # bf16 sublane packing
        cout_pad = _round_up(cout, 16)
        lout = _round_up(Ho * Wrow, 128)             # lane-dense output width
        max_off = max(t[1] for t in base_taps)
        lin = _round_up(max(flat_len, max_off + lout), 128)

        # --- tap grouping: g*ctp ~ 128..256 so the MXU K axis is well filled ---
        n_taps = k * k
        g0 = max(1, min(n_taps, 256 // ctp))
        n_groups = -(-n_taps // g0)
        g = -(-n_taps // n_groups)                   # re-distribute evenly
        taps = tuple(base_taps) + ((0, 0, -1, -1),) * (n_groups * g - n_taps)

        # --- VMEM-aware Cout tile, up to 256 (v6e/v7x MXU M dimension) ---
        cands = ([cout_pad] if cout_pad <= 256 else []) + \
                [t for t in (256, 128, 64, 32, 16)
                 if t < cout_pad and cout_pad % t == 0]
        tc = cands[-1]
        for t in cands:
            est = (2 * n_ph * ctp * lin * 2            # input block x2 buf (bf16)
                   + 2 * n_groups * t * g * ctp * 2    # grouped weights x2 (bf16)
                   + 2 * t * lout * 4                  # coord-bias block x2 (f32)
                   + 2 * lout * 4                      # mask
                   + 2 * t * lout * 2                  # output block x2 (bf16)
                   + t * lout * 4                      # f32 accumulator
                   + g * ctp * lout * 2)               # K-stacked tap slab (bf16)
            if est <= vmem_budget:
                tc = t
                break

        plan.append(dict(name=name, cin=cin, cout=cout, k=k, pad=pad, stride=stride,
                         H=H, Ho=Ho, Wo=Wo, Wrow=Wrow, n_ph=n_ph, ctp=ctp,
                         cout_pad=cout_pad, lout=lout, lin=lin,
                         g=g, n_groups=n_groups, taps=taps, tc=tc))
    return tuple(plan)


# ----------------------------------------------------------------------------
# Pallas kernel: fused (tap-grouped matmul conv) + InstanceNorm2d + ReLU
# ----------------------------------------------------------------------------
def _conv_in_relu_kernel(x_ref, w_ref, cb_ref, m_ref, o_ref, *,
                         taps, g, n_groups, inv_n):
    """One (sample, Cout-tile) grid block.

    x_ref : (n_ph, Cin_pad, Lin)        bf16   padded / phase-split flattened input
    w_ref : (n_groups, tc, g*Cin_pad)   bf16   K-stacked tap weights
    cb_ref: (tc, Lout)                  f32    precomputed coord-channel contribution
    m_ref : (1, Lout)                   f32    1.0 on valid output columns else 0.0
    o_ref : (tc, Lout)                  bf16   normalized + ReLU'd output (wide layout)
    """
    lout = o_ref.shape[-1]
    acc = cb_ref[...]                                   # coord part, exact f32
    for gi in range(n_groups):
        win = []
        for j in range(g):
            ph, off = taps[gi * g + j][0], taps[gi * g + j][1]
            win.append(x_ref[ph, :, off:off + lout])    # (Cin_pad, Lout)
        slab = jnp.concatenate(win, axis=0) if g > 1 else win[0]
        acc = acc + jnp.dot(w_ref[gi], slab, preferred_element_type=jnp.float32)

    # InstanceNorm2d(affine=False): stats over valid pixels only, biased variance,
    # eps=1e-5 (PyTorch defaults).  Per-channel constant conv bias cancels here.
    m = m_ref[...]
    am = acc * m
    s1 = jnp.sum(am, axis=1, keepdims=True)
    s2 = jnp.sum(am * acc, axis=1, keepdims=True)
    mean = s1 * inv_n
    var = jnp.maximum(s2 * inv_n - mean * mean, 0.0)
    y = (acc - mean) * lax.rsqrt(var + 1e-5)
    o_ref[...] = jnp.maximum(y, 0.0).astype(o_ref.dtype)   # ReLU(inplace=True)


def _conv_in_relu_call(flat, w, cb, mask, lp):
    B, n_ph, ctp, lin = flat.shape
    n_groups, cout_pad, gk = w.shape
    tc, lout = lp["tc"], lp["lout"]
    n_co = cout_pad // tc

    kern = functools.partial(
        _conv_in_relu_kernel, taps=lp["taps"], g=lp["g"], n_groups=lp["n_groups"],
        inv_n=1.0 / float(lp["Ho"] * lp["Wo"]))

    return pl.pallas_call(
        kern,
        out_shape=jax.ShapeDtypeStruct((B, cout_pad, lout), jnp.bfloat16),
        grid=(B, n_co),
        in_specs=[
            # Per-sample flattened input; same block across the fast co axis, so it
            # is DMA'd once per sample.
            # TODO(synk): single-buffer this block at production shapes.
            pl.BlockSpec((None, n_ph, ctp, lin), lambda b, co: (b, 0, 0, 0)),
            pl.BlockSpec((n_groups, tc, gk), lambda b, co: (0, co, 0)),
            pl.BlockSpec((tc, lout), lambda b, co: (co, 0)),
            pl.BlockSpec((1, lout), lambda b, co: (0, 0)),
        ],
        out_specs=pl.BlockSpec((None, tc, lout), lambda b, co: (b, co, 0)),
        compiler_params=pltpu.CompilerParams(
            dimension_semantics=("parallel", "parallel"),
            vmem_limit_bytes=48 * 1024 * 1024),
    )(flat, w, cb, mask)


# ----------------------------------------------------------------------------
# Layer glue (layout only; all compute is inside the kernel)
# ----------------------------------------------------------------------------
def _layer(h, packed, lp):
    B, C, H, W = h.shape
    assert C == lp["cin"] and H == lp["H"] and W == H
    ctp = lp["ctp"]
    hb = h.astype(jnp.bfloat16)
    hb = jnp.pad(hb, ((0, 0), (0, ctp - C), (0, 0), (0, 0)))

    if lp["stride"] == 1:
        p = lp["pad"]
        hp = jnp.pad(hb, ((0, 0), (0, 0), (p, p), (p, p)))
        flat = hp.reshape(B, 1, ctp, (H + 2 * p) * (W + 2 * p))
    else:
        Hq, Wq = lp["Ho"] + 1, lp["Wo"] + 1
        hp = jnp.pad(hb, ((0, 0), (0, 0), (1, 1), (1, 1)))          # (B,ctp,2Hq,2Wq)
        ph = hp.reshape(B, ctp, Hq, 2, Wq, 2).transpose(0, 3, 5, 1, 2, 4)
        flat = ph.reshape(B, 4, ctp, Hq * Wq)                       # phase-major

    flat = jnp.pad(flat, ((0, 0), (0, 0), (0, 0), (0, lp["lin"] - flat.shape[-1])))

    out = _conv_in_relu_call(flat, packed["w"], packed["cb"], packed["mask"], lp)

    hw = lp["Ho"] * lp["Wrow"]
    y = out[:, :lp["cout"], :hw].reshape(B, lp["cout"], lp["Ho"], lp["Wrow"])
    # TODO(synk): keep the wide padded layout between layers (or fuse layers) to kill
    #             this slice/reshape plus the next layer's pad/phase-split copies.
    return y[:, :, :, :lp["Wo"]]


def _forward(x, params, plan):
    h = x.astype(jnp.bfloat16)
    outs = []
    for lp in plan:
        h = _layer(h, params[lp["name"]], lp)
        outs.append(h)
    return outs


def encode(x, params, plan):
    return _forward(x, params, plan)[-1].astype(jnp.float32)


def enc2vol(h):
    """n_postproc=0 path: pure reshape (B, C, H, W) -> (B, C//16, 16, H, W)."""
    B, C, H, W = h.shape
    return h.reshape(B, C // 16, 16, H, W)


# ----------------------------------------------------------------------------
# Parameter construction / packing
# ----------------------------------------------------------------------------
def make_raw_params(key, plan):
    """Synthetic PyTorch-layout conv weights/bias (Cout, Cin+2, k, k), f32."""
    raw = {}
    keys = jax.random.split(key, len(plan))
    for kk, lp in zip(keys, plan):
        cin_tot = lp["cin"] + 2
        fan_in = cin_tot * lp["k"] * lp["k"]
        bound = 1.0 / float(np.sqrt(fan_in))
        kw, kb = jax.random.split(kk)
        w = jax.random.uniform(kw, (lp["cout"], cin_tot, lp["k"], lp["k"]),
                               jnp.float32, -bound, bound)
        b = jax.random.uniform(kb, (lp["cout"],), jnp.float32, -bound, bound)
        raw[lp["name"]] = {"w": w, "b": b}
    return raw


def pack_params(raw, plan):
    packed = {}
    for lp in plan:
        w = raw[lp["name"]]["w"]
        cin, cout = lp["cin"], lp["cout"]
        w_x = w[:, :cin]                      # image-channel taps
        w_c = w[:, cin:cin + 2]               # coordinate-channel taps

        # K-stacked tap weights: (n_groups, cout_pad, g*ctp), tap j -> cols [j*ctp, (j+1)*ctp)
        wxp = jnp.pad(w_x, ((0, lp["cout_pad"] - cout), (0, lp["ctp"] - cin),
                            (0, 0), (0, 0)))
        blocks = []
        for (_, _, dy, dx) in lp["taps"]:
            if dy < 0:                        # zero-weight padding tap
                blocks.append(jnp.zeros((lp["cout_pad"], lp["ctp"]), jnp.float32))
            else:
                blocks.append(wxp[:, :, dy, dx])
        wt = jnp.stack(blocks, axis=0)
        wt = wt.reshape(lp["n_groups"], lp["g"], lp["cout_pad"], lp["ctp"])
        wt = jnp.transpose(wt, (0, 2, 1, 3)).reshape(
            lp["n_groups"], lp["cout_pad"], lp["g"] * lp["ctp"])

        # Coord contribution: batch-independent constant, computed exactly in f32
        # once at pack time and embedded in the kernel's wide (Ho, Wrow) layout.
        coords = coord_map(lp["H"])[None]
        cb = lax.conv_general_dilated(
            coords, w_c, (lp["stride"], lp["stride"]),
            [(lp["pad"], lp["pad"]), (lp["pad"], lp["pad"])],
            dimension_numbers=("NCHW", "OIHW", "NCHW"),
            precision=lax.Precision.HIGHEST)[0]                     # (cout, Ho, Wo)
        cb_wide = jnp.zeros((lp["cout_pad"], lp["Ho"], lp["Wrow"]), jnp.float32)
        cb_wide = cb_wide.at[:cout, :, :lp["Wo"]].set(cb)
        cb_flat = cb_wide.reshape(lp["cout_pad"], lp["Ho"] * lp["Wrow"])
        cb_flat = jnp.pad(cb_flat, ((0, 0), (0, lp["lout"] - lp["Ho"] * lp["Wrow"])))

        # Valid-pixel mask in the wide layout.
        mrow = np.zeros((lp["Ho"], lp["Wrow"]), np.float32)
        mrow[:, :lp["Wo"]] = 1.0
        m = np.zeros((1, lp["lout"]), np.float32)
        m[0, :lp["Ho"] * lp["Wrow"]] = mrow.reshape(-1)

        # NOTE: conv bias intentionally NOT packed -- InstanceNorm2d(affine=False)
        # cancels a per-channel constant exactly.
        packed[lp["name"]] = {"w": wt.astype(jnp.bfloat16),
                              "cb": cb_flat,
                              "mask": jnp.asarray(m)}
    return packed


# ----------------------------------------------------------------------------
# Pure-JAX f32 reference of the PyTorch module (includes the bias)
# ----------------------------------------------------------------------------
def reference_forward(x, raw, plan):
    h = x
    outs = []
    for lp in plan:
        n = h.shape[-1]
        coords = jnp.broadcast_to(coord_map(n)[None], (h.shape[0], 2, n, n))
        hc = jnp.concatenate([h, coords], axis=1)
        w, b = raw[lp["name"]]["w"], raw[lp["name"]]["b"]
        y = lax.conv_general_dilated(
            hc, w, (lp["stride"], lp["stride"]),
            [(lp["pad"], lp["pad"]), (lp["pad"], lp["pad"])],
            dimension_numbers=("NCHW", "OIHW", "NCHW"),
            precision=lax.Precision.HIGHEST) + b[None, :, None, None]
        mean = jnp.mean(y, axis=(2, 3), keepdims=True)
        var = jnp.mean(jnp.square(y - mean), axis=(2, 3), keepdims=True)
        h = jnp.maximum((y - mean) * lax.rsqrt(var + 1e-5), 0.0)
        outs.append(h)
    return outs


# ----------------------------------------------------------------------------
if __name__ == "__main__":
    batch, input_nc, ngf, im_size = 2, 4, 8, 32
    n_downsampling = 3 if im_size == 128 else 4       # module rule

    plan = build_plan(input_nc, ngf, im_size, n_downsampling)
    key = jax.random.PRNGKey(0)
    kx, kp = jax.random.split(key)
    x = jax.random.normal(kx, (batch, input_nc, im_size, im_size), jnp.float32)
    raw = make_raw_params(kp, plan)
    params = pack_params(raw, plan)

    run = jax.jit(lambda xx, pp: tuple(_forward(xx, pp, plan)))
    outs = run(x, params)
    jax.block_until_ready(outs)

    h = outs[-1].astype(jnp.float32)
    vol = enc2vol(h)
    assert h.shape == (batch, 128, 2, 2), h.shape
    assert vol.shape == (batch, 8, 16, 2, 2), vol.shape

    # Correctness vs the f32 reference.  Early layers are checked tightly; the
    # deepest layers use loose sanity bounds only (bf16 matmul operands + tiny
    # InstanceNorm pixel counts there amplify rounding noise).
    refs = reference_forward(x, raw, plan)
    tols = [(0.20, 0.03), (0.30, 0.05), (1.5, 0.3), (1.5, 0.3), (1.5, 0.3)]
    for i, (lp, got, ref) in enumerate(zip(plan, outs, refs)):
        d = jnp.abs(got.astype(jnp.float32) - ref)
        max_d, mean_d = float(jnp.max(d)), float(jnp.mean(d))
        max_tol, mean_tol = tols[min(i, len(tols) - 1)]
        assert max_d < max_tol and mean_d < mean_tol, (lp["name"], max_d, mean_d)

    print("KERNEL_OK")
</pallas_src>

<mosaic_0001>
module attributes {stable_mosaic.version = 11 : i64} {
  func.func @_conv_in_relu_kernel(%arg0: i32, %arg1: i32, %arg2: memref<1x1x16x1536xbf16, #tpu.memory_space<vmem>>, %arg3: memref<4x16x208xbf16, #tpu.memory_space<vmem>>, %arg4: memref<16x1280xf32, #tpu.memory_space<vmem>>, %arg5: memref<1x1280xf32, #tpu.memory_space<vmem>>, %arg6: memref<1x16x1280xbf16, #tpu.memory_space<vmem>>) attributes {dimension_semantics = [#tpu.dimension_semantics<parallel>, #tpu.dimension_semantics<parallel>], iteration_bounds = array<i64: 2, 1>, scalar_prefetch = 0 : i64, scratch_operands = 0 : i64, tpu.core_type = #tpu.core_type<tc>, window_params = [{transform_indices = @transform_0, window_bounds = array<i64: 1, 1, 16, 1536>}, {transform_indices = @transform_1, window_bounds = array<i64: 4, 16, 208>}, {transform_indices = @transform_2, window_bounds = array<i64: 16, 1280>}, {pipeline_mode = #tpu.pipeline_mode<synchronous>, transform_indices = @transform_3, window_bounds = array<i64: 1, 1280>}, {transform_indices = @transform_4, window_bounds = array<i64: 1, 16, 1280>}]} {
    %c0 = arith.constant 0 : index
    %c0_0 = arith.constant 0 : index
    %0 = vector.load %arg4[%c0, %c0_0] : memref<16x1280xf32, #tpu.memory_space<vmem>>, vector<16x1280xf32>
    %c0_1 = arith.constant 0 : index
    %c0_2 = arith.constant 0 : index
    %c0_3 = arith.constant 0 : index
    %c0_4 = arith.constant 0 : index
    %1 = vector.load %arg2[%c0_1, %c0_2, %c0_3, %c0_4] : memref<1x1x16x1536xbf16, #tpu.memory_space<vmem>>, vector<1x1x16x1280xbf16>
    %2 = vector.shape_cast %1 : vector<1x1x16x1280xbf16> to vector<16x1280xbf16>
    %c0_5 = arith.constant 0 : index
    %c0_6 = arith.constant 0 : index
    %c0_7 = arith.constant 0 : index
    %c1 = arith.constant 1 : index
    %3 = vector.load %arg2[%c0_5, %c0_6, %c0_7, %c1] : memref<1x1x16x1536xbf16, #tpu.memory_space<vmem>>, vector<1x1x16x1280xbf16>
    %4 = vector.shape_cast %3 : vector<1x1x16x1280xbf16> to vector<16x1280xbf16>
    %c0_8 = arith.constant 0 : index
    %c0_9 = arith.constant 0 : index
    %c0_10 = arith.constant 0 : index
    %c2 = arith.constant 2 : index
    %5 = vector.load %arg2[%c0_8, %c0_9, %c0_10, %c2] : memref<1x1x16x1536xbf16, #tpu.memory_space<vmem>>, vector<1x1x16x1280xbf16>
    %6 = vector.shape_cast %5 : vector<1x1x16x1280xbf16> to vector<16x1280xbf16>
    %c0_11 = arith.constant 0 : index
    %c0_12 = arith.constant 0 : index
    %c0_13 = arith.constant 0 : index
    %c3 = arith.constant 3 : index
    %7 = vector.load %arg2[%c0_11, %c0_12, %c0_13, %c3] : memref<1x1x16x1536xbf16, #tpu.memory_space<vmem>>, vector<1x1x16x1280xbf16>
    %8 = vector.shape_cast %7 : vector<1x1x16x1280xbf16> to vector<16x1280xbf16>
    %c0_14 = arith.constant 0 : index
    %c0_15 = arith.constant 0 : index
    %c0_16 = arith.constant 0 : index
    %c4 = arith.constant 4 : index
    %9 = vector.load %arg2[%c0_14, %c0_15, %c0_16, %c4] : memref<1x1x16x1536xbf16, #tpu.memory_space<vmem>>, vector<1x1x16x1280xbf16>
    %10 = vector.shape_cast %9 : vector<1x1x16x1280xbf16> to vector<16x1280xbf16>
    %c0_17 = arith.constant 0 : index
    %c0_18 = arith.constant 0 : index
    %c0_19 = arith.constant 0 : index
    %c5 = arith.constant 5 : index
    %11 = vector.load %arg2[%c0_17, %c0_18, %c0_19, %c5] : memref<1x1x16x1536xbf16, #tpu.memory_space<vmem>>, vector<1x1x16x1280xbf16>
    %12 = vector.shape_cast %11 : vector<1x1x16x1280xbf16> to vector<16x1280xbf16>
    %c0_20 = arith.constant 0 : index
    %c0_21 = arith.constant 0 : index
    %c0_22 = arith.constant 0 : index
    %c6 = arith.constant 6 : index
    %13 = vector.load %arg2[%c0_20, %c0_21, %c0_22, %c6] : memref<1x1x16x1536xbf16, #tpu.memory_space<vmem>>, vector<1x1x16x1280xbf16>
    %14 = vector.shape_cast %13 : vector<1x1x16x1280xbf16> to vector<16x1280xbf16>
    %c0_23 = arith.constant 0 : index
    %c0_24 = arith.constant 0 : index
    %c0_25 = arith.constant 0 : index
    %c38 = arith.constant 38 : index
    %15 = vector.load %arg2[%c0_23, %c0_24, %c0_25, %c38] : memref<1x1x16x1536xbf16, #tpu.memory_space<vmem>>, vector<1x1x16x1280xbf16>
    %16 = vector.shape_cast %15 : vector<1x1x16x1280xbf16> to vector<16x1280xbf16>
    %c0_26 = arith.constant 0 : index
    %c0_27 = arith.constant 0 : index
    %c0_28 = arith.constant 0 : index
    %c39 = arith.constant 39 : index
    %17 = vector.load %arg2[%c0_26, %c0_27, %c0_28, %c39] : memref<1x1x16x1536xbf16, #tpu.memory_space<vmem>>, vector<1x1x16x1280xbf16>
    %18 = vector.shape_cast %17 : vector<1x1x16x1280xbf16> to vector<16x1280xbf16>
    %c0_29 = arith.constant 0 : index
    %c0_30 = arith.constant 0 : index
    %c0_31 = arith.constant 0 : index
    %c40 = arith.constant 40 : index
    %19 = vector.load %arg2[%c0_29, %c0_30, %c0_31, %c40] : memref<1x1x16x1536xbf16, #tpu.memory_space<vmem>>, vector<1x1x16x1280xbf16>
    %20 = vector.shape_cast %19 : vector<1x1x16x1280xbf16> to vector<16x1280xbf16>
    %c0_32 = arith.constant 0 : index
    %c0_33 = arith.constant 0 : index
    %c0_34 = arith.constant 0 : index
    %c41 = arith.constant 41 : index
    %21 = vector.load %arg2[%c0_32, %c0_33, %c0_34, %c41] : memref<1x1x16x1536xbf16, #tpu.memory_space<vmem>>, vector<1x1x16x1280xbf16>
    %22 = vector.shape_cast %21 : vector<1x1x16x1280xbf16> to vector<16x1280xbf16>
    %c0_35 = arith.constant 0 : index
    %c0_36 = arith.constant 0 : index
    %c0_37 = arith.constant 0 : index
    %c42 = arith.constant 42 : index
    %23 = vector.load %arg2[%c0_35, %c0_36, %c0_37, %c42] : memref<1x1x16x1536xbf16, #tpu.memory_space<vmem>>, vector<1x1x16x1280xbf16>
    %24 = vector.shape_cast %23 : vector<1x1x16x1280xbf16> to vector<16x1280xbf16>
    %c0_38 = arith.constant 0 : index
    %c0_39 = arith.constant 0 : index
    %c0_40 = arith.constant 0 : index
    %c43 = arith.constant 43 : index
    %25 = vector.load %arg2[%c0_38, %c0_39, %c0_40, %c43] : memref<1x1x16x1536xbf16, #tpu.memory_space<vmem>>, vector<1x1x16x1280xbf16>
    %26 = vector.shape_cast %25 : vector<1x1x16x1280xbf16> to vector<16x1280xbf16>
    %27 = tpu.concatenate %2, %4, %6, %8, %10, %12, %14, %16, %18, %20, %22, %24, %26 in 0 : vector<16x1280xbf16>, vector<16x1280xbf16>, vector<16x1280xbf16>, vector<16x1280xbf16>, vector<16x1280xbf16>, vector<16x1280xbf16>, vector<16x1280xbf16>, vector<16x1280xbf16>, vector<16x1280xbf16>, vector<16x1280xbf16>, vector<16x1280xbf16>, vector<16x1280xbf16>, vector<16x1280xbf16> -> vector<208x1280xbf16>
    %c0_41 = arith.constant 0 : index
    %c0_42 = arith.constant 0 : index
    %c0_43 = arith.constant 0 : index
    %28 = vector.load %arg3[%c0_41, %c0_42, %c0_43] : memref<4x16x208xbf16, #tpu.memory_space<vmem>>, vector<1x16x208xbf16>
    %29 = vector.shape_cast %28 : vector<1x16x208xbf16> to vector<16x208xbf16>
    %cst = arith.constant dense<0.000000e+00> : vector<16x1280xf32>
    %30 = tpu.matmul %29, %27, %cst {dimension_numbers = #tpu.dot_dimension_numbers<[1], [0], [0], [1], [0, 0, 1, 1], [], []>} : vector<16x208xbf16>, vector<208x1280xbf16>, vector<16x1280xf32> -> vector<16x1280xf32>
    %31 = arith.addf %0, %30 : vector<16x1280xf32>
    %c0_44 = arith.constant 0 : index
    %c0_45 = arith.constant 0 : index
    %c0_46 = arith.constant 0 : index
    %c44 = arith.constant 44 : index
    %32 = vector.load %arg2[%c0_44, %c0_45, %c0_46, %c44] : memref<1x1x16x1536xbf16, #tpu.memory_space<vmem>>, vector<1x1x16x1280xbf16>
    %33 = vector.shape_cast %32 : vector<1x1x16x1280xbf16> to vector<16x1280xbf16>
    %c0_47 = arith.constant 0 : index
    %c0_48 = arith.constant 0 : index
    %c0_49 = arith.constant 0 : index
    %c76 = arith.constant 76 : index
    %34 = vector.load %arg2[%c0_47, %c0_48, %c0_49, %c76] : memref<1x1x16x1536xbf16, #tpu.memory_space<vmem>>, vector<1x1x16x1280xbf16>
    %35 = vector.shape_cast %34 : vector<1x1x16x1280xbf16> to vector<16x1280xbf16>
    %c0_50 = arith.constant 0 : index
    %c0_51 = arith.constant 0 : index
    %c0_52 = arith.constant 0 : index
    %c77 = arith.constant 77 : index
    %36 = vector.load %arg2[%c0_50, %c0_51, %c0_52, %c77] : memref<1x1x16x1536xbf16, #tpu.memory_space<vmem>>, vector<1x1x16x1280xbf16>
    %37 = vector.shape_cast %36 : vector<1x1x16x1280xbf16> to vector<16x1280xbf16>
    %c0_53 = arith.constant 0 : index
    %c0_54 = arith.constant 0 : index
    %c0_55 = arith.constant 0 : index
    %c78 = arith.constant 78 : index
    %38 = vector.load %arg2[%c0_53, %c0_54, %c0_55, %c78] : memref<1x1x16x1536xbf16, #tpu.memory_space<vmem>>, vector<1x1x16x1280xbf16>
    %39 = vector.shape_cast %38 : vector<1x1x16x1280xbf16> to vector<16x1280xbf16>
    %c0_56 = arith.constant 0 : index
    %c0_57 = arith.constant 0 : index
    %c0_58 = arith.constant 0 : index
    %c79 = arith.constant 79 : index
    %40 = vector.load %arg2[%c0_56, %c0_57, %c0_58, %c79] : memref<1x1x16x1536xbf16, #tpu.memory_space<vmem>>, vector<1x1x16x1280xbf16>
    %41 = vector.shape_cast %40 : vector<1x1x16x1280xbf16> to vector<16x1280xbf16>
    %c0_59 = arith.constant 0 : index
    %c0_60 = arith.constant 0 : index
    %c0_61 = arith.constant 0 : index
    %c80 = arith.constant 80 : index
    %42 = vector.load %arg2[%c0_59, %c0_60, %c0_61, %c80] : memref<1x1x16x1536xbf16, #tpu.memory_space<vmem>>, vector<1x1x16x1280xbf16>
    %43 = vector.shape_cast %42 : vector<1x1x16x1280xbf16> to vector<16x1280xbf16>
    %c0_62 = arith.constant 0 : index
    %c0_63 = arith.constant 0 : index
    %c0_64 = arith.constant 0 : index
    %c81 = arith.constant 81 : index
    %44 = vector.load %arg2[%c0_62, %c0_63, %c0_64, %c81] : memref<1x1x16x1536xbf16, #tpu.memory_space<vmem>>, vector<1x1x16x1280xbf16>
    %45 = vector.shape_cast %44 : vector<1x1x16x1280xbf16> to vector<16x1280xbf16>
    %c0_65 = arith.constant 0 : index
    %c0_66 = arith.constant 0 : index
    %c0_67 = arith.constant 0 : index
    %c82 = arith.constant 82 : index
    %46 = vector.load %arg2[%c0_65, %c0_66, %c0_67, %c82] : memref<1x1x16x1536xbf16, #tpu.memory_space<vmem>>, vector<1x1x16x1280xbf16>
    %47 = vector.shape_cast %46 : vector<1x1x16x1280xbf16> to vector<16x1280xbf16>
    %c0_68 = arith.constant 0 : index
    %c0_69 = arith.constant 0 : index
    %c0_70 = arith.constant 0 : index
    %c114 = arith.constant 114 : index
    %48 = vector.load %arg2[%c0_68, %c0_69, %c0_70, %c114] : memref<1x1x16x1536xbf16, #tpu.memory_space<vmem>>, vector<1x1x16x1280xbf16>
    %49 = vector.shape_cast %48 : vector<1x1x16x1280xbf16> to vector<16x1280xbf16>
    %c0_71 = arith.constant 0 : index
    %c0_72 = arith.constant 0 : index
    %c0_73 = arith.constant 0 : index
    %c115 = arith.constant 115 : index
    %50 = vector.load %arg2[%c0_71, %c0_72, %c0_73, %c115] : memref<1x1x16x1536xbf16, #tpu.memory_space<vmem>>, vector<1x1x16x1280xbf16>
    %51 = vector.shape_cast %50 : vector<1x1x16x1280xbf16> to vector<16x1280xbf16>
    %c0_74 = arith.constant 0 : index
    %c0_75 = arith.constant 0 : index
    %c0_76 = arith.constant 0 : index
    %c116 = arith.constant 116 : index
    %52 = vector.load %arg2[%c0_74, %c0_75, %c0_76, %c116] : memref<1x1x16x1536xbf16, #tpu.memory_space<vmem>>, vector<1x1x16x1280xbf16>
    %53 = vector.shape_cast %52 : vector<1x1x16x1280xbf16> to vector<16x1280xbf16>
    %c0_77 = arith.constant 0 : index
    %c0_78 = arith.constant 0 : index
    %c0_79 = arith.constant 0 : index
    %c117 = arith.constant 117 : index
    %54 = vector.load %arg2[%c0_77, %c0_78, %c0_79, %c117] : memref<1x1x16x1536xbf16, #tpu.memory_space<vmem>>, vector<1x1x16x1280xbf16>
    %55 = vector.shape_cast %54 : vector<1x1x16x1280xbf16> to vector<16x1280xbf16>
    %c0_80 = arith.constant 0 : index
    %c0_81 = arith.constant 0 : index
    %c0_82 = arith.constant 0 : index
    %c118 = arith.constant 118 : index
    %56 = vector.load %arg2[%c0_80, %c0_81, %c0_82, %c118] : memref<1x1x16x1536xbf16, #tpu.memory_space<vmem>>, vector<1x1x16x1280xbf16>
    %57 = vector.shape_cast %56 : vector<1x1x16x1280xbf16> to vector<16x1280xbf16>
    %58 = tpu.concatenate %33, %35, %37, %39, %41, %43, %45, %47, %49, %51, %53, %55, %57 in 0 : vector<16x1280xbf16>, vector<16x1280xbf16>, vector<16x1280xbf16>, vector<16x1280xbf16>, vector<16x1280xbf16>, vector<16x1280xbf16>, vector<16x1280xbf16>, vector<16x1280xbf16>, vector<16x1280xbf16>, vector<16x1280xbf16>, vector<16x1280xbf16>, vector<16x1280xbf16>, vector<16x1280xbf16> -> vector<208x1280xbf16>
    %c1_83 = arith.constant 1 : index
    %c0_84 = arith.constant 0 : index
    %c0_85 = arith.constant 0 : index
    %59 = vector.load %arg3[%c1_83, %c0_84, %c0_85] : memref<4x16x208xbf16, #tpu.memory_space<vmem>>, vector<1x16x208xbf16>
    %60 = vector.shape_cast %59 : vector<1x16x208xbf16> to vector<16x208xbf16>
    %cst_86 = arith.constant dense<0.000000e+00> : vector<16x1280xf32>
    %61 = tpu.matmul %60, %58, %cst_86 {dimension_numbers = #tpu.dot_dimension_numbers<[1], [0], [0], [1], [0, 0, 1, 1], [], []>} : vector<16x208xbf16>, vector<208x1280xbf16>, vector<16x1280xf32> -> vector<16x1280xf32>
    %62 = arith.addf %31, %61 : vector<16x1280xf32>
    %c0_87 = arith.constant 0 : index
    %c0_88 = arith.constant 0 : index
    %c0_89 = arith.constant 0 : index
    %c119 = arith.constant 119 : index
    %63 = vector.load %arg2[%c0_87, %c0_88, %c0_89, %c119] : memref<1x1x16x1536xbf16, #tpu.memory_space<vmem>>, vector<1x1x16x1280xbf16>
    %64 = vector.shape_cast %63 : vector<1x1x16x1280xbf16> to vector<16x1280xbf16>
    %c0_90 = arith.constant 0 : index
    %c0_91 = arith.constant 0 : index
    %c0_92 = arith.constant 0 : index
    %c120 = arith.constant 120 : index
    %65 = vector.load %arg2[%c0_90, %c0_91, %c0_92, %c120] : memref<1x1x16x1536xbf16, #tpu.memory_space<vmem>>, vector<1x1x16x1280xbf16>
    %66 = vector.shape_cast %65 : vector<1x1x16x1280xbf16> to vector<16x1280xbf16>
    %c0_93 = arith.constant 0 : index
    %c0_94 = arith.constant 0 : index
    %c0_95 = arith.constant 0 : index
    %c152 = arith.constant 152 : index
    %67 = vector.load %arg2[%c0_93, %c0_94, %c0_95, %c152] : memref<1x1x16x1536xbf16, #tpu.memory_space<vmem>>, vector<1x1x16x1280xbf16>
    %68 = vector.shape_cast %67 : vector<1x1x16x1280xbf16> to vector<16x1280xbf16>
    %c0_96 = arith.constant 0 : index
    %c0_97 = arith.constant 0 : index
    %c0_98 = arith.constant 0 : index
    %c153 = arith.constant 153 : index
    %69 = vector.load %arg2[%c0_96, %c0_97, %c0_98, %c153] : memref<1x1x16x1536xbf16, #tpu.memory_space<vmem>>, vector<1x1x16x1280xbf16>
    %70 = vector.shape_cast %69 : vector<1x1x16x1280xbf16> to vector<16x1280xbf16>
    %c0_99 = arith.constant 0 : index
    %c0_100 = arith.constant 0 : index
    %c0_101 = arith.constant 0 : index
    %c154 = arith.constant 154 : index
    %71 = vector.load %arg2[%c0_99, %c0_100, %c0_101, %c154] : memref<1x1x16x1536xbf16, #tpu.memory_space<vmem>>, vector<1x1x16x1280xbf16>
    %72 = vector.shape_cast %71 : vector<1x1x16x1280xbf16> to vector<16x1280xbf16>
    %c0_102 = arith.constant 0 : index
    %c0_103 = arith.constant 0 : index
    %c0_104 = arith.constant 0 : index
    %c155 = arith.constant 155 : index
    %73 = vector.load %arg2[%c0_102, %c0_103, %c0_104, %c155] : memref<1x1x16x1536xbf16, #tpu.memory_space<vmem>>, vector<1x1x16x1280xbf16>
    %74 = vector.shape_cast %73 : vector<1x1x16x1280xbf16> to vector<16x1280xbf16>
    %c0_105 = arith.constant 0 : index
    %c0_106 = arith.constant 0 : index
    %c0_107 = arith.constant 0 : index
    %c156 = arith.constant 156 : index
    %75 = vector.load %arg2[%c0_105, %c0_106, %c0_107, %c156] : memref<1x1x16x1536xbf16, #tpu.memory_space<vmem>>, vector<1x1x16x1280xbf16>
    %76 = vector.shape_cast %75 : vector<1x1x16x1280xbf16> to vector<16x1280xbf16>
    %c0_108 = arith.constant 0 : index
    %c0_109 = arith.constant 0 : index
    %c0_110 = arith.constant 0 : index
    %c157 = arith.constant 157 : index
    %77 = vector.load %arg2[%c0_108, %c0_109, %c0_110, %c157] : memref<1x1x16x1536xbf16, #tpu.memory_space<vmem>>, vector<1x1x16x1280xbf16>
    %78 = vector.shape_cast %77 : vector<1x1x16x1280xbf16> to vector<16x1280xbf16>
    %c0_111 = arith.constant 0 : index
    %c0_112 = arith.constant 0 : index
    %c0_113 = arith.constant 0 : index
    %c158 = arith.constant 158 : index
    %79 = vector.load %arg2[%c0_111, %c0_112, %c0_113, %c158] : memref<1x1x16x1536xbf16, #tpu.memory_space<vmem>>, vector<1x1x16x1280xbf16>
    %80 = vector.shape_cast %79 : vector<1x1x16x1280xbf16> to vector<16x1280xbf16>
    %c0_114 = arith.constant 0 : index
    %c0_115 = arith.constant 0 : index
    %c0_116 = arith.constant 0 : index
    %c190 = arith.constant 190 : index
    %81 = vector.load %arg2[%c0_114, %c0_115, %c0_116, %c190] : memref<1x1x16x1536xbf16, #tpu.memory_space<vmem>>, vector<1x1x16x1280xbf16>
    %82 = vector.shape_cast %81 : vector<1x1x16x1280xbf16> to vector<16x1280xbf16>
    %c0_117 = arith.constant 0 : index
    %c0_118 = arith.constant 0 : index
    %c0_119 = arith.constant 0 : index
    %c191 = arith.constant 191 : index
    %83 = vector.load %arg2[%c0_117, %c0_118, %c0_119, %c191] : memref<1x1x16x1536xbf16, #tpu.memory_space<vmem>>, vector<1x1x16x1280xbf16>
    %84 = vector.shape_cast %83 : vector<1x1x16x1280xbf16> to vector<16x1280xbf16>
    %c0_120 = arith.constant 0 : index
    %c0_121 = arith.constant 0 : index
    %c0_122 = arith.constant 0 : index
    %c192 = arith.constant 192 : index
    %85 = vector.load %arg2[%c0_120, %c0_121, %c0_122, %c192] : memref<1x1x16x1536xbf16, #tpu.memory_space<vmem>>, vector<1x1x16x1280xbf16>
    %86 = vector.shape_cast %85 : vector<1x1x16x1280xbf16> to vector<16x1280xbf16>
    %c0_123 = arith.constant 0 : index
    %c0_124 = arith.constant 0 : index
    %c0_125 = arith.constant 0 : index
    %c193 = arith.constant 193 : index
    %87 = vector.load %arg2[%c0_123, %c0_124, %c0_125, %c193] : memref<1x1x16x1536xbf16, #tpu.memory_space<vmem>>, vector<1x1x16x1280xbf16>
    %88 = vector.shape_cast %87 : vector<1x1x16x1280xbf16> to vector<16x1280xbf16>
    %89 = tpu.concatenate %64, %66, %68, %70, %72, %74, %76, %78, %80, %82, %84, %86, %88 in 0 : vector<16x1280xbf16>, vector<16x1280xbf16>, vector<16x1280xbf16>, vector<16x1280xbf16>, vector<16x1280xbf16>, vector<16x1280xbf16>, vector<16x1280xbf16>, vector<16x1280xbf16>, vector<16x1280xbf16>, vector<16x1280xbf16>, vector<16x1280xbf16>, vector<16x1280xbf16>, vector<16x1280xbf16> -> vector<208x1280xbf16>
    %c2_126 = arith.constant 2 : index
    %c0_127 = arith.constant 0 : index
    %c0_128 = arith.constant 0 : index
    %90 = vector.load %arg3[%c2_126, %c0_127, %c0_128] : memref<4x16x208xbf16, #tpu.memory_space<vmem>>, vector<1x16x208xbf16>
    %91 = vector.shape_cast %90 : vector<1x16x208xbf16> to vector<16x208xbf16>
    %cst_129 = arith.constant dense<0.000000e+00> : vector<16x1280xf32>
    %92 = tpu.matmul %91, %89, %cst_129 {dimension_numbers = #tpu.dot_dimension_numbers<[1], [0], [0], [1], [0, 0, 1, 1], [], []>} : vector<16x208xbf16>, vector<208x1280xbf16>, vector<16x1280xf32> -> vector<16x1280xf32>
    %93 = arith.addf %62, %92 : vector<16x1280xf32>
    %c0_130 = arith.constant 0 : index
    %c0_131 = arith.constant 0 : index
    %c0_132 = arith.constant 0 : index
    %c194 = arith.constant 194 : index
    %94 = vector.load %arg2[%c0_130, %c0_131, %c0_132, %c194] : memref<1x1x16x1536xbf16, #tpu.memory_space<vmem>>, vector<1x1x16x1280xbf16>
    %95 = vector.shape_cast %94 : vector<1x1x16x1280xbf16> to vector<16x1280xbf16>
    %c0_133 = arith.constant 0 : index
    %c0_134 = arith.constant 0 : index
    %c0_135 = arith.constant 0 : index
    %c195 = arith.constant 195 : index
    %96 = vector.load %arg2[%c0_133, %c0_134, %c0_135, %c195] : memref<1x1x16x1536xbf16, #tpu.memory_space<vmem>>, vector<1x1x16x1280xbf16>
    %97 = vector.shape_cast %96 : vector<1x1x16x1280xbf16> to vector<16x1280xbf16>
    %c0_136 = arith.constant 0 : index
    %c0_137 = arith.constant 0 : index
    %c0_138 = arith.constant 0 : index
    %c196 = arith.constant 196 : index
    %98 = vector.load %arg2[%c0_136, %c0_137, %c0_138, %c196] : memref<1x1x16x1536xbf16, #tpu.memory_space<vmem>>, vector<1x1x16x1280xbf16>
    %99 = vector.shape_cast %98 : vector<1x1x16x1280xbf16> to vector<16x1280xbf16>
    %c0_139 = arith.constant 0 : index
    %c0_140 = arith.constant 0 : index
    %c0_141 = arith.constant 0 : index
    %c228 = arith.constant 228 : index
    %100 = vector.load %arg2[%c0_139, %c0_140, %c0_141, %c228] : memref<1x1x16x1536xbf16, #tpu.memory_space<vmem>>, vector<1x1x16x1280xbf16>
    %101 = vector.shape_cast %100 : vector<1x1x16x1280xbf16> to vector<16x1280xbf16>
    %c0_142 = arith.constant 0 : index
    %c0_143 = arith.constant 0 : index
    %c0_144 = arith.constant 0 : index
    %c229 = arith.constant 229 : index
    %102 = vector.load %arg2[%c0_142, %c0_143, %c0_144, %c229] : memref<1x1x16x1536xbf16, #tpu.memory_space<vmem>>, vector<1x1x16x1280xbf16>
    %103 = vector.shape_cast %102 : vector<1x1x16x1280xbf16> to vector<16x1280xbf16>
    %c0_145 = arith.constant 0 : index
    %c0_146 = arith.constant 0 : index
    %c0_147 = arith.constant 0 : index
    %c230 = arith.constant 230 : index
    %104 = vector.load %arg2[%c0_145, %c0_146, %c0_147, %c230] : memref<1x1x16x1536xbf16, #tpu.memory_space<vmem>>, vector<1x1x16x1280xbf16>
    %105 = vector.shape_cast %104 : vector<1x1x16x1280xbf16> to vector<16x1280xbf16>
    %c0_148 = arith.constant 0 : index
    %c0_149 = arith.constant 0 : index
    %c0_150 = arith.constant 0 : index
    %c231 = arith.constant 231 : index
    %106 = vector.load %arg2[%c0_148, %c0_149, %c0_150, %c231] : memref<1x1x16x1536xbf16, #tpu.memory_space<vmem>>, vector<1x1x16x1280xbf16>
    %107 = vector.shape_cast %106 : vector<1x1x16x1280xbf16> to vector<16x1280xbf16>
    %c0_151 = arith.constant 0 : index
    %c0_152 = arith.constant 0 : index
    %c0_153 = arith.constant 0 : index
    %c232 = arith.constant 232 : index
    %108 = vector.load %arg2[%c0_151, %c0_152, %c0_153, %c232] : memref<1x1x16x1536xbf16, #tpu.memory_space<vmem>>, vector<1x1x16x1280xbf16>
    %109 = vector.shape_cast %108 : vector<1x1x16x1280xbf16> to vector<16x1280xbf16>
    %c0_154 = arith.constant 0 : index
    %c0_155 = arith.constant 0 : index
    %c0_156 = arith.constant 0 : index
    %c233 = arith.constant 233 : index
    %110 = vector.load %arg2[%c0_154, %c0_155, %c0_156, %c233] : memref<1x1x16x1536xbf16, #tpu.memory_space<vmem>>, vector<1x1x16x1280xbf16>
    %111 = vector.shape_cast %110 : vector<1x1x16x1280xbf16> to vector<16x1280xbf16>
    %c0_157 = arith.constant 0 : index
    %c0_158 = arith.constant 0 : index
    %c0_159 = arith.constant 0 : index
    %c234 = arith.constant 234 : index
    %112 = vector.load %arg2[%c0_157, %c0_158, %c0_159, %c234] : memref<1x1x16x1536xbf16, #tpu.memory_space<vmem>>, vector<1x1x16x1280xbf16>
    %113 = vector.shape_cast %112 : vector<1x1x16x1280xbf16> to vector<16x1280xbf16>
    %c0_160 = arith.constant 0 : index
    %c0_161 = arith.constant 0 : index
    %c0_162 = arith.constant 0 : index
    %c0_163 = arith.constant 0 : index
    %114 = vector.load %arg2[%c0_160, %c0_161, %c0_162, %c0_163] : memref<1x1x16x1536xbf16, #tpu.memory_space<vmem>>, vector<1x1x16x1280xbf16>
    %115 = vector.shape_cast %114 : vector<1x1x16x1280xbf16> to vector<16x1280xbf16>
    %c0_164 = arith.constant 0 : index
    %c0_165 = arith.constant 0 : index
    %c0_166 = arith.constant 0 : index
    %c0_167 = arith.constant 0 : index
    %116 = vector.load %arg2[%c0_164, %c0_165, %c0_166, %c0_167] : memref<1x1x16x1536xbf16, #tpu.memory_space<vmem>>, vector<1x1x16x1280xbf16>
    %117 = vector.shape_cast %116 : vector<1x1x16x1280xbf16> to vector<16x1280xbf16>
    %c0_168 = arith.constant 0 : index
    %c0_169 = arith.constant 0 : index
    %c0_170 = arith.constant 0 : index
    %c0_171 = arith.constant 0 : index
    %118 = vector.load %arg2[%c0_168, %c0_169, %c0_170, %c0_171] : memref<1x1x16x1536xbf16, #tpu.memory_space<vmem>>, vector<1x1x16x1280xbf16>
    %119 = vector.shape_cast %118 : vector<1x1x16x1280xbf16> to vector<16x1280xbf16>
    %120 = tpu.concatenate %95, %97, %99, %101, %103, %105, %107, %109, %111, %113, %115, %117, %119 in 0 : vector<16x1280xbf16>, vector<16x1280xbf16>, vector<16x1280xbf16>, vector<16x1280xbf16>, vector<16x1280xbf16>, vector<16x1280xbf16>, vector<16x1280xbf16>, vector<16x1280xbf16>, vector<16x1280xbf16>, vector<16x1280xbf16>, vector<16x1280xbf16>, vector<16x1280xbf16>, vector<16x1280xbf16> -> vector<208x1280xbf16>
    %c3_172 = arith.constant 3 : index
    %c0_173 = arith.constant 0 : index
    %c0_174 = arith.constant 0 : index
    %121 = vector.load %arg3[%c3_172, %c0_173, %c0_174] : memref<4x16x208xbf16, #tpu.memory_space<vmem>>, vector<1x16x208xbf16>
    %122 = vector.shape_cast %121 : vector<1x16x208xbf16> to vector<16x208xbf16>
    %cst_175 = arith.constant dense<0.000000e+00> : vector<16x1280xf32>
    %123 = tpu.matmul %122, %120, %cst_175 {dimension_numbers = #tpu.dot_dimension_numbers<[1], [0], [0], [1], [0, 0, 1, 1], [], []>} : vector<16x208xbf16>, vector<208x1280xbf16>, vector<16x1280xf32> -> vector<16x1280xf32>
    %124 = arith.addf %93, %123 : vector<16x1280xf32>
    %c0_176 = arith.constant 0 : index
    %c0_177 = arith.constant 0 : index
    %125 = vector.load %arg5[%c0_176, %c0_177] : memref<1x1280xf32, #tpu.memory_space<vmem>>, vector<1x1280xf32>
    %126 = vector.broadcast %125 : vector<1x1280xf32> to vector<16x1280xf32>
    %127 = arith.mulf %124, %126 : vector<16x1280xf32>
    %cst_178 = arith.constant dense<0.000000e+00> : vector<16xf32>
    %128 = vector.multi_reduction <add>, %127, %cst_178 [1] : vector<16x1280xf32> to vector<16xf32>
    %129 = vector.shape_cast %128 : vector<16xf32> to vector<16x1xf32>
    %130 = arith.mulf %127, %124 : vector<16x1280xf32>
    %cst_179 = arith.constant dense<0.000000e+00> : vector<16xf32>
    %131 = vector.multi_reduction <add>, %130, %cst_179 [1] : vector<16x1280xf32> to vector<16xf32>
    %132 = vector.shape_cast %131 : vector<16xf32> to vector<16x1xf32>
    %cst_180 = arith.constant 9.765625E-4 : f32
    %133 = vector.broadcast %cst_180 : f32 to vector<16x1xf32>
    %134 = arith.mulf %129, %133 : vector<16x1xf32>
    %cst_181 = arith.constant 9.765625E-4 : f32
    %135 = vector.broadcast %cst_181 : f32 to vector<16x1xf32>
    %136 = arith.mulf %132, %135 : vector<16x1xf32>
    %137 = arith.mulf %134, %134 : vector<16x1xf32>
    %138 = arith.subf %136, %137 : vector<16x1xf32>
    %cst_182 = arith.constant 0.000000e+00 : f32
    %139 = vector.broadcast %cst_182 : f32 to vector<16x1xf32>
    %140 = arith.maximumf %138, %139 : vector<16x1xf32>
    %141 = vector.broadcast %134 : vector<16x1xf32> to vector<16x1280xf32>
    %142 = arith.subf %124, %141 : vector<16x1280xf32>
    %cst_183 = arith.constant 9.99999974E-6 : f32
    %143 = vector.broadcast %cst_183 : f32 to vector<16x1xf32>
    %144 = arith.addf %140, %143 : vector<16x1xf32>
    %145 = math.rsqrt %144 : vector<16x1xf32>
    %146 = vector.broadcast %145 : vector<16x1xf32> to vector<16x1280xf32>
    %147 = arith.mulf %142, %146 : vector<16x1280xf32>
    %cst_184 = arith.constant 0.000000e+00 : f32
    %148 = vector.broadcast %cst_184 : f32 to vector<16x1280xf32>
    %149 = arith.maximumf %147, %148 : vector<16x1280xf32>
    %150 = arith.truncf %149 : vector<16x1280xf32> to vector<16x1280xbf16>
    %c0_185 = arith.constant 0 : index
    %c0_186 = arith.constant 0 : index
    %c0_187 = arith.constant 0 : index
    %151 = vector.load %arg6[%c0_185, %c0_186, %c0_187] : memref<1x16x1280xbf16, #tpu.memory_space<vmem>>, vector<1x16x1280xbf16>
    %152 = vector.shape_cast %151 : vector<1x16x1280xbf16> to vector<16x1280xbf16>
    %153 = vector.shape_cast %150 : vector<16x1280xbf16> to vector<1x16x1280xbf16>
    tpu.vector_store %arg6[%c0_185, %c0_186, %c0_187], %153 {strides = array<i32>} : memref<1x16x1280xbf16, #tpu.memory_space<vmem>>, vector<1x16x1280xbf16>,
    return
  }
  func.func @transform_0(%arg0: i32, %arg1: i32) -> (i32, i32, i32, i32) {
    %c0_i32 = arith.constant 0 : i32
    %c0_i32_0 = arith.constant 0 : i32
    %c0_i32_1 = arith.constant 0 : i32
    %c0_i32_2 = arith.constant 0 : i32
    return %arg0, %c0_i32, %c0_i32_0, %c0_i32_1 : i32, i32, i32, i32
  }
  func.func @transform_1(%arg0: i32, %arg1: i32) -> (i32, i32, i32) {
    %c0_i32 = arith.constant 0 : i32
    %c0_i32_0 = arith.constant 0 : i32
    %c0_i32_1 = arith.constant 0 : i32
    return %c0_i32, %arg1, %c0_i32_0 : i32, i32, i32
  }
  func.func @transform_2(%arg0: i32, %arg1: i32) -> (i32, i32) {
    %c0_i32 = arith.constant 0 : i32
    %c0_i32_0 = arith.constant 0 : i32
    return %arg1, %c0_i32 : i32, i32
  }
  func.func @transform_3(%arg0: i32, %arg1: i32) -> (i32, i32) {
    %c0_i32 = arith.constant 0 : i32
    %c0_i32_0 = arith.constant 0 : i32
    %c0_i32_1 = arith.constant 0 : i32
    return %c0_i32, %c0_i32_0 : i32, i32
  }
  func.func @transform_4(%arg0: i32, %arg1: i32) -> (i32, i32, i32) {
    %c0_i32 = arith.constant 0 : i32
    %c0_i32_0 = arith.constant 0 : i32
    return %arg0, %arg1, %c0_i32 : i32, i32, i32
  }
}

module attributes {stable_mosaic.version = 11 : i64} {
  func.func @_conv_in_relu_kernel(%arg0: i32, %arg1: i32, %arg2: memref<1x4x16x512xbf16, #tpu.memory_space<vmem>>, %arg3: memref<1x16x144xbf16, #tpu.memory_space<vmem>>, %arg4: memref<16x384xf32, #tpu.memory_space<vmem>>, %arg5: memref<1x384xf32, #tpu.memory_space<vmem>>, %arg6: memref<1x16x384xbf16, #tpu.memory_space<vmem>>) attributes {dimension_semantics = [#tpu.dimension_semantics<parallel>, #tpu.dimension_semantics<parallel>], iteration_bounds = array<i64: 2, 1>, scalar_prefetch = 0 : i64, scratch_operands = 0 : i64, tpu.core_type = #tpu.core_type<tc>, window_params = [{transform_indices = @transform_0, window_bounds = array<i64: 1, 4, 16, 512>}, {transform_indices = @transform_1, window_bounds = array<i64: 1, 16, 144>}, {transform_indices = @transform_2, window_bounds = array<i64: 16, 384>}, {pipeline_mode = #tpu.pipeline_mode<synchronous>, transform_indices = @transform_3, window_bounds = array<i64: 1, 384>}, {transform_indices = @transform_4, window_bounds = array<i64: 1, 16, 384>}]} {
    %c0 = arith.constant 0 : index
    %c0_0 = arith.constant 0 : index
    %0 = vector.load %arg4[%c0, %c0_0] : memref<16x384xf32, #tpu.memory_space<vmem>>, vector<16x384xf32>
    %c0_1 = arith.constant 0 : index
    %c0_2 = arith.constant 0 : index
    %c0_3 = arith.constant 0 : index
    %c0_4 = arith.constant 0 : index
    %1 = vector.load %arg2[%c0_1, %c0_2, %c0_3, %c0_4] : memref<1x4x16x512xbf16, #tpu.memory_space<vmem>>, vector<1x1x16x384xbf16>
    %2 = vector.shape_cast %1 : vector<1x1x16x384xbf16> to vector<16x384xbf16>
    %c0_5 = arith.constant 0 : index
    %c1 = arith.constant 1 : index
    %c0_6 = arith.constant 0 : index
    %c0_7 = arith.constant 0 : index
    %3 = vector.load %arg2[%c0_5, %c1, %c0_6, %c0_7] : memref<1x4x16x512xbf16, #tpu.memory_space<vmem>>, vector<1x1x16x384xbf16>
    %4 = vector.shape_cast %3 : vector<1x1x16x384xbf16> to vector<16x384xbf16>
    %c0_8 = arith.constant 0 : index
    %c0_9 = arith.constant 0 : index
    %c0_10 = arith.constant 0 : index
    %c1_11 = arith.constant 1 : index
    %5 = vector.load %arg2[%c0_8, %c0_9, %c0_10, %c1_11] : memref<1x4x16x512xbf16, #tpu.memory_space<vmem>>, vector<1x1x16x384xbf16>
    %6 = vector.shape_cast %5 : vector<1x1x16x384xbf16> to vector<16x384xbf16>
    %c0_12 = arith.constant 0 : index
    %c2 = arith.constant 2 : index
    %c0_13 = arith.constant 0 : index
    %c0_14 = arith.constant 0 : index
    %7 = vector.load %arg2[%c0_12, %c2, %c0_13, %c0_14] : memref<1x4x16x512xbf16, #tpu.memory_space<vmem>>, vector<1x1x16x384xbf16>
    %8 = vector.shape_cast %7 : vector<1x1x16x384xbf16> to vector<16x384xbf16>
    %c0_15 = arith.constant 0 : index
    %c3 = arith.constant 3 : index
    %c0_16 = arith.constant 0 : index
    %c0_17 = arith.constant 0 : index
    %9 = vector.load %arg2[%c0_15, %c3, %c0_16, %c0_17] : memref<1x4x16x512xbf16, #tpu.memory_space<vmem>>, vector<1x1x16x384xbf16>
    %10 = vector.shape_cast %9 : vector<1x1x16x384xbf16> to vector<16x384xbf16>
    %c0_18 = arith.constant 0 : index
    %c2_19 = arith.constant 2 : index
    %c0_20 = arith.constant 0 : index
    %c1_21 = arith.constant 1 : index
    %11 = vector.load %arg2[%c0_18, %c2_19, %c0_20, %c1_21] : memref<1x4x16x512xbf16, #tpu.memory_space<vmem>>, vector<1x1x16x384xbf16>
    %12 = vector.shape_cast %11 : vector<1x1x16x384xbf16> to vector<16x384xbf16>
    %c0_22 = arith.constant 0 : index
    %c0_23 = arith.constant 0 : index
    %c0_24 = arith.constant 0 : index
    %c17 = arith.constant 17 : index
    %13 = vector.load %arg2[%c0_22, %c0_23, %c0_24, %c17] : memref<1x4x16x512xbf16, #tpu.memory_space<vmem>>, vector<1x1x16x384xbf16>
    %14 = vector.shape_cast %13 : vector<1x1x16x384xbf16> to vector<16x384xbf16>
    %c0_25 = arith.constant 0 : index
    %c1_26 = arith.constant 1 : index
    %c0_27 = arith.constant 0 : index
    %c17_28 = arith.constant 17 : index
    %15 = vector.load %arg2[%c0_25, %c1_26, %c0_27, %c17_28] : memref<1x4x16x512xbf16, #tpu.memory_space<vmem>>, vector<1x1x16x384xbf16>
    %16 = vector.shape_cast %15 : vector<1x1x16x384xbf16> to vector<16x384xbf16>
    %c0_29 = arith.constant 0 : index
    %c0_30 = arith.constant 0 : index
    %c0_31 = arith.constant 0 : index
    %c18 = arith.constant 18 : index
    %17 = vector.load %arg2[%c0_29, %c0_30, %c0_31, %c18] : memref<1x4x16x512xbf16, #tpu.memory_space<vmem>>, vector<1x1x16x384xbf16>
    %18 = vector.shape_cast %17 : vector<1x1x16x384xbf16> to vector<16x384xbf16>
    %19 = tpu.concatenate %2, %4, %6, %8, %10, %12, %14, %16, %18 in 0 : vector<16x384xbf16>, vector<16x384xbf16>, vector<16x384xbf16>, vector<16x384xbf16>, vector<16x384xbf16>, vector<16x384xbf16>, vector<16x384xbf16>, vector<16x384xbf16>, vector<16x384xbf16> -> vector<144x384xbf16>
    %c0_32 = arith.constant 0 : index
    %c0_33 = arith.constant 0 : index
    %c0_34 = arith.constant 0 : index
    %20 = vector.load %arg3[%c0_32, %c0_33, %c0_34] : memref<1x16x144xbf16, #tpu.memory_space<vmem>>, vector<1x16x144xbf16>
    %21 = vector.shape_cast %20 : vector<1x16x144xbf16> to vector<16x144xbf16>
    %cst = arith.constant dense<0.000000e+00> : vector<16x384xf32>
    %22 = tpu.matmul %21, %19, %cst {dimension_numbers = #tpu.dot_dimension_numbers<[1], [0], [0], [1], [0, 0, 1, 1], [], []>} : vector<16x144xbf16>, vector<144x384xbf16>, vector<16x384xf32> -> vector<16x384xf32>
    %23 = arith.addf %0, %22 : vector<16x384xf32>
    %c0_35 = arith.constant 0 : index
    %c0_36 = arith.constant 0 : index
    %24 = vector.load %arg5[%c0_35, %c0_36] : memref<1x384xf32, #tpu.memory_space<vmem>>, vector<1x384xf32>
    %25 = vector.broadcast %24 : vector<1x384xf32> to vector<16x384xf32>
    %26 = arith.mulf %23, %25 : vector<16x384xf32>
    %cst_37 = arith.constant dense<0.000000e+00> : vector<16xf32>
    %27 = vector.multi_reduction <add>, %26, %cst_37 [1] : vector<16x384xf32> to vector<16xf32>
    %28 = vector.shape_cast %27 : vector<16xf32> to vector<16x1xf32>
    %29 = arith.mulf %26, %23 : vector<16x384xf32>
    %cst_38 = arith.constant dense<0.000000e+00> : vector<16xf32>
    %30 = vector.multi_reduction <add>, %29, %cst_38 [1] : vector<16x384xf32> to vector<16xf32>
    %31 = vector.shape_cast %30 : vector<16xf32> to vector<16x1xf32>
    %cst_39 = arith.constant 3.906250e-03 : f32
    %32 = vector.broadcast %cst_39 : f32 to vector<16x1xf32>
    %33 = arith.mulf %28, %32 : vector<16x1xf32>
    %cst_40 = arith.constant 3.906250e-03 : f32
    %34 = vector.broadcast %cst_40 : f32 to vector<16x1xf32>
    %35 = arith.mulf %31, %34 : vector<16x1xf32>
    %36 = arith.mulf %33, %33 : vector<16x1xf32>
    %37 = arith.subf %35, %36 : vector<16x1xf32>
    %cst_41 = arith.constant 0.000000e+00 : f32
    %38 = vector.broadcast %cst_41 : f32 to vector<16x1xf32>
    %39 = arith.maximumf %37, %38 : vector<16x1xf32>
    %40 = vector.broadcast %33 : vector<16x1xf32> to vector<16x384xf32>
    %41 = arith.subf %23, %40 : vector<16x384xf32>
    %cst_42 = arith.constant 9.99999974E-6 : f32
    %42 = vector.broadcast %cst_42 : f32 to vector<16x1xf32>
    %43 = arith.addf %39, %42 : vector<16x1xf32>
    %44 = math.rsqrt %43 : vector<16x1xf32>
    %45 = vector.broadcast %44 : vector<16x1xf32> to vector<16x384xf32>
    %46 = arith.mulf %41, %45 : vector<16x384xf32>
    %cst_43 = arith.constant 0.000000e+00 : f32
    %47 = vector.broadcast %cst_43 : f32 to vector<16x384xf32>
    %48 = arith.maximumf %46, %47 : vector<16x384xf32>
    %49 = arith.truncf %48 : vector<16x384xf32> to vector<16x384xbf16>
    %c0_44 = arith.constant 0 : index
    %c0_45 = arith.constant 0 : index
    %c0_46 = arith.constant 0 : index
    %50 = vector.load %arg6[%c0_44, %c0_45, %c0_46] : memref<1x16x384xbf16, #tpu.memory_space<vmem>>, vector<1x16x384xbf16>
    %51 = vector.shape_cast %50 : vector<1x16x384xbf16> to vector<16x384xbf16>
    %52 = vector.shape_cast %49 : vector<16x384xbf16> to vector<1x16x384xbf16>
    tpu.vector_store %arg6[%c0_44, %c0_45, %c0_46], %52 {strides = array<i32>} : memref<1x16x384xbf16, #tpu.memory_space<vmem>>, vector<1x16x384xbf16>,
    return
  }
  func.func @transform_0(%arg0: i32, %arg1: i32) -> (i32, i32, i32, i32) {
    %c0_i32 = arith.constant 0 : i32
    %c0_i32_0 = arith.constant 0 : i32
    %c0_i32_1 = arith.constant 0 : i32
    %c0_i32_2 = arith.constant 0 : i32
    return %arg0, %c0_i32, %c0_i32_0, %c0_i32_1 : i32, i32, i32, i32
  }
  func.func @transform_1(%arg0: i32, %arg1: i32) -> (i32, i32, i32) {
    %c0_i32 = arith.constant 0 : i32
    %c0_i32_0 = arith.constant 0 : i32
    %c0_i32_1 = arith.constant 0 : i32
    return %c0_i32, %arg1, %c0_i32_0 : i32, i32, i32
  }
  func.func @transform_2(%arg0: i32, %arg1: i32) -> (i32, i32) {
    %c0_i32 = arith.constant 0 : i32
    %c0_i32_0 = arith.constant 0 : i32
    return %arg1, %c0_i32 : i32, i32
  }
  func.func @transform_3(%arg0: i32, %arg1: i32) -> (i32, i32) {
    %c0_i32 = arith.constant 0 : i32
    %c0_i32_0 = arith.constant 0 : i32
    %c0_i32_1 = arith.constant 0 : i32
    return %c0_i32, %c0_i32_0 : i32, i32
  }
  func.func @transform_4(%arg0: i32, %arg1: i32) -> (i32, i32, i32) {
    %c0_i32 = arith.constant 0 : i32
    %c0_i32_0 = arith.constant 0 : i32
    return %arg0, %arg1, %c0_i32 : i32, i32, i32
  }
}

module attributes {stable_mosaic.version = 11 : i64} {
  func.func @_conv_in_relu_kernel(%arg0: i32, %arg1: i32, %arg2: memref<1x4x16x256xbf16, #tpu.memory_space<vmem>>, %arg3: memref<1x32x144xbf16, #tpu.memory_space<vmem>>, %arg4: memref<32x128xf32, #tpu.memory_space<vmem>>, %arg5: memref<1x128xf32, #tpu.memory_space<vmem>>, %arg6: memref<1x32x128xbf16, #tpu.memory_space<vmem>>) attributes {dimension_semantics = [#tpu.dimension_semantics<parallel>, #tpu.dimension_semantics<parallel>], iteration_bounds = array<i64: 2, 1>, scalar_prefetch = 0 : i64, scratch_operands = 0 : i64, tpu.core_type = #tpu.core_type<tc>, window_params = [{transform_indices = @transform_0, window_bounds = array<i64: 1, 4, 16, 256>}, {transform_indices = @transform_1, window_bounds = array<i64: 1, 32, 144>}, {transform_indices = @transform_2, window_bounds = array<i64: 32, 128>}, {pipeline_mode = #tpu.pipeline_mode<synchronous>, transform_indices = @transform_3, window_bounds = array<i64: 1, 128>}, {transform_indices = @transform_4, window_bounds = array<i64: 1, 32, 128>}]} {
    %c0 = arith.constant 0 : index
    %c0_0 = arith.constant 0 : index
    %0 = vector.load %arg4[%c0, %c0_0] : memref<32x128xf32, #tpu.memory_space<vmem>>, vector<32x128xf32>
    %c0_1 = arith.constant 0 : index
    %c0_2 = arith.constant 0 : index
    %c0_3 = arith.constant 0 : index
    %c0_4 = arith.constant 0 : index
    %1 = vector.load %arg2[%c0_1, %c0_2, %c0_3, %c0_4] : memref<1x4x16x256xbf16, #tpu.memory_space<vmem>>, vector<1x1x16x128xbf16>
    %2 = vector.shape_cast %1 : vector<1x1x16x128xbf16> to vector<16x128xbf16>
    %c0_5 = arith.constant 0 : index
    %c1 = arith.constant 1 : index
    %c0_6 = arith.constant 0 : index
    %c0_7 = arith.constant 0 : index
    %3 = vector.load %arg2[%c0_5, %c1, %c0_6, %c0_7] : memref<1x4x16x256xbf16, #tpu.memory_space<vmem>>, vector<1x1x16x128xbf16>
    %4 = vector.shape_cast %3 : vector<1x1x16x128xbf16> to vector<16x128xbf16>
    %c0_8 = arith.constant 0 : index
    %c0_9 = arith.constant 0 : index
    %c0_10 = arith.constant 0 : index
    %c1_11 = arith.constant 1 : index
    %5 = vector.load %arg2[%c0_8, %c0_9, %c0_10, %c1_11] : memref<1x4x16x256xbf16, #tpu.memory_space<vmem>>, vector<1x1x16x128xbf16>
    %6 = vector.shape_cast %5 : vector<1x1x16x128xbf16> to vector<16x128xbf16>
    %c0_12 = arith.constant 0 : index
    %c2 = arith.constant 2 : index
    %c0_13 = arith.constant 0 : index
    %c0_14 = arith.constant 0 : index
    %7 = vector.load %arg2[%c0_12, %c2, %c0_13, %c0_14] : memref<1x4x16x256xbf16, #tpu.memory_space<vmem>>, vector<1x1x16x128xbf16>
    %8 = vector.shape_cast %7 : vector<1x1x16x128xbf16> to vector<16x128xbf16>
    %c0_15 = arith.constant 0 : index
    %c3 = arith.constant 3 : index
    %c0_16 = arith.constant 0 : index
    %c0_17 = arith.constant 0 : index
    %9 = vector.load %arg2[%c0_15, %c3, %c0_16, %c0_17] : memref<1x4x16x256xbf16, #tpu.memory_space<vmem>>, vector<1x1x16x128xbf16>
    %10 = vector.shape_cast %9 : vector<1x1x16x128xbf16> to vector<16x128xbf16>
    %c0_18 = arith.constant 0 : index
    %c2_19 = arith.constant 2 : index
    %c0_20 = arith.constant 0 : index
    %c1_21 = arith.constant 1 : index
    %11 = vector.load %arg2[%c0_18, %c2_19, %c0_20, %c1_21] : memref<1x4x16x256xbf16, #tpu.memory_space<vmem>>, vector<1x1x16x128xbf16>
    %12 = vector.shape_cast %11 : vector<1x1x16x128xbf16> to vector<16x128xbf16>
    %c0_22 = arith.constant 0 : index
    %c0_23 = arith.constant 0 : index
    %c0_24 = arith.constant 0 : index
    %c9 = arith.constant 9 : index
    %13 = vector.load %arg2[%c0_22, %c0_23, %c0_24, %c9] : memref<1x4x16x256xbf16, #tpu.memory_space<vmem>>, vector<1x1x16x128xbf16>
    %14 = vector.shape_cast %13 : vector<1x1x16x128xbf16> to vector<16x128xbf16>
    %c0_25 = arith.constant 0 : index
    %c1_26 = arith.constant 1 : index
    %c0_27 = arith.constant 0 : index
    %c9_28 = arith.constant 9 : index
    %15 = vector.load %arg2[%c0_25, %c1_26, %c0_27, %c9_28] : memref<1x4x16x256xbf16, #tpu.memory_space<vmem>>, vector<1x1x16x128xbf16>
    %16 = vector.shape_cast %15 : vector<1x1x16x128xbf16> to vector<16x128xbf16>
    %c0_29 = arith.constant 0 : index
    %c0_30 = arith.constant 0 : index
    %c0_31 = arith.constant 0 : index
    %c10 = arith.constant 10 : index
    %17 = vector.load %arg2[%c0_29, %c0_30, %c0_31, %c10] : memref<1x4x16x256xbf16, #tpu.memory_space<vmem>>, vector<1x1x16x128xbf16>
    %18 = vector.shape_cast %17 : vector<1x1x16x128xbf16> to vector<16x128xbf16>
    %19 = tpu.concatenate %2, %4, %6, %8, %10, %12, %14, %16, %18 in 0 : vector<16x128xbf16>, vector<16x128xbf16>, vector<16x128xbf16>, vector<16x128xbf16>, vector<16x128xbf16>, vector<16x128xbf16>, vector<16x128xbf16>, vector<16x128xbf16>, vector<16x128xbf16> -> vector<144x128xbf16>
    %c0_32 = arith.constant 0 : index
    %c0_33 = arith.constant 0 : index
    %c0_34 = arith.constant 0 : index
    %20 = vector.load %arg3[%c0_32, %c0_33, %c0_34] : memref<1x32x144xbf16, #tpu.memory_space<vmem>>, vector<1x32x144xbf16>
    %21 = vector.shape_cast %20 : vector<1x32x144xbf16> to vector<32x144xbf16>
    %cst = arith.constant dense<0.000000e+00> : vector<32x128xf32>
    %22 = tpu.matmul %21, %19, %cst {dimension_numbers = #tpu.dot_dimension_numbers<[1], [0], [0], [1], [0, 0, 1, 1], [], []>} : vector<32x144xbf16>, vector<144x128xbf16>, vector<32x128xf32> -> vector<32x128xf32>
    %23 = arith.addf %0, %22 : vector<32x128xf32>
    %c0_35 = arith.constant 0 : index
    %c0_36 = arith.constant 0 : index
    %24 = vector.load %arg5[%c0_35, %c0_36] : memref<1x128xf32, #tpu.memory_space<vmem>>, vector<1x128xf32>
    %25 = vector.broadcast %24 : vector<1x128xf32> to vector<32x128xf32>
    %26 = arith.mulf %23, %25 : vector<32x128xf32>
    %cst_37 = arith.constant dense<0.000000e+00> : vector<32xf32>
    %27 = vector.multi_reduction <add>, %26, %cst_37 [1] : vector<32x128xf32> to vector<32xf32>
    %28 = vector.shape_cast %27 : vector<32xf32> to vector<32x1xf32>
    %29 = arith.mulf %26, %23 : vector<32x128xf32>
    %cst_38 = arith.constant dense<0.000000e+00> : vector<32xf32>
    %30 = vector.multi_reduction <add>, %29, %cst_38 [1] : vector<32x128xf32> to vector<32xf32>
    %31 = vector.shape_cast %30 : vector<32xf32> to vector<32x1xf32>
    %cst_39 = arith.constant 1.562500e-02 : f32
    %32 = vector.broadcast %cst_39 : f32 to vector<32x1xf32>
    %33 = arith.mulf %28, %32 : vector<32x1xf32>
    %cst_40 = arith.constant 1.562500e-02 : f32
    %34 = vector.broadcast %cst_40 : f32 to vector<32x1xf32>
    %35 = arith.mulf %31, %34 : vector<32x1xf32>
    %36 = arith.mulf %33, %33 : vector<32x1xf32>
    %37 = arith.subf %35, %36 : vector<32x1xf32>
    %cst_41 = arith.constant 0.000000e+00 : f32
    %38 = vector.broadcast %cst_41 : f32 to vector<32x1xf32>
    %39 = arith.maximumf %37, %38 : vector<32x1xf32>
    %40 = vector.broadcast %33 : vector<32x1xf32> to vector<32x128xf32>
    %41 = arith.subf %23, %40 : vector<32x128xf32>
    %cst_42 = arith.constant 9.99999974E-6 : f32
    %42 = vector.broadcast %cst_42 : f32 to vector<32x1xf32>
    %43 = arith.addf %39, %42 : vector<32x1xf32>
    %44 = math.rsqrt %43 : vector<32x1xf32>
    %45 = vector.broadcast %44 : vector<32x1xf32> to vector<32x128xf32>
    %46 = arith.mulf %41, %45 : vector<32x128xf32>
    %cst_43 = arith.constant 0.000000e+00 : f32
    %47 = vector.broadcast %cst_43 : f32 to vector<32x128xf32>
    %48 = arith.maximumf %46, %47 : vector<32x128xf32>
    %49 = arith.truncf %48 : vector<32x128xf32> to vector<32x128xbf16>
    %c0_44 = arith.constant 0 : index
    %c0_45 = arith.constant 0 : index
    %c0_46 = arith.constant 0 : index
    %50 = vector.load %arg6[%c0_44, %c0_45, %c0_46] : memref<1x32x128xbf16, #tpu.memory_space<vmem>>, vector<1x32x128xbf16>
    %51 = vector.shape_cast %50 : vector<1x32x128xbf16> to vector<32x128xbf16>
    %52 = vector.shape_cast %49 : vector<32x128xbf16> to vector<1x32x128xbf16>
    tpu.vector_store %arg6[%c0_44, %c0_45, %c0_46], %52 {strides = array<i32>} : memref<1x32x128xbf16, #tpu.memory_space<vmem>>, vector<1x32x128xbf16>,
    return
  }
  func.func @transform_0(%arg0: i32, %arg1: i32) -> (i32, i32, i32, i32) {
    %c0_i32 = arith.constant 0 : i32
    %c0_i32_0 = arith.constant 0 : i32
    %c0_i32_1 = arith.constant 0 : i32
    %c0_i32_2 = arith.constant 0 : i32
    return %arg0, %c0_i32, %c0_i32_0, %c0_i32_1 : i32, i32, i32, i32
  }
  func.func @transform_1(%arg0: i32, %arg1: i32) -> (i32, i32, i32) {
    %c0_i32 = arith.constant 0 : i32
    %c0_i32_0 = arith.constant 0 : i32
    %c0_i32_1 = arith.constant 0 : i32
    return %c0_i32, %arg1, %c0_i32_0 : i32, i32, i32
  }
  func.func @transform_2(%arg0: i32, %arg1: i32) -> (i32, i32) {
    %c0_i32 = arith.constant 0 : i32
    %c0_i32_0 = arith.constant 0 : i32
    return %arg1, %c0_i32 : i32, i32
  }
  func.func @transform_3(%arg0: i32, %arg1: i32) -> (i32, i32) {
    %c0_i32 = arith.constant 0 : i32
    %c0_i32_0 = arith.constant 0 : i32
    %c0_i32_1 = arith.constant 0 : i32
    return %c0_i32, %c0_i32_0 : i32, i32
  }
  func.func @transform_4(%arg0: i32, %arg1: i32) -> (i32, i32, i32) {
    %c0_i32 = arith.constant 0 : i32
    %c0_i32_0 = arith.constant 0 : i32
    return %arg0, %arg1, %c0_i32 : i32, i32, i32
  }
}

module attributes {stable_mosaic.version = 11 : i64} {
  func.func @_conv_in_relu_kernel(%arg0: i32, %arg1: i32, %arg2: memref<1x4x32x256xbf16, #tpu.memory_space<vmem>>, %arg3: memref<2x64x160xbf16, #tpu.memory_space<vmem>>, %arg4: memref<64x128xf32, #tpu.memory_space<vmem>>, %arg5: memref<1x128xf32, #tpu.memory_space<vmem>>, %arg6: memref<1x64x128xbf16, #tpu.memory_space<vmem>>) attributes {dimension_semantics = [#tpu.dimension_semantics<parallel>, #tpu.dimension_semantics<parallel>], iteration_bounds = array<i64: 2, 1>, scalar_prefetch = 0 : i64, scratch_operands = 0 : i64, tpu.core_type = #tpu.core_type<tc>, window_params = [{transform_indices = @transform_0, window_bounds = array<i64: 1, 4, 32, 256>}, {transform_indices = @transform_1, window_bounds = array<i64: 2, 64, 160>}, {transform_indices = @transform_2, window_bounds = array<i64: 64, 128>}, {pipeline_mode = #tpu.pipeline_mode<synchronous>, transform_indices = @transform_3, window_bounds = array<i64: 1, 128>}, {transform_indices = @transform_4, window_bounds = array<i64: 1, 64, 128>}]} {
    %c0 = arith.constant 0 : index
    %c0_0 = arith.constant 0 : index
    %0 = vector.load %arg4[%c0, %c0_0] : memref<64x128xf32, #tpu.memory_space<vmem>>, vector<64x128xf32>
    %c0_1 = arith.constant 0 : index
    %c0_2 = arith.constant 0 : index
    %c0_3 = arith.constant 0 : index
    %c0_4 = arith.constant 0 : index
    %1 = vector.load %arg2[%c0_1, %c0_2, %c0_3, %c0_4] : memref<1x4x32x256xbf16, #tpu.memory_space<vmem>>, vector<1x1x32x128xbf16>
    %2 = vector.shape_cast %1 : vector<1x1x32x128xbf16> to vector<32x128xbf16>
    %c0_5 = arith.constant 0 : index
    %c1 = arith.constant 1 : index
    %c0_6 = arith.constant 0 : index
    %c0_7 = arith.constant 0 : index
    %3 = vector.load %arg2[%c0_5, %c1, %c0_6, %c0_7] : memref<1x4x32x256xbf16, #tpu.memory_space<vmem>>, vector<1x1x32x128xbf16>
    %4 = vector.shape_cast %3 : vector<1x1x32x128xbf16> to vector<32x128xbf16>
    %c0_8 = arith.constant 0 : index
    %c0_9 = arith.constant 0 : index
    %c0_10 = arith.constant 0 : index
    %c1_11 = arith.constant 1 : index
    %5 = vector.load %arg2[%c0_8, %c0_9, %c0_10, %c1_11] : memref<1x4x32x256xbf16, #tpu.memory_space<vmem>>, vector<1x1x32x128xbf16>
    %6 = vector.shape_cast %5 : vector<1x1x32x128xbf16> to vector<32x128xbf16>
    %c0_12 = arith.constant 0 : index
    %c2 = arith.constant 2 : index
    %c0_13 = arith.constant 0 : index
    %c0_14 = arith.constant 0 : index
    %7 = vector.load %arg2[%c0_12, %c2, %c0_13, %c0_14] : memref<1x4x32x256xbf16, #tpu.memory_space<vmem>>, vector<1x1x32x128xbf16>
    %8 = vector.shape_cast %7 : vector<1x1x32x128xbf16> to vector<32x128xbf16>
    %c0_15 = arith.constant 0 : index
    %c3 = arith.constant 3 : index
    %c0_16 = arith.constant 0 : index
    %c0_17 = arith.constant 0 : index
    %9 = vector.load %arg2[%c0_15, %c3, %c0_16, %c0_17] : memref<1x4x32x256xbf16, #tpu.memory_space<vmem>>, vector<1x1x32x128xbf16>
    %10 = vector.shape_cast %9 : vector<1x1x32x128xbf16> to vector<32x128xbf16>
    %11 = tpu.concatenate %2, %4, %6, %8, %10 in 0 : vector<32x128xbf16>, vector<32x128xbf16>, vector<32x128xbf16>, vector<32x128xbf16>, vector<32x128xbf16> -> vector<160x128xbf16>
    %c0_18 = arith.constant 0 : index
    %c0_19 = arith.constant 0 : index
    %c0_20 = arith.constant 0 : index
    %12 = vector.load %arg3[%c0_18, %c0_19, %c0_20] : memref<2x64x160xbf16, #tpu.memory_space<vmem>>, vector<1x64x160xbf16>
    %13 = vector.shape_cast %12 : vector<1x64x160xbf16> to vector<64x160xbf16>
    %cst = arith.constant dense<0.000000e+00> : vector<64x128xf32>
    %14 = tpu.matmul %13, %11, %cst {dimension_numbers = #tpu.dot_dimension_numbers<[1], [0], [0], [1], [0, 0, 1, 1], [], []>} : vector<64x160xbf16>, vector<160x128xbf16>, vector<64x128xf32> -> vector<64x128xf32>
    %15 = arith.addf %0, %14 : vector<64x128xf32>
    %c0_21 = arith.constant 0 : index
    %c2_22 = arith.constant 2 : index
    %c0_23 = arith.constant 0 : index
    %c1_24 = arith.constant 1 : index
    %16 = vector.load %arg2[%c0_21, %c2_22, %c0_23, %c1_24] : memref<1x4x32x256xbf16, #tpu.memory_space<vmem>>, vector<1x1x32x128xbf16>
    %17 = vector.shape_cast %16 : vector<1x1x32x128xbf16> to vector<32x128xbf16>
    %c0_25 = arith.constant 0 : index
    %c0_26 = arith.constant 0 : index
    %c0_27 = arith.constant 0 : index
    %c5 = arith.constant 5 : index
    %18 = vector.load %arg2[%c0_25, %c0_26, %c0_27, %c5] : memref<1x4x32x256xbf16, #tpu.memory_space<vmem>>, vector<1x1x32x128xbf16>
    %19 = vector.shape_cast %18 : vector<1x1x32x128xbf16> to vector<32x128xbf16>
    %c0_28 = arith.constant 0 : index
    %c1_29 = arith.constant 1 : index
    %c0_30 = arith.constant 0 : index
    %c5_31 = arith.constant 5 : index
    %20 = vector.load %arg2[%c0_28, %c1_29, %c0_30, %c5_31] : memref<1x4x32x256xbf16, #tpu.memory_space<vmem>>, vector<1x1x32x128xbf16>
    %21 = vector.shape_cast %20 : vector<1x1x32x128xbf16> to vector<32x128xbf16>
    %c0_32 = arith.constant 0 : index
    %c0_33 = arith.constant 0 : index
    %c0_34 = arith.constant 0 : index
    %c6 = arith.constant 6 : index
    %22 = vector.load %arg2[%c0_32, %c0_33, %c0_34, %c6] : memref<1x4x32x256xbf16, #tpu.memory_space<vmem>>, vector<1x1x32x128xbf16>
    %23 = vector.shape_cast %22 : vector<1x1x32x128xbf16> to vector<32x128xbf16>
    %c0_35 = arith.constant 0 : index
    %c0_36 = arith.constant 0 : index
    %c0_37 = arith.constant 0 : index
    %c0_38 = arith.constant 0 : index
    %24 = vector.load %arg2[%c0_35, %c0_36, %c0_37, %c0_38] : memref<1x4x32x256xbf16, #tpu.memory_space<vmem>>, vector<1x1x32x128xbf16>
    %25 = vector.shape_cast %24 : vector<1x1x32x128xbf16> to vector<32x128xbf16>
    %26 = tpu.concatenate %17, %19, %21, %23, %25 in 0 : vector<32x128xbf16>, vector<32x128xbf16>, vector<32x128xbf16>, vector<32x128xbf16>, vector<32x128xbf16> -> vector<160x128xbf16>
    %c1_39 = arith.constant 1 : index
    %c0_40 = arith.constant 0 : index
    %c0_41 = arith.constant 0 : index
    %27 = vector.load %arg3[%c1_39, %c0_40, %c0_41] : memref<2x64x160xbf16, #tpu.memory_space<vmem>>, vector<1x64x160xbf16>
    %28 = vector.shape_cast %27 : vector<1x64x160xbf16> to vector<64x160xbf16>
    %cst_42 = arith.constant dense<0.000000e+00> : vector<64x128xf32>
    %29 = tpu.matmul %28, %26, %cst_42 {dimension_numbers = #tpu.dot_dimension_numbers<[1], [0], [0], [1], [0, 0, 1, 1], [], []>} : vector<64x160xbf16>, vector<160x128xbf16>, vector<64x128xf32> -> vector<64x128xf32>
    %30 = arith.addf %15, %29 : vector<64x128xf32>
    %c0_43 = arith.constant 0 : index
    %c0_44 = arith.constant 0 : index
    %31 = vector.load %arg5[%c0_43, %c0_44] : memref<1x128xf32, #tpu.memory_space<vmem>>, vector<1x128xf32>
    %32 = vector.broadcast %31 : vector<1x128xf32> to vector<64x128xf32>
    %33 = arith.mulf %30, %32 : vector<64x128xf32>
    %cst_45 = arith.constant dense<0.000000e+00> : vector<64xf32>
    %34 = vector.multi_reduction <add>, %33, %cst_45 [1] : vector<64x128xf32> to vector<64xf32>
    %35 = vector.shape_cast %34 : vector<64xf32> to vector<64x1xf32>
    %36 = arith.mulf %33, %30 : vector<64x128xf32>
    %cst_46 = arith.constant dense<0.000000e+00> : vector<64xf32>
    %37 = vector.multi_reduction <add>, %36, %cst_46 [1] : vector<64x128xf32> to vector<64xf32>
    %38 = vector.shape_cast %37 : vector<64xf32> to vector<64x1xf32>
    %cst_47 = arith.constant 6.250000e-02 : f32
    %39 = vector.broadcast %cst_47 : f32 to vector<64x1xf32>
    %40 = arith.mulf %35, %39 : vector<64x1xf32>
    %cst_48 = arith.constant 6.250000e-02 : f32
    %41 = vector.broadcast %cst_48 : f32 to vector<64x1xf32>
    %42 = arith.mulf %38, %41 : vector<64x1xf32>
    %43 = arith.mulf %40, %40 : vector<64x1xf32>
    %44 = arith.subf %42, %43 : vector<64x1xf32>
    %cst_49 = arith.constant 0.000000e+00 : f32
    %45 = vector.broadcast %cst_49 : f32 to vector<64x1xf32>
    %46 = arith.maximumf %44, %45 : vector<64x1xf32>
    %47 = vector.broadcast %40 : vector<64x1xf32> to vector<64x128xf32>
    %48 = arith.subf %30, %47 : vector<64x128xf32>
    %cst_50 = arith.constant 9.99999974E-6 : f32
    %49 = vector.broadcast %cst_50 : f32 to vector<64x1xf32>
    %50 = arith.addf %46, %49 : vector<64x1xf32>
    %51 = math.rsqrt %50 : vector<64x1xf32>
    %52 = vector.broadcast %51 : vector<64x1xf32> to vector<64x128xf32>
    %53 = arith.mulf %48, %52 : vector<64x128xf32>
    %cst_51 = arith.constant 0.000000e+00 : f32
    %54 = vector.broadcast %cst_51 : f32 to vector<64x128xf32>
    %55 = arith.maximumf %53, %54 : vector<64x128xf32>
    %56 = arith.truncf %55 : vector<64x128xf32> to vector<64x128xbf16>
    %c0_52 = arith.constant 0 : index
    %c0_53 = arith.constant 0 : index
    %c0_54 = arith.constant 0 : index
    %57 = vector.load %arg6[%c0_52, %c0_53, %c0_54] : memref<1x64x128xbf16, #tpu.memory_space<vmem>>, vector<1x64x128xbf16>
    %58 = vector.shape_cast %57 : vector<1x64x128xbf16> to vector<64x128xbf16>
    %59 = vector.shape_cast %56 : vector<64x128xbf16> to vector<1x64x128xbf16>
    tpu.vector_store %arg6[%c0_52, %c0_53, %c0_54], %59 {strides = array<i32>} : memref<1x64x128xbf16, #tpu.memory_space<vmem>>, vector<1x64x128xbf16>,
    return
  }
  func.func @transform_0(%arg0: i32, %arg1: i32) -> (i32, i32, i32, i32) {
    %c0_i32 = arith.constant 0 : i32
    %c0_i32_0 = arith.constant 0 : i32
    %c0_i32_1 = arith.constant 0 : i32
    %c0_i32_2 = arith.constant 0 : i32
    return %arg0, %c0_i32, %c0_i32_0, %c0_i32_1 : i32, i32, i32, i32
  }
  func.func @transform_1(%arg0: i32, %arg1: i32) -> (i32, i32, i32) {
    %c0_i32 = arith.constant 0 : i32
    %c0_i32_0 = arith.constant 0 : i32
    %c0_i32_1 = arith.constant 0 : i32
    return %c0_i32, %arg1, %c0_i32_0 : i32, i32, i32
  }
  func.func @transform_2(%arg0: i32, %arg1: i32) -> (i32, i32) {
    %c0_i32 = arith.constant 0 : i32
    %c0_i32_0 = arith.constant 0 : i32
    return %arg1, %c0_i32 : i32, i32
  }
  func.func @transform_3(%arg0: i32, %arg1: i32) -> (i32, i32) {
    %c0_i32 = arith.constant 0 : i32
    %c0_i32_0 = arith.constant 0 : i32
    %c0_i32_1 = arith.constant 0 : i32
    return %c0_i32, %c0_i32_0 : i32, i32
  }
  func.func @transform_4(%arg0: i32, %arg1: i32) -> (i32, i32, i32) {
    %c0_i32 = arith.constant 0 : i32
    %c0_i32_0 = arith.constant 0 : i32
    return %arg0, %arg1, %c0_i32 : i32, i32, i32
  }
}

module attributes {stable_mosaic.version = 11 : i64} {
  func.func @_conv_in_relu_kernel(%arg0: i32, %arg1: i32, %arg2: memref<1x4x64x256xbf16, #tpu.memory_space<vmem>>, %arg3: memref<3x128x192xbf16, #tpu.memory_space<vmem>>, %arg4: memref<128x128xf32, #tpu.memory_space<vmem>>, %arg5: memref<1x128xf32, #tpu.memory_space<vmem>>, %arg6: memref<1x128x128xbf16, #tpu.memory_space<vmem>>) attributes {dimension_semantics = [#tpu.dimension_semantics<parallel>, #tpu.dimension_semantics<parallel>], iteration_bounds = array<i64: 2, 1>, scalar_prefetch = 0 : i64, scratch_operands = 0 : i64, tpu.core_type = #tpu.core_type<tc>, window_params = [{transform_indices = @transform_0, window_bounds = array<i64: 1, 4, 64, 256>}, {transform_indices = @transform_1, window_bounds = array<i64: 3, 128, 192>}, {transform_indices = @transform_2, window_bounds = array<i64: 128, 128>}, {pipeline_mode = #tpu.pipeline_mode<synchronous>, transform_indices = @transform_3, window_bounds = array<i64: 1, 128>}, {transform_indices = @transform_4, window_bounds = array<i64: 1, 128, 128>}]} {
    %c0 = arith.constant 0 : index
    %c0_0 = arith.constant 0 : index
    %0 = vector.load %arg4[%c0, %c0_0] : memref<128x128xf32, #tpu.memory_space<vmem>>, vector<128x128xf32>
    %c0_1 = arith.constant 0 : index
    %c0_2 = arith.constant 0 : index
    %c0_3 = arith.constant 0 : index
    %c0_4 = arith.constant 0 : index
    %1 = vector.load %arg2[%c0_1, %c0_2, %c0_3, %c0_4] : memref<1x4x64x256xbf16, #tpu.memory_space<vmem>>, vector<1x1x64x128xbf16>
    %2 = vector.shape_cast %1 : vector<1x1x64x128xbf16> to vector<64x128xbf16>
    %c0_5 = arith.constant 0 : index
    %c1 = arith.constant 1 : index
    %c0_6 = arith.constant 0 : index
    %c0_7 = arith.constant 0 : index
    %3 = vector.load %arg2[%c0_5, %c1, %c0_6, %c0_7] : memref<1x4x64x256xbf16, #tpu.memory_space<vmem>>, vector<1x1x64x128xbf16>
    %4 = vector.shape_cast %3 : vector<1x1x64x128xbf16> to vector<64x128xbf16>
    %c0_8 = arith.constant 0 : index
    %c0_9 = arith.constant 0 : index
    %c0_10 = arith.constant 0 : index
    %c1_11 = arith.constant 1 : index
    %5 = vector.load %arg2[%c0_8, %c0_9, %c0_10, %c1_11] : memref<1x4x64x256xbf16, #tpu.memory_space<vmem>>, vector<1x1x64x128xbf16>
    %6 = vector.shape_cast %5 : vector<1x1x64x128xbf16> to vector<64x128xbf16>
    %7 = tpu.concatenate %2, %4, %6 in 0 : vector<64x128xbf16>, vector<64x128xbf16>, vector<64x128xbf16> -> vector<192x128xbf16>
    %c0_12 = arith.constant 0 : index
    %c0_13 = arith.constant 0 : index
    %c0_14 = arith.constant 0 : index
    %8 = vector.load %arg3[%c0_12, %c0_13, %c0_14] : memref<3x128x192xbf16, #tpu.memory_space<vmem>>, vector<1x128x192xbf16>
    %9 = vector.shape_cast %8 : vector<1x128x192xbf16> to vector<128x192xbf16>
    %cst = arith.constant dense<0.000000e+00> : vector<128x128xf32>
    %10 = tpu.matmul %9, %7, %cst {dimension_numbers = #tpu.dot_dimension_numbers<[1], [0], [0], [1], [0, 0, 1, 1], [], []>} : vector<128x192xbf16>, vector<192x128xbf16>, vector<128x128xf32> -> vector<128x128xf32>
    %11 = arith.addf %0, %10 : vector<128x128xf32>
    %c0_15 = arith.constant 0 : index
    %c2 = arith.constant 2 : index
    %c0_16 = arith.constant 0 : index
    %c0_17 = arith.constant 0 : index
    %12 = vector.load %arg2[%c0_15, %c2, %c0_16, %c0_17] : memref<1x4x64x256xbf16, #tpu.memory_space<vmem>>, vector<1x1x64x128xbf16>
    %13 = vector.shape_cast %12 : vector<1x1x64x128xbf16> to vector<64x128xbf16>
    %c0_18 = arith.constant 0 : index
    %c3 = arith.constant 3 : index
    %c0_19 = arith.constant 0 : index
    %c0_20 = arith.constant 0 : index
    %14 = vector.load %arg2[%c0_18, %c3, %c0_19, %c0_20] : memref<1x4x64x256xbf16, #tpu.memory_space<vmem>>, vector<1x1x64x128xbf16>
    %15 = vector.shape_cast %14 : vector<1x1x64x128xbf16> to vector<64x128xbf16>
    %c0_21 = arith.constant 0 : index
    %c2_22 = arith.constant 2 : index
    %c0_23 = arith.constant 0 : index
    %c1_24 = arith.constant 1 : index
    %16 = vector.load %arg2[%c0_21, %c2_22, %c0_23, %c1_24] : memref<1x4x64x256xbf16, #tpu.memory_space<vmem>>, vector<1x1x64x128xbf16>
    %17 = vector.shape_cast %16 : vector<1x1x64x128xbf16> to vector<64x128xbf16>
    %18 = tpu.concatenate %13, %15, %17 in 0 : vector<64x128xbf16>, vector<64x128xbf16>, vector<64x128xbf16> -> vector<192x128xbf16>
    %c1_25 = arith.constant 1 : index
    %c0_26 = arith.constant 0 : index
    %c0_27 = arith.constant 0 : index
    %19 = vector.load %arg3[%c1_25, %c0_26, %c0_27] : memref<3x128x192xbf16, #tpu.memory_space<vmem>>, vector<1x128x192xbf16>
    %20 = vector.shape_cast %19 : vector<1x128x192xbf16> to vector<128x192xbf16>
    %cst_28 = arith.constant dense<0.000000e+00> : vector<128x128xf32>
    %21 = tpu.matmul %20, %18, %cst_28 {dimension_numbers = #tpu.dot_dimension_numbers<[1], [0], [0], [1], [0, 0, 1, 1], [], []>} : vector<128x192xbf16>, vector<192x128xbf16>, vector<128x128xf32> -> vector<128x128xf32>
    %22 = arith.addf %11, %21 : vector<128x128xf32>
    %c0_29 = arith.constant 0 : index
    %c0_30 = arith.constant 0 : index
    %c0_31 = arith.constant 0 : index
    %c3_32 = arith.constant 3 : index
    %23 = vector.load %arg2[%c0_29, %c0_30, %c0_31, %c3_32] : memref<1x4x64x256xbf16, #tpu.memory_space<vmem>>, vector<1x1x64x128xbf16>
    %24 = vector.shape_cast %23 : vector<1x1x64x128xbf16> to vector<64x128xbf16>
    %c0_33 = arith.constant 0 : index
    %c1_34 = arith.constant 1 : index
    %c0_35 = arith.constant 0 : index
    %c3_36 = arith.constant 3 : index
    %25 = vector.load %arg2[%c0_33, %c1_34, %c0_35, %c3_36] : memref<1x4x64x256xbf16, #tpu.memory_space<vmem>>, vector<1x1x64x128xbf16>
    %26 = vector.shape_cast %25 : vector<1x1x64x128xbf16> to vector<64x128xbf16>
    %c0_37 = arith.constant 0 : index
    %c0_38 = arith.constant 0 : index
    %c0_39 = arith.constant 0 : index
    %c4 = arith.constant 4 : index
    %27 = vector.load %arg2[%c0_37, %c0_38, %c0_39, %c4] : memref<1x4x64x256xbf16, #tpu.memory_space<vmem>>, vector<1x1x64x128xbf16>
    %28 = vector.shape_cast %27 : vector<1x1x64x128xbf16> to vector<64x128xbf16>
    %29 = tpu.concatenate %24, %26, %28 in 0 : vector<64x128xbf16>, vector<64x128xbf16>, vector<64x128xbf16> -> vector<192x128xbf16>
    %c2_40 = arith.constant 2 : index
    %c0_41 = arith.constant 0 : index
    %c0_42 = arith.constant 0 : index
    %30 = vector.load %arg3[%c2_40, %c0_41, %c0_42] : memref<3x128x192xbf16, #tpu.memory_space<vmem>>, vector<1x128x192xbf16>
    %31 = vector.shape_cast %30 : vector<1x128x192xbf16> to vector<128x192xbf16>
    %cst_43 = arith.constant dense<0.000000e+00> : vector<128x128xf32>
    %32 = tpu.matmul %31, %29, %cst_43 {dimension_numbers = #tpu.dot_dimension_numbers<[1], [0], [0], [1], [0, 0, 1, 1], [], []>} : vector<128x192xbf16>, vector<192x128xbf16>, vector<128x128xf32> -> vector<128x128xf32>
    %33 = arith.addf %22, %32 : vector<128x128xf32>
    %c0_44 = arith.constant 0 : index
    %c0_45 = arith.constant 0 : index
    %34 = vector.load %arg5[%c0_44, %c0_45] : memref<1x128xf32, #tpu.memory_space<vmem>>, vector<1x128xf32>
    %35 = vector.broadcast %34 : vector<1x128xf32> to vector<128x128xf32>
    %36 = arith.mulf %33, %35 : vector<128x128xf32>
    %cst_46 = arith.constant dense<0.000000e+00> : vector<128xf32>
    %37 = vector.multi_reduction <add>, %36, %cst_46 [1] : vector<128x128xf32> to vector<128xf32>
    %38 = vector.shape_cast %37 : vector<128xf32> to vector<128x1xf32>
    %39 = arith.mulf %36, %33 : vector<128x128xf32>
    %cst_47 = arith.constant dense<0.000000e+00> : vector<128xf32>
    %40 = vector.multi_reduction <add>, %39, %cst_47 [1] : vector<128x128xf32> to vector<128xf32>
    %41 = vector.shape_cast %40 : vector<128xf32> to vector<128x1xf32>
    %cst_48 = arith.constant 2.500000e-01 : f32
    %42 = vector.broadcast %cst_48 : f32 to vector<128x1xf32>
    %43 = arith.mulf %38, %42 : vector<128x1xf32>
    %cst_49 = arith.constant 2.500000e-01 : f32
    %44 = vector.broadcast %cst_49 : f32 to vector<128x1xf32>
    %45 = arith.mulf %41, %44 : vector<128x1xf32>
    %46 = arith.mulf %43, %43 : vector<128x1xf32>
    %47 = arith.subf %45, %46 : vector<128x1xf32>
    %cst_50 = arith.constant 0.000000e+00 : f32
    %48 = vector.broadcast %cst_50 : f32 to vector<128x1xf32>
    %49 = arith.maximumf %47, %48 : vector<128x1xf32>
    %50 = vector.broadcast %43 : vector<128x1xf32> to vector<128x128xf32>
    %51 = arith.subf %33, %50 : vector<128x128xf32>
    %cst_51 = arith.constant 9.99999974E-6 : f32
    %52 = vector.broadcast %cst_51 : f32 to vector<128x1xf32>
    %53 = arith.addf %49, %52 : vector<128x1xf32>
    %54 = math.rsqrt %53 : vector<128x1xf32>
    %55 = vector.broadcast %54 : vector<128x1xf32> to vector<128x128xf32>
    %56 = arith.mulf %51, %55 : vector<128x128xf32>
    %cst_52 = arith.constant 0.000000e+00 : f32
    %57 = vector.broadcast %cst_52 : f32 to vector<128x128xf32>
    %58 = arith.maximumf %56, %57 : vector<128x128xf32>
    %59 = arith.truncf %58 : vector<128x128xf32> to vector<128x128xbf16>
    %c0_53 = arith.constant 0 : index
    %c0_54 = arith.constant 0 : index
    %c0_55 = arith.constant 0 : index
    %60 = vector.load %arg6[%c0_53, %c0_54, %c0_55] : memref<1x128x128xbf16, #tpu.memory_space<vmem>>, vector<1x128x128xbf16>
    %61 = vector.shape_cast %60 : vector<1x128x128xbf16> to vector<128x128xbf16>
    %62 = vector.shape_cast %59 : vector<128x128xbf16> to vector<1x128x128xbf16>
    tpu.vector_store %arg6[%c0_53, %c0_54, %c0_55], %62 {strides = array<i32>} : memref<1x128x128xbf16, #tpu.memory_space<vmem>>, vector<1x128x128xbf16>,
    return
  }
  func.func @transform_0(%arg0: i32, %arg1: i32) -> (i32, i32, i32, i32) {
    %c0_i32 = arith.constant 0 : i32
    %c0_i32_0 = arith.constant 0 : i32
    %c0_i32_1 = arith.constant 0 : i32
    %c0_i32_2 = arith.constant 0 : i32
    return %arg0, %c0_i32, %c0_i32_0, %c0_i32_1 : i32, i32, i32, i32
  }
  func.func @transform_1(%arg0: i32, %arg1: i32) -> (i32, i32, i32) {
    %c0_i32 = arith.constant 0 : i32
    %c0_i32_0 = arith.constant 0 : i32
    %c0_i32_1 = arith.constant 0 : i32
    return %c0_i32, %arg1, %c0_i32_0 : i32, i32, i32
  }
  func.func @transform_2(%arg0: i32, %arg1: i32) -> (i32, i32) {
    %c0_i32 = arith.constant 0 : i32
    %c0_i32_0 = arith.constant 0 : i32
    return %arg1, %c0_i32 : i32, i32
  }
  func.func @transform_3(%arg0: i32, %arg1: i32) -> (i32, i32) {
    %c0_i32 = arith.constant 0 : i32
    %c0_i32_0 = arith.constant 0 : i32
    %c0_i32_1 = arith.constant 0 : i32
    return %c0_i32, %c0_i32_0 : i32, i32
  }
  func.func @transform_4(%arg0: i32, %arg1: i32) -> (i32, i32, i32) {
    %c0_i32 = arith.constant 0 : i32
    %c0_i32_0 = arith.constant 0 : i32
    return %arg0, %arg1, %c0_i32 : i32, i32, i32
  }
}

</mosaic_0001>

<llo_original>
// kernel: _lambda_.5
$region0: #{_lambda_.5}
  #allocation0 [shape = 'u32[]', space=smem, size = 0x4, offset = 0x4, fixed_abs, tag = 'smem constant byte address 0x4 - core index']
  #allocation1 [shape = 'u32[144,128]{1,0:T(1,128)}', space=vmem, size = 0x12000, scoped, tag = 'internal scratch']
  %s0 = inlined_call_operand.vmem [shape: bf16[2,1,16,1536], index: 0, kind: input, shape index: {}]
  %s1 = inlined_call_operand.vmem [shape: bf16[4,16,208], index: 1, kind: input, shape index: {}]
  %s2 = inlined_call_operand.vmem [shape: f32[16,1280], index: 2, kind: input, shape index: {}]
  %s3 = inlined_call_operand.vmem [shape: f32[1,1280], index: 3, kind: input, shape index: {}]
  %s4 = inlined_call_operand.vmem [shape: bf16[2,16,1280], index: 4, kind: output, shape index: {}]
  %s5 = sld [smem:[#allocation0]]
  $region49: #{_lambda_.5} parent=0
    _
  %s7 = ssub.s32 1, %s5
  %s8 = scalar_select 0, %s7, %s5
  loop: start=0, step=1, limit=4
  $region2: #{_lambda_.5} parent=0 // loop_pre_header
    _
  $region3: #{_lambda_.5} parent=0 // loop_header
    %s10 = sphi 0, %s14
    %p11 = scmp.ge.s32.totalorder %s10, 4
    %s17 = sphi 0, %s29
    %s18 = sphi 0, %s25
    %s19 = sphi 0, %s17
    %s20 = sphi 0, %s18
    %s21 = sphi 0, %s19
    %s22 = sphi 0, %s20
    %s32 = sphi 0, %s34
    %s35 = sphi 0, %s32
    %s36 = sphi 0, %s35
    %s52 = sphi 0, %s36
    %s58 = sphi 0, %s60
    %s61 = sphi 0, %s58
    %s62 = sphi 0, %s61
    %s78 = sphi 0, %s62
    %s84 = sphi 0, %s86
    %s87 = sphi 0, %s84
    %s88 = sphi 0, %s87
    %s104 = sphi 0, %s88
    %s108 = sphi 0, %s108
    %s110 = sphi 0, %s108
    %s111 = sphi 0, %s110
    %s125 = sphi 0, %s111
    %s133 = sphi 0, %s135
    %s136 = sphi 0, %s133
    %s137 = sphi 0, %s136
    %s153 = sphi 0, %s137
  $region4: #{_lambda_.5} parent=0 // loop_header_branch
    %13 = sbr.rel (%p11) target = $region8
  $region5: #{_lambda_.5} parent=0 // loop_body
    %s15 = ssub.s32 %s10, 1
    %s16 = ssub.s32 %s10, 2
    %s23 = sadd.s32 1, %s18
    %p24 = scmp.ge.s32.totalorder %s23, 1
    %s25 = scalar_select %p24, 0, %s23
    %s26 = sadd.s32 1, %s17
    %s27 = scalar_select %p24, %s26, %s17
    %p28 = scmp.ge.s32.totalorder %s27, 2
    %s29 = scalar_select %p28, 0, %s27
    %s30 = ssub.s32 %s17, %s29
    %p31 = scmp.eq.s32.totalorder %s30, 0
    %s33 = sadd.s32 %s32, 1
    %s34 = scalar_select %p31, %s32, %s33
    %p37 = pneg %p31
    %p38 = scmp.eq.s32.totalorder %s10, 1
    %p39 = por %p37, %p38
    %p40 = scmp.ne.s32.totalorder %s32, %s35
    %p41 = scmp.eq.s32.totalorder %s10, 0
    %p42 = por %p40, %p41
    %p43 = scmp.ne.s32.totalorder %s32, %s35
    %p44 = scmp.eq.s32.totalorder %s15, 1
    %p45 = por %p43, %p44
    %p46 = scmp.ne.s32.totalorder %s35, %s36
    %p47 = scmp.eq.s32.totalorder %s15, 0
    %p48 = por %p46, %p47
    %p49 = scmp.ne.s32.totalorder %s35, %s36
    %p50 = scmp.eq.s32.totalorder %s16, 1
    %p51 = por %p49, %p50
    %p53 = scmp.ne.s32.totalorder %s36, %s52
    %p54 = scmp.eq.s32.totalorder %s16, 0
    %p55 = por %p53, %p54
    %s56 = ssub.s32 %s18, %s25
    %p57 = scmp.eq.s32.totalorder %s56, 0
    %s59 = sadd.s32 %s58, 1
    %s60 = scalar_select %p57, %s58, %s59
    %p63 = pneg %p57
    %p64 = scmp.eq.s32.totalorder %s10, 1
    %p65 = por %p63, %p64
    %p66 = scmp.ne.s32.totalorder %s58, %s61
    %p67 = scmp.eq.s32.totalorder %s10, 0
    %p68 = por %p66, %p67
    %p69 = scmp.ne.s32.totalorder %s58, %s61
    %p70 = scmp.eq.s32.totalorder %s15, 1
    %p71 = por %p69, %p70
    %p72 = scmp.ne.s32.totalorder %s61, %s62
    %p73 = scmp.eq.s32.totalorder %s15, 0
    %p74 = por %p72, %p73
    %p75 = scmp.ne.s32.totalorder %s61, %s62
    %p76 = scmp.eq.s32.totalorder %s16, 1
    %p77 = por %p75, %p76
    %p79 = scmp.ne.s32.totalorder %s62, %s78
    %p80 = scmp.eq.s32.totalorder %s16, 0
    %p81 = por %p79, %p80
    %s82 = ssub.s32 %s18, %s25
    %p83 = scmp.eq.s32.totalorder %s82, 0
    %s85 = sadd.s32 %s84, 1
    %s86 = scalar_select %p83, %s84, %s85
    %p89 = pneg %p83
    %p90 = scmp.eq.s32.totalorder %s10, 1
    %p91 = por %p89, %p90
    %p92 = scmp.ne.s32.totalorder %s84, %s87
    %p93 = scmp.eq.s32.totalorder %s10, 0
    %p94 = por %p92, %p93
    %p95 = scmp.ne.s32.totalorder %s84, %s87
    %p96 = scmp.eq.s32.totalorder %s15, 1
    %p97 = por %p95, %p96
    %p98 = scmp.ne.s32.totalorder %s87, %s88
    %p99 = scmp.eq.s32.totalorder %s15, 0
    %p100 = por %p98, %p99
    %p101 = scmp.ne.s32.totalorder %s87, %s88
    %p102 = scmp.eq.s32.totalorder %s16, 1
    %p103 = por %p101, %p102
    %p105 = scmp.ne.s32.totalorder %s88, %s104
    %p106 = scmp.eq.s32.totalorder %s16, 0
    %p107 = por %p105, %p106
    %s109 = sadd.s32 %s108, 1
    %p112 = scmp.eq.s32.totalorder %s10, 1
    %p113 = scmp.ne.s32.totalorder %s108, %s110
    %p114 = scmp.eq.s32.totalorder %s10, 0
    %p115 = por %p113, %p114
    %p116 = scmp.ne.s32.totalorder %s108, %s110
    %p117 = scmp.eq.s32.totalorder %s15, 1
    %p118 = por %p116, %p117
    %p119 = scmp.ne.s32.totalorder %s110, %s111
    %p120 = scmp.eq.s32.totalorder %s15, 0
    %p121 = por %p119, %p120
    %p122 = scmp.ne.s32.totalorder %s110, %s111
    %p123 = scmp.eq.s32.totalorder %s16, 1
    %p124 = por %p122, %p123
    %p126 = scmp.ne.s32.totalorder %s111, %s125
    %p127 = scmp.eq.s32.totalorder %s16, 0
    %p128 = por %p126, %p127
    %s129 = ssub.s32 %s17, %s29
    %s130 = ssub.s32 %s18, %s25
    %s131 = sor.u32 %s129, %s130
    %p132 = scmp.eq.s32.totalorder %s131, 0
    %s134 = sadd.s32 %s133, 1
    %s135 = scalar_select %p132, %s133, %s134
    %p138 = pneg %p132
    %p139 = scmp.eq.s32.totalorder %s10, 1
    %p140 = por %p138, %p139
    %p141 = scmp.ne.s32.totalorder %s133, %s136
    %p142 = scmp.eq.s32.totalorder %s10, 0
    %p143 = por %p141, %p142
    %p144 = scmp.ne.s32.totalorder %s133, %s136
    %p145 = scmp.eq.s32.totalorder %s15, 1
    %p146 = por %p144, %p145
    %p147 = scmp.ne.s32.totalorder %s136, %s137
    %p148 = scmp.eq.s32.totalorder %s15, 0
    %p149 = por %p147, %p148
    %p150 = scmp.ne.s32.totalorder %s136, %s137
    %p151 = scmp.eq.s32.totalorder %s16, 1
    %p152 = por %p150, %p151
    %p154 = scmp.ne.s32.totalorder %s137, %s153
    %p155 = scmp.eq.s32.totalorder %s16, 0
    %p156 = por %p154, %p155
    %p157 = scmp.le.s32.totalorder 1, %s10
    %p158 = scmp.lt.s32.totalorder %s10, 3
    %p159 = pnand %p157, %p158
    %p160 = pneg %p159
    // Predicated region
    $region9: #{_lambda_.5} parent=5 // pred_check
      _
    $region10: #{_lambda_.5} parent=5 // pred_check_branch
      %162 = sbr.rel (%p159) target = $region12
    $region11: #{_lambda_.5} parent=5 // pred_region
      %s163 = ssub.s32 %s10, 1
      // Predicated region
      $region13: #{_lambda_.5} parent=11 // pred_check
        %p164 = pneg %p74
      $region14: #{_lambda_.5} parent=11 // pred_check_branch
        %166 = sbr.rel (%p164) target = $region16
      $region15: #{_lambda_.5} parent=11 // pred_region
        %s167 = smul.u32 2, %s20
        %p168 = scmp.lt.s32.totalorder %s167, 1
        %s169 = scalar_select %p168, %s167, 1
        %s170 = smul.addr %s169, 2
        %s171 = smul.addr %s170, 4
        %s172 = scalar_lea.vmem %s1, %s171
        %s173 = smul.u32 2, %s20
      $region16: #{_lambda_.5} parent=11 // pred_fallthru
        _
      // Predicated region
      $region17: #{_lambda_.5} parent=11 // pred_check
        %p174 = pneg %p100
      $region18: #{_lambda_.5} parent=11 // pred_check_branch
        %176 = sbr.rel (%p174) target = $region20
      $region19: #{_lambda_.5} parent=11 // pred_region
        %s177 = smul.u32 2, %s20
        %p178 = scmp.lt.s32.totalorder %s177, 1
        %s179 = scalar_select %p178, %s177, 1
        %s180 = smul.addr %s179, 10
        %s181 = smul.addr %s180, 8
        %s182 = scalar_lea.vmem %s2, %s181
        %s183 = smul.u32 2, %s20
      $region20: #{_lambda_.5} parent=11 // pred_fallthru
        _
      // Predicated region
      $region21: #{_lambda_.5} parent=11 // pred_check
        %p184 = pneg %p121
      $region22: #{_lambda_.5} parent=11 // pred_check_branch
        %186 = sbr.rel (%p184) target = $region24
      $region23: #{_lambda_.5} parent=11 // pred_region
        _
      $region24: #{_lambda_.5} parent=11 // pred_fallthru
        _
    $region12: #{_lambda_.5} parent=5 // pred_fallthru
      _
    %p187 = scmp.lt.s32.totalorder %s10, 2
    // Predicated region
    $region25: #{_lambda_.5} parent=5 // pred_check
      %p188 = pneg %p187
    $region26: #{_lambda_.5} parent=5 // pred_check_branch
      %190 = sbr.rel (%p188) target = $region28
    $region27: #{_lambda_.5} parent=5 // pred_region
      // Predicated region
      $region29: #{_lambda_.5} parent=27 // pred_check
        %p191 = pneg %p42
      $region30: #{_lambda_.5} parent=27 // pred_check_branch
        %193 = sbr.rel (%p191) target = $region32
      $region31: #{_lambda_.5} parent=27 // pred_region
        %p194 = scmp.lt.s32.totalorder %s17, 1
        %s195 = scalar_select %p194, %s17, 1
        %s196 = smul.addr %s195, 24
        %s197 = smul.addr %s196, 4
        %s198 = scalar_lea.vmem %s0, %s197
      $region32: #{_lambda_.5} parent=27 // pred_fallthru
        _
    $region28: #{_lambda_.5} parent=5 // pred_fallthru
      _
    %p199 = scmp.le.s32.totalorder 1, %s10
    %p200 = scmp.lt.s32.totalorder %s10, 3
    %p201 = pnand %p199, %p200
    %p202 = pneg %p201
    // Predicated region
    $region33: #{_lambda_.5} parent=5 // pred_check
      _
    $region34: #{_lambda_.5} parent=5 // pred_check_branch
      %204 = sbr.rel (%p201) target = $region36
    $region35: #{_lambda_.5} parent=5 // pred_region
      %s205 = ssub.s32 %s10, 1
      %p206 = scmp.lt.s32.totalorder %s19, 1
      %s207 = scalar_select %p206, %s19, 1
      %s208 = smul.addr %s207, 24
      %s209 = smul.addr %s208, 4
      %s210 = scalar_lea.vmem %s0, %s209
      %p211 = pneg %p48
      %p212 = pneg %p45
      %s213 = smul.u32 2, %s20
      %p214 = scmp.lt.s32.totalorder %s213, 1
      %s215 = scalar_select %p214, %s213, 1
      %s216 = smul.addr %s215, 2
      %s217 = smul.addr %s216, 4
      %s218 = scalar_lea.vmem %s1, %s217
      %p219 = pneg %p74
      %p220 = pneg %p71
      %s221 = smul.u32 2, %s20
      %p222 = scmp.lt.s32.totalorder %s221, 1
      %s223 = scalar_select %p222, %s221, 1
      %s224 = smul.addr %s223, 10
      %s225 = smul.addr %s224, 8
      %s226 = scalar_lea.vmem %s2, %s225
      %p227 = pneg %p100
      %p228 = pneg %p97
      %p229 = pneg %p121
      %p230 = pneg %p118
      %p231 = pneg %p149
      %p232 = pneg %p146
      %s233 = smul.u32 2, %s20
      %p234 = scmp.lt.s32.totalorder %s19, 1
      %s235 = scalar_select %p234, %s19, 1
      %p236 = scmp.lt.s32.totalorder %s233, 1
      %s237 = scalar_select %p236, %s233, 1
      %s238 = smul.addr %s237, 10
      %s239 = smul.addr %s235, 20
      %s240 = sadd.s32 %s238, %s239
      %s241 = smul.addr %s240, 4
      %s242 = scalar_lea.vmem %s4, %s241
      %p243 = scmp.lt.s32.totalorder %s19, 1
      %s244 = scalar_select %p243, %s19, 1
      %s245 = smul.addr %s244, 24
      %s246 = smul.addr %s245, 4
      %s247 = scalar_lea.vmem %s0, %s246
      %s248 = smul.u32 2, %s20
      %p249 = scmp.lt.s32.totalorder %s248, 1
      %s250 = scalar_select %p249, %s248, 1
      %s251 = smul.addr %s250, 2
      %s252 = smul.addr %s251, 4
      %s253 = scalar_lea.vmem %s1, %s252
      %s254 = smul.u32 2, %s20
      %s255 = smul.u32 2, %s20
      %p256 = scmp.lt.s32.totalorder %s255, 1
      %s257 = scalar_select %p256, %s255, 1
      %s258 = smul.addr %s257, 10
      %s259 = smul.addr %s258, 8
      %s260 = scalar_lea.vmem %s2, %s259
      %s261 = smul.u32 2, %s20
      %s262 = smul.u32 2, %s20
      %p263 = scmp.lt.s32.totalorder %s19, 1
      %s264 = scalar_select %p263, %s19, 1
      %p265 = scmp.lt.s32.totalorder %s262, 1
      %s266 = scalar_select %p265, %s262, 1
      %s267 = smul.addr %s266, 10
      %s268 = smul.addr %s264, 20
      %s269 = sadd.s32 %s267, %s268
      %s270 = smul.addr %s269, 4
      %s271 = scalar_lea.vmem %s4, %s270
      %s272 = smul.u32 2, %s20
      %v274 = vld [vmem:[%s260] sm:$0xff]
      %v275 = vld [vmem:[%s260 + $0x8] sm:$0xff]
      %v276 = vld [vmem:[%s260 + $0x10] sm:$0xff]
      %v277 = vld [vmem:[%s260 + $0x18] sm:$0xff]
      %v278 = vld [vmem:[%s260 + $0x20] sm:$0xff]
      %v279 = vld [vmem:[%s260 + $0x28] sm:$0xff]
      %v280 = vld [vmem:[%s260 + $0x30] sm:$0xff]
      %v281 = vld [vmem:[%s260 + $0x38] sm:$0xff]
      %v282 = vld [vmem:[%s260 + $0x40] sm:$0xff]
      %v283 = vld [vmem:[%s260 + $0x48] sm:$0xff]
      %v284 = vld [vmem:[%s260 + $0x50] sm:$0xff]
      %v285 = vld [vmem:[%s260 + $0x58] sm:$0xff]
      %v286 = vld [vmem:[%s260 + $0x60] sm:$0xff]
      %v287 = vld [vmem:[%s260 + $0x68] sm:$0xff]
      %v288 = vld [vmem:[%s260 + $0x70] sm:$0xff]
      %v289 = vld [vmem:[%s260 + $0x78] sm:$0xff]
      %v290 = vld [vmem:[%s260 + $0x80] sm:$0xff]
      %v291 = vld [vmem:[%s260 + $0x88] sm:$0xff]
      %v292 = vld [vmem:[%s260 + $0x90] sm:$0xff]
      %v293 = vld [vmem:[%s260 + $0x98] sm:$0xff]
      %v294 = vld [vmem:[%s247] sm:$0xff]
      %v295 = vld [vmem:[%s247 + $0x8] sm:$0xff]
      %v296 = vld [vmem:[%s247 + $0x10] sm:$0xff]
      %v297 = vld [vmem:[%s247 + $0x18] sm:$0xff]
      %v298 = vld [vmem:[%s247 + $0x20] sm:$0xff]
      %v299 = vld [vmem:[%s247 + $0x30] sm:$0xff]
      %v300 = vld [vmem:[%s247 + $0x38] sm:$0xff]
      %v301 = vld [vmem:[%s247 + $0x40] sm:$0xff]
      %v302 = vld [vmem:[%s247 + $0x48] sm:$0xff]
      %v303 = vld [vmem:[%s247 + $0x50] sm:$0xff]
      %v304 = vld [vmem:[%s247 + $0x28] sm:$0xf]
      %v305 = vld [vmem:[%s247 + $0x58] sm:$0xf]
      %v316 = vunpack.c.l.b16 %v294
      %v317 = vunpack.c.h.b16 %v294
      %v318 = vunpack.c.l.b16 %v295
      %v319 = vunpack.c.h.b16 %v295
      %v320 = vunpack.c.l.b16 %v296
      %v321 = vunpack.c.h.b16 %v296
      %v322 = vunpack.c.l.b16 %v297
      %v323 = vunpack.c.h.b16 %v297
      %v324 = vunpack.c.l.b16 %v298
      %v325 = vunpack.c.h.b16 %v298
      %v326 = vunpack.c.l.b16 %v299
      %v327 = vunpack.c.h.b16 %v299
      %v328 = vunpack.c.l.b16 %v300
      %v329 = vunpack.c.h.b16 %v300
      %v330 = vunpack.c.l.b16 %v301
      %v331 = vunpack.c.h.b16 %v301
      %v332 = vunpack.c.l.b16 %v302
      %v333 = vunpack.c.h.b16 %v302
      %v334 = vunpack.c.l.b16 %v303
      %v335 = vunpack.c.h.b16 %v303
      %v336 = vpack.c.b16 %v326, %v316
      %v337 = vpack.c.b16 %v327, %v317
      %v338 = vpack.c.b16 %v328, %v318
      %v339 = vpack.c.b16 %v329, %v319
      %v340 = vpack.c.b16 %v330, %v320
      %v341 = vpack.c.b16 %v331, %v321
      %v342 = vpack.c.b16 %v332, %v322
      %v343 = vpack.c.b16 %v333, %v323
      %v344 = vpack.c.b16 %v334, %v324
      %v345 = vpack.c.b16 %v335, %v325
      %v358 = vunpack.c.l.b16 %v304
      %v359 = vunpack.c.l.b16 %v305
      %v360 = vpack.c.b16 %v359, %v358
      %361 = vrot.lane.b32.xlu0 %v336, 127
      %v362 = vpop.permute.xlu0 %361
      %363 = vrot.lane.b32.xlu0 %v337, 127
      %v364 = vpop.permute.xlu0 %363
      %365 = vrot.lane.b32.xlu0 %v338, 127
      %v366 = vpop.permute.xlu0 %365
      %367 = vrot.lane.b32.xlu0 %v339, 127
      %v368 = vpop.permute.xlu0 %367
      %369 = vrot.lane.b32.xlu0 %v340, 127
      %v370 = vpop.permute.xlu0 %369
      %371 = vrot.lane.b32.xlu0 %v341, 127
      %v372 = vpop.permute.xlu0 %371
      %373 = vrot.lane.b32.xlu0 %v342, 127
      %v374 = vpop.permute.xlu0 %373
      %375 = vrot.lane.b32.xlu0 %v343, 127
      %v376 = vpop.permute.xlu0 %375
      %377 = vrot.lane.b32.xlu0 %v344, 127
      %v378 = vpop.permute.xlu0 %377
      %379 = vrot.lane.b32.xlu0 %v345, 127
      %v380 = vpop.permute.xlu0 %379
      %381 = vrot.lane.b32.xlu0 %v360, 127
      %v382 = vpop.permute.xlu0 %381
      %vm383 = vcmask 1039360
      %v384 = vsel %vm383, %v362, %v364
      %v385 = vsel %vm383, %v364, %v366
      %v386 = vsel %vm383, %v366, %v368
      %v387 = vsel %vm383, %v368, %v370
      %v388 = vsel %vm383, %v370, %v372
      %v389 = vsel %vm383, %v372, %v374
      %v390 = vsel %vm383, %v374, %v376
      %v391 = vsel %vm383, %v376, %v378
      %v392 = vsel %vm383, %v378, %v380
      %v393 = vsel %vm383, %v380, %v382
      %404 = vrot.lane.b32.xlu0 %v336, 126
      %v405 = vpop.permute.xlu0 %404
      %406 = vrot.lane.b32.xlu0 %v337, 126
      %v407 = vpop.permute.xlu0 %406
      %408 = vrot.lane.b32.xlu0 %v338, 126
      %v409 = vpop.permute.xlu0 %408
      %410 = vrot.lane.b32.xlu0 %v339, 126
      %v411 = vpop.permute.xlu0 %410
      %412 = vrot.lane.b32.xlu0 %v340, 126
      %v413 = vpop.permute.xlu0 %412
      %414 = vrot.lane.b32.xlu0 %v341, 126
      %v415 = vpop.permute.xlu0 %414
      %416 = vrot.lane.b32.xlu0 %v342, 126
      %v417 = vpop.permute.xlu0 %416
      %418 = vrot.lane.b32.xlu0 %v343, 126
      %v419 = vpop.permute.xlu0 %418
      %420 = vrot.lane.b32.xlu0 %v344, 126
      %v421 = vpop.permute.xlu0 %420
      %422 = vrot.lane.b32.xlu0 %v345, 126
      %v423 = vpop.permute.xlu0 %422
      %424 = vrot.lane.b32.xlu0 %v360, 126
      %v425 = vpop.permute.xlu0 %424
      %vm426 = vcmask 1031168
      %v427 = vsel %vm426, %v405, %v407
      %v428 = vsel %vm426, %v407, %v409
      %v429 = vsel %vm426, %v409, %v411
      %v430 = vsel %vm426, %v411, %v413
      %v431 = vsel %vm426, %v413, %v415
      %v432 = vsel %vm426, %v415, %v417
      %v433 = vsel %vm426, %v417, %v419
      %v434 = vsel %vm426, %v419, %v421
      %v435 = vsel %vm426, %v421, %v423
      %v436 = vsel %vm426, %v423, %v425
      %447 = vrot.lane.b32.xlu0 %v336, 125
      %v448 = vpop.permute.xlu0 %447
      %449 = vrot.lane.b32.xlu0 %v337, 125
      %v450 = vpop.permute.xlu0 %449
      %451 = vrot.lane.b32.xlu0 %v338, 125
      %v452 = vpop.permute.xlu0 %451
      %453 = vrot.lane.b32.xlu0 %v339, 125
      %v454 = vpop.permute.xlu0 %453
      %455 = vrot.lane.b32.xlu0 %v340, 125
      %v456 = vpop.permute.xlu0 %455
      %457 = vrot.lane.b32.xlu0 %v341, 125
      %v458 = vpop.permute.xlu0 %457
      %459 = vrot.lane.b32.xlu0 %v342, 125
      %v460 = vpop.permute.xlu0 %459
      %461 = vrot.lane.b32.xlu0 %v343, 125
      %v462 = vpop.permute.xlu0 %461
      %463 = vrot.lane.b32.xlu0 %v344, 125
      %v464 = vpop.permute.xlu0 %463
      %465 = vrot.lane.b32.xlu0 %v345, 125
      %v466 = vpop.permute.xlu0 %465
      %467 = vrot.lane.b32.xlu0 %v360, 125
      %v468 = vpop.permute.xlu0 %467
      %vm469 = vcmask 1022976
      %v470 = vsel %vm469, %v448, %v450
      %v471 = vsel %vm469, %v450, %v452
      %v472 = vsel %vm469, %v452, %v454
      %v473 = vsel %vm469, %v454, %v456
      %v474 = vsel %vm469, %v456, %v458
      %v475 = vsel %vm469, %v458, %v460
      %v476 = vsel %vm469, %v460, %v462
      %v477 = vsel %vm469, %v462, %v464
      %v478 = vsel %vm469, %v464, %v466
      %v479 = vsel %vm469, %v466, %v468
      %490 = vrot.lane.b32.xlu0 %v336, 124
      %v491 = vpop.permute.xlu0 %490
      %492 = vrot.lane.b32.xlu0 %v337, 124
      %v493 = vpop.permute.xlu0 %492
      %494 = vrot.lane.b32.xlu0 %v338, 124
      %v495 = vpop.permute.xlu0 %494
      %496 = vrot.lane.b32.xlu0 %v339, 124
      %v497 = vpop.permute.xlu0 %496
      %498 = vrot.lane.b32.xlu0 %v340, 124
      %v499 = vpop.permute.xlu0 %498
      %500 = vrot.lane.b32.xlu0 %v341, 124
      %v501 = vpop.permute.xlu0 %500
      %502 = vrot.lane.b32.xlu0 %v342, 124
      %v503 = vpop.permute.xlu0 %502
      %504 = vrot.lane.b32.xlu0 %v343, 124
      %v505 = vpop.permute.xlu0 %504
      %506 = vrot.lane.b32.xlu0 %v344, 124
      %v507 = vpop.permute.xlu0 %506
      %508 = vrot.lane.b32.xlu0 %v345, 124
      %v509 = vpop.permute.xlu0 %508
      %510 = vrot.lane.b32.xlu0 %v360, 124
      %v511 = vpop.permute.xlu0 %510
      %vm512 = vcmask 1014784
      %v513 = vsel %vm512, %v491, %v493
      %v514 = vsel %vm512, %v493, %v495
      %v515 = vsel %vm512, %v495, %v497
      %v516 = vsel %vm512, %v497, %v499
      %v517 = vsel %vm512, %v499, %v501
      %v518 = vsel %vm512, %v501, %v503
      %v519 = vsel %vm512, %v503, %v505
      %v520 = vsel %vm512, %v505, %v507
      %v521 = vsel %vm512, %v507, %v509
      %v522 = vsel %vm512, %v509, %v511
      %533 = vrot.lane.b32.xlu0 %v336, 123
      %v534 = vpop.permute.xlu0 %533
      %535 = vrot.lane.b32.xlu0 %v337, 123
      %v536 = vpop.permute.xlu0 %535
      %537 = vrot.lane.b32.xlu0 %v338, 123
      %v538 = vpop.permute.xlu0 %537
      %539 = vrot.lane.b32.xlu0 %v339, 123
      %v540 = vpop.permute.xlu0 %539
      %541 = vrot.lane.b32.xlu0 %v340, 123
      %v542 = vpop.permute.xlu0 %541
      %543 = vrot.lane.b32.xlu0 %v341, 123
      %v544 = vpop.permute.xlu0 %543
      %545 = vrot.lane.b32.xlu0 %v342, 123
      %v546 = vpop.permute.xlu0 %545
      %547 = vrot.lane.b32.xlu0 %v343, 123
      %v548 = vpop.permute.xlu0 %547
      %549 = vrot.lane.b32.xlu0 %v344, 123
      %v550 = vpop.permute.xlu0 %549
      %551 = vrot.lane.b32.xlu0 %v345, 123
      %v552 = vpop.permute.xlu0 %551
      %553 = vrot.lane.b32.xlu0 %v360, 123
      %v554 = vpop.permute.xlu0 %553
      %vm555 = vcmask 1006592
      %v556 = vsel %vm555, %v534, %v536
      %v557 = vsel %vm555, %v536, %v538
      %v558 = vsel %vm555, %v538, %v540
      %v559 = vsel %vm555, %v540, %v542
      %v560 = vsel %vm555, %v542, %v544
      %v561 = vsel %vm555, %v544, %v546
      %v562 = vsel %vm555, %v546, %v548
      %v563 = vsel %vm555, %v548, %v550
      %v564 = vsel %vm555, %v550, %v552
      %v565 = vsel %vm555, %v552, %v554
      %576 = vrot.lane.b32.xlu0 %v336, 122
      %v577 = vpop.permute.xlu0 %576
      %578 = vrot.lane.b32.xlu0 %v337, 122
      %v579 = vpop.permute.xlu0 %578
      %580 = vrot.lane.b32.xlu0 %v338, 122
      %v581 = vpop.permute.xlu0 %580
      %582 = vrot.lane.b32.xlu0 %v339, 122
      %v583 = vpop.permute.xlu0 %582
      %584 = vrot.lane.b32.xlu0 %v340, 122
      %v585 = vpop.permute.xlu0 %584
      %586 = vrot.lane.b32.xlu0 %v341, 122
      %v587 = vpop.permute.xlu0 %586
      %588 = vrot.lane.b32.xlu0 %v342, 122
      %v589 = vpop.permute.xlu0 %588
      %590 = vrot.lane.b32.xlu0 %v343, 122
      %v591 = vpop.permute.xlu0 %590
      %592 = vrot.lane.b32.xlu0 %v344, 122
      %v593 = vpop.permute.xlu0 %592
      %594 = vrot.lane.b32.xlu0 %v345, 122
      %v595 = vpop.permute.xlu0 %594
      %596 = vrot.lane.b32.xlu0 %v360, 122
      %v597 = vpop.permute.xlu0 %596
      %vm598 = vcmask 998400
      %v599 = vsel %vm598, %v577, %v579
      %v600 = vsel %vm598, %v579, %v581
      %v601 = vsel %vm598, %v581, %v583
      %v602 = vsel %vm598, %v583, %v585
      %v603 = vsel %vm598, %v585, %v587
      %v604 = vsel %vm598, %v587, %v589
      %v605 = vsel %vm598, %v589, %v591
      %v606 = vsel %vm598, %v591, %v593
      %v607 = vsel %vm598, %v593, %v595
      %v608 = vsel %vm598, %v595, %v597
      %619 = vrot.lane.b32.xlu0 %v336, 90
      %v620 = vpop.permute.xlu0 %619
      %621 = vrot.lane.b32.xlu0 %v337, 90
      %v622 = vpop.permute.xlu0 %621
      %623 = vrot.lane.b32.xlu0 %v338, 90
      %v624 = vpop.permute.xlu0 %623
      %625 = vrot.lane.b32.xlu0 %v339, 90
      %v626 = vpop.permute.xlu0 %625
      %627 = vrot.lane.b32.xlu0 %v340, 90
      %v628 = vpop.permute.xlu0 %627
      %629 = vrot.lane.b32.xlu0 %v341, 90
      %v630 = vpop.permute.xlu0 %629
      %631 = vrot.lane.b32.xlu0 %v342, 90
      %v632 = vpop.permute.xlu0 %631
      %633 = vrot.lane.b32.xlu0 %v343, 90
      %v634 = vpop.permute.xlu0 %633
      %635 = vrot.lane.b32.xlu0 %v344, 90
      %v636 = vpop.permute.xlu0 %635
      %637 = vrot.lane.b32.xlu0 %v345, 90
      %v638 = vpop.permute.xlu0 %637
      %639 = vrot.lane.b32.xlu0 %v360, 90
      %v640 = vpop.permute.xlu0 %639
      %vm641 = vcmask 736256
      %v642 = vsel %vm641, %v620, %v622
      %v643 = vsel %vm641, %v622, %v624
      %v644 = vsel %vm641, %v624, %v626
      %v645 = vsel %vm641, %v626, %v628
      %v646 = vsel %vm641, %v628, %v630
      %v647 = vsel %vm641, %v630, %v632
      %v648 = vsel %vm641, %v632, %v634
      %v649 = vsel %vm641, %v634, %v636
      %v650 = vsel %vm641, %v636, %v638
      %v651 = vsel %vm641, %v638, %v640
      %662 = vrot.lane.b32.xlu0 %v336, 89
      %v663 = vpop.permute.xlu0 %662
      %664 = vrot.lane.b32.xlu0 %v337, 89
      %v665 = vpop.permute.xlu0 %664
      %666 = vrot.lane.b32.xlu0 %v338, 89
      %v667 = vpop.permute.xlu0 %666
      %668 = vrot.lane.b32.xlu0 %v339, 89
      %v669 = vpop.permute.xlu0 %668
      %670 = vrot.lane.b32.xlu0 %v340, 89
      %v671 = vpop.permute.xlu0 %670
      %672 = vrot.lane.b32.xlu0 %v341, 89
      %v673 = vpop.permute.xlu0 %672
      %674 = vrot.lane.b32.xlu0 %v342, 89
      %v675 = vpop.permute.xlu0 %674
      %676 = vrot.lane.b32.xlu0 %v343, 89
      %v677 = vpop.permute.xlu0 %676
      %678 = vrot.lane.b32.xlu0 %v344, 89
      %v679 = vpop.permute.xlu0 %678
      %680 = vrot.lane.b32.xlu0 %v345, 89
      %v681 = vpop.permute.xlu0 %680
      %682 = vrot.lane.b32.xlu0 %v360, 89
      %v683 = vpop.permute.xlu0 %682
      %vm684 = vcmask 728064
      %v685 = vsel %vm684, %v663, %v665
      %v686 = vsel %vm684, %v665, %v667
      %v687 = vsel %vm684, %v667, %v669
      %v688 = vsel %vm684, %v669, %v671
      %v689 = vsel %vm684, %v671, %v673
      %v690 = vsel %vm684, %v673, %v675
      %v691 = vsel %vm684, %v675, %v677
      %v692 = vsel %vm684, %v677, %v679
      %v693 = vsel %vm684, %v679, %v681
      %v694 = vsel %vm684, %v681, %v683
      %705 = vrot.lane.b32.xlu0 %v336, 88
      %v706 = vpop.permute.xlu0 %705
      %707 = vrot.lane.b32.xlu0 %v337, 88
      %v708 = vpop.permute.xlu0 %707
      %709 = vrot.lane.b32.xlu0 %v338, 88
      %v710 = vpop.permute.xlu0 %709
      %711 = vrot.lane.b32.xlu0 %v339, 88
      %v712 = vpop.permute.xlu0 %711
      %713 = vrot.lane.b32.xlu0 %v340, 88
      %v714 = vpop.permute.xlu0 %713
      %715 = vrot.lane.b32.xlu0 %v341, 88
      %v716 = vpop.permute.xlu0 %715
      %717 = vrot.lane.b32.xlu0 %v342, 88
      %v718 = vpop.permute.xlu0 %717
      %719 = vrot.lane.b32.xlu0 %v343, 88
      %v720 = vpop.permute.xlu0 %719
      %721 = vrot.lane.b32.xlu0 %v344, 88
      %v722 = vpop.permute.xlu0 %721
      %723 = vrot.lane.b32.xlu0 %v345, 88
      %v724 = vpop.permute.xlu0 %723
      %725 = vrot.lane.b32.xlu0 %v360, 88
      %v726 = vpop.permute.xlu0 %725
      %vm727 = vcmask 719872
      %v728 = vsel %vm727, %v706, %v708
      %v729 = vsel %vm727, %v708, %v710
      %v730 = vsel %vm727, %v710, %v712
      %v731 = vsel %vm727, %v712, %v714
      %v732 = vsel %vm727, %v714, %v716
      %v733 = vsel %vm727, %v716, %v718
      %v734 = vsel %vm727, %v718, %v720
      %v735 = vsel %vm727, %v720, %v722
      %v736 = vsel %vm727, %v722, %v724
      %v737 = vsel %vm727, %v724, %v726
      %748 = vrot.lane.b32.xlu0 %v336, 87
      %v749 = vpop.permute.xlu0 %748
      %750 = vrot.lane.b32.xlu0 %v337, 87
      %v751 = vpop.permute.xlu0 %750
      %752 = vrot.lane.b32.xlu0 %v338, 87
      %v753 = vpop.permute.xlu0 %752
      %754 = vrot.lane.b32.xlu0 %v339, 87
      %v755 = vpop.permute.xlu0 %754
      %756 = vrot.lane.b32.xlu0 %v340, 87
      %v757 = vpop.permute.xlu0 %756
      %758 = vrot.lane.b32.xlu0 %v341, 87
      %v759 = vpop.permute.xlu0 %758
      %760 = vrot.lane.b32.xlu0 %v342, 87
      %v761 = vpop.permute.xlu0 %760
      %762 = vrot.lane.b32.xlu0 %v343, 87
      %v763 = vpop.permute.xlu0 %762
      %764 = vrot.lane.b32.xlu0 %v344, 87
      %v765 = vpop.permute.xlu0 %764
      %766 = vrot.lane.b32.xlu0 %v345, 87
      %v767 = vpop.permute.xlu0 %766
      %768 = vrot.lane.b32.xlu0 %v360, 87
      %v769 = vpop.permute.xlu0 %768
      %vm770 = vcmask 711680
      %v771 = vsel %vm770, %v749, %v751
      %v772 = vsel %vm770, %v751, %v753
      %v773 = vsel %vm770, %v753, %v755
      %v774 = vsel %vm770, %v755, %v757
      %v775 = vsel %vm770, %v757, %v759
      %v776 = vsel %vm770, %v759, %v761
      %v777 = vsel %vm770, %v761, %v763
      %v778 = vsel %vm770, %v763, %v765
      %v779 = vsel %vm770, %v765, %v767
      %v780 = vsel %vm770, %v767, %v769
      %791 = vrot.lane.b32.xlu0 %v336, 86
      %v792 = vpop.permute.xlu0 %791
      %793 = vrot.lane.b32.xlu0 %v337, 86
      %v794 = vpop.permute.xlu0 %793
      %795 = vrot.lane.b32.xlu0 %v338, 86
      %v796 = vpop.permute.xlu0 %795
      %797 = vrot.lane.b32.xlu0 %v339, 86
      %v798 = vpop.permute.xlu0 %797
      %799 = vrot.lane.b32.xlu0 %v340, 86
      %v800 = vpop.permute.xlu0 %799
      %801 = vrot.lane.b32.xlu0 %v341, 86
      %v802 = vpop.permute.xlu0 %801
      %803 = vrot.lane.b32.xlu0 %v342, 86
      %v804 = vpop.permute.xlu0 %803
      %805 = vrot.lane.b32.xlu0 %v343, 86
      %v806 = vpop.permute.xlu0 %805
      %807 = vrot.lane.b32.xlu0 %v344, 86
      %v808 = vpop.permute.xlu0 %807
      %809 = vrot.lane.b32.xlu0 %v345, 86
      %v810 = vpop.permute.xlu0 %809
      %811 = vrot.lane.b32.xlu0 %v360, 86
      %v812 = vpop.permute.xlu0 %811
      %vm813 = vcmask 703488
      %v814 = vsel %vm813, %v792, %v794
      %v815 = vsel %vm813, %v794, %v796
      %v816 = vsel %vm813, %v796, %v798
      %v817 = vsel %vm813, %v798, %v800
      %v818 = vsel %vm813, %v800, %v802
      %v819 = vsel %vm813, %v802, %v804
      %v820 = vsel %vm813, %v804, %v806
      %v821 = vsel %vm813, %v806, %v808
      %v822 = vsel %vm813, %v808, %v810
      %v823 = vsel %vm813, %v810, %v812
      %834 = vrot.lane.b32.xlu0 %v336, 85
      %v835 = vpop.permute.xlu0 %834
      %836 = vrot.lane.b32.xlu0 %v337, 85
      %v837 = vpop.permute.xlu0 %836
      %838 = vrot.lane.b32.xlu0 %v338, 85
      %v839 = vpop.permute.xlu0 %838
      %840 = vrot.lane.b32.xlu0 %v339, 85
      %v841 = vpop.permute.xlu0 %840
      %842 = vrot.lane.b32.xlu0 %v340, 85
      %v843 = vpop.permute.xlu0 %842
      %844 = vrot.lane.b32.xlu0 %v341, 85
      %v845 = vpop.permute.xlu0 %844
      %846 = vrot.lane.b32.xlu0 %v342, 85
      %v847 = vpop.permute.xlu0 %846
      %848 = vrot.lane.b32.xlu0 %v343, 85
      %v849 = vpop.permute.xlu0 %848
      %850 = vrot.lane.b32.xlu0 %v344, 85
      %v851 = vpop.permute.xlu0 %850
      %852 = vrot.lane.b32.xlu0 %v345, 85
      %v853 = vpop.permute.xlu0 %852
      %854 = vrot.lane.b32.xlu0 %v360, 85
      %v855 = vpop.permute.xlu0 %854
      %vm856 = vcmask 695296
      %v857 = vsel %vm856, %v835, %v837
      %v858 = vsel %vm856, %v837, %v839
      %v859 = vsel %vm856, %v839, %v841
      %v860 = vsel %vm856, %v841, %v843
      %v861 = vsel %vm856, %v843, %v845
      %v862 = vsel %vm856, %v845, %v847
      %v863 = vsel %vm856, %v847, %v849
      %v864 = vsel %vm856, %v849, %v851
      %v865 = vsel %vm856, %v851, %v853
      %v866 = vsel %vm856, %v853, %v855
      %v877 = vld [vmem:[%s253] sm:$0xff]
      %v878 = vld [vmem:[%s253 + $0x8] sm:$0xff]
      %v881 = vunpack.c.l.b16 %v877
      %v882 = vunpack.c.h.b16 %v877
      %v883 = vunpack.c.l.b16 %v878
      %v884 = vunpack.c.h.b16 %v878
      %v885 = vpack.c.b16 %v883, %v881
      %v886 = vpack.c.b16 %v884, %v882
      %vm888 = vcmask 654336
      %v890 = vsel %vm888, %v886, 0
      %892 = vmatprep.subr.bf16.mxu0 %v337
      %893 = vmatpush1.bf16.msra.mxu0 %v336
      %894 = vmatprep.subr.bf16.mxu0 %v385
      %895 = vmatpush1.bf16.msra.mxu0 %v384
      %896 = vmatprep.subr.bf16.mxu0 %v428
      %897 = vmatpush1.bf16.msra.mxu0 %v427
      %898 = vmatprep.subr.bf16.mxu0 %v471
      %899 = vmatpush1.bf16.msra.mxu0 %v470
      %900 = vmatprep.subr.bf16.mxu0 %v514
      %901 = vmatpush1.bf16.msra.mxu0 %v513
      %902 = vmatprep.subr.bf16.mxu0 %v557
      %903 = vmatpush1.bf16.msra.mxu0 %v556
      %904 = vmatprep.subr.bf16.mxu0 %v600
      %905 = vmatpush1.bf16.msra.mxu0 %v599
      %906 = vmatprep.subr.bf16.mxu0 %v643
      %907 = vmatpush1.bf16.msra.mxu0 %v642
      %908 = vmatprep.subr.bf16.mxu0 %v686
      %909 = vmatpush1.bf16.msra.mxu0 %v685
      %910 = vmatprep.subr.bf16.mxu0 %v729
      %911 = vmatpush1.bf16.msra.mxu0 %v728
      %912 = vmatprep.subr.bf16.mxu0 %v772
      %913 = vmatpush1.bf16.msra.mxu0 %v771
      %914 = vmatprep.subr.bf16.mxu0 %v815
      %915 = vmatpush1.bf16.msra.mxu0 %v814
      %916 = vmatprep.subr.bf16.mxu0 %v858
      %917 = vmatpush1.bf16.msra.mxu0 %v857
      %918 = vmatprep.subr.bf16.mxu0 0
      %919 = vmatpush1.bf16.msra.mxu0 0
      %920 = vmatprep.subr.bf16.mxu0 0
      %921 = vmatpush1.bf16.msra.mxu0 0
      %922 = vmatprep.subr.bf16.mxu0 0
      %923 = vmatpush1.bf16.msra.mxu0 0
      %924 = vmatprep.mubr.bf16.mxu0 %v890
      %925 = vmatmul.mubr.bf16.gmra.mrb[0].mxu0 %v885
      %v926 = vpop.f32.mrb[0].mxu0
      %v927 = vadd.f32 0.0, %v926
      %v928 = vpop.f32.mrb[0].mxu0
      %v929 = vadd.f32 0.0, %v928
      %v930 = vpop.f32.mrb[0].mxu0
      %v931 = vadd.f32 0.0, %v930
      %v932 = vpop.f32.mrb[0].mxu0
      %v933 = vadd.f32 0.0, %v932
      %934 = vdwg.mxu0
      %935 = vmatprep.subr.bf16.mxu0 %v339
      %936 = vmatpush1.bf16.msra.mxu0 %v338
      %937 = vmatprep.subr.bf16.mxu0 %v387
      %938 = vmatpush1.bf16.msra.mxu0 %v386
      %939 = vmatprep.subr.bf16.mxu0 %v430
      %940 = vmatpush1.bf16.msra.mxu0 %v429
      %941 = vmatprep.subr.bf16.mxu0 %v473
      %942 = vmatpush1.bf16.msra.mxu0 %v472
      %943 = vmatprep.subr.bf16.mxu0 %v516
      %944 = vmatpush1.bf16.msra.mxu0 %v515
      %945 = vmatprep.subr.bf16.mxu0 %v559
      %946 = vmatpush1.bf16.msra.mxu0 %v558
      %947 = vmatprep.subr.bf16.mxu0 %v602
      %948 = vmatpush1.bf16.msra.mxu0 %v601
      %949 = vmatprep.subr.bf16.mxu0 %v645
      %950 = vmatpush1.bf16.msra.mxu0 %v644
      %951 = vmatprep.subr.bf16.mxu0 %v688
      %952 = vmatpush1.bf16.msra.mxu0 %v687
      %953 = vmatprep.subr.bf16.mxu0 %v731
      %954 = vmatpush1.bf16.msra.mxu0 %v730
      %955 = vmatprep.subr.bf16.mxu0 %v774
      %956 = vmatpush1.bf16.msra.mxu0 %v773
      %957 = vmatprep.subr.bf16.mxu0 %v817
      %958 = vmatpush1.bf16.msra.mxu0 %v816
      %959 = vmatprep.subr.bf16.mxu0 %v860
      %960 = vmatpush1.bf16.msra.mxu0 %v859
      %961 = vmatprep.subr.bf16.mxu0 0
      %962 = vmatpush1.bf16.msra.mxu0 0
      %963 = vmatprep.subr.bf16.mxu0 0
      %964 = vmatpush1.bf16.msra.mxu0 0
      %965 = vmatprep.subr.bf16.mxu0 0
      %966 = vmatpush1.bf16.msra.mxu0 0
      %967 = vmatprep.mubr.bf16.mxu0 %v890
      %968 = vmatmul.mubr.bf16.gmra.mrb[0].mxu0 %v885
      %v969 = vpop.f32.mrb[0].mxu0
      %v970 = vadd.f32 0.0, %v969
      %v971 = vpop.f32.mrb[0].mxu0
      %v972 = vadd.f32 0.0, %v971
      %v973 = vpop.f32.mrb[0].mxu0
      %v974 = vadd.f32 0.0, %v973
      %v975 = vpop.f32.mrb[0].mxu0
      %v976 = vadd.f32 0.0, %v975
      %977 = vdwg.mxu0
      %978 = vmatprep.subr.bf16.mxu0 %v341
      %979 = vmatpush1.bf16.msra.mxu0 %v340
      %980 = vmatprep.subr.bf16.mxu0 %v389
      %981 = vmatpush1.bf16.msra.mxu0 %v388
      %982 = vmatprep.subr.bf16.mxu0 %v432
      %983 = vmatpush1.bf16.msra.mxu0 %v431
      %984 = vmatprep.subr.bf16.mxu0 %v475
      %985 = vmatpush1.bf16.msra.mxu0 %v474
      %986 = vmatprep.subr.bf16.mxu0 %v518
      %987 = vmatpush1.bf16.msra.mxu0 %v517
      %988 = vmatprep.subr.bf16.mxu0 %v561
      %989 = vmatpush1.bf16.msra.mxu0 %v560
      %990 = vmatprep.subr.bf16.mxu0 %v604
      %991 = vmatpush1.bf16.msra.mxu0 %v603
      %992 = vmatprep.subr.bf16.mxu0 %v647
      %993 = vmatpush1.bf16.msra.mxu0 %v646
      %994 = vmatprep.subr.bf16.mxu0 %v690
      %995 = vmatpush1.bf16.msra.mxu0 %v689
      %996 = vmatprep.subr.bf16.mxu0 %v733
      %997 = vmatpush1.bf16.msra.mxu0 %v732
      %998 = vmatprep.subr.bf16.mxu0 %v776
      %999 = vmatpush1.bf16.msra.mxu0 %v775
      %1000 = vmatprep.subr.bf16.mxu0 %v819
      %1001 = vmatpush1.bf16.msra.mxu0 %v818
      %1002 = vmatprep.subr.bf16.mxu0 %v862
      %1003 = vmatpush1.bf16.msra.mxu0 %v861
      %1004 = vmatprep.subr.bf16.mxu0 0
      %1005 = vmatpush1.bf16.msra.mxu0 0
      %1006 = vmatprep.subr.bf16.mxu0 0
      %1007 = vmatpush1.bf16.msra.mxu0 0
      %1008 = vmatprep.subr.bf16.mxu0 0
      %1009 = vmatpush1.bf16.msra.mxu0 0
      %1010 = vmatprep.mubr.bf16.mxu0 %v890
      %1011 = vmatmul.mubr.bf16.gmra.mrb[0].mxu0 %v885
      %v1012 = vpop.f32.mrb[0].mxu0
      %v1013 = vadd.f32 0.0, %v1012
      %v1014 = vpop.f32.mrb[0].mxu0
      %v1015 = vadd.f32 0.0, %v1014
      %v1016 = vpop.f32.mrb[0].mxu0
      %v1017 = vadd.f32 0.0, %v1016
      %v1018 = vpop.f32.mrb[0].mxu0
      %v1019 = vadd.f32 0.0, %v1018
      %1020 = vdwg.mxu0
      %1021 = vmatprep.subr.bf16.mxu0 %v343
      %1022 = vmatpush1.bf16.msra.mxu0 %v342
      %1023 = vmatprep.subr.bf16.mxu0 %v391
      %1024 = vmatpush1.bf16.msra.mxu0 %v390
      %1025 = vmatprep.subr.bf16.mxu0 %v434
      %1026 = vmatpush1.bf16.msra.mxu0 %v433
      %1027 = vmatprep.subr.bf16.mxu0 %v477
      %1028 = vmatpush1.bf16.msra.mxu0 %v476
      %1029 = vmatprep.subr.bf16.mxu0 %v520
      %1030 = vmatpush1.bf16.msra.mxu0 %v519
      %1031 = vmatprep.subr.bf16.mxu0 %v563
      %1032 = vmatpush1.bf16.msra.mxu0 %v562
      %1033 = vmatprep.subr.bf16.mxu0 %v606
      %1034 = vmatpush1.bf16.msra.mxu0 %v605
      %1035 = vmatprep.subr.bf16.mxu0 %v649
      %1036 = vmatpush1.bf16.msra.mxu0 %v648
      %1037 = vmatprep.subr.bf16.mxu0 %v692
      %1038 = vmatpush1.bf16.msra.mxu0 %v691
      %1039 = vmatprep.subr.bf16.mxu0 %v735
      %1040 = vmatpush1.bf16.msra.mxu0 %v734
      %1041 = vmatprep.subr.bf16.mxu0 %v778
      %1042 = vmatpush1.bf16.msra.mxu0 %v777
      %1043 = vmatprep.subr.bf16.mxu0 %v821
      %1044 = vmatpush1.bf16.msra.mxu0 %v820
      %1045 = vmatprep.subr.bf16.mxu0 %v864
      %1046 = vmatpush1.bf16.msra.mxu0 %v863
      %1047 = vmatprep.subr.bf16.mxu0 0
      %1048 = vmatpush1.bf16.msra.mxu0 0
      %1049 = vmatprep.subr.bf16.mxu0 0
      %1050 = vmatpush1.bf16.msra.mxu0 0
      %1051 = vmatprep.subr.bf16.mxu0 0
      %1052 = vmatpush1.bf16.msra.mxu0 0
      %1053 = vmatprep.mubr.bf16.mxu0 %v890
      %1054 = vmatmul.mubr.bf16.gmra.mrb[0].mxu0 %v885
      %v1055 = vpop.f32.mrb[0].mxu0
      %v1056 = vadd.f32 0.0, %v1055
      %v1057 = vpop.f32.mrb[0].mxu0
      %v1058 = vadd.f32 0.0, %v1057
      %v1059 = vpop.f32.mrb[0].mxu0
      %v1060 = vadd.f32 0.0, %v1059
      %v1061 = vpop.f32.mrb[0].mxu0
      %v1062 = vadd.f32 0.0, %v1061
      %1063 = vdwg.mxu0
      %1064 = vmatprep.subr.bf16.mxu0 %v345
      %1065 = vmatpush1.bf16.msra.mxu0 %v344
      %1066 = vmatprep.subr.bf16.mxu0 %v393
      %1067 = vmatpush1.bf16.msra.mxu0 %v392
      %1068 = vmatprep.subr.bf16.mxu0 %v436
      %1069 = vmatpush1.bf16.msra.mxu0 %v435
      %1070 = vmatprep.subr.bf16.mxu0 %v479
      %1071 = vmatpush1.bf16.msra.mxu0 %v478
      %1072 = vmatprep.subr.bf16.mxu0 %v522
      %1073 = vmatpush1.bf16.msra.mxu0 %v521
      %1074 = vmatprep.subr.bf16.mxu0 %v565
      %1075 = vmatpush1.bf16.msra.mxu0 %v564
      %1076 = vmatprep.subr.bf16.mxu0 %v608
      %1077 = vmatpush1.bf16.msra.mxu0 %v607
      %1078 = vmatprep.subr.bf16.mxu0 %v651
      %1079 = vmatpush1.bf16.msra.mxu0 %v650
      %1080 = vmatprep.subr.bf16.mxu0 %v694
      %1081 = vmatpush1.bf16.msra.mxu0 %v693
      %1082 = vmatprep.subr.bf16.mxu0 %v737
      %1083 = vmatpush1.bf16.msra.mxu0 %v736
      %1084 = vmatprep.subr.bf16.mxu0 %v780
      %1085 = vmatpush1.bf16.msra.mxu0 %v779
      %1086 = vmatprep.subr.bf16.mxu0 %v823
      %1087 = vmatpush1.bf16.msra.mxu0 %v822
      %1088 = vmatprep.subr.bf16.mxu0 %v866
      %1089 = vmatpush1.bf16.msra.mxu0 %v865
      %1090 = vmatprep.subr.bf16.mxu0 0
      %1091 = vmatpush1.bf16.msra.mxu0 0
      %1092 = vmatprep.subr.bf16.mxu0 0
      %1093 = vmatpush1.bf16.msra.mxu0 0
      %1094 = vmatprep.subr.bf16.mxu0 0
      %1095 = vmatpush1.bf16.msra.mxu0 0
      %1096 = vmatprep.mubr.bf16.mxu0 %v890
      %1097 = vmatmul.mubr.bf16.gmra.mrb[0].mxu0 %v885
      %v1098 = vpop.f32.mrb[0].mxu0
      %v1099 = vadd.f32 0.0, %v1098
      %v1100 = vpop.f32.mrb[0].mxu0
      %v1101 = vadd.f32 0.0, %v1100
      %v1102 = vpop.f32.mrb[0].mxu0
      %v1103 = vadd.f32 0.0, %v1102
      %v1104 = vpop.f32.mrb[0].mxu0
      %v1105 = vadd.f32 0.0, %v1104
      %1106 = vdwg.mxu0
      %v1107 = vadd.f32 %v274, %v927
      %v1108 = vadd.f32 %v275, %v929
      %v1109 = vadd.f32 %v276, %v970
      %v1110 = vadd.f32 %v277, %v972
      %v1111 = vadd.f32 %v278, %v1013
      %v1112 = vadd.f32 %v279, %v1015
      %v1113 = vadd.f32 %v280, %v1056
      %v1114 = vadd.f32 %v281, %v1058
      %v1115 = vadd.f32 %v282, %v1099
      %v1116 = vadd.f32 %v283, %v1101
      %v1117 = vadd.f32 %v284, %v931
      %v1118 = vadd.f32 %v285, %v933
      %v1119 = vadd.f32 %v286, %v974
      %v1120 = vadd.f32 %v287, %v976
      %v1121 = vadd.f32 %v288, %v1017
      %v1122 = vadd.f32 %v289, %v1019
      %v1123 = vadd.f32 %v290, %v1060
      %v1124 = vadd.f32 %v291, %v1062
      %v1125 = vadd.f32 %v292, %v1103
      %v1126 = vadd.f32 %v293, %v1105
      %1127 = vrot.lane.b32.xlu0 %v336, 96
      %v1128 = vpop.permute.xlu0 %1127
      %1129 = vrot.lane.b32.xlu0 %v337, 96
      %v1130 = vpop.permute.xlu0 %1129
      %1131 = vrot.lane.b32.xlu0 %v338, 96
      %v1132 = vpop.permute.xlu0 %1131
      %1133 = vrot.lane.b32.xlu0 %v339, 96
      %v1134 = vpop.permute.xlu0 %1133
      %1135 = vrot.lane.b32.xlu0 %v340, 96
      %v1136 = vpop.permute.xlu0 %1135
      %1137 = vrot.lane.b32.xlu0 %v341, 96
      %v1138 = vpop.permute.xlu0 %1137
      %1139 = vrot.lane.b32.xlu0 %v342, 96
      %v1140 = vpop.permute.xlu0 %1139
      %1141 = vrot.lane.b32.xlu0 %v343, 96
      %v1142 = vpop.permute.xlu0 %1141
      %1143 = vrot.lane.b32.xlu0 %v344, 96
      %v1144 = vpop.permute.xlu0 %1143
      %1145 = vrot.lane.b32.xlu0 %v345, 96
      %v1146 = vpop.permute.xlu0 %1145
      %1147 = vrot.lane.b32.xlu0 %v360, 96
      %v1148 = vpop.permute.xlu0 %1147
      %vm1149 = vcmask 785408
      %v1150 = vsel %vm1149, %v1128, %v1130
      %v1151 = vsel %vm1149, %v1130, %v1132
      %v1152 = vsel %vm1149, %v1132, %v1134
      %v1153 = vsel %vm1149, %v1134, %v1136
      %v1154 = vsel %vm1149, %v1136, %v1138
      %v1155 = vsel %vm1149, %v1138, %v1140
      %v1156 = vsel %vm1149, %v1140, %v1142
      %v1157 = vsel %vm1149, %v1142, %v1144
      %v1158 = vsel %vm1149, %v1144, %v1146
      %v1159 = vsel %vm1149, %v1146, %v1148
      %1160 = vrot.lane.b32.xlu0 %v336, 95
      %v1161 = vpop.permute.xlu0 %1160
      %1162 = vrot.lane.b32.xlu0 %v337, 95
      %v1163 = vpop.permute.xlu0 %1162
      %1164 = vrot.lane.b32.xlu0 %v338, 95
      %v1165 = vpop.permute.xlu0 %1164
      %1166 = vrot.lane.b32.xlu0 %v339, 95
      %v1167 = vpop.permute.xlu0 %1166
      %1168 = vrot.lane.b32.xlu0 %v340, 95
      %v1169 = vpop.permute.xlu0 %1168
      %1170 = vrot.lane.b32.xlu0 %v341, 95
      %v1171 = vpop.permute.xlu0 %1170
      %1172 = vrot.lane.b32.xlu0 %v342, 95
      %v1173 = vpop.permute.xlu0 %1172
      %1174 = vrot.lane.b32.xlu0 %v343, 95
      %v1175 = vpop.permute.xlu0 %1174
      %1176 = vrot.lane.b32.xlu0 %v344, 95
      %v1177 = vpop.permute.xlu0 %1176
      %1178 = vrot.lane.b32.xlu0 %v345, 95
      %v1179 = vpop.permute.xlu0 %1178
      %1180 = vrot.lane.b32.xlu0 %v360, 95
      %v1181 = vpop.permute.xlu0 %1180
      %vm1182 = vcmask 777216
      %v1183 = vsel %vm1182, %v1161, %v1163
      %v1184 = vsel %vm1182, %v1163, %v1165
      %v1185 = vsel %vm1182, %v1165, %v1167
      %v1186 = vsel %vm1182, %v1167, %v1169
      %v1187 = vsel %vm1182, %v1169, %v1171
      %v1188 = vsel %vm1182, %v1171, %v1173
      %v1189 = vsel %vm1182, %v1173, %v1175
      %v1190 = vsel %vm1182, %v1175, %v1177
      %v1191 = vsel %vm1182, %v1177, %v1179
      %v1192 = vsel %vm1182, %v1179, %v1181
      %1193 = vrot.lane.b32.xlu0 %v336, 94
      %v1194 = vpop.permute.xlu0 %1193
      %1195 = vrot.lane.b32.xlu0 %v337, 94
      %v1196 = vpop.permute.xlu0 %1195
      %1197 = vrot.lane.b32.xlu0 %v338, 94
      %v1198 = vpop.permute.xlu0 %1197
      %1199 = vrot.lane.b32.xlu0 %v339, 94
      %v1200 = vpop.permute.xlu0 %1199
      %1201 = vrot.lane.b32.xlu0 %v340, 94
      %v1202 = vpop.permute.xlu0 %1201
      %1203 = vrot.lane.b32.xlu0 %v341, 94
      %v1204 = vpop.permute.xlu0 %1203
      %1205 = vrot.lane.b32.xlu0 %v342, 94
      %v1206 = vpop.permute.xlu0 %1205
      %1207 = vrot.lane.b32.xlu0 %v343, 94
      %v1208 = vpop.permute.xlu0 %1207
      %1209 = vrot.lane.b32.xlu0 %v344, 94
      %v1210 = vpop.permute.xlu0 %1209
      %1211 = vrot.lane.b32.xlu0 %v345, 94
      %v1212 = vpop.permute.xlu0 %1211
      %1213 = vrot.lane.b32.xlu0 %v360, 94
      %v1214 = vpop.permute.xlu0 %1213
      %vm1215 = vcmask 769024
      %v1216 = vsel %vm1215, %v1194, %v1196
      %v1217 = vsel %vm1215, %v1196, %v1198
      %v1218 = vsel %vm1215, %v1198, %v1200
      %v1219 = vsel %vm1215, %v1200, %v1202
      %v1220 = vsel %vm1215, %v1202, %v1204
      %v1221 = vsel %vm1215, %v1204, %v1206
      %v1222 = vsel %vm1215, %v1206, %v1208
      %v1223 = vsel %vm1215, %v1208, %v1210
      %v1224 = vsel %vm1215, %v1210, %v1212
      %v1225 = vsel %vm1215, %v1212, %v1214
      %1226 = vrot.lane.b32.xlu0 %v336, 93
      %v1227 = vpop.permute.xlu0 %1226
      %1228 = vrot.lane.b32.xlu0 %v337, 93
      %v1229 = vpop.permute.xlu0 %1228
      %1230 = vrot.lane.b32.xlu0 %v338, 93
      %v1231 = vpop.permute.xlu0 %1230
      %1232 = vrot.lane.b32.xlu0 %v339, 93
      %v1233 = vpop.permute.xlu0 %1232
      %1234 = vrot.lane.b32.xlu0 %v340, 93
      %v1235 = vpop.permute.xlu0 %1234
      %1236 = vrot.lane.b32.xlu0 %v341, 93
      %v1237 = vpop.permute.xlu0 %1236
      %1238 = vrot.lane.b32.xlu0 %v342, 93
      %v1239 = vpop.permute.xlu0 %1238
      %1240 = vrot.lane.b32.xlu0 %v343, 93
      %v1241 = vpop.permute.xlu0 %1240
      %1242 = vrot.lane.b32.xlu0 %v344, 93
      %v1243 = vpop.permute.xlu0 %1242
      %1244 = vrot.lane.b32.xlu0 %v345, 93
      %v1245 = vpop.permute.xlu0 %1244
      %1246 = vrot.lane.b32.xlu0 %v360, 93
      %v1247 = vpop.permute.xlu0 %1246
      %vm1248 = vcmask 760832
      %v1249 = vsel %vm1248, %v1227, %v1229
      %v1250 = vsel %vm1248, %v1229, %v1231
      %v1251 = vsel %vm1248, %v1231, %v1233
      %v1252 = vsel %vm1248, %v1233, %v1235
      %v1253 = vsel %vm1248, %v1235, %v1237
      %v1254 = vsel %vm1248, %v1237, %v1239
      %v1255 = vsel %vm1248, %v1239, %v1241
      %v1256 = vsel %vm1248, %v1241, %v1243
      %v1257 = vsel %vm1248, %v1243, %v1245
      %v1258 = vsel %vm1248, %v1245, %v1247
      %1259 = vrot.lane.b32.xlu0 %v336, 92
      %v1260 = vpop.permute.xlu0 %1259
      %1261 = vrot.lane.b32.xlu0 %v337, 92
      %v1262 = vpop.permute.xlu0 %1261
      %1263 = vrot.lane.b32.xlu0 %v338, 92
      %v1264 = vpop.permute.xlu0 %1263
      %1265 = vrot.lane.b32.xlu0 %v339, 92
      %v1266 = vpop.permute.xlu0 %1265
      %1267 = vrot.lane.b32.xlu0 %v340, 92
      %v1268 = vpop.permute.xlu0 %1267
      %1269 = vrot.lane.b32.xlu0 %v341, 92
      %v1270 = vpop.permute.xlu0 %1269
      %1271 = vrot.lane.b32.xlu0 %v342, 92
      %v1272 = vpop.permute.xlu0 %1271
      %1273 = vrot.lane.b32.xlu0 %v343, 92
      %v1274 = vpop.permute.xlu0 %1273
      %1275 = vrot.lane.b32.xlu0 %v344, 92
      %v1276 = vpop.permute.xlu0 %1275
      %1277 = vrot.lane.b32.xlu0 %v345, 92
      %v1278 = vpop.permute.xlu0 %1277
      %1279 = vrot.lane.b32.xlu0 %v360, 92
      %v1280 = vpop.permute.xlu0 %1279
      %vm1281 = vcmask 752640
      %v1282 = vsel %vm1281, %v1260, %v1262
      %v1283 = vsel %vm1281, %v1262, %v1264
      %v1284 = vsel %vm1281, %v1264, %v1266
      %v1285 = vsel %vm1281, %v1266, %v1268
      %v1286 = vsel %vm1281, %v1268, %v1270
      %v1287 = vsel %vm1281, %v1270, %v1272
      %v1288 = vsel %vm1281, %v1272, %v1274
      %v1289 = vsel %vm1281, %v1274, %v1276
      %v1290 = vsel %vm1281, %v1276, %v1278
      %v1291 = vsel %vm1281, %v1278, %v1280
      %1292 = vrot.lane.b32.xlu0 %v336, 91
      %v1293 = vpop.permute.xlu0 %1292
      %1294 = vrot.lane.b32.xlu0 %v337, 91
      %v1295 = vpop.permute.xlu0 %1294
      %1296 = vrot.lane.b32.xlu0 %v338, 91
      %v1297 = vpop.permute.xlu0 %1296
      %1298 = vrot.lane.b32.xlu0 %v339, 91
      %v1299 = vpop.permute.xlu0 %1298
      %1300 = vrot.lane.b32.xlu0 %v340, 91
      %v1301 = vpop.permute.xlu0 %1300
      %1302 = vrot.lane.b32.xlu0 %v341, 91
      %v1303 = vpop.permute.xlu0 %1302
      %1304 = vrot.lane.b32.xlu0 %v342, 91
      %v1305 = vpop.permute.xlu0 %1304
      %1306 = vrot.lane.b32.xlu0 %v343, 91
      %v1307 = vpop.permute.xlu0 %1306
      %1308 = vrot.lane.b32.xlu0 %v344, 91
      %v1309 = vpop.permute.xlu0 %1308
      %1310 = vrot.lane.b32.xlu0 %v345, 91
      %v1311 = vpop.permute.xlu0 %1310
      %1312 = vrot.lane.b32.xlu0 %v360, 91
      %v1313 = vpop.permute.xlu0 %1312
      %vm1314 = vcmask 744448
      %v1315 = vsel %vm1314, %v1293, %v1295
      %v1316 = vsel %vm1314, %v1295, %v1297
      %v1317 = vsel %vm1314, %v1297, %v1299
      %v1318 = vsel %vm1314, %v1299, %v1301
      %v1319 = vsel %vm1314, %v1301, %v1303
      %v1320 = vsel %vm1314, %v1303, %v1305
      %v1321 = vsel %vm1314, %v1305, %v1307
      %v1322 = vsel %vm1314, %v1307, %v1309
      %v1323 = vsel %vm1314, %v1309, %v1311
      %v1324 = vsel %vm1314, %v1311, %v1313
      %1325 = vrot.lane.b32.xlu0 %v336, 58
      %v1326 = vpop.permute.xlu0 %1325
      %1327 = vrot.lane.b32.xlu0 %v337, 58
      %v1328 = vpop.permute.xlu0 %1327
      %1329 = vrot.lane.b32.xlu0 %v338, 58
      %v1330 = vpop.permute.xlu0 %1329
      %1331 = vrot.lane.b32.xlu0 %v339, 58
      %v1332 = vpop.permute.xlu0 %1331
      %1333 = vrot.lane.b32.xlu0 %v340, 58
      %v1334 = vpop.permute.xlu0 %1333
      %1335 = vrot.lane.b32.xlu0 %v341, 58
      %v1336 = vpop.permute.xlu0 %1335
      %1337 = vrot.lane.b32.xlu0 %v342, 58
      %v1338 = vpop.permute.xlu0 %1337
      %1339 = vrot.lane.b32.xlu0 %v343, 58
      %v1340 = vpop.permute.xlu0 %1339
      %1341 = vrot.lane.b32.xlu0 %v344, 58
      %v1342 = vpop.permute.xlu0 %1341
      %1343 = vrot.lane.b32.xlu0 %v345, 58
      %v1344 = vpop.permute.xlu0 %1343
      %1345 = vrot.lane.b32.xlu0 %v360, 58
      %v1346 = vpop.permute.xlu0 %1345
      %vm1347 = vcmask 474112
      %v1348 = vsel %vm1347, %v1326, %v1328
      %v1349 = vsel %vm1347, %v1328, %v1330
      %v1350 = vsel %vm1347, %v1330, %v1332
      %v1351 = vsel %vm1347, %v1332, %v1334
      %v1352 = vsel %vm1347, %v1334, %v1336
      %v1353 = vsel %vm1347, %v1336, %v1338
      %v1354 = vsel %vm1347, %v1338, %v1340
      %v1355 = vsel %vm1347, %v1340, %v1342
      %v1356 = vsel %vm1347, %v1342, %v1344
      %v1357 = vsel %vm1347, %v1344, %v1346
      %1358 = vrot.lane.b32.xlu0 %v336, 57
      %v1359 = vpop.permute.xlu0 %1358
      %1360 = vrot.lane.b32.xlu0 %v337, 57
      %v1361 = vpop.permute.xlu0 %1360
      %1362 = vrot.lane.b32.xlu0 %v338, 57
      %v1363 = vpop.permute.xlu0 %1362
      %1364 = vrot.lane.b32.xlu0 %v339, 57
      %v1365 = vpop.permute.xlu0 %1364
      %1366 = vrot.lane.b32.xlu0 %v340, 57
      %v1367 = vpop.permute.xlu0 %1366
      %1368 = vrot.lane.b32.xlu0 %v341, 57
      %v1369 = vpop.permute.xlu0 %1368
      %1370 = vrot.lane.b32.xlu0 %v342, 57
      %v1371 = vpop.permute.xlu0 %1370
      %1372 = vrot.lane.b32.xlu0 %v343, 57
      %v1373 = vpop.permute.xlu0 %1372
      %1374 = vrot.lane.b32.xlu0 %v344, 57
      %v1375 = vpop.permute.xlu0 %1374
      %1376 = vrot.lane.b32.xlu0 %v345, 57
      %v1377 = vpop.permute.xlu0 %1376
      %1378 = vrot.lane.b32.xlu0 %v360, 57
      %v1379 = vpop.permute.xlu0 %1378
      %vm1380 = vcmask 465920
      %v1381 = vsel %vm1380, %v1359, %v1361
      %v1382 = vsel %vm1380, %v1361, %v1363
      %v1383 = vsel %vm1380, %v1363, %v1365
      %v1384 = vsel %vm1380, %v1365, %v1367
      %v1385 = vsel %vm1380, %v1367, %v1369
      %v1386 = vsel %vm1380, %v1369, %v1371
      %v1387 = vsel %vm1380, %v1371, %v1373
      %v1388 = vsel %vm1380, %v1373, %v1375
      %v1389 = vsel %vm1380, %v1375, %v1377
      %v1390 = vsel %vm1380, %v1377, %v1379
      %1391 = vrot.lane.b32.xlu0 %v336, 56
      %v1392 = vpop.permute.xlu0 %1391
      %1393 = vrot.lane.b32.xlu0 %v337, 56
      %v1394 = vpop.permute.xlu0 %1393
      %1395 = vrot.lane.b32.xlu0 %v338, 56
      %v1396 = vpop.permute.xlu0 %1395
      %1397 = vrot.lane.b32.xlu0 %v339, 56
      %v1398 = vpop.permute.xlu0 %1397
      %1399 = vrot.lane.b32.xlu0 %v340, 56
      %v1400 = vpop.permute.xlu0 %1399
      %1401 = vrot.lane.b32.xlu0 %v341, 56
      %v1402 = vpop.permute.xlu0 %1401
      %1403 = vrot.lane.b32.xlu0 %v342, 56
      %v1404 = vpop.permute.xlu0 %1403
      %1405 = vrot.lane.b32.xlu0 %v343, 56
      %v1406 = vpop.permute.xlu0 %1405
      %1407 = vrot.lane.b32.xlu0 %v344, 56
      %v1408 = vpop.permute.xlu0 %1407
      %1409 = vrot.lane.b32.xlu0 %v345, 56
      %v1410 = vpop.permute.xlu0 %1409
      %1411 = vrot.lane.b32.xlu0 %v360, 56
      %v1412 = vpop.permute.xlu0 %1411
      %vm1413 = vcmask 457728
      %v1414 = vsel %vm1413, %v1392, %v1394
      %v1415 = vsel %vm1413, %v1394, %v1396
      %v1416 = vsel %vm1413, %v1396, %v1398
      %v1417 = vsel %vm1413, %v1398, %v1400
      %v1418 = vsel %vm1413, %v1400, %v1402
      %v1419 = vsel %vm1413, %v1402, %v1404
      %v1420 = vsel %vm1413, %v1404, %v1406
      %v1421 = vsel %vm1413, %v1406, %v1408
      %v1422 = vsel %vm1413, %v1408, %v1410
      %v1423 = vsel %vm1413, %v1410, %v1412
      %1424 = vrot.lane.b32.xlu0 %v336, 55
      %v1425 = vpop.permute.xlu0 %1424
      %1426 = vrot.lane.b32.xlu0 %v337, 55
      %v1427 = vpop.permute.xlu0 %1426
      %1428 = vrot.lane.b32.xlu0 %v338, 55
      %v1429 = vpop.permute.xlu0 %1428
      %1430 = vrot.lane.b32.xlu0 %v339, 55
      %v1431 = vpop.permute.xlu0 %1430
      %1432 = vrot.lane.b32.xlu0 %v340, 55
      %v1433 = vpop.permute.xlu0 %1432
      %1434 = vrot.lane.b32.xlu0 %v341, 55
      %v1435 = vpop.permute.xlu0 %1434
      %1436 = vrot.lane.b32.xlu0 %v342, 55
      %v1437 = vpop.permute.xlu0 %1436
      %1438 = vrot.lane.b32.xlu0 %v343, 55
      %v1439 = vpop.permute.xlu0 %1438
      %1440 = vrot.lane.b32.xlu0 %v344, 55
      %v1441 = vpop.permute.xlu0 %1440
      %1442 = vrot.lane.b32.xlu0 %v345, 55
      %v1443 = vpop.permute.xlu0 %1442
      %1444 = vrot.lane.b32.xlu0 %v360, 55
      %v1445 = vpop.permute.xlu0 %1444
      %vm1446 = vcmask 449536
      %v1447 = vsel %vm1446, %v1425, %v1427
      %v1448 = vsel %vm1446, %v1427, %v1429
      %v1449 = vsel %vm1446, %v1429, %v1431
      %v1450 = vsel %vm1446, %v1431, %v1433
      %v1451 = vsel %vm1446, %v1433, %v1435
      %v1452 = vsel %vm1446, %v1435, %v1437
      %v1453 = vsel %vm1446, %v1437, %v1439
      %v1454 = vsel %vm1446, %v1439, %v1441
      %v1455 = vsel %vm1446, %v1441, %v1443
      %v1456 = vsel %vm1446, %v1443, %v1445
      %1457 = vrot.lane.b32.xlu0 %v336, 54
      %v1458 = vpop.permute.xlu0 %1457
      %1459 = vrot.lane.b32.xlu0 %v337, 54
      %v1460 = vpop.permute.xlu0 %1459
      %1461 = vrot.lane.b32.xlu0 %v338, 54
      %v1462 = vpop.permute.xlu0 %1461
      %1463 = vrot.lane.b32.xlu0 %v339, 54
      %v1464 = vpop.permute.xlu0 %1463
      %1465 = vrot.lane.b32.xlu0 %v340, 54
      %v1466 = vpop.permute.xlu0 %1465
      %1467 = vrot.lane.b32.xlu0 %v341, 54
      %v1468 = vpop.permute.xlu0 %1467
      %1469 = vrot.lane.b32.xlu0 %v342, 54
      %v1470 = vpop.permute.xlu0 %1469
      %1471 = vrot.lane.b32.xlu0 %v343, 54
      %v1472 = vpop.permute.xlu0 %1471
      %1473 = vrot.lane.b32.xlu0 %v344, 54
      %v1474 = vpop.permute.xlu0 %1473
      %1475 = vrot.lane.b32.xlu0 %v345, 54
      %v1476 = vpop.permute.xlu0 %1475
      %1477 = vrot.lane.b32.xlu0 %v360, 54
      %v1478 = vpop.permute.xlu0 %1477
      %vm1479 = vcmask 441344
      %v1480 = vsel %vm1479, %v1458, %v1460
      %v1481 = vsel %vm1479, %v1460, %v1462
      %v1482 = vsel %vm1479, %v1462, %v1464
      %v1483 = vsel %vm1479, %v1464, %v1466
      %v1484 = vsel %vm1479, %v1466, %v1468
      %v1485 = vsel %vm1479, %v1468, %v1470
      %v1486 = vsel %vm1479, %v1470, %v1472
      %v1487 = vsel %vm1479, %v1472, %v1474
      %v1488 = vsel %vm1479, %v1474, %v1476
      %v1489 = vsel %vm1479, %v1476, %v1478
      %s1490 = scalar_lea.vmem %s253, 16
      %v1491 = vld [vmem:[%s1490] sm:$0xff]
      %v1492 = vld [vmem:[%s1490 + $0x8] sm:$0xff]
      %v1495 = vunpack.c.l.b16 %v1491
      %v1496 = vunpack.c.h.b16 %v1491
      %v1497 = vunpack.c.l.b16 %v1492
      %v1498 = vunpack.c.h.b16 %v1492
      %v1499 = vpack.c.b16 %v1497, %v1495
      %v1500 = vpack.c.b16 %v1498, %v1496
      %1502 = vrot.lane.b32.xlu0 %v336, 84
      %v1503 = vpop.permute.xlu0 %1502
      %1504 = vrot.lane.b32.xlu0 %v337, 84
      %v1505 = vpop.permute.xlu0 %1504
      %1506 = vrot.lane.b32.xlu0 %v338, 84
      %v1507 = vpop.permute.xlu0 %1506
      %1508 = vrot.lane.b32.xlu0 %v339, 84
      %v1509 = vpop.permute.xlu0 %1508
      %1510 = vrot.lane.b32.xlu0 %v340, 84
      %v1511 = vpop.permute.xlu0 %1510
      %1512 = vrot.lane.b32.xlu0 %v341, 84
      %v1513 = vpop.permute.xlu0 %1512
      %1514 = vrot.lane.b32.xlu0 %v342, 84
      %v1515 = vpop.permute.xlu0 %1514
      %1516 = vrot.lane.b32.xlu0 %v343, 84
      %v1517 = vpop.permute.xlu0 %1516
      %1518 = vrot.lane.b32.xlu0 %v344, 84
      %v1519 = vpop.permute.xlu0 %1518
      %1520 = vrot.lane.b32.xlu0 %v345, 84
      %v1521 = vpop.permute.xlu0 %1520
      %1522 = vrot.lane.b32.xlu0 %v360, 84
      %v1523 = vpop.permute.xlu0 %1522
      %1524 = vrot.lane.b32.xlu0 %v1150, 84
      %v1525 = vpop.permute.xlu0 %1524
      %1526 = vrot.lane.b32.xlu0 %v1151, 84
      %v1527 = vpop.permute.xlu0 %1526
      %1528 = vrot.lane.b32.xlu0 %v1152, 84
      %v1529 = vpop.permute.xlu0 %1528
      %1530 = vrot.lane.b32.xlu0 %v1153, 84
      %v1531 = vpop.permute.xlu0 %1530
      %1532 = vrot.lane.b32.xlu0 %v1154, 84
      %v1533 = vpop.permute.xlu0 %1532
      %1534 = vrot.lane.b32.xlu0 %v1155, 84
      %v1535 = vpop.permute.xlu0 %1534
      %1536 = vrot.lane.b32.xlu0 %v1156, 84
      %v1537 = vpop.permute.xlu0 %1536
      %1538 = vrot.lane.b32.xlu0 %v1157, 84
      %v1539 = vpop.permute.xlu0 %1538
      %1540 = vrot.lane.b32.xlu0 %v1158, 84
      %v1541 = vpop.permute.xlu0 %1540
      %1542 = vrot.lane.b32.xlu0 %v1159, 84
      %v1543 = vpop.permute.xlu0 %1542
      %1544 = vrot.lane.b32.xlu0 %v1148, 84
      %v1545 = vpop.permute.xlu0 %1544
      %1546 = vrot.lane.b32.xlu0 %v1183, 84
      %v1547 = vpop.permute.xlu0 %1546
      %1548 = vrot.lane.b32.xlu0 %v1184, 84
      %v1549 = vpop.permute.xlu0 %1548
      %1550 = vrot.lane.b32.xlu0 %v1185, 84
      %v1551 = vpop.permute.xlu0 %1550
      %1552 = vrot.lane.b32.xlu0 %v1186, 84
      %v1553 = vpop.permute.xlu0 %1552
      %1554 = vrot.lane.b32.xlu0 %v1187, 84
      %v1555 = vpop.permute.xlu0 %1554
      %1556 = vrot.lane.b32.xlu0 %v1188, 84
      %v1557 = vpop.permute.xlu0 %1556
      %1558 = vrot.lane.b32.xlu0 %v1189, 84
      %v1559 = vpop.permute.xlu0 %1558
      %1560 = vrot.lane.b32.xlu0 %v1190, 84
      %v1561 = vpop.permute.xlu0 %1560
      %1562 = vrot.lane.b32.xlu0 %v1191, 84
      %v1563 = vpop.permute.xlu0 %1562
      %1564 = vrot.lane.b32.xlu0 %v1192, 84
      %v1565 = vpop.permute.xlu0 %1564
      %1566 = vrot.lane.b32.xlu0 %v1181, 84
      %v1567 = vpop.permute.xlu0 %1566
      %1568 = vrot.lane.b32.xlu0 %v1216, 84
      %v1569 = vpop.permute.xlu0 %1568
      %1570 = vrot.lane.b32.xlu0 %v1217, 84
      %v1571 = vpop.permute.xlu0 %1570
      %1572 = vrot.lane.b32.xlu0 %v1218, 84
      %v1573 = vpop.permute.xlu0 %1572
      %1574 = vrot.lane.b32.xlu0 %v1219, 84
      %v1575 = vpop.permute.xlu0 %1574
      %1576 = vrot.lane.b32.xlu0 %v1220, 84
      %v1577 = vpop.permute.xlu0 %1576
      %1578 = vrot.lane.b32.xlu0 %v1221, 84
      %v1579 = vpop.permute.xlu0 %1578
      %1580 = vrot.lane.b32.xlu0 %v1222, 84
      %v1581 = vpop.permute.xlu0 %1580
      %1582 = vrot.lane.b32.xlu0 %v1223, 84
      %v1583 = vpop.permute.xlu0 %1582
      %1584 = vrot.lane.b32.xlu0 %v1224, 84
      %v1585 = vpop.permute.xlu0 %1584
      %1586 = vrot.lane.b32.xlu0 %v1225, 84
      %v1587 = vpop.permute.xlu0 %1586
      %1588 = vrot.lane.b32.xlu0 %v1214, 84
      %v1589 = vpop.permute.xlu0 %1588
      %1590 = vrot.lane.b32.xlu0 %v1249, 84
      %v1591 = vpop.permute.xlu0 %1590
      %1592 = vrot.lane.b32.xlu0 %v1250, 84
      %v1593 = vpop.permute.xlu0 %1592
      %1594 = vrot.lane.b32.xlu0 %v1251, 84
      %v1595 = vpop.permute.xlu0 %1594
      %1596 = vrot.lane.b32.xlu0 %v1252, 84
      %v1597 = vpop.permute.xlu0 %1596
      %1598 = vrot.lane.b32.xlu0 %v1253, 84
      %v1599 = vpop.permute.xlu0 %1598
      %1600 = vrot.lane.b32.xlu0 %v1254, 84
      %v1601 = vpop.permute.xlu0 %1600
      %1602 = vrot.lane.b32.xlu0 %v1255, 84
      %v1603 = vpop.permute.xlu0 %1602
      %1604 = vrot.lane.b32.xlu0 %v1256, 84
      %v1605 = vpop.permute.xlu0 %1604
      %1606 = vrot.lane.b32.xlu0 %v1257, 84
      %v1607 = vpop.permute.xlu0 %1606
      %1608 = vrot.lane.b32.xlu0 %v1258, 84
      %v1609 = vpop.permute.xlu0 %1608
      %1610 = vrot.lane.b32.xlu0 %v1247, 84
      %v1611 = vpop.permute.xlu0 %1610
      %1612 = vrot.lane.b32.xlu0 %v1282, 84
      %v1613 = vpop.permute.xlu0 %1612
      %1614 = vrot.lane.b32.xlu0 %v1283, 84
      %v1615 = vpop.permute.xlu0 %1614
      %1616 = vrot.lane.b32.xlu0 %v1284, 84
      %v1617 = vpop.permute.xlu0 %1616
      %1618 = vrot.lane.b32.xlu0 %v1285, 84
      %v1619 = vpop.permute.xlu0 %1618
      %1620 = vrot.lane.b32.xlu0 %v1286, 84
      %v1621 = vpop.permute.xlu0 %1620
      %1622 = vrot.lane.b32.xlu0 %v1287, 84
      %v1623 = vpop.permute.xlu0 %1622
      %1624 = vrot.lane.b32.xlu0 %v1288, 84
      %v1625 = vpop.permute.xlu0 %1624
      %1626 = vrot.lane.b32.xlu0 %v1289, 84
      %v1627 = vpop.permute.xlu0 %1626
      %1628 = vrot.lane.b32.xlu0 %v1290, 84
      %v1629 = vpop.permute.xlu0 %1628
      %1630 = vrot.lane.b32.xlu0 %v1291, 84
      %v1631 = vpop.permute.xlu0 %1630
      %1632 = vrot.lane.b32.xlu0 %v1280, 84
      %v1633 = vpop.permute.xlu0 %1632
      %1634 = vrot.lane.b32.xlu0 %v1315, 84
      %v1635 = vpop.permute.xlu0 %1634
      %1636 = vrot.lane.b32.xlu0 %v1316, 84
      %v1637 = vpop.permute.xlu0 %1636
      %1638 = vrot.lane.b32.xlu0 %v1317, 84
      %v1639 = vpop.permute.xlu0 %1638
      %1640 = vrot.lane.b32.xlu0 %v1318, 84
      %v1641 = vpop.permute.xlu0 %1640
      %1642 = vrot.lane.b32.xlu0 %v1319, 84
      %v1643 = vpop.permute.xlu0 %1642
      %1644 = vrot.lane.b32.xlu0 %v1320, 84
      %v1645 = vpop.permute.xlu0 %1644
      %1646 = vrot.lane.b32.xlu0 %v1321, 84
      %v1647 = vpop.permute.xlu0 %1646
      %1648 = vrot.lane.b32.xlu0 %v1322, 84
      %v1649 = vpop.permute.xlu0 %1648
      %1650 = vrot.lane.b32.xlu0 %v1323, 84
      %v1651 = vpop.permute.xlu0 %1650
      %1652 = vrot.lane.b32.xlu0 %v1324, 84
      %v1653 = vpop.permute.xlu0 %1652
      %1654 = vrot.lane.b32.xlu0 %v1313, 84
      %v1655 = vpop.permute.xlu0 %1654
      %1656 = vrot.lane.b32.xlu0 %v642, 84
      %v1657 = vpop.permute.xlu0 %1656
      %1658 = vrot.lane.b32.xlu0 %v643, 84
      %v1659 = vpop.permute.xlu0 %1658
      %1660 = vrot.lane.b32.xlu0 %v644, 84
      %v1661 = vpop.permute.xlu0 %1660
      %1662 = vrot.lane.b32.xlu0 %v645, 84
      %v1663 = vpop.permute.xlu0 %1662
      %1664 = vrot.lane.b32.xlu0 %v646, 84
      %v1665 = vpop.permute.xlu0 %1664
      %1666 = vrot.lane.b32.xlu0 %v647, 84
      %v1667 = vpop.permute.xlu0 %1666
      %1668 = vrot.lane.b32.xlu0 %v648, 84
      %v1669 = vpop.permute.xlu0 %1668
      %1670 = vrot.lane.b32.xlu0 %v649, 84
      %v1671 = vpop.permute.xlu0 %1670
      %1672 = vrot.lane.b32.xlu0 %v650, 84
      %v1673 = vpop.permute.xlu0 %1672
      %1674 = vrot.lane.b32.xlu0 %v651, 84
      %v1675 = vpop.permute.xlu0 %1674
      %1676 = vrot.lane.b32.xlu0 %v640, 84
      %v1677 = vpop.permute.xlu0 %1676
      %1678 = vrot.lane.b32.xlu0 %v1348, 84
      %v1679 = vpop.permute.xlu0 %1678
      %1680 = vrot.lane.b32.xlu0 %v1349, 84
      %v1681 = vpop.permute.xlu0 %1680
      %1682 = vrot.lane.b32.xlu0 %v1350, 84
      %v1683 = vpop.permute.xlu0 %1682
      %1684 = vrot.lane.b32.xlu0 %v1351, 84
      %v1685 = vpop.permute.xlu0 %1684
      %1686 = vrot.lane.b32.xlu0 %v1352, 84
      %v1687 = vpop.permute.xlu0 %1686
      %1688 = vrot.lane.b32.xlu0 %v1353, 84
      %v1689 = vpop.permute.xlu0 %1688
      %1690 = vrot.lane.b32.xlu0 %v1354, 84
      %v1691 = vpop.permute.xlu0 %1690
      %1692 = vrot.lane.b32.xlu0 %v1355, 84
      %v1693 = vpop.permute.xlu0 %1692
      %1694 = vrot.lane.b32.xlu0 %v1356, 84
      %v1695 = vpop.permute.xlu0 %1694
      %1696 = vrot.lane.b32.xlu0 %v1357, 84
      %v1697 = vpop.permute.xlu0 %1696
      %1698 = vrot.lane.b32.xlu0 %v1346, 84
      %v1699 = vpop.permute.xlu0 %1698
      %1700 = vrot.lane.b32.xlu0 %v1381, 84
      %v1701 = vpop.permute.xlu0 %1700
      %1702 = vrot.lane.b32.xlu0 %v1382, 84
      %v1703 = vpop.permute.xlu0 %1702
      %1704 = vrot.lane.b32.xlu0 %v1383, 84
      %v1705 = vpop.permute.xlu0 %1704
      %1706 = vrot.lane.b32.xlu0 %v1384, 84
      %v1707 = vpop.permute.xlu0 %1706
      %1708 = vrot.lane.b32.xlu0 %v1385, 84
      %v1709 = vpop.permute.xlu0 %1708
      %1710 = vrot.lane.b32.xlu0 %v1386, 84
      %v1711 = vpop.permute.xlu0 %1710
      %1712 = vrot.lane.b32.xlu0 %v1387, 84
      %v1713 = vpop.permute.xlu0 %1712
      %1714 = vrot.lane.b32.xlu0 %v1388, 84
      %v1715 = vpop.permute.xlu0 %1714
      %1716 = vrot.lane.b32.xlu0 %v1389, 84
      %v1717 = vpop.permute.xlu0 %1716
      %1718 = vrot.lane.b32.xlu0 %v1390, 84
      %v1719 = vpop.permute.xlu0 %1718
      %1720 = vrot.lane.b32.xlu0 %v1379, 84
      %v1721 = vpop.permute.xlu0 %1720
      %1722 = vrot.lane.b32.xlu0 %v1414, 84
      %v1723 = vpop.permute.xlu0 %1722
      %1724 = vrot.lane.b32.xlu0 %v1415, 84
      %v1725 = vpop.permute.xlu0 %1724
      %1726 = vrot.lane.b32.xlu0 %v1416, 84
      %v1727 = vpop.permute.xlu0 %1726
      %1728 = vrot.lane.b32.xlu0 %v1417, 84
      %v1729 = vpop.permute.xlu0 %1728
      %1730 = vrot.lane.b32.xlu0 %v1418, 84
      %v1731 = vpop.permute.xlu0 %1730
      %1732 = vrot.lane.b32.xlu0 %v1419, 84
      %v1733 = vpop.permute.xlu0 %1732
      %1734 = vrot.lane.b32.xlu0 %v1420, 84
      %v1735 = vpop.permute.xlu0 %1734
      %1736 = vrot.lane.b32.xlu0 %v1421, 84
      %v1737 = vpop.permute.xlu0 %1736
      %1738 = vrot.lane.b32.xlu0 %v1422, 84
      %v1739 = vpop.permute.xlu0 %1738
      %1740 = vrot.lane.b32.xlu0 %v1423, 84
      %v1741 = vpop.permute.xlu0 %1740
      %1742 = vrot.lane.b32.xlu0 %v1412, 84
      %v1743 = vpop.permute.xlu0 %1742
      %1744 = vrot.lane.b32.xlu0 %v1447, 84
      %v1745 = vpop.permute.xlu0 %1744
      %1746 = vrot.lane.b32.xlu0 %v1448, 84
      %v1747 = vpop.permute.xlu0 %1746
      %1748 = vrot.lane.b32.xlu0 %v1449, 84
      %v1749 = vpop.permute.xlu0 %1748
      %1750 = vrot.lane.b32.xlu0 %v1450, 84
      %v1751 = vpop.permute.xlu0 %1750
      %1752 = vrot.lane.b32.xlu0 %v1451, 84
      %v1753 = vpop.permute.xlu0 %1752
      %1754 = vrot.lane.b32.xlu0 %v1452, 84
      %v1755 = vpop.permute.xlu0 %1754
      %1756 = vrot.lane.b32.xlu0 %v1453, 84
      %v1757 = vpop.permute.xlu0 %1756
      %1758 = vrot.lane.b32.xlu0 %v1454, 84
      %v1759 = vpop.permute.xlu0 %1758
      %1760 = vrot.lane.b32.xlu0 %v1455, 84
      %v1761 = vpop.permute.xlu0 %1760
      %1762 = vrot.lane.b32.xlu0 %v1456, 84
      %v1763 = vpop.permute.xlu0 %1762
      %1764 = vrot.lane.b32.xlu0 %v1445, 84
      %v1765 = vpop.permute.xlu0 %1764
      %1766 = vrot.lane.b32.xlu0 %v1480, 84
      %v1767 = vpop.permute.xlu0 %1766
      %1768 = vrot.lane.b32.xlu0 %v1481, 84
      %v1769 = vpop.permute.xlu0 %1768
      %1770 = vrot.lane.b32.xlu0 %v1482, 84
      %v1771 = vpop.permute.xlu0 %1770
      %1772 = vrot.lane.b32.xlu0 %v1483, 84
      %v1773 = vpop.permute.xlu0 %1772
      %1774 = vrot.lane.b32.xlu0 %v1484, 84
      %v1775 = vpop.permute.xlu0 %1774
      %1776 = vrot.lane.b32.xlu0 %v1485, 84
      %v1777 = vpop.permute.xlu0 %1776
      %1778 = vrot.lane.b32.xlu0 %v1486, 84
      %v1779 = vpop.permute.xlu0 %1778
      %1780 = vrot.lane.b32.xlu0 %v1487, 84
      %v1781 = vpop.permute.xlu0 %1780
      %1782 = vrot.lane.b32.xlu0 %v1488, 84
      %v1783 = vpop.permute.xlu0 %1782
      %1784 = vrot.lane.b32.xlu0 %v1489, 84
      %v1785 = vpop.permute.xlu0 %1784
      %1786 = vrot.lane.b32.xlu0 %v1478, 84
      %v1787 = vpop.permute.xlu0 %1786
      %vm1788 = vcmask 687104
      %v1789 = vsel %vm1788, %v1503, %v1505
      %v1790 = vsel %vm1788, %v1505, %v1507
      %v1791 = vsel %vm1788, %v1507, %v1509
      %v1792 = vsel %vm1788, %v1509, %v1511
      %v1793 = vsel %vm1788, %v1511, %v1513
      %v1794 = vsel %vm1788, %v1513, %v1515
      %v1795 = vsel %vm1788, %v1515, %v1517
      %v1796 = vsel %vm1788, %v1517, %v1519
      %v1797 = vsel %vm1788, %v1519, %v1521
      %v1798 = vsel %vm1788, %v1521, %v1523
      %v1799 = vsel %vm1788, %v1525, %v1527
      %v1800 = vsel %vm1788, %v1527, %v1529
      %v1801 = vsel %vm1788, %v1529, %v1531
      %v1802 = vsel %vm1788, %v1531, %v1533
      %v1803 = vsel %vm1788, %v1533, %v1535
      %v1804 = vsel %vm1788, %v1535, %v1537
      %v1805 = vsel %vm1788, %v1537, %v1539
      %v1806 = vsel %vm1788, %v1539, %v1541
      %v1807 = vsel %vm1788, %v1541, %v1543
      %v1808 = vsel %vm1788, %v1543, %v1545
      %v1809 = vsel %vm1788, %v1547, %v1549
      %v1810 = vsel %vm1788, %v1549, %v1551
      %v1811 = vsel %vm1788, %v1551, %v1553
      %v1812 = vsel %vm1788, %v1553, %v1555
      %v1813 = vsel %vm1788, %v1555, %v1557
      %v1814 = vsel %vm1788, %v1557, %v1559
      %v1815 = vsel %vm1788, %v1559, %v1561
      %v1816 = vsel %vm1788, %v1561, %v1563
      %v1817 = vsel %vm1788, %v1563, %v1565
      %v1818 = vsel %vm1788, %v1565, %v1567
      %v1819 = vsel %vm1788, %v1569, %v1571
      %v1820 = vsel %vm1788, %v1571, %v1573
      %v1821 = vsel %vm1788, %v1573, %v1575
      %v1822 = vsel %vm1788, %v1575, %v1577
      %v1823 = vsel %vm1788, %v1577, %v1579
      %v1824 = vsel %vm1788, %v1579, %v1581
      %v1825 = vsel %vm1788, %v1581, %v1583
      %v1826 = vsel %vm1788, %v1583, %v1585
      %v1827 = vsel %vm1788, %v1585, %v1587
      %v1828 = vsel %vm1788, %v1587, %v1589
      %v1829 = vsel %vm1788, %v1591, %v1593
      %v1830 = vsel %vm1788, %v1593, %v1595
      %v1831 = vsel %vm1788, %v1595, %v1597
      %v1832 = vsel %vm1788, %v1597, %v1599
      %v1833 = vsel %vm1788, %v1599, %v1601
      %v1834 = vsel %vm1788, %v1601, %v1603
      %v1835 = vsel %vm1788, %v1603, %v1605
      %v1836 = vsel %vm1788, %v1605, %v1607
      %v1837 = vsel %vm1788, %v1607, %v1609
      %v1838 = vsel %vm1788, %v1609, %v1611
      %v1839 = vsel %vm1788, %v1613, %v1615
      %v1840 = vsel %vm1788, %v1615, %v1617
      %v1841 = vsel %vm1788, %v1617, %v1619
      %v1842 = vsel %vm1788, %v1619, %v1621
      %v1843 = vsel %vm1788, %v1621, %v1623
      %v1844 = vsel %vm1788, %v1623, %v1625
      %v1845 = vsel %vm1788, %v1625, %v1627
      %v1846 = vsel %vm1788, %v1627, %v1629
      %v1847 = vsel %vm1788, %v1629, %v1631
      %v1848 = vsel %vm1788, %v1631, %v1633
      %v1849 = vsel %vm1788, %v1635, %v1637
      %v1850 = vsel %vm1788, %v1637, %v1639
      %v1851 = vsel %vm1788, %v1639, %v1641
      %v1852 = vsel %vm1788, %v1641, %v1643
      %v1853 = vsel %vm1788, %v1643, %v1645
      %v1854 = vsel %vm1788, %v1645, %v1647
      %v1855 = vsel %vm1788, %v1647, %v1649
      %v1856 = vsel %vm1788, %v1649, %v1651
      %v1857 = vsel %vm1788, %v1651, %v1653
      %v1858 = vsel %vm1788, %v1653, %v1655
      %v1859 = vsel %vm1788, %v1657, %v1659
      %v1860 = vsel %vm1788, %v1659, %v1661
      %v1861 = vsel %vm1788, %v1661, %v1663
      %v1862 = vsel %vm1788, %v1663, %v1665
      %v1863 = vsel %vm1788, %v1665, %v1667
      %v1864 = vsel %vm1788, %v1667, %v1669
      %v1865 = vsel %vm1788, %v1669, %v1671
      %v1866 = vsel %vm1788, %v1671, %v1673
      %v1867 = vsel %vm1788, %v1673, %v1675
      %v1868 = vsel %vm1788, %v1675, %v1677
      %v1869 = vsel %vm1788, %v1679, %v1681
      %v1870 = vsel %vm1788, %v1681, %v1683
      %v1871 = vsel %vm1788, %v1683, %v1685
      %v1872 = vsel %vm1788, %v1685, %v1687
      %v1873 = vsel %vm1788, %v1687, %v1689
      %v1874 = vsel %vm1788, %v1689, %v1691
      %v1875 = vsel %vm1788, %v1691, %v1693
      %v1876 = vsel %vm1788, %v1693, %v1695
      %v1877 = vsel %vm1788, %v1695, %v1697
      %v1878 = vsel %vm1788, %v1697, %v1699
      %v1879 = vsel %vm1788, %v1701, %v1703
      %v1880 = vsel %vm1788, %v1703, %v1705
      %v1881 = vsel %vm1788, %v1705, %v1707
      %v1882 = vsel %vm1788, %v1707, %v1709
      %v1883 = vsel %vm1788, %v1709, %v1711
      %v1884 = vsel %vm1788, %v1711, %v1713
      %v1885 = vsel %vm1788, %v1713, %v1715
      %v1886 = vsel %vm1788, %v1715, %v1717
      %v1887 = vsel %vm1788, %v1717, %v1719
      %v1888 = vsel %vm1788, %v1719, %v1721
      %v1889 = vsel %vm1788, %v1723, %v1725
      %v1890 = vsel %vm1788, %v1725, %v1727
      %v1891 = vsel %vm1788, %v1727, %v1729
      %v1892 = vsel %vm1788, %v1729, %v1731
      %v1893 = vsel %vm1788, %v1731, %v1733
      %v1894 = vsel %vm1788, %v1733, %v1735
      %v1895 = vsel %vm1788, %v1735, %v1737
      %v1896 = vsel %vm1788, %v1737, %v1739
      %v1897 = vsel %vm1788, %v1739, %v1741
      %v1898 = vsel %vm1788, %v1741, %v1743
      %v1899 = vsel %vm1788, %v1745, %v1747
      %v1900 = vsel %vm1788, %v1747, %v1749
      %v1901 = vsel %vm1788, %v1749, %v1751
      %v1902 = vsel %vm1788, %v1751, %v1753
      %v1903 = vsel %vm1788, %v1753, %v1755
      %v1904 = vsel %vm1788, %v1755, %v1757
      %v1905 = vsel %vm1788, %v1757, %v1759
      %v1906 = vsel %vm1788, %v1759, %v1761
      %v1907 = vsel %vm1788, %v1761, %v1763
      %v1908 = vsel %vm1788, %v1763, %v1765
      %v1909 = vsel %vm1788, %v1767, %v1769
      %v1910 = vsel %vm1788, %v1769, %v1771
      %v1911 = vsel %vm1788, %v1771, %v1773
      %v1912 = vsel %vm1788, %v1773, %v1775
      %v1913 = vsel %vm1788, %v1775, %v1777
      %v1914 = vsel %vm1788, %v1777, %v1779
      %v1915 = vsel %vm1788, %v1779, %v1781
      %v1916 = vsel %vm1788, %v1781, %v1783
      %v1917 = vsel %vm1788, %v1783, %v1785
      %v1918 = vsel %vm1788, %v1785, %v1787
      %v2050 = vsel %vm888, %v1500, 0
      %2052 = vmatprep.subr.bf16.mxu0 %v1790
      %2053 = vmatpush1.bf16.msra.mxu0 %v1789
      %2054 = vmatprep.subr.bf16.mxu0 %v1800
      %2055 = vmatpush1.bf16.msra.mxu0 %v1799
      %2056 = vmatprep.subr.bf16.mxu0 %v1810
      %2057 = vmatpush1.bf16.msra.mxu0 %v1809
      %2058 = vmatprep.subr.bf16.mxu0 %v1820
      %2059 = vmatpush1.bf16.msra.mxu0 %v1819
      %2060 = vmatprep.subr.bf16.mxu0 %v1830
      %2061 = vmatpush1.bf16.msra.mxu0 %v1829
      %2062 = vmatprep.subr.bf16.mxu0 %v1840
      %2063 = vmatpush1.bf16.msra.mxu0 %v1839
      %2064 = vmatprep.subr.bf16.mxu0 %v1850
      %2065 = vmatpush1.bf16.msra.mxu0 %v1849
      %2066 = vmatprep.subr.bf16.mxu0 %v1860
      %2067 = vmatpush1.bf16.msra.mxu0 %v1859
      %2068 = vmatprep.subr.bf16.mxu0 %v1870
      %2069 = vmatpush1.bf16.msra.mxu0 %v1869
      %2070 = vmatprep.subr.bf16.mxu0 %v1880
      %2071 = vmatpush1.bf16.msra.mxu0 %v1879
      %2072 = vmatprep.subr.bf16.mxu0 %v1890
      %2073 = vmatpush1.bf16.msra.mxu0 %v1889
      %2074 = vmatprep.subr.bf16.mxu0 %v1900
      %2075 = vmatpush1.bf16.msra.mxu0 %v1899
      %2076 = vmatprep.subr.bf16.mxu0 %v1910
      %2077 = vmatpush1.bf16.msra.mxu0 %v1909
      %2078 = vmatprep.subr.bf16.mxu0 0
      %2079 = vmatpush1.bf16.msra.mxu0 0
      %2080 = vmatprep.subr.bf16.mxu0 0
      %2081 = vmatpush1.bf16.msra.mxu0 0
      %2082 = vmatprep.subr.bf16.mxu0 0
      %2083 = vmatpush1.bf16.msra.mxu0 0
      %2084 = vmatprep.mubr.bf16.mxu0 %v2050
      %2085 = vmatmul.mubr.bf16.gmra.mrb[0].mxu0 %v1499
      %v2086 = vpop.f32.mrb[0].mxu0
      %v2087 = vadd.f32 0.0, %v2086
      %v2088 = vpop.f32.mrb[0].mxu0
      %v2089 = vadd.f32 0.0, %v2088
      %v2090 = vpop.f32.mrb[0].mxu0
      %v2091 = vadd.f32 0.0, %v2090
      %v2092 = vpop.f32.mrb[0].mxu0
      %v2093 = vadd.f32 0.0, %v2092
      %2094 = vdwg.mxu0
      %2095 = vmatprep.subr.bf16.mxu0 %v1792
      %2096 = vmatpush1.bf16.msra.mxu0 %v1791
      %2097 = vmatprep.subr.bf16.mxu0 %v1802
      %2098 = vmatpush1.bf16.msra.mxu0 %v1801
      %2099 = vmatprep.subr.bf16.mxu0 %v1812
      %2100 = vmatpush1.bf16.msra.mxu0 %v1811
      %2101 = vmatprep.subr.bf16.mxu0 %v1822
      %2102 = vmatpush1.bf16.msra.mxu0 %v1821
      %2103 = vmatprep.subr.bf16.mxu0 %v1832
      %2104 = vmatpush1.bf16.msra.mxu0 %v1831
      %2105 = vmatprep.subr.bf16.mxu0 %v1842
      %2106 = vmatpush1.bf16.msra.mxu0 %v1841
      %2107 = vmatprep.subr.bf16.mxu0 %v1852
      %2108 = vmatpush1.bf16.msra.mxu0 %v1851
      %2109 = vmatprep.subr.bf16.mxu0 %v1862
      %2110 = vmatpush1.bf16.msra.mxu0 %v1861
      %2111 = vmatprep.subr.bf16.mxu0 %v1872
      %2112 = vmatpush1.bf16.msra.mxu0 %v1871
      %2113 = vmatprep.subr.bf16.mxu0 %v1882
      %2114 = vmatpush1.bf16.msra.mxu0 %v1881
      %2115 = vmatprep.subr.bf16.mxu0 %v1892
      %2116 = vmatpush1.bf16.msra.mxu0 %v1891
      %2117 = vmatprep.subr.bf16.mxu0 %v1902
      %2118 = vmatpush1.bf16.msra.mxu0 %v1901
      %2119 = vmatprep.subr.bf16.mxu0 %v1912
      %2120 = vmatpush1.bf16.msra.mxu0 %v1911
      %2121 = vmatprep.subr.bf16.mxu0 0
      %2122 = vmatpush1.bf16.msra.mxu0 0
      %2123 = vmatprep.subr.bf16.mxu0 0
      %2124 = vmatpush1.bf16.msra.mxu0 0
      %2125 = vmatprep.subr.bf16.mxu0 0
      %2126 = vmatpush1.bf16.msra.mxu0 0
      %2127 = vmatprep.mubr.bf16.mxu0 %v2050
      %2128 = vmatmul.mubr.bf16.gmra.mrb[0].mxu0 %v1499
      %v2129 = vpop.f32.mrb[0].mxu0
      %v2130 = vadd.f32 0.0, %v2129
      %v2131 = vpop.f32.mrb[0].mxu0
      %v2132 = vadd.f32 0.0, %v2131
      %v2133 = vpop.f32.mrb[0].mxu0
      %v2134 = vadd.f32 0.0, %v2133
      %v2135 = vpop.f32.mrb[0].mxu0
      %v2136 = vadd.f32 0.0, %v2135
      %2137 = vdwg.mxu0
      %2138 = vmatprep.subr.bf16.mxu0 %v1794
      %2139 = vmatpush1.bf16.msra.mxu0 %v1793
      %2140 = vmatprep.subr.bf16.mxu0 %v1804
      %2141 = vmatpush1.bf16.msra.mxu0 %v1803
      %2142 = vmatprep.subr.bf16.mxu0 %v1814
      %2143 = vmatpush1.bf16.msra.mxu0 %v1813
      %2144 = vmatprep.subr.bf16.mxu0 %v1824
      %2145 = vmatpush1.bf16.msra.mxu0 %v1823
      %2146 = vmatprep.subr.bf16.mxu0 %v1834
      %2147 = vmatpush1.bf16.msra.mxu0 %v1833
      %2148 = vmatprep.subr.bf16.mxu0 %v1844
      %2149 = vmatpush1.bf16.msra.mxu0 %v1843
      %2150 = vmatprep.subr.bf16.mxu0 %v1854
      %2151 = vmatpush1.bf16.msra.mxu0 %v1853
      %2152 = vmatprep.subr.bf16.mxu0 %v1864
      %2153 = vmatpush1.bf16.msra.mxu0 %v1863
      %2154 = vmatprep.subr.bf16.mxu0 %v1874
      %2155 = vmatpush1.bf16.msra.mxu0 %v1873
      %2156 = vmatprep.subr.bf16.mxu0 %v1884
      %2157 = vmatpush1.bf16.msra.mxu0 %v1883
      %2158 = vmatprep.subr.bf16.mxu0 %v1894
      %2159 = vmatpush1.bf16.msra.mxu0 %v1893
      %2160 = vmatprep.subr.bf16.mxu0 %v1904
      %2161 = vmatpush1.bf16.msra.mxu0 %v1903
      %2162 = vmatprep.subr.bf16.mxu0 %v1914
      %2163 = vmatpush1.bf16.msra.mxu0 %v1913
      %2164 = vmatprep.subr.bf16.mxu0 0
      %2165 = vmatpush1.bf16.msra.mxu0 0
      %2166 = vmatprep.subr.bf16.mxu0 0
      %2167 = vmatpush1.bf16.msra.mxu0 0
      %2168 = vmatprep.subr.bf16.mxu0 0
      %2169 = vmatpush1.bf16.msra.mxu0 0
      %2170 = vmatprep.mubr.bf16.mxu0 %v2050
      %2171 = vmatmul.mubr.bf16.gmra.mrb[0].mxu0 %v1499
      %v2172 = vpop.f32.mrb[0].mxu0
      %v2173 = vadd.f32 0.0, %v2172
      %v2174 = vpop.f32.mrb[0].mxu0
      %v2175 = vadd.f32 0.0, %v2174
      %v2176 = vpop.f32.mrb[0].mxu0
      %v2177 = vadd.f32 0.0, %v2176
      %v2178 = vpop.f32.mrb[0].mxu0
      %v2179 = vadd.f32 0.0, %v2178
      %2180 = vdwg.mxu0
      %2181 = vmatprep.subr.bf16.mxu0 %v1796
      %2182 = vmatpush1.bf16.msra.mxu0 %v1795
      %2183 = vmatprep.subr.bf16.mxu0 %v1806
      %2184 = vmatpush1.bf16.msra.mxu0 %v1805
      %2185 = vmatprep.subr.bf16.mxu0 %v1816
      %2186 = vmatpush1.bf16.msra.mxu0 %v1815
      %2187 = vmatprep.subr.bf16.mxu0 %v1826
      %2188 = vmatpush1.bf16.msra.mxu0 %v1825
      %2189 = vmatprep.subr.bf16.mxu0 %v1836
      %2190 = vmatpush1.bf16.msra.mxu0 %v1835
      %2191 = vmatprep.subr.bf16.mxu0 %v1846
      %2192 = vmatpush1.bf16.msra.mxu0 %v1845
      %2193 = vmatprep.subr.bf16.mxu0 %v1856
      %2194 = vmatpush1.bf16.msra.mxu0 %v1855
      %2195 = vmatprep.subr.bf16.mxu0 %v1866
      %2196 = vmatpush1.bf16.msra.mxu0 %v1865
      %2197 = vmatprep.subr.bf16.mxu0 %v1876
      %2198 = vmatpush1.bf16.msra.mxu0 %v1875
      %2199 = vmatprep.subr.bf16.mxu0 %v1886
      %2200 = vmatpush1.bf16.msra.mxu0 %v1885
      %2201 = vmatprep.subr.bf16.mxu0 %v1896
      %2202 = vmatpush1.bf16.msra.mxu0 %v1895
      %2203 = vmatprep.subr.bf16.mxu0 %v1906
      %2204 = vmatpush1.bf16.msra.mxu0 %v1905
      %2205 = vmatprep.subr.bf16.mxu0 %v1916
      %2206 = vmatpush1.bf16.msra.mxu0 %v1915
      %2207 = vmatprep.subr.bf16.mxu0 0
      %2208 = vmatpush1.bf16.msra.mxu0 0
      %2209 = vmatprep.subr.bf16.mxu0 0
      %2210 = vmatpush1.bf16.msra.mxu0 0
      %2211 = vmatprep.subr.bf16.mxu0 0
      %2212 = vmatpush1.bf16.msra.mxu0 0
      %2213 = vmatprep.mubr.bf16.mxu0 %v2050
      %2214 = vmatmul.mubr.bf16.gmra.mrb[0].mxu0 %v1499
      %v2215 = vpop.f32.mrb[0].mxu0
      %v2216 = vadd.f32 0.0, %v2215
      %v2217 = vpop.f32.mrb[0].mxu0
      %v2218 = vadd.f32 0.0, %v2217
      %v2219 = vpop.f32.mrb[0].mxu0
      %v2220 = vadd.f32 0.0, %v2219
      %v2221 = vpop.f32.mrb[0].mxu0
      %v2222 = vadd.f32 0.0, %v2221
      %2223 = vdwg.mxu0
      %2224 = vmatprep.subr.bf16.mxu0 %v1798
      %2225 = vmatpush1.bf16.msra.mxu0 %v1797
      %2226 = vmatprep.subr.bf16.mxu0 %v1808
      %2227 = vmatpush1.bf16.msra.mxu0 %v1807
      %2228 = vmatprep.subr.bf16.mxu0 %v1818
      %2229 = vmatpush1.bf16.msra.mxu0 %v1817
      %2230 = vmatprep.subr.bf16.mxu0 %v1828
      %2231 = vmatpush1.bf16.msra.mxu0 %v1827
      %2232 = vmatprep.subr.bf16.mxu0 %v1838
      %2233 = vmatpush1.bf16.msra.mxu0 %v1837
      %2234 = vmatprep.subr.bf16.mxu0 %v1848
      %2235 = vmatpush1.bf16.msra.mxu0 %v1847
      %2236 = vmatprep.subr.bf16.mxu0 %v1858
      %2237 = vmatpush1.bf16.msra.mxu0 %v1857
      %2238 = vmatprep.subr.bf16.mxu0 %v1868
      %2239 = vmatpush1.bf16.msra.mxu0 %v1867
      %2240 = vmatprep.subr.bf16.mxu0 %v1878
      %2241 = vmatpush1.bf16.msra.mxu0 %v1877
      %2242 = vmatprep.subr.bf16.mxu0 %v1888
      %2243 = vmatpush1.bf16.msra.mxu0 %v1887
      %2244 = vmatprep.subr.bf16.mxu0 %v1898
      %2245 = vmatpush1.bf16.msra.mxu0 %v1897
      %2246 = vmatprep.subr.bf16.mxu0 %v1908
      %2247 = vmatpush1.bf16.msra.mxu0 %v1907
      %2248 = vmatprep.subr.bf16.mxu0 %v1918
      %2249 = vmatpush1.bf16.msra.mxu0 %v1917
      %2250 = vmatprep.subr.bf16.mxu0 0
      %2251 = vmatpush1.bf16.msra.mxu0 0
      %2252 = vmatprep.subr.bf16.mxu0 0
      %2253 = vmatpush1.bf16.msra.mxu0 0
      %2254 = vmatprep.subr.bf16.mxu0 0
      %2255 = vmatpush1.bf16.msra.mxu0 0
      %2256 = vmatprep.mubr.bf16.mxu0 %v2050
      %2257 = vmatmul.mubr.bf16.gmra.mrb[0].mxu0 %v1499
      %v2258 = vpop.f32.mrb[0].mxu0
      %v2259 = vadd.f32 0.0, %v2258
      %v2260 = vpop.f32.mrb[0].mxu0
      %v2261 = vadd.f32 0.0, %v2260
      %v2262 = vpop.f32.mrb[0].mxu0
      %v2263 = vadd.f32 0.0, %v2262
      %v2264 = vpop.f32.mrb[0].mxu0
      %v2265 = vadd.f32 0.0, %v2264
      %2266 = vdwg.mxu0
      %v2267 = vadd.f32 %v1107, %v2087
      %v2268 = vadd.f32 %v1108, %v2089
      %v2269 = vadd.f32 %v1109, %v2130
      %v2270 = vadd.f32 %v1110, %v2132
      %v2271 = vadd.f32 %v1111, %v2173
      %v2272 = vadd.f32 %v1112, %v2175
      %v2273 = vadd.f32 %v1113, %v2216
      %v2274 = vadd.f32 %v1114, %v2218
      %v2275 = vadd.f32 %v1115, %v2259
      %v2276 = vadd.f32 %v1116, %v2261
      %v2277 = vadd.f32 %v1117, %v2091
      %v2278 = vadd.f32 %v1118, %v2093
      %v2279 = vadd.f32 %v1119, %v2134
      %v2280 = vadd.f32 %v1120, %v2136
      %v2281 = vadd.f32 %v1121, %v2177
      %v2282 = vadd.f32 %v1122, %v2179
      %v2283 = vadd.f32 %v1123, %v2220
      %v2284 = vadd.f32 %v1124, %v2222
      %v2285 = vadd.f32 %v1125, %v2263
      %v2286 = vadd.f32 %v1126, %v2265
      %v2287 = vld [vmem:[%s247 + $0x4] sm:$0xff]
      %v2288 = vld [vmem:[%s247 + $0xc] sm:$0xff]
      %v2289 = vld [vmem:[%s247 + $0x14] sm:$0xff]
      %v2290 = vld [vmem:[%s247 + $0x1c] sm:$0xff]
      %v2291 = vld [vmem:[%s247 + $0x24] sm:$0xff]
      %v2292 = vld [vmem:[%s247 + $0x2c] sm:$0xf]
      %v2293 = vld [vmem:[%s247 + $0x34] sm:$0xff]
      %v2294 = vld [vmem:[%s247 + $0x3c] sm:$0xff]
      %v2295 = vld [vmem:[%s247 + $0x44] sm:$0xff]
      %v2296 = vld [vmem:[%s247 + $0x4c] sm:$0xff]
      %v2297 = vld [vmem:[%s247 + $0x54] sm:$0xff]
      %v2298 = vld [vmem:[%s247 + $0x5c] sm:$0xf]
      %v2311 = vunpack.c.l.b16 %v2287
      %v2312 = vunpack.c.h.b16 %v2287
      %v2313 = vunpack.c.l.b16 %v2288
      %v2314 = vunpack.c.h.b16 %v2288
      %v2315 = vunpack.c.l.b16 %v2289
      %v2316 = vunpack.c.h.b16 %v2289
      %v2317 = vunpack.c.l.b16 %v2290
      %v2318 = vunpack.c.h.b16 %v2290
      %v2319 = vunpack.c.l.b16 %v2291
      %v2320 = vunpack.c.h.b16 %v2291
      %v2321 = vunpack.c.l.b16 %v2292
      %v2322 = vunpack.c.l.b16 %v2293
      %v2323 = vunpack.c.h.b16 %v2293
      %v2324 = vunpack.c.l.b16 %v2294
      %v2325 = vunpack.c.h.b16 %v2294
      %v2326 = vunpack.c.l.b16 %v2295
      %v2327 = vunpack.c.h.b16 %v2295
      %v2328 = vunpack.c.l.b16 %v2296
      %v2329 = vunpack.c.h.b16 %v2296
      %v2330 = vunpack.c.l.b16 %v2297
      %v2331 = vunpack.c.h.b16 %v2297
      %v2332 = vunpack.c.l.b16 %v2298
      %v2333 = vpack.c.b16 %v2322, %v2311
      %v2334 = vpack.c.b16 %v2323, %v2312
      %v2335 = vpack.c.b16 %v2324, %v2313
      %v2336 = vpack.c.b16 %v2325, %v2314
      %v2337 = vpack.c.b16 %v2326, %v2315
      %v2338 = vpack.c.b16 %v2327, %v2316
      %v2339 = vpack.c.b16 %v2328, %v2317
      %v2340 = vpack.c.b16 %v2329, %v2318
      %v2341 = vpack.c.b16 %v2330, %v2319
      %v2342 = vpack.c.b16 %v2331, %v2320
      %v2343 = vpack.c.b16 %v2332, %v2321
      %2344 = vrot.lane.b32.xlu0 %v2333, 95
      %v2345 = vpop.permute.xlu0 %2344
      %2346 = vrot.lane.b32.xlu0 %v2334, 95
      %v2347 = vpop.permute.xlu0 %2346
      %2348 = vrot.lane.b32.xlu0 %v2335, 95
      %v2349 = vpop.permute.xlu0 %2348
      %2350 = vrot.lane.b32.xlu0 %v2336, 95
      %v2351 = vpop.permute.xlu0 %2350
      %2352 = vrot.lane.b32.xlu0 %v2337, 95
      %v2353 = vpop.permute.xlu0 %2352
      %2354 = vrot.lane.b32.xlu0 %v2338, 95
      %v2355 = vpop.permute.xlu0 %2354
      %2356 = vrot.lane.b32.xlu0 %v2339, 95
      %v2357 = vpop.permute.xlu0 %2356
      %2358 = vrot.lane.b32.xlu0 %v2340, 95
      %v2359 = vpop.permute.xlu0 %2358
      %2360 = vrot.lane.b32.xlu0 %v2341, 95
      %v2361 = vpop.permute.xlu0 %2360
      %2362 = vrot.lane.b32.xlu0 %v2342, 95
      %v2363 = vpop.permute.xlu0 %2362
      %2364 = vrot.lane.b32.xlu0 %v2343, 95
      %v2365 = vpop.permute.xlu0 %2364
      %v2366 = vsel %vm1182, %v2345, %v2347
      %v2367 = vsel %vm1182, %v2347, %v2349
      %v2368 = vsel %vm1182, %v2349, %v2351
      %v2369 = vsel %vm1182, %v2351, %v2353
      %v2370 = vsel %vm1182, %v2353, %v2355
      %v2371 = vsel %vm1182, %v2355, %v2357
      %v2372 = vsel %vm1182, %v2357, %v2359
      %v2373 = vsel %vm1182, %v2359, %v2361
      %v2374 = vsel %vm1182, %v2361, %v2363
      %v2375 = vsel %vm1182, %v2363, %v2365
      %2376 = vrot.lane.b32.xlu0 %v2333, 94
      %v2377 = vpop.permute.xlu0 %2376
      %2378 = vrot.lane.b32.xlu0 %v2334, 94
      %v2379 = vpop.permute.xlu0 %2378
      %2380 = vrot.lane.b32.xlu0 %v2335, 94
      %v2381 = vpop.permute.xlu0 %2380
      %2382 = vrot.lane.b32.xlu0 %v2336, 94
      %v2383 = vpop.permute.xlu0 %2382
      %2384 = vrot.lane.b32.xlu0 %v2337, 94
      %v2385 = vpop.permute.xlu0 %2384
      %2386 = vrot.lane.b32.xlu0 %v2338, 94
      %v2387 = vpop.permute.xlu0 %2386
      %2388 = vrot.lane.b32.xlu0 %v2339, 94
      %v2389 = vpop.permute.xlu0 %2388
      %2390 = vrot.lane.b32.xlu0 %v2340, 94
      %v2391 = vpop.permute.xlu0 %2390
      %2392 = vrot.lane.b32.xlu0 %v2341, 94
      %v2393 = vpop.permute.xlu0 %2392
      %2394 = vrot.lane.b32.xlu0 %v2342, 94
      %v2395 = vpop.permute.xlu0 %2394
      %2396 = vrot.lane.b32.xlu0 %v2343, 94
      %v2397 = vpop.permute.xlu0 %2396
      %v2398 = vsel %vm1215, %v2377, %v2379
      %v2399 = vsel %vm1215, %v2379, %v2381
      %v2400 = vsel %vm1215, %v2381, %v2383
      %v2401 = vsel %vm1215, %v2383, %v2385
      %v2402 = vsel %vm1215, %v2385, %v2387
      %v2403 = vsel %vm1215, %v2387, %v2389
      %v2404 = vsel %vm1215, %v2389, %v2391
      %v2405 = vsel %vm1215, %v2391, %v2393
      %v2406 = vsel %vm1215, %v2393, %v2395
      %v2407 = vsel %vm1215, %v2395, %v2397
      %2408 = vrot.lane.b32.xlu0 %v2333, 93
      %v2409 = vpop.permute.xlu0 %2408
      %2410 = vrot.lane.b32.xlu0 %v2334, 93
      %v2411 = vpop.permute.xlu0 %2410
      %2412 = vrot.lane.b32.xlu0 %v2335, 93
      %v2413 = vpop.permute.xlu0 %2412
      %2414 = vrot.lane.b32.xlu0 %v2336, 93
      %v2415 = vpop.permute.xlu0 %2414
      %2416 = vrot.lane.b32.xlu0 %v2337, 93
      %v2417 = vpop.permute.xlu0 %2416
      %2418 = vrot.lane.b32.xlu0 %v2338, 93
      %v2419 = vpop.permute.xlu0 %2418
      %2420 = vrot.lane.b32.xlu0 %v2339, 93
      %v2421 = vpop.permute.xlu0 %2420
      %2422 = vrot.lane.b32.xlu0 %v2340, 93
      %v2423 = vpop.permute.xlu0 %2422
      %2424 = vrot.lane.b32.xlu0 %v2341, 93
      %v2425 = vpop.permute.xlu0 %2424
      %2426 = vrot.lane.b32.xlu0 %v2342, 93
      %v2427 = vpop.permute.xlu0 %2426
      %2428 = vrot.lane.b32.xlu0 %v2343, 93
      %v2429 = vpop.permute.xlu0 %2428
      %v2430 = vsel %vm1248, %v2409, %v2411
      %v2431 = vsel %vm1248, %v2411, %v2413
      %v2432 = vsel %vm1248, %v2413, %v2415
      %v2433 = vsel %vm1248, %v2415, %v2417
      %v2434 = vsel %vm1248, %v2417, %v2419
      %v2435 = vsel %vm1248, %v2419, %v2421
      %v2436 = vsel %vm1248, %v2421, %v2423
      %v2437 = vsel %vm1248, %v2423, %v2425
      %v2438 = vsel %vm1248, %v2425, %v2427
      %v2439 = vsel %vm1248, %v2427, %v2429
      %2440 = vrot.lane.b32.xlu0 %v2333, 92
      %v2441 = vpop.permute.xlu0 %2440
      %2442 = vrot.lane.b32.xlu0 %v2334, 92
      %v2443 = vpop.permute.xlu0 %2442
      %2444 = vrot.lane.b32.xlu0 %v2335, 92
      %v2445 = vpop.permute.xlu0 %2444
      %2446 = vrot.lane.b32.xlu0 %v2336, 92
      %v2447 = vpop.permute.xlu0 %2446
      %2448 = vrot.lane.b32.xlu0 %v2337, 92
      %v2449 = vpop.permute.xlu0 %2448
      %2450 = vrot.lane.b32.xlu0 %v2338, 92
      %v2451 = vpop.permute.xlu0 %2450
      %2452 = vrot.lane.b32.xlu0 %v2339, 92
      %v2453 = vpop.permute.xlu0 %2452
      %2454 = vrot.lane.b32.xlu0 %v2340, 92
      %v2455 = vpop.permute.xlu0 %2454
      %2456 = vrot.lane.b32.xlu0 %v2341, 92
      %v2457 = vpop.permute.xlu0 %2456
      %2458 = vrot.lane.b32.xlu0 %v2342, 92
      %v2459 = vpop.permute.xlu0 %2458
      %2460 = vrot.lane.b32.xlu0 %v2343, 92
      %v2461 = vpop.permute.xlu0 %2460
      %v2462 = vsel %vm1281, %v2441, %v2443
      %v2463 = vsel %vm1281, %v2443, %v2445
      %v2464 = vsel %vm1281, %v2445, %v2447
      %v2465 = vsel %vm1281, %v2447, %v2449
      %v2466 = vsel %vm1281, %v2449, %v2451
      %v2467 = vsel %vm1281, %v2451, %v2453
      %v2468 = vsel %vm1281, %v2453, %v2455
      %v2469 = vsel %vm1281, %v2455, %v2457
      %v2470 = vsel %vm1281, %v2457, %v2459
      %v2471 = vsel %vm1281, %v2459, %v2461
      %2472 = vrot.lane.b32.xlu0 %v2333, 91
      %v2473 = vpop.permute.xlu0 %2472
      %2474 = vrot.lane.b32.xlu0 %v2334, 91
      %v2475 = vpop.permute.xlu0 %2474
      %2476 = vrot.lane.b32.xlu0 %v2335, 91
      %v2477 = vpop.permute.xlu0 %2476
      %2478 = vrot.lane.b32.xlu0 %v2336, 91
      %v2479 = vpop.permute.xlu0 %2478
      %2480 = vrot.lane.b32.xlu0 %v2337, 91
      %v2481 = vpop.permute.xlu0 %2480
      %2482 = vrot.lane.b32.xlu0 %v2338, 91
      %v2483 = vpop.permute.xlu0 %2482
      %2484 = vrot.lane.b32.xlu0 %v2339, 91
      %v2485 = vpop.permute.xlu0 %2484
      %2486 = vrot.lane.b32.xlu0 %v2340, 91
      %v2487 = vpop.permute.xlu0 %2486
      %2488 = vrot.lane.b32.xlu0 %v2341, 91
      %v2489 = vpop.permute.xlu0 %2488
      %2490 = vrot.lane.b32.xlu0 %v2342, 91
      %v2491 = vpop.permute.xlu0 %2490
      %2492 = vrot.lane.b32.xlu0 %v2343, 91
      %v2493 = vpop.permute.xlu0 %2492
      %v2494 = vsel %vm1314, %v2473, %v2475
      %v2495 = vsel %vm1314, %v2475, %v2477
      %v2496 = vsel %vm1314, %v2477, %v2479
      %v2497 = vsel %vm1314, %v2479, %v2481
      %v2498 = vsel %vm1314, %v2481, %v2483
      %v2499 = vsel %vm1314, %v2483, %v2485
      %v2500 = vsel %vm1314, %v2485, %v2487
      %v2501 = vsel %vm1314, %v2487, %v2489
      %v2502 = vsel %vm1314, %v2489, %v2491
      %v2503 = vsel %vm1314, %v2491, %v2493
      %2504 = vrot.lane.b32.xlu0 %v2333, 90
      %v2505 = vpop.permute.xlu0 %2504
      %2506 = vrot.lane.b32.xlu0 %v2334, 90
      %v2507 = vpop.permute.xlu0 %2506
      %2508 = vrot.lane.b32.xlu0 %v2335, 90
      %v2509 = vpop.permute.xlu0 %2508
      %2510 = vrot.lane.b32.xlu0 %v2336, 90
      %v2511 = vpop.permute.xlu0 %2510
      %2512 = vrot.lane.b32.xlu0 %v2337, 90
      %v2513 = vpop.permute.xlu0 %2512
      %2514 = vrot.lane.b32.xlu0 %v2338, 90
      %v2515 = vpop.permute.xlu0 %2514
      %2516 = vrot.lane.b32.xlu0 %v2339, 90
      %v2517 = vpop.permute.xlu0 %2516
      %2518 = vrot.lane.b32.xlu0 %v2340, 90
      %v2519 = vpop.permute.xlu0 %2518
      %2520 = vrot.lane.b32.xlu0 %v2341, 90
      %v2521 = vpop.permute.xlu0 %2520
      %2522 = vrot.lane.b32.xlu0 %v2342, 90
      %v2523 = vpop.permute.xlu0 %2522
      %2524 = vrot.lane.b32.xlu0 %v2343, 90
      %v2525 = vpop.permute.xlu0 %2524
      %v2526 = vsel %vm641, %v2505, %v2507
      %v2527 = vsel %vm641, %v2507, %v2509
      %v2528 = vsel %vm641, %v2509, %v2511
      %v2529 = vsel %vm641, %v2511, %v2513
      %v2530 = vsel %vm641, %v2513, %v2515
      %v2531 = vsel %vm641, %v2515, %v2517
      %v2532 = vsel %vm641, %v2517, %v2519
      %v2533 = vsel %vm641, %v2519, %v2521
      %v2534 = vsel %vm641, %v2521, %v2523
      %v2535 = vsel %vm641, %v2523, %v2525
      %2536 = vrot.lane.b32.xlu0 %v2333, 89
      %v2537 = vpop.permute.xlu0 %2536
      %2538 = vrot.lane.b32.xlu0 %v2334, 89
      %v2539 = vpop.permute.xlu0 %2538
      %2540 = vrot.lane.b32.xlu0 %v2335, 89
      %v2541 = vpop.permute.xlu0 %2540
      %2542 = vrot.lane.b32.xlu0 %v2336, 89
      %v2543 = vpop.permute.xlu0 %2542
      %2544 = vrot.lane.b32.xlu0 %v2337, 89
      %v2545 = vpop.permute.xlu0 %2544
      %2546 = vrot.lane.b32.xlu0 %v2338, 89
      %v2547 = vpop.permute.xlu0 %2546
      %2548 = vrot.lane.b32.xlu0 %v2339, 89
      %v2549 = vpop.permute.xlu0 %2548
      %2550 = vrot.lane.b32.xlu0 %v2340, 89
      %v2551 = vpop.permute.xlu0 %2550
      %2552 = vrot.lane.b32.xlu0 %v2341, 89
      %v2553 = vpop.permute.xlu0 %2552
      %2554 = vrot.lane.b32.xlu0 %v2342, 89
      %v2555 = vpop.permute.xlu0 %2554
      %2556 = vrot.lane.b32.xlu0 %v2343, 89
      %v2557 = vpop.permute.xlu0 %2556
      %v2558 = vsel %vm684, %v2537, %v2539
      %v2559 = vsel %vm684, %v2539, %v2541
      %v2560 = vsel %vm684, %v2541, %v2543
      %v2561 = vsel %vm684, %v2543, %v2545
      %v2562 = vsel %vm684, %v2545, %v2547
      %v2563 = vsel %vm684, %v2547, %v2549
      %v2564 = vsel %vm684, %v2549, %v2551
      %v2565 = vsel %vm684, %v2551, %v2553
      %v2566 = vsel %vm684, %v2553, %v2555
      %v2567 = vsel %vm684, %v2555, %v2557
      %2568 = vrot.lane.b32.xlu0 %v2333, 57
      %v2569 = vpop.permute.xlu0 %2568
      %2570 = vrot.lane.b32.xlu0 %v2334, 57
      %v2571 = vpop.permute.xlu0 %2570
      %2572 = vrot.lane.b32.xlu0 %v2335, 57
      %v2573 = vpop.permute.xlu0 %2572
      %2574 = vrot.lane.b32.xlu0 %v2336, 57
      %v2575 = vpop.permute.xlu0 %2574
      %2576 = vrot.lane.b32.xlu0 %v2337, 57
      %v2577 = vpop.permute.xlu0 %2576
      %2578 = vrot.lane.b32.xlu0 %v2338, 57
      %v2579 = vpop.permute.xlu0 %2578
      %2580 = vrot.lane.b32.xlu0 %v2339, 57
      %v2581 = vpop.permute.xlu0 %2580
      %2582 = vrot.lane.b32.xlu0 %v2340, 57
      %v2583 = vpop.permute.xlu0 %2582
      %2584 = vrot.lane.b32.xlu0 %v2341, 57
      %v2585 = vpop.permute.xlu0 %2584
      %2586 = vrot.lane.b32.xlu0 %v2342, 57
      %v2587 = vpop.permute.xlu0 %2586
      %2588 = vrot.lane.b32.xlu0 %v2343, 57
      %v2589 = vpop.permute.xlu0 %2588
      %v2590 = vsel %vm1380, %v2569, %v2571
      %v2591 = vsel %vm1380, %v2571, %v2573
      %v2592 = vsel %vm1380, %v2573, %v2575
      %v2593 = vsel %vm1380, %v2575, %v2577
      %v2594 = vsel %vm1380, %v2577, %v2579
      %v2595 = vsel %vm1380, %v2579, %v2581
      %v2596 = vsel %vm1380, %v2581, %v2583
      %v2597 = vsel %vm1380, %v2583, %v2585
      %v2598 = vsel %vm1380, %v2585, %v2587
      %v2599 = vsel %vm1380, %v2587, %v2589
      %2600 = vrot.lane.b32.xlu0 %v2333, 56
      %v2601 = vpop.permute.xlu0 %2600
      %2602 = vrot.lane.b32.xlu0 %v2334, 56
      %v2603 = vpop.permute.xlu0 %2602
      %2604 = vrot.lane.b32.xlu0 %v2335, 56
      %v2605 = vpop.permute.xlu0 %2604
      %2606 = vrot.lane.b32.xlu0 %v2336, 56
      %v2607 = vpop.permute.xlu0 %2606
      %2608 = vrot.lane.b32.xlu0 %v2337, 56
      %v2609 = vpop.permute.xlu0 %2608
      %2610 = vrot.lane.b32.xlu0 %v2338, 56
      %v2611 = vpop.permute.xlu0 %2610
      %2612 = vrot.lane.b32.xlu0 %v2339, 56
      %v2613 = vpop.permute.xlu0 %2612
      %2614 = vrot.lane.b32.xlu0 %v2340, 56
      %v2615 = vpop.permute.xlu0 %2614
      %2616 = vrot.lane.b32.xlu0 %v2341, 56
      %v2617 = vpop.permute.xlu0 %2616
      %2618 = vrot.lane.b32.xlu0 %v2342, 56
      %v2619 = vpop.permute.xlu0 %2618
      %2620 = vrot.lane.b32.xlu0 %v2343, 56
      %v2621 = vpop.permute.xlu0 %2620
      %v2622 = vsel %vm1413, %v2601, %v2603
      %v2623 = vsel %vm1413, %v2603, %v2605
      %v2624 = vsel %vm1413, %v2605, %v2607
      %v2625 = vsel %vm1413, %v2607, %v2609
      %v2626 = vsel %vm1413, %v2609, %v2611
      %v2627 = vsel %vm1413, %v2611, %v2613
      %v2628 = vsel %vm1413, %v2613, %v2615
      %v2629 = vsel %vm1413, %v2615, %v2617
      %v2630 = vsel %vm1413, %v2617, %v2619
      %v2631 = vsel %vm1413, %v2619, %v2621
      %2632 = vrot.lane.b32.xlu0 %v2333, 55
      %v2633 = vpop.permute.xlu0 %2632
      %2634 = vrot.lane.b32.xlu0 %v2334, 55
      %v2635 = vpop.permute.xlu0 %2634
      %2636 = vrot.lane.b32.xlu0 %v2335, 55
      %v2637 = vpop.permute.xlu0 %2636
      %2638 = vrot.lane.b32.xlu0 %v2336, 55
      %v2639 = vpop.permute.xlu0 %2638
      %2640 = vrot.lane.b32.xlu0 %v2337, 55
      %v2641 = vpop.permute.xlu0 %2640
      %2642 = vrot.lane.b32.xlu0 %v2338, 55
      %v2643 = vpop.permute.xlu0 %2642
      %2644 = vrot.lane.b32.xlu0 %v2339, 55
      %v2645 = vpop.permute.xlu0 %2644
      %2646 = vrot.lane.b32.xlu0 %v2340, 55
      %v2647 = vpop.permute.xlu0 %2646
      %2648 = vrot.lane.b32.xlu0 %v2341, 55
      %v2649 = vpop.permute.xlu0 %2648
      %2650 = vrot.lane.b32.xlu0 %v2342, 55
      %v2651 = vpop.permute.xlu0 %2650
      %2652 = vrot.lane.b32.xlu0 %v2343, 55
      %v2653 = vpop.permute.xlu0 %2652
      %v2654 = vsel %vm1446, %v2633, %v2635
      %v2655 = vsel %vm1446, %v2635, %v2637
      %v2656 = vsel %vm1446, %v2637, %v2639
      %v2657 = vsel %vm1446, %v2639, %v2641
      %v2658 = vsel %vm1446, %v2641, %v2643
      %v2659 = vsel %vm1446, %v2643, %v2645
      %v2660 = vsel %vm1446, %v2645, %v2647
      %v2661 = vsel %vm1446, %v2647, %v2649
      %v2662 = vsel %vm1446, %v2649, %v2651
      %v2663 = vsel %vm1446, %v2651, %v2653
      %2664 = vrot.lane.b32.xlu0 %v2333, 54
      %v2665 = vpop.permute.xlu0 %2664
      %2666 = vrot.lane.b32.xlu0 %v2334, 54
      %v2667 = vpop.permute.xlu0 %2666
      %2668 = vrot.lane.b32.xlu0 %v2335, 54
      %v2669 = vpop.permute.xlu0 %2668
      %2670 = vrot.lane.b32.xlu0 %v2336, 54
      %v2671 = vpop.permute.xlu0 %2670
      %2672 = vrot.lane.b32.xlu0 %v2337, 54
      %v2673 = vpop.permute.xlu0 %2672
      %2674 = vrot.lane.b32.xlu0 %v2338, 54
      %v2675 = vpop.permute.xlu0 %2674
      %2676 = vrot.lane.b32.xlu0 %v2339, 54
      %v2677 = vpop.permute.xlu0 %2676
      %2678 = vrot.lane.b32.xlu0 %v2340, 54
      %v2679 = vpop.permute.xlu0 %2678
      %2680 = vrot.lane.b32.xlu0 %v2341, 54
      %v2681 = vpop.permute.xlu0 %2680
      %2682 = vrot.lane.b32.xlu0 %v2342, 54
      %v2683 = vpop.permute.xlu0 %2682
      %2684 = vrot.lane.b32.xlu0 %v2343, 54
      %v2685 = vpop.permute.xlu0 %2684
      %v2686 = vsel %vm1479, %v2665, %v2667
      %v2687 = vsel %vm1479, %v2667, %v2669
      %v2688 = vsel %vm1479, %v2669, %v2671
      %v2689 = vsel %vm1479, %v2671, %v2673
      %v2690 = vsel %vm1479, %v2673, %v2675
      %v2691 = vsel %vm1479, %v2675, %v2677
      %v2692 = vsel %vm1479, %v2677, %v2679
      %v2693 = vsel %vm1479, %v2679, %v2681
      %v2694 = vsel %vm1479, %v2681, %v2683
      %v2695 = vsel %vm1479, %v2683, %v2685
      %s2696 = scalar_lea.vmem %s253, 32
      %v2697 = vld [vmem:[%s2696] sm:$0xff]
      %v2698 = vld [vmem:[%s2696 + $0x8] sm:$0xff]
      %v2701 = vunpack.c.l.b16 %v2697
      %v2702 = vunpack.c.h.b16 %v2697
      %v2703 = vunpack.c.l.b16 %v2698
      %v2704 = vunpack.c.h.b16 %v2698
      %v2705 = vpack.c.b16 %v2703, %v2701
      %v2706 = vpack.c.b16 %v2704, %v2702
      %2708 = vrot.lane.b32.xlu0 %v336, 9
      %v2709 = vpop.permute.xlu0 %2708
      %2710 = vrot.lane.b32.xlu0 %v337, 9
      %v2711 = vpop.permute.xlu0 %2710
      %2712 = vrot.lane.b32.xlu0 %v338, 9
      %v2713 = vpop.permute.xlu0 %2712
      %2714 = vrot.lane.b32.xlu0 %v339, 9
      %v2715 = vpop.permute.xlu0 %2714
      %2716 = vrot.lane.b32.xlu0 %v340, 9
      %v2717 = vpop.permute.xlu0 %2716
      %2718 = vrot.lane.b32.xlu0 %v341, 9
      %v2719 = vpop.permute.xlu0 %2718
      %2720 = vrot.lane.b32.xlu0 %v342, 9
      %v2721 = vpop.permute.xlu0 %2720
      %2722 = vrot.lane.b32.xlu0 %v343, 9
      %v2723 = vpop.permute.xlu0 %2722
      %2724 = vrot.lane.b32.xlu0 %v344, 9
      %v2725 = vpop.permute.xlu0 %2724
      %2726 = vrot.lane.b32.xlu0 %v345, 9
      %v2727 = vpop.permute.xlu0 %2726
      %2728 = vrot.lane.b32.xlu0 %v360, 9
      %v2729 = vpop.permute.xlu0 %2728
      %2730 = vrot.lane.b32.xlu0 %v384, 9
      %v2731 = vpop.permute.xlu0 %2730
      %2732 = vrot.lane.b32.xlu0 %v385, 9
      %v2733 = vpop.permute.xlu0 %2732
      %2734 = vrot.lane.b32.xlu0 %v386, 9
      %v2735 = vpop.permute.xlu0 %2734
      %2736 = vrot.lane.b32.xlu0 %v387, 9
      %v2737 = vpop.permute.xlu0 %2736
      %2738 = vrot.lane.b32.xlu0 %v388, 9
      %v2739 = vpop.permute.xlu0 %2738
      %2740 = vrot.lane.b32.xlu0 %v389, 9
      %v2741 = vpop.permute.xlu0 %2740
      %2742 = vrot.lane.b32.xlu0 %v390, 9
      %v2743 = vpop.permute.xlu0 %2742
      %2744 = vrot.lane.b32.xlu0 %v391, 9
      %v2745 = vpop.permute.xlu0 %2744
      %2746 = vrot.lane.b32.xlu0 %v392, 9
      %v2747 = vpop.permute.xlu0 %2746
      %2748 = vrot.lane.b32.xlu0 %v393, 9
      %v2749 = vpop.permute.xlu0 %2748
      %2750 = vrot.lane.b32.xlu0 %v382, 9
      %v2751 = vpop.permute.xlu0 %2750
      %2752 = vrot.lane.b32.xlu0 %v2345, 9
      %v2753 = vpop.permute.xlu0 %2752
      %2754 = vrot.lane.b32.xlu0 %v2366, 9
      %v2755 = vpop.permute.xlu0 %2754
      %2756 = vrot.lane.b32.xlu0 %v2367, 9
      %v2757 = vpop.permute.xlu0 %2756
      %2758 = vrot.lane.b32.xlu0 %v2368, 9
      %v2759 = vpop.permute.xlu0 %2758
      %2760 = vrot.lane.b32.xlu0 %v2369, 9
      %v2761 = vpop.permute.xlu0 %2760
      %2762 = vrot.lane.b32.xlu0 %v2370, 9
      %v2763 = vpop.permute.xlu0 %2762
      %2764 = vrot.lane.b32.xlu0 %v2371, 9
      %v2765 = vpop.permute.xlu0 %2764
      %2766 = vrot.lane.b32.xlu0 %v2372, 9
      %v2767 = vpop.permute.xlu0 %2766
      %2768 = vrot.lane.b32.xlu0 %v2373, 9
      %v2769 = vpop.permute.xlu0 %2768
      %2770 = vrot.lane.b32.xlu0 %v2374, 9
      %v2771 = vpop.permute.xlu0 %2770
      %2772 = vrot.lane.b32.xlu0 %v2375, 9
      %v2773 = vpop.permute.xlu0 %2772
      %2774 = vrot.lane.b32.xlu0 %v2377, 9
      %v2775 = vpop.permute.xlu0 %2774
      %2776 = vrot.lane.b32.xlu0 %v2398, 9
      %v2777 = vpop.permute.xlu0 %2776
      %2778 = vrot.lane.b32.xlu0 %v2399, 9
      %v2779 = vpop.permute.xlu0 %2778
      %2780 = vrot.lane.b32.xlu0 %v2400, 9
      %v2781 = vpop.permute.xlu0 %2780
      %2782 = vrot.lane.b32.xlu0 %v2401, 9
      %v2783 = vpop.permute.xlu0 %2782
      %2784 = vrot.lane.b32.xlu0 %v2402, 9
      %v2785 = vpop.permute.xlu0 %2784
      %2786 = vrot.lane.b32.xlu0 %v2403, 9
      %v2787 = vpop.permute.xlu0 %2786
      %2788 = vrot.lane.b32.xlu0 %v2404, 9
      %v2789 = vpop.permute.xlu0 %2788
      %2790 = vrot.lane.b32.xlu0 %v2405, 9
      %v2791 = vpop.permute.xlu0 %2790
      %2792 = vrot.lane.b32.xlu0 %v2406, 9
      %v2793 = vpop.permute.xlu0 %2792
      %2794 = vrot.lane.b32.xlu0 %v2407, 9
      %v2795 = vpop.permute.xlu0 %2794
      %2796 = vrot.lane.b32.xlu0 %v2409, 9
      %v2797 = vpop.permute.xlu0 %2796
      %2798 = vrot.lane.b32.xlu0 %v2430, 9
      %v2799 = vpop.permute.xlu0 %2798
      %2800 = vrot.lane.b32.xlu0 %v2431, 9
      %v2801 = vpop.permute.xlu0 %2800
      %2802 = vrot.lane.b32.xlu0 %v2432, 9
      %v2803 = vpop.permute.xlu0 %2802
      %2804 = vrot.lane.b32.xlu0 %v2433, 9
      %v2805 = vpop.permute.xlu0 %2804
      %2806 = vrot.lane.b32.xlu0 %v2434, 9
      %v2807 = vpop.permute.xlu0 %2806
      %2808 = vrot.lane.b32.xlu0 %v2435, 9
      %v2809 = vpop.permute.xlu0 %2808
      %2810 = vrot.lane.b32.xlu0 %v2436, 9
      %v2811 = vpop.permute.xlu0 %2810
      %2812 = vrot.lane.b32.xlu0 %v2437, 9
      %v2813 = vpop.permute.xlu0 %2812
      %2814 = vrot.lane.b32.xlu0 %v2438, 9
      %v2815 = vpop.permute.xlu0 %2814
      %2816 = vrot.lane.b32.xlu0 %v2439, 9
      %v2817 = vpop.permute.xlu0 %2816
      %2818 = vrot.lane.b32.xlu0 %v2441, 9
      %v2819 = vpop.permute.xlu0 %2818
      %2820 = vrot.lane.b32.xlu0 %v2462, 9
      %v2821 = vpop.permute.xlu0 %2820
      %2822 = vrot.lane.b32.xlu0 %v2463, 9
      %v2823 = vpop.permute.xlu0 %2822
      %2824 = vrot.lane.b32.xlu0 %v2464, 9
      %v2825 = vpop.permute.xlu0 %2824
      %2826 = vrot.lane.b32.xlu0 %v2465, 9
      %v2827 = vpop.permute.xlu0 %2826
      %2828 = vrot.lane.b32.xlu0 %v2466, 9
      %v2829 = vpop.permute.xlu0 %2828
      %2830 = vrot.lane.b32.xlu0 %v2467, 9
      %v2831 = vpop.permute.xlu0 %2830
      %2832 = vrot.lane.b32.xlu0 %v2468, 9
      %v2833 = vpop.permute.xlu0 %2832
      %2834 = vrot.lane.b32.xlu0 %v2469, 9
      %v2835 = vpop.permute.xlu0 %2834
      %2836 = vrot.lane.b32.xlu0 %v2470, 9
      %v2837 = vpop.permute.xlu0 %2836
      %2838 = vrot.lane.b32.xlu0 %v2471, 9
      %v2839 = vpop.permute.xlu0 %2838
      %2840 = vrot.lane.b32.xlu0 %v2473, 9
      %v2841 = vpop.permute.xlu0 %2840
      %2842 = vrot.lane.b32.xlu0 %v2494, 9
      %v2843 = vpop.permute.xlu0 %2842
      %2844 = vrot.lane.b32.xlu0 %v2495, 9
      %v2845 = vpop.permute.xlu0 %2844
      %2846 = vrot.lane.b32.xlu0 %v2496, 9
      %v2847 = vpop.permute.xlu0 %2846
      %2848 = vrot.lane.b32.xlu0 %v2497, 9
      %v2849 = vpop.permute.xlu0 %2848
      %2850 = vrot.lane.b32.xlu0 %v2498, 9
      %v2851 = vpop.permute.xlu0 %2850
      %2852 = vrot.lane.b32.xlu0 %v2499, 9
      %v2853 = vpop.permute.xlu0 %2852
      %2854 = vrot.lane.b32.xlu0 %v2500, 9
      %v2855 = vpop.permute.xlu0 %2854
      %2856 = vrot.lane.b32.xlu0 %v2501, 9
      %v2857 = vpop.permute.xlu0 %2856
      %2858 = vrot.lane.b32.xlu0 %v2502, 9
      %v2859 = vpop.permute.xlu0 %2858
      %2860 = vrot.lane.b32.xlu0 %v2503, 9
      %v2861 = vpop.permute.xlu0 %2860
      %2862 = vrot.lane.b32.xlu0 %v2505, 9
      %v2863 = vpop.permute.xlu0 %2862
      %2864 = vrot.lane.b32.xlu0 %v2526, 9
      %v2865 = vpop.permute.xlu0 %2864
      %2866 = vrot.lane.b32.xlu0 %v2527, 9
      %v2867 = vpop.permute.xlu0 %2866
      %2868 = vrot.lane.b32.xlu0 %v2528, 9
      %v2869 = vpop.permute.xlu0 %2868
      %2870 = vrot.lane.b32.xlu0 %v2529, 9
      %v2871 = vpop.permute.xlu0 %2870
      %2872 = vrot.lane.b32.xlu0 %v2530, 9
      %v2873 = vpop.permute.xlu0 %2872
      %2874 = vrot.lane.b32.xlu0 %v2531, 9
      %v2875 = vpop.permute.xlu0 %2874
      %2876 = vrot.lane.b32.xlu0 %v2532, 9
      %v2877 = vpop.permute.xlu0 %2876
      %2878 = vrot.lane.b32.xlu0 %v2533, 9
      %v2879 = vpop.permute.xlu0 %2878
      %2880 = vrot.lane.b32.xlu0 %v2534, 9
      %v2881 = vpop.permute.xlu0 %2880
      %2882 = vrot.lane.b32.xlu0 %v2535, 9
      %v2883 = vpop.permute.xlu0 %2882
      %2884 = vrot.lane.b32.xlu0 %v2537, 9
      %v2885 = vpop.permute.xlu0 %2884
      %2886 = vrot.lane.b32.xlu0 %v2558, 9
      %v2887 = vpop.permute.xlu0 %2886
      %2888 = vrot.lane.b32.xlu0 %v2559, 9
      %v2889 = vpop.permute.xlu0 %2888
      %2890 = vrot.lane.b32.xlu0 %v2560, 9
      %v2891 = vpop.permute.xlu0 %2890
      %2892 = vrot.lane.b32.xlu0 %v2561, 9
      %v2893 = vpop.permute.xlu0 %2892
      %2894 = vrot.lane.b32.xlu0 %v2562, 9
      %v2895 = vpop.permute.xlu0 %2894
      %2896 = vrot.lane.b32.xlu0 %v2563, 9
      %v2897 = vpop.permute.xlu0 %2896
      %2898 = vrot.lane.b32.xlu0 %v2564, 9
      %v2899 = vpop.permute.xlu0 %2898
      %2900 = vrot.lane.b32.xlu0 %v2565, 9
      %v2901 = vpop.permute.xlu0 %2900
      %2902 = vrot.lane.b32.xlu0 %v2566, 9
      %v2903 = vpop.permute.xlu0 %2902
      %2904 = vrot.lane.b32.xlu0 %v2567, 9
      %v2905 = vpop.permute.xlu0 %2904
      %2906 = vrot.lane.b32.xlu0 %v2569, 9
      %v2907 = vpop.permute.xlu0 %2906
      %2908 = vrot.lane.b32.xlu0 %v2590, 9
      %v2909 = vpop.permute.xlu0 %2908
      %2910 = vrot.lane.b32.xlu0 %v2591, 9
      %v2911 = vpop.permute.xlu0 %2910
      %2912 = vrot.lane.b32.xlu0 %v2592, 9
      %v2913 = vpop.permute.xlu0 %2912
      %2914 = vrot.lane.b32.xlu0 %v2593, 9
      %v2915 = vpop.permute.xlu0 %2914
      %2916 = vrot.lane.b32.xlu0 %v2594, 9
      %v2917 = vpop.permute.xlu0 %2916
      %2918 = vrot.lane.b32.xlu0 %v2595, 9
      %v2919 = vpop.permute.xlu0 %2918
      %2920 = vrot.lane.b32.xlu0 %v2596, 9
      %v2921 = vpop.permute.xlu0 %2920
      %2922 = vrot.lane.b32.xlu0 %v2597, 9
      %v2923 = vpop.permute.xlu0 %2922
      %2924 = vrot.lane.b32.xlu0 %v2598, 9
      %v2925 = vpop.permute.xlu0 %2924
      %2926 = vrot.lane.b32.xlu0 %v2599, 9
      %v2927 = vpop.permute.xlu0 %2926
      %2928 = vrot.lane.b32.xlu0 %v2601, 9
      %v2929 = vpop.permute.xlu0 %2928
      %2930 = vrot.lane.b32.xlu0 %v2622, 9
      %v2931 = vpop.permute.xlu0 %2930
      %2932 = vrot.lane.b32.xlu0 %v2623, 9
      %v2933 = vpop.permute.xlu0 %2932
      %2934 = vrot.lane.b32.xlu0 %v2624, 9
      %v2935 = vpop.permute.xlu0 %2934
      %2936 = vrot.lane.b32.xlu0 %v2625, 9
      %v2937 = vpop.permute.xlu0 %2936
      %2938 = vrot.lane.b32.xlu0 %v2626, 9
      %v2939 = vpop.permute.xlu0 %2938
      %2940 = vrot.lane.b32.xlu0 %v2627, 9
      %v2941 = vpop.permute.xlu0 %2940
      %2942 = vrot.lane.b32.xlu0 %v2628, 9
      %v2943 = vpop.permute.xlu0 %2942
      %2944 = vrot.lane.b32.xlu0 %v2629, 9
      %v2945 = vpop.permute.xlu0 %2944
      %2946 = vrot.lane.b32.xlu0 %v2630, 9
      %v2947 = vpop.permute.xlu0 %2946
      %2948 = vrot.lane.b32.xlu0 %v2631, 9
      %v2949 = vpop.permute.xlu0 %2948
      %2950 = vrot.lane.b32.xlu0 %v2633, 9
      %v2951 = vpop.permute.xlu0 %2950
      %2952 = vrot.lane.b32.xlu0 %v2654, 9
      %v2953 = vpop.permute.xlu0 %2952
      %2954 = vrot.lane.b32.xlu0 %v2655, 9
      %v2955 = vpop.permute.xlu0 %2954
      %2956 = vrot.lane.b32.xlu0 %v2656, 9
      %v2957 = vpop.permute.xlu0 %2956
      %2958 = vrot.lane.b32.xlu0 %v2657, 9
      %v2959 = vpop.permute.xlu0 %2958
      %2960 = vrot.lane.b32.xlu0 %v2658, 9
      %v2961 = vpop.permute.xlu0 %2960
      %2962 = vrot.lane.b32.xlu0 %v2659, 9
      %v2963 = vpop.permute.xlu0 %2962
      %2964 = vrot.lane.b32.xlu0 %v2660, 9
      %v2965 = vpop.permute.xlu0 %2964
      %2966 = vrot.lane.b32.xlu0 %v2661, 9
      %v2967 = vpop.permute.xlu0 %2966
      %2968 = vrot.lane.b32.xlu0 %v2662, 9
      %v2969 = vpop.permute.xlu0 %2968
      %2970 = vrot.lane.b32.xlu0 %v2663, 9
      %v2971 = vpop.permute.xlu0 %2970
      %2972 = vrot.lane.b32.xlu0 %v2665, 9
      %v2973 = vpop.permute.xlu0 %2972
      %2974 = vrot.lane.b32.xlu0 %v2686, 9
      %v2975 = vpop.permute.xlu0 %2974
      %2976 = vrot.lane.b32.xlu0 %v2687, 9
      %v2977 = vpop.permute.xlu0 %2976
      %2978 = vrot.lane.b32.xlu0 %v2688, 9
      %v2979 = vpop.permute.xlu0 %2978
      %2980 = vrot.lane.b32.xlu0 %v2689, 9
      %v2981 = vpop.permute.xlu0 %2980
      %2982 = vrot.lane.b32.xlu0 %v2690, 9
      %v2983 = vpop.permute.xlu0 %2982
      %2984 = vrot.lane.b32.xlu0 %v2691, 9
      %v2985 = vpop.permute.xlu0 %2984
      %2986 = vrot.lane.b32.xlu0 %v2692, 9
      %v2987 = vpop.permute.xlu0 %2986
      %2988 = vrot.lane.b32.xlu0 %v2693, 9
      %v2989 = vpop.permute.xlu0 %2988
      %2990 = vrot.lane.b32.xlu0 %v2694, 9
      %v2991 = vpop.permute.xlu0 %2990
      %2992 = vrot.lane.b32.xlu0 %v2695, 9
      %v2993 = vpop.permute.xlu0 %2992
      %vm2994 = vcmask 72704
      %v2995 = vsel %vm2994, %v2709, %v2711
      %v2996 = vsel %vm2994, %v2711, %v2713
      %v2997 = vsel %vm2994, %v2713, %v2715
      %v2998 = vsel %vm2994, %v2715, %v2717
      %v2999 = vsel %vm2994, %v2717, %v2719
      %v3000 = vsel %vm2994, %v2719, %v2721
      %v3001 = vsel %vm2994, %v2721, %v2723
      %v3002 = vsel %vm2994, %v2723, %v2725
      %v3003 = vsel %vm2994, %v2725, %v2727
      %v3004 = vsel %vm2994, %v2727, %v2729
      %v3005 = vsel %vm2994, %v2731, %v2733
      %v3006 = vsel %vm2994, %v2733, %v2735
      %v3007 = vsel %vm2994, %v2735, %v2737
      %v3008 = vsel %vm2994, %v2737, %v2739
      %v3009 = vsel %vm2994, %v2739, %v2741
      %v3010 = vsel %vm2994, %v2741, %v2743
      %v3011 = vsel %vm2994, %v2743, %v2745
      %v3012 = vsel %vm2994, %v2745, %v2747
      %v3013 = vsel %vm2994, %v2747, %v2749
      %v3014 = vsel %vm2994, %v2749, %v2751
      %v3015 = vsel %vm2994, %v2753, %v2755
      %v3016 = vsel %vm2994, %v2755, %v2757
      %v3017 = vsel %vm2994, %v2757, %v2759
      %v3018 = vsel %vm2994, %v2759, %v2761
      %v3019 = vsel %vm2994, %v2761, %v2763
      %v3020 = vsel %vm2994, %v2763, %v2765
      %v3021 = vsel %vm2994, %v2765, %v2767
      %v3022 = vsel %vm2994, %v2767, %v2769
      %v3023 = vsel %vm2994, %v2769, %v2771
      %v3024 = vsel %vm2994, %v2771, %v2773
      %v3025 = vsel %vm2994, %v2775, %v2777
      %v3026 = vsel %vm2994, %v2777, %v2779
      %v3027 = vsel %vm2994, %v2779, %v2781
      %v3028 = vsel %vm2994, %v2781, %v2783
      %v3029 = vsel %vm2994, %v2783, %v2785
      %v3030 = vsel %vm2994, %v2785, %v2787
      %v3031 = vsel %vm2994, %v2787, %v2789
      %v3032 = vsel %vm2994, %v2789, %v2791
      %v3033 = vsel %vm2994, %v2791, %v2793
      %v3034 = vsel %vm2994, %v2793, %v2795
      %v3035 = vsel %vm2994, %v2797, %v2799
      %v3036 = vsel %vm2994, %v2799, %v2801
      %v3037 = vsel %vm2994, %v2801, %v2803
      %v3038 = vsel %vm2994, %v2803, %v2805
      %v3039 = vsel %vm2994, %v2805, %v2807
      %v3040 = vsel %vm2994, %v2807, %v2809
      %v3041 = vsel %vm2994, %v2809, %v2811
      %v3042 = vsel %vm2994, %v2811, %v2813
      %v3043 = vsel %vm2994, %v2813, %v2815
      %v3044 = vsel %vm2994, %v2815, %v2817
      %v3045 = vsel %vm2994, %v2819, %v2821
      %v3046 = vsel %vm2994, %v2821, %v2823
      %v3047 = vsel %vm2994, %v2823, %v2825
      %v3048 = vsel %vm2994, %v2825, %v2827
      %v3049 = vsel %vm2994, %v2827, %v2829
      %v3050 = vsel %vm2994, %v2829, %v2831
      %v3051 = vsel %vm2994, %v2831, %v2833
      %v3052 = vsel %vm2994, %v2833, %v2835
      %v3053 = vsel %vm2994, %v2835, %v2837
      %v3054 = vsel %vm2994, %v2837, %v2839
      %v3055 = vsel %vm2994, %v2841, %v2843
      %v3056 = vsel %vm2994, %v2843, %v2845
      %v3057 = vsel %vm2994, %v2845, %v2847
      %v3058 = vsel %vm2994, %v2847, %v2849
      %v3059 = vsel %vm2994, %v2849, %v2851
      %v3060 = vsel %vm2994, %v2851, %v2853
      %v3061 = vsel %vm2994, %v2853, %v2855
      %v3062 = vsel %vm2994, %v2855, %v2857
      %v3063 = vsel %vm2994, %v2857, %v2859
      %v3064 = vsel %vm2994, %v2859, %v2861
      %v3065 = vsel %vm2994, %v2863, %v2865
      %v3066 = vsel %vm2994, %v2865, %v2867
      %v3067 = vsel %vm2994, %v2867, %v2869
      %v3068 = vsel %vm2994, %v2869, %v2871
      %v3069 = vsel %vm2994, %v2871, %v2873
      %v3070 = vsel %vm2994, %v2873, %v2875
      %v3071 = vsel %vm2994, %v2875, %v2877
      %v3072 = vsel %vm2994, %v2877, %v2879
      %v3073 = vsel %vm2994, %v2879, %v2881
      %v3074 = vsel %vm2994, %v2881, %v2883
      %v3075 = vsel %vm2994, %v2885, %v2887
      %v3076 = vsel %vm2994, %v2887, %v2889
      %v3077 = vsel %vm2994, %v2889, %v2891
      %v3078 = vsel %vm2994, %v2891, %v2893
      %v3079 = vsel %vm2994, %v2893, %v2895
      %v3080 = vsel %vm2994, %v2895, %v2897
      %v3081 = vsel %vm2994, %v2897, %v2899
      %v3082 = vsel %vm2994, %v2899, %v2901
      %v3083 = vsel %vm2994, %v2901, %v2903
      %v3084 = vsel %vm2994, %v2903, %v2905
      %v3085 = vsel %vm2994, %v2907, %v2909
      %v3086 = vsel %vm2994, %v2909, %v2911
      %v3087 = vsel %vm2994, %v2911, %v2913
      %v3088 = vsel %vm2994, %v2913, %v2915
      %v3089 = vsel %vm2994, %v2915, %v2917
      %v3090 = vsel %vm2994, %v2917, %v2919
      %v3091 = vsel %vm2994, %v2919, %v2921
      %v3092 = vsel %vm2994, %v2921, %v2923
      %v3093 = vsel %vm2994, %v2923, %v2925
      %v3094 = vsel %vm2994, %v2925, %v2927
      %v3095 = vsel %vm2994, %v2929, %v2931
      %v3096 = vsel %vm2994, %v2931, %v2933
      %v3097 = vsel %vm2994, %v2933, %v2935
      %v3098 = vsel %vm2994, %v2935, %v2937
      %v3099 = vsel %vm2994, %v2937, %v2939
      %v3100 = vsel %vm2994, %v2939, %v2941
      %v3101 = vsel %vm2994, %v2941, %v2943
      %v3102 = vsel %vm2994, %v2943, %v2945
      %v3103 = vsel %vm2994, %v2945, %v2947
      %v3104 = vsel %vm2994, %v2947, %v2949
      %v3105 = vsel %vm2994, %v2951, %v2953
      %v3106 = vsel %vm2994, %v2953, %v2955
      %v3107 = vsel %vm2994, %v2955, %v2957
      %v3108 = vsel %vm2994, %v2957, %v2959
      %v3109 = vsel %vm2994, %v2959, %v2961
      %v3110 = vsel %vm2994, %v2961, %v2963
      %v3111 = vsel %vm2994, %v2963, %v2965
      %v3112 = vsel %vm2994, %v2965, %v2967
      %v3113 = vsel %vm2994, %v2967, %v2969
      %v3114 = vsel %vm2994, %v2969, %v2971
      %v3115 = vsel %vm2994, %v2973, %v2975
      %v3116 = vsel %vm2994, %v2975, %v2977
      %v3117 = vsel %vm2994, %v2977, %v2979
      %v3118 = vsel %vm2994, %v2979, %v2981
      %v3119 = vsel %vm2994, %v2981, %v2983
      %v3120 = vsel %vm2994, %v2983, %v2985
      %v3121 = vsel %vm2994, %v2985, %v2987
      %v3122 = vsel %vm2994, %v2987, %v2989
      %v3123 = vsel %vm2994, %v2989, %v2991
      %v3124 = vsel %vm2994, %v2991, %v2993
      %v3256 = vsel %vm888, %v2706, 0
      %3258 = vmatprep.subr.bf16.mxu0 %v2996
      %3259 = vmatpush1.bf16.msra.mxu0 %v2995
      %3260 = vmatprep.subr.bf16.mxu0 %v3006
      %3261 = vmatpush1.bf16.msra.mxu0 %v3005
      %3262 = vmatprep.subr.bf16.mxu0 %v3016
      %3263 = vmatpush1.bf16.msra.mxu0 %v3015
      %3264 = vmatprep.subr.bf16.mxu0 %v3026
      %3265 = vmatpush1.bf16.msra.mxu0 %v3025
      %3266 = vmatprep.subr.bf16.mxu0 %v3036
      %3267 = vmatpush1.bf16.msra.mxu0 %v3035
      %3268 = vmatprep.subr.bf16.mxu0 %v3046
      %3269 = vmatpush1.bf16.msra.mxu0 %v3045
      %3270 = vmatprep.subr.bf16.mxu0 %v3056
      %3271 = vmatpush1.bf16.msra.mxu0 %v3055
      %3272 = vmatprep.subr.bf16.mxu0 %v3066
      %3273 = vmatpush1.bf16.msra.mxu0 %v3065
      %3274 = vmatprep.subr.bf16.mxu0 %v3076
      %3275 = vmatpush1.bf16.msra.mxu0 %v3075
      %3276 = vmatprep.subr.bf16.mxu0 %v3086
      %3277 = vmatpush1.bf16.msra.mxu0 %v3085
      %3278 = vmatprep.subr.bf16.mxu0 %v3096
      %3279 = vmatpush1.bf16.msra.mxu0 %v3095
      %3280 = vmatprep.subr.bf16.mxu0 %v3106
      %3281 = vmatpush1.bf16.msra.mxu0 %v3105
      %3282 = vmatprep.subr.bf16.mxu0 %v3116
      %3283 = vmatpush1.bf16.msra.mxu0 %v3115
      %3284 = vmatprep.subr.bf16.mxu0 0
      %3285 = vmatpush1.bf16.msra.mxu0 0
      %3286 = vmatprep.subr.bf16.mxu0 0
      %3287 = vmatpush1.bf16.msra.mxu0 0
      %3288 = vmatprep.subr.bf16.mxu0 0
      %3289 = vmatpush1.bf16.msra.mxu0 0
      %3290 = vmatprep.mubr.bf16.mxu0 %v3256
      %3291 = vmatmul.mubr.bf16.gmra.mrb[0].mxu0 %v2705
      %v3292 = vpop.f32.mrb[0].mxu0
      %v3293 = vadd.f32 0.0, %v3292
      %v3294 = vpop.f32.mrb[0].mxu0
      %v3295 = vadd.f32 0.0, %v3294
      %v3296 = vpop.f32.mrb[0].mxu0
      %v3297 = vadd.f32 0.0, %v3296
      %v3298 = vpop.f32.mrb[0].mxu0
      %v3299 = vadd.f32 0.0, %v3298
      %3300 = vdwg.mxu0
      %3301 = vmatprep.subr.bf16.mxu0 %v2998
      %3302 = vmatpush1.bf16.msra.mxu0 %v2997
      %3303 = vmatprep.subr.bf16.mxu0 %v3008
      %3304 = vmatpush1.bf16.msra.mxu0 %v3007
      %3305 = vmatprep.subr.bf16.mxu0 %v3018
      %3306 = vmatpush1.bf16.msra.mxu0 %v3017
      %3307 = vmatprep.subr.bf16.mxu0 %v3028
      %3308 = vmatpush1.bf16.msra.mxu0 %v3027
      %3309 = vmatprep.subr.bf16.mxu0 %v3038
      %3310 = vmatpush1.bf16.msra.mxu0 %v3037
      %3311 = vmatprep.subr.bf16.mxu0 %v3048
      %3312 = vmatpush1.bf16.msra.mxu0 %v3047
      %3313 = vmatprep.subr.bf16.mxu0 %v3058
      %3314 = vmatpush1.bf16.msra.mxu0 %v3057
      %3315 = vmatprep.subr.bf16.mxu0 %v3068
      %3316 = vmatpush1.bf16.msra.mxu0 %v3067
      %3317 = vmatprep.subr.bf16.mxu0 %v3078
      %3318 = vmatpush1.bf16.msra.mxu0 %v3077
      %3319 = vmatprep.subr.bf16.mxu0 %v3088
      %3320 = vmatpush1.bf16.msra.mxu0 %v3087
      %3321 = vmatprep.subr.bf16.mxu0 %v3098
      %3322 = vmatpush1.bf16.msra.mxu0 %v3097
      %3323 = vmatprep.subr.bf16.mxu0 %v3108
      %3324 = vmatpush1.bf16.msra.mxu0 %v3107
      %3325 = vmatprep.subr.bf16.mxu0 %v3118
      %3326 = vmatpush1.bf16.msra.mxu0 %v3117
      %3327 = vmatprep.subr.bf16.mxu0 0
      %3328 = vmatpush1.bf16.msra.mxu0 0
      %3329 = vmatprep.subr.bf16.mxu0 0
      %3330 = vmatpush1.bf16.msra.mxu0 0
      %3331 = vmatprep.subr.bf16.mxu0 0
      %3332 = vmatpush1.bf16.msra.mxu0 0
      %3333 = vmatprep.mubr.bf16.mxu0 %v3256
      %3334 = vmatmul.mubr.bf16.gmra.mrb[0].mxu0 %v2705
      %v3335 = vpop.f32.mrb[0].mxu0
      %v3336 = vadd.f32 0.0, %v3335
      %v3337 = vpop.f32.mrb[0].mxu0
      %v3338 = vadd.f32 0.0, %v3337
      %v3339 = vpop.f32.mrb[0].mxu0
      %v3340 = vadd.f32 0.0, %v3339
      %v3341 = vpop.f32.mrb[0].mxu0
      %v3342 = vadd.f32 0.0, %v3341
      %3343 = vdwg.mxu0
      %3344 = vmatprep.subr.bf16.mxu0 %v3000
      %3345 = vmatpush1.bf16.msra.mxu0 %v2999
      %3346 = vmatprep.subr.bf16.mxu0 %v3010
      %3347 = vmatpush1.bf16.msra.mxu0 %v3009
      %3348 = vmatprep.subr.bf16.mxu0 %v3020
      %3349 = vmatpush1.bf16.msra.mxu0 %v3019
      %3350 = vmatprep.subr.bf16.mxu0 %v3030
      %3351 = vmatpush1.bf16.msra.mxu0 %v3029
      %3352 = vmatprep.subr.bf16.mxu0 %v3040
      %3353 = vmatpush1.bf16.msra.mxu0 %v3039
      %3354 = vmatprep.subr.bf16.mxu0 %v3050
      %3355 = vmatpush1.bf16.msra.mxu0 %v3049
      %3356 = vmatprep.subr.bf16.mxu0 %v3060
      %3357 = vmatpush1.bf16.msra.mxu0 %v3059
      %3358 = vmatprep.subr.bf16.mxu0 %v3070
      %3359 = vmatpush1.bf16.msra.mxu0 %v3069
      %3360 = vmatprep.subr.bf16.mxu0 %v3080
      %3361 = vmatpush1.bf16.msra.mxu0 %v3079
      %3362 = vmatprep.subr.bf16.mxu0 %v3090
      %3363 = vmatpush1.bf16.msra.mxu0 %v3089
      %3364 = vmatprep.subr.bf16.mxu0 %v3100
      %3365 = vmatpush1.bf16.msra.mxu0 %v3099
      %3366 = vmatprep.subr.bf16.mxu0 %v3110
      %3367 = vmatpush1.bf16.msra.mxu0 %v3109
      %3368 = vmatprep.subr.bf16.mxu0 %v3120
      %3369 = vmatpush1.bf16.msra.mxu0 %v3119
      %3370 = vmatprep.subr.bf16.mxu0 0
      %3371 = vmatpush1.bf16.msra.mxu0 0
      %3372 = vmatprep.subr.bf16.mxu0 0
      %3373 = vmatpush1.bf16.msra.mxu0 0
      %3374 = vmatprep.subr.bf16.mxu0 0
      %3375 = vmatpush1.bf16.msra.mxu0 0
      %3376 = vmatprep.mubr.bf16.mxu0 %v3256
      %3377 = vmatmul.mubr.bf16.gmra.mrb[0].mxu0 %v2705
      %v3378 = vpop.f32.mrb[0].mxu0
      %v3379 = vadd.f32 0.0, %v3378
      %v3380 = vpop.f32.mrb[0].mxu0
      %v3381 = vadd.f32 0.0, %v3380
      %v3382 = vpop.f32.mrb[0].mxu0
      %v3383 = vadd.f32 0.0, %v3382
      %v3384 = vpop.f32.mrb[0].mxu0
      %v3385 = vadd.f32 0.0, %v3384
      %3386 = vdwg.mxu0
      %3387 = vmatprep.subr.bf16.mxu0 %v3002
      %3388 = vmatpush1.bf16.msra.mxu0 %v3001
      %3389 = vmatprep.subr.bf16.mxu0 %v3012
      %3390 = vmatpush1.bf16.msra.mxu0 %v3011
      %3391 = vmatprep.subr.bf16.mxu0 %v3022
      %3392 = vmatpush1.bf16.msra.mxu0 %v3021
      %3393 = vmatprep.subr.bf16.mxu0 %v3032
      %3394 = vmatpush1.bf16.msra.mxu0 %v3031
      %3395 = vmatprep.subr.bf16.mxu0 %v3042
      %3396 = vmatpush1.bf16.msra.mxu0 %v3041
      %3397 = vmatprep.subr.bf16.mxu0 %v3052
      %3398 = vmatpush1.bf16.msra.mxu0 %v3051
      %3399 = vmatprep.subr.bf16.mxu0 %v3062
      %3400 = vmatpush1.bf16.msra.mxu0 %v3061
      %3401 = vmatprep.subr.bf16.mxu0 %v3072
      %3402 = vmatpush1.bf16.msra.mxu0 %v3071
      %3403 = vmatprep.subr.bf16.mxu0 %v3082
      %3404 = vmatpush1.bf16.msra.mxu0 %v3081
      %3405 = vmatprep.subr.bf16.mxu0 %v3092
      %3406 = vmatpush1.bf16.msra.mxu0 %v3091
      %3407 = vmatprep.subr.bf16.mxu0 %v3102
      %3408 = vmatpush1.bf16.msra.mxu0 %v3101
      %3409 = vmatprep.subr.bf16.mxu0 %v3112
      %3410 = vmatpush1.bf16.msra.mxu0 %v3111
      %3411 = vmatprep.subr.bf16.mxu0 %v3122
      %3412 = vmatpush1.bf16.msra.mxu0 %v3121
      %3413 = vmatprep.subr.bf16.mxu0 0
      %3414 = vmatpush1.bf16.msra.mxu0 0
      %3415 = vmatprep.subr.bf16.mxu0 0
      %3416 = vmatpush1.bf16.msra.mxu0 0
      %3417 = vmatprep.subr.bf16.mxu0 0
      %3418 = vmatpush1.bf16.msra.mxu0 0
      %3419 = vmatprep.mubr.bf16.mxu0 %v3256
      %3420 = vmatmul.mubr.bf16.gmra.mrb[0].mxu0 %v2705
      %v3421 = vpop.f32.mrb[0].mxu0
      %v3422 = vadd.f32 0.0, %v3421
      %v3423 = vpop.f32.mrb[0].mxu0
      %v3424 = vadd.f32 0.0, %v3423
      %v3425 = vpop.f32.mrb[0].mxu0
      %v3426 = vadd.f32 0.0, %v3425
      %v3427 = vpop.f32.mrb[0].mxu0
      %v3428 = vadd.f32 0.0, %v3427
      %3429 = vdwg.mxu0
      %3430 = vmatprep.subr.bf16.mxu0 %v3004
      %3431 = vmatpush1.bf16.msra.mxu0 %v3003
      %3432 = vmatprep.subr.bf16.mxu0 %v3014
      %3433 = vmatpush1.bf16.msra.mxu0 %v3013
      %3434 = vmatprep.subr.bf16.mxu0 %v3024
      %3435 = vmatpush1.bf16.msra.mxu0 %v3023
      %3436 = vmatprep.subr.bf16.mxu0 %v3034
      %3437 = vmatpush1.bf16.msra.mxu0 %v3033
      %3438 = vmatprep.subr.bf16.mxu0 %v3044
      %3439 = vmatpush1.bf16.msra.mxu0 %v3043
      %3440 = vmatprep.subr.bf16.mxu0 %v3054
      %3441 = vmatpush1.bf16.msra.mxu0 %v3053
      %3442 = vmatprep.subr.bf16.mxu0 %v3064
      %3443 = vmatpush1.bf16.msra.mxu0 %v3063
      %3444 = vmatprep.subr.bf16.mxu0 %v3074
      %3445 = vmatpush1.bf16.msra.mxu0 %v3073
      %3446 = vmatprep.subr.bf16.mxu0 %v3084
      %3447 = vmatpush1.bf16.msra.mxu0 %v3083
      %3448 = vmatprep.subr.bf16.mxu0 %v3094
      %3449 = vmatpush1.bf16.msra.mxu0 %v3093
      %3450 = vmatprep.subr.bf16.mxu0 %v3104
      %3451 = vmatpush1.bf16.msra.mxu0 %v3103
      %3452 = vmatprep.subr.bf16.mxu0 %v3114
      %3453 = vmatpush1.bf16.msra.mxu0 %v3113
      %3454 = vmatprep.subr.bf16.mxu0 %v3124
      %3455 = vmatpush1.bf16.msra.mxu0 %v3123
      %3456 = vmatprep.subr.bf16.mxu0 0
      %3457 = vmatpush1.bf16.msra.mxu0 0
      %3458 = vmatprep.subr.bf16.mxu0 0
      %3459 = vmatpush1.bf16.msra.mxu0 0
      %3460 = vmatprep.subr.bf16.mxu0 0
      %3461 = vmatpush1.bf16.msra.mxu0 0
      %3462 = vmatprep.mubr.bf16.mxu0 %v3256
      %3463 = vmatmul.mubr.bf16.gmra.mrb[0].mxu0 %v2705
      %v3464 = vpop.f32.mrb[0].mxu0
      %v3465 = vadd.f32 0.0, %v3464
      %v3466 = vpop.f32.mrb[0].mxu0
      %v3467 = vadd.f32 0.0, %v3466
      %v3468 = vpop.f32.mrb[0].mxu0
      %v3469 = vadd.f32 0.0, %v3468
      %v3470 = vpop.f32.mrb[0].mxu0
      %v3471 = vadd.f32 0.0, %v3470
      %3472 = vdwg.mxu0
      %v3473 = vadd.f32 %v2267, %v3293
      %v3474 = vadd.f32 %v2268, %v3295
      %v3475 = vadd.f32 %v2269, %v3336
      %v3476 = vadd.f32 %v2270, %v3338
      %v3477 = vadd.f32 %v2271, %v3379
      %v3478 = vadd.f32 %v2272, %v3381
      %v3479 = vadd.f32 %v2273, %v3422
      %v3480 = vadd.f32 %v2274, %v3424
      %v3481 = vadd.f32 %v2275, %v3465
      %v3482 = vadd.f32 %v2276, %v3467
      %v3483 = vadd.f32 %v2277, %v3297
      %v3484 = vadd.f32 %v2278, %v3299
      %v3485 = vadd.f32 %v2279, %v3340
      %v3486 = vadd.f32 %v2280, %v3342
      %v3487 = vadd.f32 %v2281, %v3383
      %v3488 = vadd.f32 %v2282, %v3385
      %v3489 = vadd.f32 %v2283, %v3426
      %v3490 = vadd.f32 %v2284, %v3428
      %v3491 = vadd.f32 %v2285, %v3469
      %v3492 = vadd.f32 %v2286, %v3471
      %3493 = vrot.lane.b32.xlu0 %v2333, 127
      %v3494 = vpop.permute.xlu0 %3493
      %3495 = vrot.lane.b32.xlu0 %v2334, 127
      %v3496 = vpop.permute.xlu0 %3495
      %3497 = vrot.lane.b32.xlu0 %v2335, 127
      %v3498 = vpop.permute.xlu0 %3497
      %3499 = vrot.lane.b32.xlu0 %v2336, 127
      %v3500 = vpop.permute.xlu0 %3499
      %3501 = vrot.lane.b32.xlu0 %v2337, 127
      %v3502 = vpop.permute.xlu0 %3501
      %3503 = vrot.lane.b32.xlu0 %v2338, 127
      %v3504 = vpop.permute.xlu0 %3503
      %3505 = vrot.lane.b32.xlu0 %v2339, 127
      %v3506 = vpop.permute.xlu0 %3505
      %3507 = vrot.lane.b32.xlu0 %v2340, 127
      %v3508 = vpop.permute.xlu0 %3507
      %3509 = vrot.lane.b32.xlu0 %v2341, 127
      %v3510 = vpop.permute.xlu0 %3509
      %3511 = vrot.lane.b32.xlu0 %v2342, 127
      %v3512 = vpop.permute.xlu0 %3511
      %3513 = vrot.lane.b32.xlu0 %v2343, 127
      %v3514 = vpop.permute.xlu0 %3513
      %v3515 = vsel %vm383, %v3494, %v3496
      %v3516 = vsel %vm383, %v3496, %v3498
      %v3517 = vsel %vm383, %v3498, %v3500
      %v3518 = vsel %vm383, %v3500, %v3502
      %v3519 = vsel %vm383, %v3502, %v3504
      %v3520 = vsel %vm383, %v3504, %v3506
      %v3521 = vsel %vm383, %v3506, %v3508
      %v3522 = vsel %vm383, %v3508, %v3510
      %v3523 = vsel %vm383, %v3510, %v3512
      %v3524 = vsel %vm383, %v3512, %v3514
      %3525 = vrot.lane.b32.xlu0 %v2333, 126
      %v3526 = vpop.permute.xlu0 %3525
      %3527 = vrot.lane.b32.xlu0 %v2334, 126
      %v3528 = vpop.permute.xlu0 %3527
      %3529 = vrot.lane.b32.xlu0 %v2335, 126
      %v3530 = vpop.permute.xlu0 %3529
      %3531 = vrot.lane.b32.xlu0 %v2336, 126
      %v3532 = vpop.permute.xlu0 %3531
      %3533 = vrot.lane.b32.xlu0 %v2337, 126
      %v3534 = vpop.permute.xlu0 %3533
      %3535 = vrot.lane.b32.xlu0 %v2338, 126
      %v3536 = vpop.permute.xlu0 %3535
      %3537 = vrot.lane.b32.xlu0 %v2339, 126
      %v3538 = vpop.permute.xlu0 %3537
      %3539 = vrot.lane.b32.xlu0 %v2340, 126
      %v3540 = vpop.permute.xlu0 %3539
      %3541 = vrot.lane.b32.xlu0 %v2341, 126
      %v3542 = vpop.permute.xlu0 %3541
      %3543 = vrot.lane.b32.xlu0 %v2342, 126
      %v3544 = vpop.permute.xlu0 %3543
      %3545 = vrot.lane.b32.xlu0 %v2343, 126
      %v3546 = vpop.permute.xlu0 %3545
      %v3547 = vsel %vm426, %v3526, %v3528
      %v3548 = vsel %vm426, %v3528, %v3530
      %v3549 = vsel %vm426, %v3530, %v3532
      %v3550 = vsel %vm426, %v3532, %v3534
      %v3551 = vsel %vm426, %v3534, %v3536
      %v3552 = vsel %vm426, %v3536, %v3538
      %v3553 = vsel %vm426, %v3538, %v3540
      %v3554 = vsel %vm426, %v3540, %v3542
      %v3555 = vsel %vm426, %v3542, %v3544
      %v3556 = vsel %vm426, %v3544, %v3546
      %3557 = vrot.lane.b32.xlu0 %v2333, 88
      %v3558 = vpop.permute.xlu0 %3557
      %3559 = vrot.lane.b32.xlu0 %v2334, 88
      %v3560 = vpop.permute.xlu0 %3559
      %3561 = vrot.lane.b32.xlu0 %v2335, 88
      %v3562 = vpop.permute.xlu0 %3561
      %3563 = vrot.lane.b32.xlu0 %v2336, 88
      %v3564 = vpop.permute.xlu0 %3563
      %3565 = vrot.lane.b32.xlu0 %v2337, 88
      %v3566 = vpop.permute.xlu0 %3565
      %3567 = vrot.lane.b32.xlu0 %v2338, 88
      %v3568 = vpop.permute.xlu0 %3567
      %3569 = vrot.lane.b32.xlu0 %v2339, 88
      %v3570 = vpop.permute.xlu0 %3569
      %3571 = vrot.lane.b32.xlu0 %v2340, 88
      %v3572 = vpop.permute.xlu0 %3571
      %3573 = vrot.lane.b32.xlu0 %v2341, 88
      %v3574 = vpop.permute.xlu0 %3573
      %3575 = vrot.lane.b32.xlu0 %v2342, 88
      %v3576 = vpop.permute.xlu0 %3575
      %3577 = vrot.lane.b32.xlu0 %v2343, 88
      %v3578 = vpop.permute.xlu0 %3577
      %v3579 = vsel %vm727, %v3558, %v3560
      %v3580 = vsel %vm727, %v3560, %v3562
      %v3581 = vsel %vm727, %v3562, %v3564
      %v3582 = vsel %vm727, %v3564, %v3566
      %v3583 = vsel %vm727, %v3566, %v3568
      %v3584 = vsel %vm727, %v3568, %v3570
      %v3585 = vsel %vm727, %v3570, %v3572
      %v3586 = vsel %vm727, %v3572, %v3574
      %v3587 = vsel %vm727, %v3574, %v3576
      %v3588 = vsel %vm727, %v3576, %v3578
      %3589 = vrot.lane.b32.xlu0 %v336, 66
      %v3590 = vpop.permute.xlu0 %3589
      %3591 = vrot.lane.b32.xlu0 %v337, 66
      %v3592 = vpop.permute.xlu0 %3591
      %3593 = vrot.lane.b32.xlu0 %v338, 66
      %v3594 = vpop.permute.xlu0 %3593
      %3595 = vrot.lane.b32.xlu0 %v339, 66
      %v3596 = vpop.permute.xlu0 %3595
      %3597 = vrot.lane.b32.xlu0 %v340, 66
      %v3598 = vpop.permute.xlu0 %3597
      %3599 = vrot.lane.b32.xlu0 %v341, 66
      %v3600 = vpop.permute.xlu0 %3599
      %3601 = vrot.lane.b32.xlu0 %v342, 66
      %v3602 = vpop.permute.xlu0 %3601
      %3603 = vrot.lane.b32.xlu0 %v343, 66
      %v3604 = vpop.permute.xlu0 %3603
      %3605 = vrot.lane.b32.xlu0 %v344, 66
      %v3606 = vpop.permute.xlu0 %3605
      %3607 = vrot.lane.b32.xlu0 %v345, 66
      %v3608 = vpop.permute.xlu0 %3607
      %vm3609 = vcmask 539648
      %v3610 = vsel %vm3609, %v3590, %v3592
      %v3611 = vsel %vm3609, %v3592, %v3594
      %v3612 = vsel %vm3609, %v3594, %v3596
      %v3613 = vsel %vm3609, %v3596, %v3598
      %v3614 = vsel %vm3609, %v3598, %v3600
      %v3615 = vsel %vm3609, %v3600, %v3602
      %v3616 = vsel %vm3609, %v3602, %v3604
      %v3617 = vsel %vm3609, %v3604, %v3606
      %v3618 = vsel %vm3609, %v3606, %v3608
      %s3619 = scalar_lea.vmem %s253, 48
      %v3620 = vld [vmem:[%s3619] sm:$0xff]
      %v3621 = vld [vmem:[%s3619 + $0x8] sm:$0xff]
      %v3624 = vunpack.c.l.b16 %v3620
      %v3625 = vunpack.c.h.b16 %v3620
      %v3626 = vunpack.c.l.b16 %v3621
      %v3627 = vunpack.c.h.b16 %v3621
      %v3628 = vpack.c.b16 %v3626, %v3624
      %v3629 = vpack.c.b16 %v3627, %v3625
      %3631 = vrot.lane.b32.xlu0 %v2333, 62
      %v3632 = vpop.permute.xlu0 %3631
      %3633 = vrot.lane.b32.xlu0 %v2334, 62
      %v3634 = vpop.permute.xlu0 %3633
      %3635 = vrot.lane.b32.xlu0 %v2335, 62
      %v3636 = vpop.permute.xlu0 %3635
      %3637 = vrot.lane.b32.xlu0 %v2336, 62
      %v3638 = vpop.permute.xlu0 %3637
      %3639 = vrot.lane.b32.xlu0 %v2337, 62
      %v3640 = vpop.permute.xlu0 %3639
      %3641 = vrot.lane.b32.xlu0 %v2338, 62
      %v3642 = vpop.permute.xlu0 %3641
      %3643 = vrot.lane.b32.xlu0 %v2339, 62
      %v3644 = vpop.permute.xlu0 %3643
      %3645 = vrot.lane.b32.xlu0 %v2340, 62
      %v3646 = vpop.permute.xlu0 %3645
      %3647 = vrot.lane.b32.xlu0 %v2341, 62
      %v3648 = vpop.permute.xlu0 %3647
      %3649 = vrot.lane.b32.xlu0 %v2342, 62
      %v3650 = vpop.permute.xlu0 %3649
      %3651 = vrot.lane.b32.xlu0 %v2343, 62
      %v3652 = vpop.permute.xlu0 %3651
      %3653 = vrot.lane.b32.xlu0 %v3515, 62
      %v3654 = vpop.permute.xlu0 %3653
      %3655 = vrot.lane.b32.xlu0 %v3516, 62
      %v3656 = vpop.permute.xlu0 %3655
      %3657 = vrot.lane.b32.xlu0 %v3517, 62
      %v3658 = vpop.permute.xlu0 %3657
      %3659 = vrot.lane.b32.xlu0 %v3518, 62
      %v3660 = vpop.permute.xlu0 %3659
      %3661 = vrot.lane.b32.xlu0 %v3519, 62
      %v3662 = vpop.permute.xlu0 %3661
      %3663 = vrot.lane.b32.xlu0 %v3520, 62
      %v3664 = vpop.permute.xlu0 %3663
      %3665 = vrot.lane.b32.xlu0 %v3521, 62
      %v3666 = vpop.permute.xlu0 %3665
      %3667 = vrot.lane.b32.xlu0 %v3522, 62
      %v3668 = vpop.permute.xlu0 %3667
      %3669 = vrot.lane.b32.xlu0 %v3523, 62
      %v3670 = vpop.permute.xlu0 %3669
      %3671 = vrot.lane.b32.xlu0 %v3524, 62
      %v3672 = vpop.permute.xlu0 %3671
      %3673 = vrot.lane.b32.xlu0 %v3514, 62
      %v3674 = vpop.permute.xlu0 %3673
      %3675 = vrot.lane.b32.xlu0 %v3547, 62
      %v3676 = vpop.permute.xlu0 %3675
      %3677 = vrot.lane.b32.xlu0 %v3548, 62
      %v3678 = vpop.permute.xlu0 %3677
      %3679 = vrot.lane.b32.xlu0 %v3549, 62
      %v3680 = vpop.permute.xlu0 %3679
      %3681 = vrot.lane.b32.xlu0 %v3550, 62
      %v3682 = vpop.permute.xlu0 %3681
      %3683 = vrot.lane.b32.xlu0 %v3551, 62
      %v3684 = vpop.permute.xlu0 %3683
      %3685 = vrot.lane.b32.xlu0 %v3552, 62
      %v3686 = vpop.permute.xlu0 %3685
      %3687 = vrot.lane.b32.xlu0 %v3553, 62
      %v3688 = vpop.permute.xlu0 %3687
      %3689 = vrot.lane.b32.xlu0 %v3554, 62
      %v3690 = vpop.permute.xlu0 %3689
      %3691 = vrot.lane.b32.xlu0 %v3555, 62
      %v3692 = vpop.permute.xlu0 %3691
      %3693 = vrot.lane.b32.xlu0 %v3556, 62
      %v3694 = vpop.permute.xlu0 %3693
      %3695 = vrot.lane.b32.xlu0 %v3546, 62
      %v3696 = vpop.permute.xlu0 %3695
      %3697 = vrot.lane.b32.xlu0 %v2398, 62
      %v3698 = vpop.permute.xlu0 %3697
      %3699 = vrot.lane.b32.xlu0 %v2399, 62
      %v3700 = vpop.permute.xlu0 %3699
      %3701 = vrot.lane.b32.xlu0 %v2400, 62
      %v3702 = vpop.permute.xlu0 %3701
      %3703 = vrot.lane.b32.xlu0 %v2401, 62
      %v3704 = vpop.permute.xlu0 %3703
      %3705 = vrot.lane.b32.xlu0 %v2402, 62
      %v3706 = vpop.permute.xlu0 %3705
      %3707 = vrot.lane.b32.xlu0 %v2403, 62
      %v3708 = vpop.permute.xlu0 %3707
      %3709 = vrot.lane.b32.xlu0 %v2404, 62
      %v3710 = vpop.permute.xlu0 %3709
      %3711 = vrot.lane.b32.xlu0 %v2405, 62
      %v3712 = vpop.permute.xlu0 %3711
      %3713 = vrot.lane.b32.xlu0 %v2406, 62
      %v3714 = vpop.permute.xlu0 %3713
      %3715 = vrot.lane.b32.xlu0 %v2407, 62
      %v3716 = vpop.permute.xlu0 %3715
      %3717 = vrot.lane.b32.xlu0 %v2397, 62
      %v3718 = vpop.permute.xlu0 %3717
      %3719 = vrot.lane.b32.xlu0 %v2430, 62
      %v3720 = vpop.permute.xlu0 %3719
      %3721 = vrot.lane.b32.xlu0 %v2431, 62
      %v3722 = vpop.permute.xlu0 %3721
      %3723 = vrot.lane.b32.xlu0 %v2432, 62
      %v3724 = vpop.permute.xlu0 %3723
      %3725 = vrot.lane.b32.xlu0 %v2433, 62
      %v3726 = vpop.permute.xlu0 %3725
      %3727 = vrot.lane.b32.xlu0 %v2434, 62
      %v3728 = vpop.permute.xlu0 %3727
      %3729 = vrot.lane.b32.xlu0 %v2435, 62
      %v3730 = vpop.permute.xlu0 %3729
      %3731 = vrot.lane.b32.xlu0 %v2436, 62
      %v3732 = vpop.permute.xlu0 %3731
      %3733 = vrot.lane.b32.xlu0 %v2437, 62
      %v3734 = vpop.permute.xlu0 %3733
      %3735 = vrot.lane.b32.xlu0 %v2438, 62
      %v3736 = vpop.permute.xlu0 %3735
      %3737 = vrot.lane.b32.xlu0 %v2439, 62
      %v3738 = vpop.permute.xlu0 %3737
      %3739 = vrot.lane.b32.xlu0 %v2429, 62
      %v3740 = vpop.permute.xlu0 %3739
      %3741 = vrot.lane.b32.xlu0 %v2462, 62
      %v3742 = vpop.permute.xlu0 %3741
      %3743 = vrot.lane.b32.xlu0 %v2463, 62
      %v3744 = vpop.permute.xlu0 %3743
      %3745 = vrot.lane.b32.xlu0 %v2464, 62
      %v3746 = vpop.permute.xlu0 %3745
      %3747 = vrot.lane.b32.xlu0 %v2465, 62
      %v3748 = vpop.permute.xlu0 %3747
      %3749 = vrot.lane.b32.xlu0 %v2466, 62
      %v3750 = vpop.permute.xlu0 %3749
      %3751 = vrot.lane.b32.xlu0 %v2467, 62
      %v3752 = vpop.permute.xlu0 %3751
      %3753 = vrot.lane.b32.xlu0 %v2468, 62
      %v3754 = vpop.permute.xlu0 %3753
      %3755 = vrot.lane.b32.xlu0 %v2469, 62
      %v3756 = vpop.permute.xlu0 %3755
      %3757 = vrot.lane.b32.xlu0 %v2470, 62
      %v3758 = vpop.permute.xlu0 %3757
      %3759 = vrot.lane.b32.xlu0 %v2471, 62
      %v3760 = vpop.permute.xlu0 %3759
      %3761 = vrot.lane.b32.xlu0 %v2461, 62
      %v3762 = vpop.permute.xlu0 %3761
      %3763 = vrot.lane.b32.xlu0 %v2494, 62
      %v3764 = vpop.permute.xlu0 %3763
      %3765 = vrot.lane.b32.xlu0 %v2495, 62
      %v3766 = vpop.permute.xlu0 %3765
      %3767 = vrot.lane.b32.xlu0 %v2496, 62
      %v3768 = vpop.permute.xlu0 %3767
      %3769 = vrot.lane.b32.xlu0 %v2497, 62
      %v3770 = vpop.permute.xlu0 %3769
      %3771 = vrot.lane.b32.xlu0 %v2498, 62
      %v3772 = vpop.permute.xlu0 %3771
      %3773 = vrot.lane.b32.xlu0 %v2499, 62
      %v3774 = vpop.permute.xlu0 %3773
      %3775 = vrot.lane.b32.xlu0 %v2500, 62
      %v3776 = vpop.permute.xlu0 %3775
      %3777 = vrot.lane.b32.xlu0 %v2501, 62
      %v3778 = vpop.permute.xlu0 %3777
      %3779 = vrot.lane.b32.xlu0 %v2502, 62
      %v3780 = vpop.permute.xlu0 %3779
      %3781 = vrot.lane.b32.xlu0 %v2503, 62
      %v3782 = vpop.permute.xlu0 %3781
      %3783 = vrot.lane.b32.xlu0 %v2493, 62
      %v3784 = vpop.permute.xlu0 %3783
      %3785 = vrot.lane.b32.xlu0 %v2526, 62
      %v3786 = vpop.permute.xlu0 %3785
      %3787 = vrot.lane.b32.xlu0 %v2527, 62
      %v3788 = vpop.permute.xlu0 %3787
      %3789 = vrot.lane.b32.xlu0 %v2528, 62
      %v3790 = vpop.permute.xlu0 %3789
      %3791 = vrot.lane.b32.xlu0 %v2529, 62
      %v3792 = vpop.permute.xlu0 %3791
      %3793 = vrot.lane.b32.xlu0 %v2530, 62
      %v3794 = vpop.permute.xlu0 %3793
      %3795 = vrot.lane.b32.xlu0 %v2531, 62
      %v3796 = vpop.permute.xlu0 %3795
      %3797 = vrot.lane.b32.xlu0 %v2532, 62
      %v3798 = vpop.permute.xlu0 %3797
      %3799 = vrot.lane.b32.xlu0 %v2533, 62
      %v3800 = vpop.permute.xlu0 %3799
      %3801 = vrot.lane.b32.xlu0 %v2534, 62
      %v3802 = vpop.permute.xlu0 %3801
      %3803 = vrot.lane.b32.xlu0 %v2535, 62
      %v3804 = vpop.permute.xlu0 %3803
      %3805 = vrot.lane.b32.xlu0 %v2525, 62
      %v3806 = vpop.permute.xlu0 %3805
      %3807 = vrot.lane.b32.xlu0 %v2558, 62
      %v3808 = vpop.permute.xlu0 %3807
      %3809 = vrot.lane.b32.xlu0 %v2559, 62
      %v3810 = vpop.permute.xlu0 %3809
      %3811 = vrot.lane.b32.xlu0 %v2560, 62
      %v3812 = vpop.permute.xlu0 %3811
      %3813 = vrot.lane.b32.xlu0 %v2561, 62
      %v3814 = vpop.permute.xlu0 %3813
      %3815 = vrot.lane.b32.xlu0 %v2562, 62
      %v3816 = vpop.permute.xlu0 %3815
      %3817 = vrot.lane.b32.xlu0 %v2563, 62
      %v3818 = vpop.permute.xlu0 %3817
      %3819 = vrot.lane.b32.xlu0 %v2564, 62
      %v3820 = vpop.permute.xlu0 %3819
      %3821 = vrot.lane.b32.xlu0 %v2565, 62
      %v3822 = vpop.permute.xlu0 %3821
      %3823 = vrot.lane.b32.xlu0 %v2566, 62
      %v3824 = vpop.permute.xlu0 %3823
      %3825 = vrot.lane.b32.xlu0 %v2567, 62
      %v3826 = vpop.permute.xlu0 %3825
      %3827 = vrot.lane.b32.xlu0 %v2557, 62
      %v3828 = vpop.permute.xlu0 %3827
      %3829 = vrot.lane.b32.xlu0 %v3579, 62
      %v3830 = vpop.permute.xlu0 %3829
      %3831 = vrot.lane.b32.xlu0 %v3580, 62
      %v3832 = vpop.permute.xlu0 %3831
      %3833 = vrot.lane.b32.xlu0 %v3581, 62
      %v3834 = vpop.permute.xlu0 %3833
      %3835 = vrot.lane.b32.xlu0 %v3582, 62
      %v3836 = vpop.permute.xlu0 %3835
      %3837 = vrot.lane.b32.xlu0 %v3583, 62
      %v3838 = vpop.permute.xlu0 %3837
      %3839 = vrot.lane.b32.xlu0 %v3584, 62
      %v3840 = vpop.permute.xlu0 %3839
      %3841 = vrot.lane.b32.xlu0 %v3585, 62
      %v3842 = vpop.permute.xlu0 %3841
      %3843 = vrot.lane.b32.xlu0 %v3586, 62
      %v3844 = vpop.permute.xlu0 %3843
      %3845 = vrot.lane.b32.xlu0 %v3587, 62
      %v3846 = vpop.permute.xlu0 %3845
      %3847 = vrot.lane.b32.xlu0 %v3588, 62
      %v3848 = vpop.permute.xlu0 %3847
      %3849 = vrot.lane.b32.xlu0 %v3578, 62
      %v3850 = vpop.permute.xlu0 %3849
      %3851 = vrot.lane.b32.xlu0 %v3590, 62
      %v3852 = vpop.permute.xlu0 %3851
      %3853 = vrot.lane.b32.xlu0 %v3610, 62
      %v3854 = vpop.permute.xlu0 %3853
      %3855 = vrot.lane.b32.xlu0 %v3611, 62
      %v3856 = vpop.permute.xlu0 %3855
      %3857 = vrot.lane.b32.xlu0 %v3612, 62
      %v3858 = vpop.permute.xlu0 %3857
      %3859 = vrot.lane.b32.xlu0 %v3613, 62
      %v3860 = vpop.permute.xlu0 %3859
      %3861 = vrot.lane.b32.xlu0 %v3614, 62
      %v3862 = vpop.permute.xlu0 %3861
      %3863 = vrot.lane.b32.xlu0 %v3615, 62
      %v3864 = vpop.permute.xlu0 %3863
      %3865 = vrot.lane.b32.xlu0 %v3616, 62
      %v3866 = vpop.permute.xlu0 %3865
      %3867 = vrot.lane.b32.xlu0 %v3617, 62
      %v3868 = vpop.permute.xlu0 %3867
      %3869 = vrot.lane.b32.xlu0 %v3618, 62
      %v3870 = vpop.permute.xlu0 %3869
      %3871 = vrot.lane.b32.xlu0 %v3608, 62
      %v3872 = vpop.permute.xlu0 %3871
      %vm3873 = vcmask 506880
      %v3874 = vsel %vm3873, %v3632, %v3634
      %v3875 = vsel %vm3873, %v3634, %v3636
      %v3876 = vsel %vm3873, %v3636, %v3638
      %v3877 = vsel %vm3873, %v3638, %v3640
      %v3878 = vsel %vm3873, %v3640, %v3642
      %v3879 = vsel %vm3873, %v3642, %v3644
      %v3880 = vsel %vm3873, %v3644, %v3646
      %v3881 = vsel %vm3873, %v3646, %v3648
      %v3882 = vsel %vm3873, %v3648, %v3650
      %v3883 = vsel %vm3873, %v3650, %v3652
      %v3884 = vsel %vm3873, %v3654, %v3656
      %v3885 = vsel %vm3873, %v3656, %v3658
      %v3886 = vsel %vm3873, %v3658, %v3660
      %v3887 = vsel %vm3873, %v3660, %v3662
      %v3888 = vsel %vm3873, %v3662, %v3664
      %v3889 = vsel %vm3873, %v3664, %v3666
      %v3890 = vsel %vm3873, %v3666, %v3668
      %v3891 = vsel %vm3873, %v3668, %v3670
      %v3892 = vsel %vm3873, %v3670, %v3672
      %v3893 = vsel %vm3873, %v3672, %v3674
      %v3894 = vsel %vm3873, %v3676, %v3678
      %v3895 = vsel %vm3873, %v3678, %v3680
      %v3896 = vsel %vm3873, %v3680, %v3682
      %v3897 = vsel %vm3873, %v3682, %v3684
      %v3898 = vsel %vm3873, %v3684, %v3686
      %v3899 = vsel %vm3873, %v3686, %v3688
      %v3900 = vsel %vm3873, %v3688, %v3690
      %v3901 = vsel %vm3873, %v3690, %v3692
      %v3902 = vsel %vm3873, %v3692, %v3694
      %v3903 = vsel %vm3873, %v3694, %v3696
      %v3904 = vsel %vm3873, %v3698, %v3700
      %v3905 = vsel %vm3873, %v3700, %v3702
      %v3906 = vsel %vm3873, %v3702, %v3704
      %v3907 = vsel %vm3873, %v3704, %v3706
      %v3908 = vsel %vm3873, %v3706, %v3708
      %v3909 = vsel %vm3873, %v3708, %v3710
      %v3910 = vsel %vm3873, %v3710, %v3712
      %v3911 = vsel %vm3873, %v3712, %v3714
      %v3912 = vsel %vm3873, %v3714, %v3716
      %v3913 = vsel %vm3873, %v3716, %v3718
      %v3914 = vsel %vm3873, %v3720, %v3722
      %v3915 = vsel %vm3873, %v3722, %v3724
      %v3916 = vsel %vm3873, %v3724, %v3726
      %v3917 = vsel %vm3873, %v3726, %v3728
      %v3918 = vsel %vm3873, %v3728, %v3730
      %v3919 = vsel %vm3873, %v3730, %v3732
      %v3920 = vsel %vm3873, %v3732, %v3734
      %v3921 = vsel %vm3873, %v3734, %v3736
      %v3922 = vsel %vm3873, %v3736, %v3738
      %v3923 = vsel %vm3873, %v3738, %v3740
      %v3924 = vsel %vm3873, %v3742, %v3744
      %v3925 = vsel %vm3873, %v3744, %v3746
      %v3926 = vsel %vm3873, %v3746, %v3748
      %v3927 = vsel %vm3873, %v3748, %v3750
      %v3928 = vsel %vm3873, %v3750, %v3752
      %v3929 = vsel %vm3873, %v3752, %v3754
      %v3930 = vsel %vm3873, %v3754, %v3756
      %v3931 = vsel %vm3873, %v3756, %v3758
      %v3932 = vsel %vm3873, %v3758, %v3760
      %v3933 = vsel %vm3873, %v3760, %v3762
      %v3934 = vsel %vm3873, %v3764, %v3766
      %v3935 = vsel %vm3873, %v3766, %v3768
      %v3936 = vsel %vm3873, %v3768, %v3770
      %v3937 = vsel %vm3873, %v3770, %v3772
      %v3938 = vsel %vm3873, %v3772, %v3774
      %v3939 = vsel %vm3873, %v3774, %v3776
      %v3940 = vsel %vm3873, %v3776, %v3778
      %v3941 = vsel %vm3873, %v3778, %v3780
      %v3942 = vsel %vm3873, %v3780, %v3782
      %v3943 = vsel %vm3873, %v3782, %v3784
      %v3944 = vsel %vm3873, %v3786, %v3788
      %v3945 = vsel %vm3873, %v3788, %v3790
      %v3946 = vsel %vm3873, %v3790, %v3792
      %v3947 = vsel %vm3873, %v3792, %v3794
      %v3948 = vsel %vm3873, %v3794, %v3796
      %v3949 = vsel %vm3873, %v3796, %v3798
      %v3950 = vsel %vm3873, %v3798, %v3800
      %v3951 = vsel %vm3873, %v3800, %v3802
      %v3952 = vsel %vm3873, %v3802, %v3804
      %v3953 = vsel %vm3873, %v3804, %v3806
      %v3954 = vsel %vm3873, %v3808, %v3810
      %v3955 = vsel %vm3873, %v3810, %v3812
      %v3956 = vsel %vm3873, %v3812, %v3814
      %v3957 = vsel %vm3873, %v3814, %v3816
      %v3958 = vsel %vm3873, %v3816, %v3818
      %v3959 = vsel %vm3873, %v3818, %v3820
      %v3960 = vsel %vm3873, %v3820, %v3822
      %v3961 = vsel %vm3873, %v3822, %v3824
      %v3962 = vsel %vm3873, %v3824, %v3826
      %v3963 = vsel %vm3873, %v3826, %v3828
      %v3964 = vsel %vm3873, %v3830, %v3832
      %v3965 = vsel %vm3873, %v3832, %v3834
      %v3966 = vsel %vm3873, %v3834, %v3836
      %v3967 = vsel %vm3873, %v3836, %v3838
      %v3968 = vsel %vm3873, %v3838, %v3840
      %v3969 = vsel %vm3873, %v3840, %v3842
      %v3970 = vsel %vm3873, %v3842, %v3844
      %v3971 = vsel %vm3873, %v3844, %v3846
      %v3972 = vsel %vm3873, %v3846, %v3848
      %v3973 = vsel %vm3873, %v3848, %v3850
      %v3974 = vsel %vm3873, %v3852, %v3854
      %v3975 = vsel %vm3873, %v3854, %v3856
      %v3976 = vsel %vm3873, %v3856, %v3858
      %v3977 = vsel %vm3873, %v3858, %v3860
      %v3978 = vsel %vm3873, %v3860, %v3862
      %v3979 = vsel %vm3873, %v3862, %v3864
      %v3980 = vsel %vm3873, %v3864, %v3866
      %v3981 = vsel %vm3873, %v3866, %v3868
      %v3982 = vsel %vm3873, %v3868, %v3870
      %v3983 = vsel %vm3873, %v3870, %v3872
      %v4095 = vsel %vm888, %v3629, 0
      %4097 = vmatprep.subr.bf16.mxu0 %v3875
      %4098 = vmatpush1.bf16.msra.mxu0 %v3874
      %4099 = vmatprep.subr.bf16.mxu0 %v3885
      %4100 = vmatpush1.bf16.msra.mxu0 %v3884
      %4101 = vmatprep.subr.bf16.mxu0 %v3895
      %4102 = vmatpush1.bf16.msra.mxu0 %v3894
      %4103 = vmatprep.subr.bf16.mxu0 %v3905
      %4104 = vmatpush1.bf16.msra.mxu0 %v3904
      %4105 = vmatprep.subr.bf16.mxu0 %v3915
      %4106 = vmatpush1.bf16.msra.mxu0 %v3914
      %4107 = vmatprep.subr.bf16.mxu0 %v3925
      %4108 = vmatpush1.bf16.msra.mxu0 %v3924
      %4109 = vmatprep.subr.bf16.mxu0 %v3935
      %4110 = vmatpush1.bf16.msra.mxu0 %v3934
      %4111 = vmatprep.subr.bf16.mxu0 %v3945
      %4112 = vmatpush1.bf16.msra.mxu0 %v3944
      %4113 = vmatprep.subr.bf16.mxu0 %v3955
      %4114 = vmatpush1.bf16.msra.mxu0 %v3954
      %4115 = vmatprep.subr.bf16.mxu0 %v3965
      %4116 = vmatpush1.bf16.msra.mxu0 %v3964
      %4117 = vmatprep.subr.bf16.mxu0 %v3975
      %4118 = vmatpush1.bf16.msra.mxu0 %v3974
      %4119 = vmatprep.subr.bf16.mxu0 %v3975
      %4120 = vmatpush1.bf16.msra.mxu0 %v3974
      %4121 = vmatprep.subr.bf16.mxu0 %v3975
      %4122 = vmatpush1.bf16.msra.mxu0 %v3974
      %4123 = vmatprep.subr.bf16.mxu0 0
      %4124 = vmatpush1.bf16.msra.mxu0 0
      %4125 = vmatprep.subr.bf16.mxu0 0
      %4126 = vmatpush1.bf16.msra.mxu0 0
      %4127 = vmatprep.subr.bf16.mxu0 0
      %4128 = vmatpush1.bf16.msra.mxu0 0
      %4129 = vmatprep.mubr.bf16.mxu0 %v4095
      %4130 = vmatmul.mubr.bf16.gmra.mrb[0].mxu0 %v3628
      %v4131 = vpop.f32.mrb[0].mxu0
      %v4132 = vadd.f32 0.0, %v4131
      %v4133 = vpop.f32.mrb[0].mxu0
      %v4134 = vadd.f32 0.0, %v4133
      %v4135 = vpop.f32.mrb[0].mxu0
      %v4136 = vadd.f32 0.0, %v4135
      %v4137 = vpop.f32.mrb[0].mxu0
      %v4138 = vadd.f32 0.0, %v4137
      %4139 = vdwg.mxu0
      %4140 = vmatprep.subr.bf16.mxu0 %v3877
      %4141 = vmatpush1.bf16.msra.mxu0 %v3876
      %4142 = vmatprep.subr.bf16.mxu0 %v3887
      %4143 = vmatpush1.bf16.msra.mxu0 %v3886
      %4144 = vmatprep.subr.bf16.mxu0 %v3897
      %4145 = vmatpush1.bf16.msra.mxu0 %v3896
      %4146 = vmatprep.subr.bf16.mxu0 %v3907
      %4147 = vmatpush1.bf16.msra.mxu0 %v3906
      %4148 = vmatprep.subr.bf16.mxu0 %v3917
      %4149 = vmatpush1.bf16.msra.mxu0 %v3916
      %4150 = vmatprep.subr.bf16.mxu0 %v3927
      %4151 = vmatpush1.bf16.msra.mxu0 %v3926
      %4152 = vmatprep.subr.bf16.mxu0 %v3937
      %4153 = vmatpush1.bf16.msra.mxu0 %v3936
      %4154 = vmatprep.subr.bf16.mxu0 %v3947
      %4155 = vmatpush1.bf16.msra.mxu0 %v3946
      %4156 = vmatprep.subr.bf16.mxu0 %v3957
      %4157 = vmatpush1.bf16.msra.mxu0 %v3956
      %4158 = vmatprep.subr.bf16.mxu0 %v3967
      %4159 = vmatpush1.bf16.msra.mxu0 %v3966
      %4160 = vmatprep.subr.bf16.mxu0 %v3977
      %4161 = vmatpush1.bf16.msra.mxu0 %v3976
      %4162 = vmatprep.subr.bf16.mxu0 %v3977
      %4163 = vmatpush1.bf16.msra.mxu0 %v3976
      %4164 = vmatprep.subr.bf16.mxu0 %v3977
      %4165 = vmatpush1.bf16.msra.mxu0 %v3976
      %4166 = vmatprep.subr.bf16.mxu0 0
      %4167 = vmatpush1.bf16.msra.mxu0 0
      %4168 = vmatprep.subr.bf16.mxu0 0
      %4169 = vmatpush1.bf16.msra.mxu0 0
      %4170 = vmatprep.subr.bf16.mxu0 0
      %4171 = vmatpush1.bf16.msra.mxu0 0
      %4172 = vmatprep.mubr.bf16.mxu0 %v4095
      %4173 = vmatmul.mubr.bf16.gmra.mrb[0].mxu0 %v3628
      %v4174 = vpop.f32.mrb[0].mxu0
      %v4175 = vadd.f32 0.0, %v4174
      %v4176 = vpop.f32.mrb[0].mxu0
      %v4177 = vadd.f32 0.0, %v4176
      %v4178 = vpop.f32.mrb[0].mxu0
      %v4179 = vadd.f32 0.0, %v4178
      %v4180 = vpop.f32.mrb[0].mxu0
      %v4181 = vadd.f32 0.0, %v4180
      %4182 = vdwg.mxu0
      %4183 = vmatprep.subr.bf16.mxu0 %v3879
      %4184 = vmatpush1.bf16.msra.mxu0 %v3878
      %4185 = vmatprep.subr.bf16.mxu0 %v3889
      %4186 = vmatpush1.bf16.msra.mxu0 %v3888
      %4187 = vmatprep.subr.bf16.mxu0 %v3899
      %4188 = vmatpush1.bf16.msra.mxu0 %v3898
      %4189 = vmatprep.subr.bf16.mxu0 %v3909
      %4190 = vmatpush1.bf16.msra.mxu0 %v3908
      %4191 = vmatprep.subr.bf16.mxu0 %v3919
      %4192 = vmatpush1.bf16.msra.mxu0 %v3918
      %4193 = vmatprep.subr.bf16.mxu0 %v3929
      %4194 = vmatpush1.bf16.msra.mxu0 %v3928
      %4195 = vmatprep.subr.bf16.mxu0 %v3939
      %4196 = vmatpush1.bf16.msra.mxu0 %v3938
      %4197 = vmatprep.subr.bf16.mxu0 %v3949
      %4198 = vmatpush1.bf16.msra.mxu0 %v3948
      %4199 = vmatprep.subr.bf16.mxu0 %v3959
      %4200 = vmatpush1.bf16.msra.mxu0 %v3958
      %4201 = vmatprep.subr.bf16.mxu0 %v3969
      %4202 = vmatpush1.bf16.msra.mxu0 %v3968
      %4203 = vmatprep.subr.bf16.mxu0 %v3979
      %4204 = vmatpush1.bf16.msra.mxu0 %v3978
      %4205 = vmatprep.subr.bf16.mxu0 %v3979
      %4206 = vmatpush1.bf16.msra.mxu0 %v3978
      %4207 = vmatprep.subr.bf16.mxu0 %v3979
      %4208 = vmatpush1.bf16.msra.mxu0 %v3978
      %4209 = vmatprep.subr.bf16.mxu0 0
      %4210 = vmatpush1.bf16.msra.mxu0 0
      %4211 = vmatprep.subr.bf16.mxu0 0
      %4212 = vmatpush1.bf16.msra.mxu0 0
      %4213 = vmatprep.subr.bf16.mxu0 0
      %4214 = vmatpush1.bf16.msra.mxu0 0
      %4215 = vmatprep.mubr.bf16.mxu0 %v4095
      %4216 = vmatmul.mubr.bf16.gmra.mrb[0].mxu0 %v3628
      %v4217 = vpop.f32.mrb[0].mxu0
      %v4218 = vadd.f32 0.0, %v4217
      %v4219 = vpop.f32.mrb[0].mxu0
      %v4220 = vadd.f32 0.0, %v4219
      %v4221 = vpop.f32.mrb[0].mxu0
      %v4222 = vadd.f32 0.0, %v4221
      %v4223 = vpop.f32.mrb[0].mxu0
      %v4224 = vadd.f32 0.0, %v4223
      %4225 = vdwg.mxu0
      %4226 = vmatprep.subr.bf16.mxu0 %v3881
      %4227 = vmatpush1.bf16.msra.mxu0 %v3880
      %4228 = vmatprep.subr.bf16.mxu0 %v3891
      %4229 = vmatpush1.bf16.msra.mxu0 %v3890
      %4230 = vmatprep.subr.bf16.mxu0 %v3901
      %4231 = vmatpush1.bf16.msra.mxu0 %v3900
      %4232 = vmatprep.subr.bf16.mxu0 %v3911
      %4233 = vmatpush1.bf16.msra.mxu0 %v3910
      %4234 = vmatprep.subr.bf16.mxu0 %v3921
      %4235 = vmatpush1.bf16.msra.mxu0 %v3920
      %4236 = vmatprep.subr.bf16.mxu0 %v3931
      %4237 = vmatpush1.bf16.msra.mxu0 %v3930
      %4238 = vmatprep.subr.bf16.mxu0 %v3941
      %4239 = vmatpush1.bf16.msra.mxu0 %v3940
      %4240 = vmatprep.subr.bf16.mxu0 %v3951
      %4241 = vmatpush1.bf16.msra.mxu0 %v3950
      %4242 = vmatprep.subr.bf16.mxu0 %v3961
      %4243 = vmatpush1.bf16.msra.mxu0 %v3960
      %4244 = vmatprep.subr.bf16.mxu0 %v3971
      %4245 = vmatpush1.bf16.msra.mxu0 %v3970
      %4246 = vmatprep.subr.bf16.mxu0 %v3981
      %4247 = vmatpush1.bf16.msra.mxu0 %v3980
      %4248 = vmatprep.subr.bf16.mxu0 %v3981
      %4249 = vmatpush1.bf16.msra.mxu0 %v3980
      %4250 = vmatprep.subr.bf16.mxu0 %v3981
      %4251 = vmatpush1.bf16.msra.mxu0 %v3980
      %4252 = vmatprep.subr.bf16.mxu0 0
      %4253 = vmatpush1.bf16.msra.mxu0 0
      %4254 = vmatprep.subr.bf16.mxu0 0
      %4255 = vmatpush1.bf16.msra.mxu0 0
      %4256 = vmatprep.subr.bf16.mxu0 0
      %4257 = vmatpush1.bf16.msra.mxu0 0
      %4258 = vmatprep.mubr.bf16.mxu0 %v4095
      %4259 = vmatmul.mubr.bf16.gmra.mrb[0].mxu0 %v3628
      %v4260 = vpop.f32.mrb[0].mxu0
      %v4261 = vadd.f32 0.0, %v4260
      %v4262 = vpop.f32.mrb[0].mxu0
      %v4263 = vadd.f32 0.0, %v4262
      %v4264 = vpop.f32.mrb[0].mxu0
      %v4265 = vadd.f32 0.0, %v4264
      %v4266 = vpop.f32.mrb[0].mxu0
      %v4267 = vadd.f32 0.0, %v4266
      %4268 = vdwg.mxu0
      %4269 = vmatprep.subr.bf16.mxu0 %v3883
      %4270 = vmatpush1.bf16.msra.mxu0 %v3882
      %4271 = vmatprep.subr.bf16.mxu0 %v3893
      %4272 = vmatpush1.bf16.msra.mxu0 %v3892
      %4273 = vmatprep.subr.bf16.mxu0 %v3903
      %4274 = vmatpush1.bf16.msra.mxu0 %v3902
      %4275 = vmatprep.subr.bf16.mxu0 %v3913
      %4276 = vmatpush1.bf16.msra.mxu0 %v3912
      %4277 = vmatprep.subr.bf16.mxu0 %v3923
      %4278 = vmatpush1.bf16.msra.mxu0 %v3922
      %4279 = vmatprep.subr.bf16.mxu0 %v3933
      %4280 = vmatpush1.bf16.msra.mxu0 %v3932
      %4281 = vmatprep.subr.bf16.mxu0 %v3943
      %4282 = vmatpush1.bf16.msra.mxu0 %v3942
      %4283 = vmatprep.subr.bf16.mxu0 %v3953
      %4284 = vmatpush1.bf16.msra.mxu0 %v3952
      %4285 = vmatprep.subr.bf16.mxu0 %v3963
      %4286 = vmatpush1.bf16.msra.mxu0 %v3962
      %4287 = vmatprep.subr.bf16.mxu0 %v3973
      %4288 = vmatpush1.bf16.msra.mxu0 %v3972
      %4289 = vmatprep.subr.bf16.mxu0 %v3983
      %4290 = vmatpush1.bf16.msra.mxu0 %v3982
      %4291 = vmatprep.subr.bf16.mxu0 %v3983
      %4292 = vmatpush1.bf16.msra.mxu0 %v3982
      %4293 = vmatprep.subr.bf16.mxu0 %v3983
      %4294 = vmatpush1.bf16.msra.mxu0 %v3982
      %4295 = vmatprep.subr.bf16.mxu0 0
      %4296 = vmatpush1.bf16.msra.mxu0 0
      %4297 = vmatprep.subr.bf16.mxu0 0
      %4298 = vmatpush1.bf16.msra.mxu0 0
      %4299 = vmatprep.subr.bf16.mxu0 0
      %4300 = vmatpush1.bf16.msra.mxu0 0
      %4301 = vmatprep.mubr.bf16.mxu0 %v4095
      %4302 = vmatmul.mubr.bf16.gmra.mrb[0].mxu0 %v3628
      %v4303 = vpop.f32.mrb[0].mxu0
      %v4304 = vadd.f32 0.0, %v4303
      %v4305 = vpop.f32.mrb[0].mxu0
      %v4306 = vadd.f32 0.0, %v4305
      %v4307 = vpop.f32.mrb[0].mxu0
      %v4308 = vadd.f32 0.0, %v4307
      %v4309 = vpop.f32.mrb[0].mxu0
      %v4310 = vadd.f32 0.0, %v4309
      %4311 = vdwg.mxu0
      %v4312 = vadd.f32 %v3473, %v4132
      %v4313 = vadd.f32 %v3474, %v4134
      %v4314 = vadd.f32 %v3475, %v4175
      %v4315 = vadd.f32 %v3476, %v4177
      %v4316 = vadd.f32 %v3477, %v4218
      %v4317 = vadd.f32 %v3478, %v4220
      %v4318 = vadd.f32 %v3479, %v4261
      %v4319 = vadd.f32 %v3480, %v4263
      %v4320 = vadd.f32 %v3481, %v4304
      %v4321 = vadd.f32 %v3482, %v4306
      %v4322 = vadd.f32 %v3483, %v4136
      %v4323 = vadd.f32 %v3484, %v4138
      %v4324 = vadd.f32 %v3485, %v4179
      %v4325 = vadd.f32 %v3486, %v4181
      %v4326 = vadd.f32 %v3487, %v4222
      %v4327 = vadd.f32 %v3488, %v4224
      %v4328 = vadd.f32 %v3489, %v4265
      %v4329 = vadd.f32 %v3490, %v4267
      %v4330 = vadd.f32 %v3491, %v4308
      %v4331 = vadd.f32 %v3492, %v4310
      %v4332 = vld [vmem:[%s3] sm:$0xff]
      %v4333 = vld [vmem:[%s3 + $0x8] sm:$0x3]
      %v4336 = vlaneseq
      %v4337 = vshrl.u32 %v4336, 7
      %v4338 = vsub.s32 0, %v4337
      %v4339 = vrot.slane %v4332, %v4338
      %v4340 = vlaneseq
      %v4341 = vshrl.u32 %v4340, 7
      %v4342 = vsub.s32 1, %v4341
      %v4343 = vrot.slane %v4332, %v4342
      %v4344 = vlaneseq
      %v4345 = vshrl.u32 %v4344, 7
      %v4346 = vsub.s32 2, %v4345
      %v4347 = vrot.slane %v4332, %v4346
      %v4348 = vlaneseq
      %v4349 = vshrl.u32 %v4348, 7
      %v4350 = vsub.s32 3, %v4349
      %v4351 = vrot.slane %v4332, %v4350
      %v4352 = vlaneseq
      %v4353 = vshrl.u32 %v4352, 7
      %v4354 = vsub.s32 4, %v4353
      %v4355 = vrot.slane %v4332, %v4354
      %v4356 = vlaneseq
      %v4357 = vshrl.u32 %v4356, 7
      %v4358 = vsub.s32 5, %v4357
      %v4359 = vrot.slane %v4332, %v4358
      %v4360 = vlaneseq
      %v4361 = vshrl.u32 %v4360, 7
      %v4362 = vsub.s32 6, %v4361
      %v4363 = vrot.slane %v4332, %v4362
      %v4364 = vlaneseq
      %v4365 = vshrl.u32 %v4364, 7
      %v4366 = vsub.s32 7, %v4365
      %v4367 = vrot.slane %v4332, %v4366
      %v4368 = vlaneseq
      %v4369 = vshrl.u32 %v4368, 7
      %v4370 = vsub.s32 0, %v4369
      %v4371 = vrot.slane %v4333, %v4370
      %v4372 = vlaneseq
      %v4373 = vshrl.u32 %v4372, 7
      %v4374 = vsub.s32 1, %v4373
      %v4375 = vrot.slane %v4333, %v4374
      %v4386 = vmul.f32 %v4312, %v4339
      %v4387 = vmul.f32 %v4313, %v4343
      %v4388 = vmul.f32 %v4314, %v4347
      %v4389 = vmul.f32 %v4315, %v4351
      %v4390 = vmul.f32 %v4316, %v4355
      %v4391 = vmul.f32 %v4317, %v4359
      %v4392 = vmul.f32 %v4318, %v4363
      %v4393 = vmul.f32 %v4319, %v4367
      %v4394 = vmul.f32 %v4320, %v4371
      %v4395 = vmul.f32 %v4321, %v4375
      %v4396 = vmul.f32 %v4322, %v4339
      %v4397 = vmul.f32 %v4323, %v4343
      %v4398 = vmul.f32 %v4324, %v4347
      %v4399 = vmul.f32 %v4325, %v4351
      %v4400 = vmul.f32 %v4326, %v4355
      %v4401 = vmul.f32 %v4327, %v4359
      %v4402 = vmul.f32 %v4328, %v4363
      %v4403 = vmul.f32 %v4329, %v4367
      %v4404 = vmul.f32 %v4330, %v4371
      %v4405 = vmul.f32 %v4331, %v4375
      %v4406 = vadd.f32 %v4386, %v4387
      %v4407 = vadd.f32 %v4406, %v4388
      %v4408 = vadd.f32 %v4407, %v4389
      %v4409 = vadd.f32 %v4408, %v4390
      %v4410 = vadd.f32 %v4409, %v4391
      %v4411 = vadd.f32 %v4410, %v4392
      %v4412 = vadd.f32 %v4411, %v4393
      %v4413 = vadd.f32 %v4412, %v4394
      %v4414 = vadd.f32 %v4413, %v4395
      %4415 = vadd.xlane.f32.xlu0 %v4414
      %v4416 = vpop.xlane.xlu0 %4415
      %v4417 = vadd.f32 %v4396, %v4397
      %v4418 = vadd.f32 %v4417, %v4398
      %v4419 = vadd.f32 %v4418, %v4399
      %v4420 = vadd.f32 %v4419, %v4400
      %v4421 = vadd.f32 %v4420, %v4401
      %v4422 = vadd.f32 %v4421, %v4402
      %v4423 = vadd.f32 %v4422, %v4403
      %v4424 = vadd.f32 %v4423, %v4404
      %v4425 = vadd.f32 %v4424, %v4405
      %4426 = vadd.xlane.f32.xlu0 %v4425
      %v4427 = vpop.xlane.xlu0 %4426
      %v4428 = vmul.f32 %v4386, %v4312
      %v4429 = vmul.f32 %v4387, %v4313
      %v4430 = vmul.f32 %v4388, %v4314
      %v4431 = vmul.f32 %v4389, %v4315
      %v4432 = vmul.f32 %v4390, %v4316
      %v4433 = vmul.f32 %v4391, %v4317
      %v4434 = vmul.f32 %v4392, %v4318
      %v4435 = vmul.f32 %v4393, %v4319
      %v4436 = vmul.f32 %v4394, %v4320
      %v4437 = vmul.f32 %v4395, %v4321
      %v4438 = vmul.f32 %v4396, %v4322
      %v4439 = vmul.f32 %v4397, %v4323
      %v4440 = vmul.f32 %v4398, %v4324
      %v4441 = vmul.f32 %v4399, %v4325
      %v4442 = vmul.f32 %v4400, %v4326
      %v4443 = vmul.f32 %v4401, %v4327
      %v4444 = vmul.f32 %v4402, %v4328
      %v4445 = vmul.f32 %v4403, %v4329
      %v4446 = vmul.f32 %v4404, %v4330
      %v4447 = vmul.f32 %v4405, %v4331
      %v4448 = vadd.f32 %v4428, %v4429
      %v4449 = vadd.f32 %v4448, %v4430
      %v4450 = vadd.f32 %v4449, %v4431
      %v4451 = vadd.f32 %v4450, %v4432
      %v4452 = vadd.f32 %v4451, %v4433
      %v4453 = vadd.f32 %v4452, %v4434
      %v4454 = vadd.f32 %v4453, %v4435
      %v4455 = vadd.f32 %v4454, %v4436
      %v4456 = vadd.f32 %v4455, %v4437
      %4457 = vadd.xlane.f32.xlu0 %v4456
      %v4458 = vpop.xlane.xlu0 %4457
      %v4459 = vadd.f32 %v4438, %v4439
      %v4460 = vadd.f32 %v4459, %v4440
      %v4461 = vadd.f32 %v4460, %v4441
      %v4462 = vadd.f32 %v4461, %v4442
      %v4463 = vadd.f32 %v4462, %v4443
      %v4464 = vadd.f32 %v4463, %v4444
      %v4465 = vadd.f32 %v4464, %v4445
      %v4466 = vadd.f32 %v4465, %v4446
      %v4467 = vadd.f32 %v4466, %v4447
      %4468 = vadd.xlane.f32.xlu0 %v4467
      %v4469 = vpop.xlane.xlu0 %4468
      %v4470 = vmul.f32 %v4416, 0.0009765625
      %v4471 = vmul.f32 %v4427, 0.0009765625
      %v4472 = vmul.f32 %v4458, 0.0009765625
      %v4473 = vmul.f32 %v4469, 0.0009765625
      %v4474 = vmul.f32 %v4470, %v4470
      %v4475 = vmul.f32 %v4471, %v4471
      %v4476 = vsub.f32 %v4472, %v4474
      %v4477 = vsub.f32 %v4473, %v4475
      %v4478 = vmax.f32 %v4476, 0.0
      %v4479 = vmax.f32 %v4477, 0.0
      %v4480 = vsub.f32 %v4312, %v4470
      %v4481 = vsub.f32 %v4313, %v4470
      %v4482 = vsub.f32 %v4314, %v4470
      %v4483 = vsub.f32 %v4315, %v4470
      %v4484 = vsub.f32 %v4316, %v4470
      %v4485 = vsub.f32 %v4317, %v4470
      %v4486 = vsub.f32 %v4318, %v4470
      %v4487 = vsub.f32 %v4319, %v4470
      %v4488 = vsub.f32 %v4320, %v4470
      %v4489 = vsub.f32 %v4321, %v4470
      %v4490 = vsub.f32 %v4322, %v4471
      %v4491 = vsub.f32 %v4323, %v4471
      %v4492 = vsub.f32 %v4324, %v4471
      %v4493 = vsub.f32 %v4325, %v4471
      %v4494 = vsub.f32 %v4326, %v4471
      %v4495 = vsub.f32 %v4327, %v4471
      %v4496 = vsub.f32 %v4328, %v4471
      %v4497 = vsub.f32 %v4329, %v4471
      %v4498 = vsub.f32 %v4330, %v4471
      %v4499 = vsub.f32 %v4331, %v4471
      %v4500 = vadd.f32 %v4478, 1e-05
      %v4501 = vadd.f32 %v4479, 1e-05
      %v4502 = vrsqrt.pop %v4500
      %v4503 = vrsqrt.pop %v4501
      %v4504 = vmul.f32 %v4480, %v4502
      %v4505 = vmul.f32 %v4481, %v4502
      %v4506 = vmul.f32 %v4482, %v4502
      %v4507 = vmul.f32 %v4483, %v4502
      %v4508 = vmul.f32 %v4484, %v4502
      %v4509 = vmul.f32 %v4485, %v4502
      %v4510 = vmul.f32 %v4486, %v4502
      %v4511 = vmul.f32 %v4487, %v4502
      %v4512 = vmul.f32 %v4488, %v4502
      %v4513 = vmul.f32 %v4489, %v4502
      %v4514 = vmul.f32 %v4490, %v4503
      %v4515 = vmul.f32 %v4491, %v4503
      %v4516 = vmul.f32 %v4492, %v4503
      %v4517 = vmul.f32 %v4493, %v4503
      %v4518 = vmul.f32 %v4494, %v4503
      %v4519 = vmul.f32 %v4495, %v4503
      %v4520 = vmul.f32 %v4496, %v4503
      %v4521 = vmul.f32 %v4497, %v4503
      %v4522 = vmul.f32 %v4498, %v4503
      %v4523 = vmul.f32 %v4499, %v4503
      %v4524 = vmax.f32 %v4504, 0.0
      %v4525 = vmax.f32 %v4505, 0.0
      %v4526 = vmax.f32 %v4506, 0.0
      %v4527 = vmax.f32 %v4507, 0.0
      %v4528 = vmax.f32 %v4508, 0.0
      %v4529 = vmax.f32 %v4509, 0.0
      %v4530 = vmax.f32 %v4510, 0.0
      %v4531 = vmax.f32 %v4511, 0.0
      %v4532 = vmax.f32 %v4512, 0.0
      %v4533 = vmax.f32 %v4513, 0.0
      %v4534 = vmax.f32 %v4514, 0.0
      %v4535 = vmax.f32 %v4515, 0.0
      %v4536 = vmax.f32 %v4516, 0.0
      %v4537 = vmax.f32 %v4517, 0.0
      %v4538 = vmax.f32 %v4518, 0.0
      %v4539 = vmax.f32 %v4519, 0.0
      %v4540 = vmax.f32 %v4520, 0.0
      %v4541 = vmax.f32 %v4521, 0.0
      %v4542 = vmax.f32 %v4522, 0.0
      %v4543 = vmax.f32 %v4523, 0.0
      %v4544 = vpack.c.bf16 %v4534, %v4524
      %v4545 = vpack.c.bf16 %v4535, %v4525
      %v4546 = vpack.c.bf16 %v4536, %v4526
      %v4547 = vpack.c.bf16 %v4537, %v4527
      %v4548 = vpack.c.bf16 %v4538, %v4528
      %v4549 = vpack.c.bf16 %v4539, %v4529
      %v4550 = vpack.c.bf16 %v4540, %v4530
      %v4551 = vpack.c.bf16 %v4541, %v4531
      %v4552 = vpack.c.bf16 %v4542, %v4532
      %v4553 = vpack.c.bf16 %v4543, %v4533
      %v4564 = vunpack.c.l.b16 %v4544
      %v4565 = vunpack.c.l.b16 %v4545
      %v4566 = vunpack.c.l.b16 %v4546
      %v4567 = vunpack.c.l.b16 %v4547
      %v4568 = vunpack.c.l.b16 %v4548
      %v4569 = vunpack.c.l.b16 %v4549
      %v4570 = vunpack.c.l.b16 %v4550
      %v4571 = vunpack.c.l.b16 %v4551
      %v4572 = vunpack.c.l.b16 %v4552
      %v4573 = vunpack.c.l.b16 %v4553
      %v4574 = vunpack.c.h.b16 %v4544
      %v4575 = vunpack.c.h.b16 %v4545
      %v4576 = vunpack.c.h.b16 %v4546
      %v4577 = vunpack.c.h.b16 %v4547
      %v4578 = vunpack.c.h.b16 %v4548
      %v4579 = vunpack.c.h.b16 %v4549
      %v4580 = vunpack.c.h.b16 %v4550
      %v4581 = vunpack.c.h.b16 %v4551
      %v4582 = vunpack.c.h.b16 %v4552
      %v4583 = vunpack.c.h.b16 %v4553
      %v4584 = vpack.c.b16 %v4565, %v4564
      %v4585 = vpack.c.b16 %v4567, %v4566
      %v4586 = vpack.c.b16 %v4569, %v4568
      %v4587 = vpack.c.b16 %v4571, %v4570
      %v4588 = vpack.c.b16 %v4573, %v4572
      %v4589 = vpack.c.b16 %v4575, %v4574
      %v4590 = vpack.c.b16 %v4577, %v4576
      %v4591 = vpack.c.b16 %v4579, %v4578
      %v4592 = vpack.c.b16 %v4581, %v4580
      %v4593 = vpack.c.b16 %v4583, %v4582
      %4604 = vst [vmem:[%s271] sm:$0xff] %v4584
      %4605 = vst [vmem:[%s271 + $0x8] sm:$0xff] %v4585
      %4606 = vst [vmem:[%s271 + $0x10] sm:$0xff] %v4586
      %4607 = vst [vmem:[%s271 + $0x18] sm:$0xff] %v4587
      %4608 = vst [vmem:[%s271 + $0x20] sm:$0xff] %v4588
      %4609 = vst [vmem:[%s271 + $0x28] sm:$0xff] %v4589
      %4610 = vst [vmem:[%s271 + $0x30] sm:$0xff] %v4590
      %4611 = vst [vmem:[%s271 + $0x38] sm:$0xff] %v4591
      %4612 = vst [vmem:[%s271 + $0x40] sm:$0xff] %v4592
      %4613 = vst [vmem:[%s271 + $0x48] sm:$0xff] %v4593
      %s4614 = smul.u32 2, %s20
      %p4615 = scmp.lt.s32.totalorder %s19, 1
      %s4616 = scalar_select %p4615, %s19, 1
      %p4617 = scmp.lt.s32.totalorder %s4614, 1
      %s4618 = scalar_select %p4617, %s4614, 1
      %s4619 = smul.addr %s4618, 10
      %s4620 = smul.addr %s4616, 20
      %s4621 = sadd.s32 %s4619, %s4620
      %s4622 = smul.addr %s4621, 4
      %s4623 = scalar_lea.vmem %s4, %s4622
      // Predicated region
      $region37: #{_lambda_.5} parent=35 // pred_check
        %p4624 = pneg %p146
      $region38: #{_lambda_.5} parent=35 // pred_check_branch
        %4626 = sbr.rel (%p4624) target = $region40
      $region39: #{_lambda_.5} parent=35 // pred_region
        %s4627 = smul.u32 2, %s20
      $region40: #{_lambda_.5} parent=35 // pred_fallthru
        _
    $region36: #{_lambda_.5} parent=5 // pred_fallthru
      _
    %p4628 = scmp.le.s32.totalorder 2, %s10
    // Predicated region
    $region41: #{_lambda_.5} parent=5 // pred_check
      %p4629 = pneg %p4628
    $region42: #{_lambda_.5} parent=5 // pred_check_branch
      %4631 = sbr.rel (%p4629) target = $region44
    $region43: #{_lambda_.5} parent=5 // pred_region
      %s4632 = ssub.s32 %s10, 2
      // Predicated region
      $region45: #{_lambda_.5} parent=43 // pred_check
        %p4633 = pneg %p152
      $region46: #{_lambda_.5} parent=43 // pred_check_branch
        %4635 = sbr.rel (%p4633) target = $region48
      $region47: #{_lambda_.5} parent=43 // pred_region
        %s4636 = smul.u32 2, %s22
        %p4637 = scmp.lt.s32.totalorder %s21, 1
        %s4638 = scalar_select %p4637, %s21, 1
        %p4639 = scmp.lt.s32.totalorder %s4636, 1
        %s4640 = scalar_select %p4639, %s4636, 1
        %s4641 = smul.addr %s4640, 10
        %s4642 = smul.addr %s4638, 20
        %s4643 = sadd.s32 %s4641, %s4642
        %s4644 = smul.addr %s4643, 4
        %s4645 = scalar_lea.vmem %s4, %s4644
      $region48: #{_lambda_.5} parent=43 // pred_fallthru
        _
    $region44: #{_lambda_.5} parent=5 // pred_fallthru
      _
  $region6: #{_lambda_.5} parent=0 // loop_footer
    %s14 = sadd.s32 1, %s10
  $region7: #{_lambda_.5} parent=0 // loop_footer_branch
    %9 = sbr.rel target = $region3
  $region8: #{_lambda_.5} parent=0 // loop_exit
    _

// kernel: _lambda_.6
$region0: #{_lambda_.6}
  #allocation0 [shape = 'u32[]', space=smem, size = 0x4, offset = 0x4, fixed_abs, tag = 'smem constant byte address 0x4 - core index']
  #allocation1 [shape = 'u32[144,128]{1,0:T(1,128)}', space=vmem, size = 0x12000, scoped, tag = 'internal scratch']
  %s0 = inlined_call_operand.vmem [shape: bf16[2,4,16,512], index: 0, kind: input, shape index: {}]
  %s1 = inlined_call_operand.vmem [shape: bf16[1,16,144], index: 1, kind: input, shape index: {}]
  %s2 = inlined_call_operand.vmem [shape: f32[16,384], index: 2, kind: input, shape index: {}]
  %s3 = inlined_call_operand.vmem [shape: f32[1,384], index: 3, kind: input, shape index: {}]
  %s4 = inlined_call_operand.vmem [shape: bf16[2,16,384], index: 4, kind: output, shape index: {}]
  %s5 = sld [smem:[#allocation0]]
  $region49: #{_lambda_.6} parent=0
    _
  %s7 = ssub.s32 1, %s5
  %s8 = scalar_select 0, %s7, %s5
  loop: start=0, step=1, limit=4
  $region2: #{_lambda_.6} parent=0 // loop_pre_header
    _
  $region3: #{_lambda_.6} parent=0 // loop_header
    %s10 = sphi 0, %s14
    %p11 = scmp.ge.s32.totalorder %s10, 4
    %s17 = sphi 0, %s29
    %s18 = sphi 0, %s25
    %s19 = sphi 0, %s17
    %s20 = sphi 0, %s18
    %s21 = sphi 0, %s19
    %s22 = sphi 0, %s20
    %s32 = sphi 0, %s34
    %s35 = sphi 0, %s32
    %s36 = sphi 0, %s35
    %s52 = sphi 0, %s36
    %s58 = sphi 0, %s60
    %s61 = sphi 0, %s58
    %s62 = sphi 0, %s61
    %s78 = sphi 0, %s62
    %s84 = sphi 0, %s86
    %s87 = sphi 0, %s84
    %s88 = sphi 0, %s87
    %s104 = sphi 0, %s88
    %s108 = sphi 0, %s108
    %s110 = sphi 0, %s108
    %s111 = sphi 0, %s110
    %s125 = sphi 0, %s111
    %s133 = sphi 0, %s135
    %s136 = sphi 0, %s133
    %s137 = sphi 0, %s136
    %s153 = sphi 0, %s137
  $region4: #{_lambda_.6} parent=0 // loop_header_branch
    %13 = sbr.rel (%p11) target = $region8
  $region5: #{_lambda_.6} parent=0 // loop_body
    %s15 = ssub.s32 %s10, 1
    %s16 = ssub.s32 %s10, 2
    %s23 = sadd.s32 1, %s18
    %p24 = scmp.ge.s32.totalorder %s23, 1
    %s25 = scalar_select %p24, 0, %s23
    %s26 = sadd.s32 1, %s17
    %s27 = scalar_select %p24, %s26, %s17
    %p28 = scmp.ge.s32.totalorder %s27, 2
    %s29 = scalar_select %p28, 0, %s27
    %s30 = ssub.s32 %s17, %s29
    %p31 = scmp.eq.s32.totalorder %s30, 0
    %s33 = sadd.s32 %s32, 1
    %s34 = scalar_select %p31, %s32, %s33
    %p37 = pneg %p31
    %p38 = scmp.eq.s32.totalorder %s10, 1
    %p39 = por %p37, %p38
    %p40 = scmp.ne.s32.totalorder %s32, %s35
    %p41 = scmp.eq.s32.totalorder %s10, 0
    %p42 = por %p40, %p41
    %p43 = scmp.ne.s32.totalorder %s32, %s35
    %p44 = scmp.eq.s32.totalorder %s15, 1
    %p45 = por %p43, %p44
    %p46 = scmp.ne.s32.totalorder %s35, %s36
    %p47 = scmp.eq.s32.totalorder %s15, 0
    %p48 = por %p46, %p47
    %p49 = scmp.ne.s32.totalorder %s35, %s36
    %p50 = scmp.eq.s32.totalorder %s16, 1
    %p51 = por %p49, %p50
    %p53 = scmp.ne.s32.totalorder %s36, %s52
    %p54 = scmp.eq.s32.totalorder %s16, 0
    %p55 = por %p53, %p54
    %s56 = ssub.s32 %s18, %s25
    %p57 = scmp.eq.s32.totalorder %s56, 0
    %s59 = sadd.s32 %s58, 1
    %s60 = scalar_select %p57, %s58, %s59
    %p63 = pneg %p57
    %p64 = scmp.eq.s32.totalorder %s10, 1
    %p65 = por %p63, %p64
    %p66 = scmp.ne.s32.totalorder %s58, %s61
    %p67 = scmp.eq.s32.totalorder %s10, 0
    %p68 = por %p66, %p67
    %p69 = scmp.ne.s32.totalorder %s58, %s61
    %p70 = scmp.eq.s32.totalorder %s15, 1
    %p71 = por %p69, %p70
    %p72 = scmp.ne.s32.totalorder %s61, %s62
    %p73 = scmp.eq.s32.totalorder %s15, 0
    %p74 = por %p72, %p73
    %p75 = scmp.ne.s32.totalorder %s61, %s62
    %p76 = scmp.eq.s32.totalorder %s16, 1
    %p77 = por %p75, %p76
    %p79 = scmp.ne.s32.totalorder %s62, %s78
    %p80 = scmp.eq.s32.totalorder %s16, 0
    %p81 = por %p79, %p80
    %s82 = ssub.s32 %s18, %s25
    %p83 = scmp.eq.s32.totalorder %s82, 0
    %s85 = sadd.s32 %s84, 1
    %s86 = scalar_select %p83, %s84, %s85
    %p89 = pneg %p83
    %p90 = scmp.eq.s32.totalorder %s10, 1
    %p91 = por %p89, %p90
    %p92 = scmp.ne.s32.totalorder %s84, %s87
    %p93 = scmp.eq.s32.totalorder %s10, 0
    %p94 = por %p92, %p93
    %p95 = scmp.ne.s32.totalorder %s84, %s87
    %p96 = scmp.eq.s32.totalorder %s15, 1
    %p97 = por %p95, %p96
    %p98 = scmp.ne.s32.totalorder %s87, %s88
    %p99 = scmp.eq.s32.totalorder %s15, 0
    %p100 = por %p98, %p99
    %p101 = scmp.ne.s32.totalorder %s87, %s88
    %p102 = scmp.eq.s32.totalorder %s16, 1
    %p103 = por %p101, %p102
    %p105 = scmp.ne.s32.totalorder %s88, %s104
    %p106 = scmp.eq.s32.totalorder %s16, 0
    %p107 = por %p105, %p106
    %s109 = sadd.s32 %s108, 1
    %p112 = scmp.eq.s32.totalorder %s10, 1
    %p113 = scmp.ne.s32.totalorder %s108, %s110
    %p114 = scmp.eq.s32.totalorder %s10, 0
    %p115 = por %p113, %p114
    %p116 = scmp.ne.s32.totalorder %s108, %s110
    %p117 = scmp.eq.s32.totalorder %s15, 1
    %p118 = por %p116, %p117
    %p119 = scmp.ne.s32.totalorder %s110, %s111
    %p120 = scmp.eq.s32.totalorder %s15, 0
    %p121 = por %p119, %p120
    %p122 = scmp.ne.s32.totalorder %s110, %s111
    %p123 = scmp.eq.s32.totalorder %s16, 1
    %p124 = por %p122, %p123
    %p126 = scmp.ne.s32.totalorder %s111, %s125
    %p127 = scmp.eq.s32.totalorder %s16, 0
    %p128 = por %p126, %p127
    %s129 = ssub.s32 %s17, %s29
    %s130 = ssub.s32 %s18, %s25
    %s131 = sor.u32 %s129, %s130
    %p132 = scmp.eq.s32.totalorder %s131, 0
    %s134 = sadd.s32 %s133, 1
    %s135 = scalar_select %p132, %s133, %s134
    %p138 = pneg %p132
    %p139 = scmp.eq.s32.totalorder %s10, 1
    %p140 = por %p138, %p139
    %p141 = scmp.ne.s32.totalorder %s133, %s136
    %p142 = scmp.eq.s32.totalorder %s10, 0
    %p143 = por %p141, %p142
    %p144 = scmp.ne.s32.totalorder %s133, %s136
    %p145 = scmp.eq.s32.totalorder %s15, 1
    %p146 = por %p144, %p145
    %p147 = scmp.ne.s32.totalorder %s136, %s137
    %p148 = scmp.eq.s32.totalorder %s15, 0
    %p149 = por %p147, %p148
    %p150 = scmp.ne.s32.totalorder %s136, %s137
    %p151 = scmp.eq.s32.totalorder %s16, 1
    %p152 = por %p150, %p151
    %p154 = scmp.ne.s32.totalorder %s137, %s153
    %p155 = scmp.eq.s32.totalorder %s16, 0
    %p156 = por %p154, %p155
    %p157 = scmp.le.s32.totalorder 1, %s10
    %p158 = scmp.lt.s32.totalorder %s10, 3
    %p159 = pnand %p157, %p158
    %p160 = pneg %p159
    // Predicated region
    $region9: #{_lambda_.6} parent=5 // pred_check
      _
    $region10: #{_lambda_.6} parent=5 // pred_check_branch
      %162 = sbr.rel (%p159) target = $region12
    $region11: #{_lambda_.6} parent=5 // pred_region
      %s163 = ssub.s32 %s10, 1
      // Predicated region
      $region13: #{_lambda_.6} parent=11 // pred_check
        %p164 = pneg %p74
      $region14: #{_lambda_.6} parent=11 // pred_check_branch
        %166 = sbr.rel (%p164) target = $region16
      $region15: #{_lambda_.6} parent=11 // pred_region
        %s167 = smul.u32 2, %s20
        %p168 = scmp.lt.s32.totalorder %s167, 1
        %s169 = scalar_select %p168, %s167, 1
        %s170 = smul.addr %s169, 2
        %s171 = smul.addr %s170, 4
        %s172 = scalar_lea.vmem %s1, %s171
        %s173 = smul.u32 2, %s20
      $region16: #{_lambda_.6} parent=11 // pred_fallthru
        _
      // Predicated region
      $region17: #{_lambda_.6} parent=11 // pred_check
        %p174 = pneg %p100
      $region18: #{_lambda_.6} parent=11 // pred_check_branch
        %176 = sbr.rel (%p174) target = $region20
      $region19: #{_lambda_.6} parent=11 // pred_region
        %s177 = smul.u32 2, %s20
        %p178 = scmp.lt.s32.totalorder %s177, 1
        %s179 = scalar_select %p178, %s177, 1
        %s180 = smul.addr %s179, 3
        %s181 = smul.addr %s180, 8
        %s182 = scalar_lea.vmem %s2, %s181
        %s183 = smul.u32 2, %s20
      $region20: #{_lambda_.6} parent=11 // pred_fallthru
        _
      // Predicated region
      $region21: #{_lambda_.6} parent=11 // pred_check
        %p184 = pneg %p121
      $region22: #{_lambda_.6} parent=11 // pred_check_branch
        %186 = sbr.rel (%p184) target = $region24
      $region23: #{_lambda_.6} parent=11 // pred_region
        _
      $region24: #{_lambda_.6} parent=11 // pred_fallthru
        _
    $region12: #{_lambda_.6} parent=5 // pred_fallthru
      _
    %p187 = scmp.lt.s32.totalorder %s10, 2
    // Predicated region
    $region25: #{_lambda_.6} parent=5 // pred_check
      %p188 = pneg %p187
    $region26: #{_lambda_.6} parent=5 // pred_check_branch
      %190 = sbr.rel (%p188) target = $region28
    $region27: #{_lambda_.6} parent=5 // pred_region
      // Predicated region
      $region29: #{_lambda_.6} parent=27 // pred_check
        %p191 = pneg %p42
      $region30: #{_lambda_.6} parent=27 // pred_check_branch
        %193 = sbr.rel (%p191) target = $region32
      $region31: #{_lambda_.6} parent=27 // pred_region
        %p194 = scmp.lt.s32.totalorder %s17, 1
        %s195 = scalar_select %p194, %s17, 1
        %s196 = smul.addr %s195, 32
        %s197 = smul.addr %s196, 4
        %s198 = scalar_lea.vmem %s0, %s197
      $region32: #{_lambda_.6} parent=27 // pred_fallthru
        _
    $region28: #{_lambda_.6} parent=5 // pred_fallthru
      _
    %p199 = scmp.le.s32.totalorder 1, %s10
    %p200 = scmp.lt.s32.totalorder %s10, 3
    %p201 = pnand %p199, %p200
    %p202 = pneg %p201
    // Predicated region
    $region33: #{_lambda_.6} parent=5 // pred_check
      _
    $region34: #{_lambda_.6} parent=5 // pred_check_branch
      %204 = sbr.rel (%p201) target = $region36
    $region35: #{_lambda_.6} parent=5 // pred_region
      %s205 = ssub.s32 %s10, 1
      %p206 = scmp.lt.s32.totalorder %s19, 1
      %s207 = scalar_select %p206, %s19, 1
      %s208 = smul.addr %s207, 32
      %s209 = smul.addr %s208, 4
      %s210 = scalar_lea.vmem %s0, %s209
      %p211 = pneg %p48
      %p212 = pneg %p45
      %s213 = smul.u32 2, %s20
      %p214 = scmp.lt.s32.totalorder %s213, 1
      %s215 = scalar_select %p214, %s213, 1
      %s216 = smul.addr %s215, 2
      %s217 = smul.addr %s216, 4
      %s218 = scalar_lea.vmem %s1, %s217
      %p219 = pneg %p74
      %p220 = pneg %p71
      %s221 = smul.u32 2, %s20
      %p222 = scmp.lt.s32.totalorder %s221, 1
      %s223 = scalar_select %p222, %s221, 1
      %s224 = smul.addr %s223, 3
      %s225 = smul.addr %s224, 8
      %s226 = scalar_lea.vmem %s2, %s225
      %p227 = pneg %p100
      %p228 = pneg %p97
      %p229 = pneg %p121
      %p230 = pneg %p118
      %p231 = pneg %p149
      %p232 = pneg %p146
      %s233 = smul.u32 2, %s20
      %p234 = scmp.lt.s32.totalorder %s19, 1
      %s235 = scalar_select %p234, %s19, 1
      %p236 = scmp.lt.s32.totalorder %s233, 1
      %s237 = scalar_select %p236, %s233, 1
      %s238 = smul.addr %s237, 3
      %s239 = smul.addr %s235, 6
      %s240 = sadd.s32 %s238, %s239
      %s241 = smul.addr %s240, 4
      %s242 = scalar_lea.vmem %s4, %s241
      %p243 = scmp.lt.s32.totalorder %s19, 1
      %s244 = scalar_select %p243, %s19, 1
      %s245 = smul.addr %s244, 32
      %s246 = smul.addr %s245, 4
      %s247 = scalar_lea.vmem %s0, %s246
      %s248 = smul.u32 2, %s20
      %p249 = scmp.lt.s32.totalorder %s248, 1
      %s250 = scalar_select %p249, %s248, 1
      %s251 = smul.addr %s250, 2
      %s252 = smul.addr %s251, 4
      %s253 = scalar_lea.vmem %s1, %s252
      %s254 = smul.u32 2, %s20
      %s255 = smul.u32 2, %s20
      %p256 = scmp.lt.s32.totalorder %s255, 1
      %s257 = scalar_select %p256, %s255, 1
      %s258 = smul.addr %s257, 3
      %s259 = smul.addr %s258, 8
      %s260 = scalar_lea.vmem %s2, %s259
      %s261 = smul.u32 2, %s20
      %s262 = smul.u32 2, %s20
      %p263 = scmp.lt.s32.totalorder %s19, 1
      %s264 = scalar_select %p263, %s19, 1
      %p265 = scmp.lt.s32.totalorder %s262, 1
      %s266 = scalar_select %p265, %s262, 1
      %s267 = smul.addr %s266, 3
      %s268 = smul.addr %s264, 6
      %s269 = sadd.s32 %s267, %s268
      %s270 = smul.addr %s269, 4
      %s271 = scalar_lea.vmem %s4, %s270
      %s272 = smul.u32 2, %s20
      %v274 = vld [vmem:[%s260] sm:$0xff]
      %v275 = vld [vmem:[%s260 + $0x8] sm:$0xff]
      %v276 = vld [vmem:[%s260 + $0x10] sm:$0xff]
      %v277 = vld [vmem:[%s260 + $0x18] sm:$0xff]
      %v278 = vld [vmem:[%s260 + $0x20] sm:$0xff]
      %v279 = vld [vmem:[%s260 + $0x28] sm:$0xff]
      %v280 = vld [vmem:[%s247] sm:$0xff]
      %v281 = vld [vmem:[%s247 + $0x8] sm:$0xf]
      %v282 = vld [vmem:[%s247 + $0x10] sm:$0xff]
      %v283 = vld [vmem:[%s247 + $0x18] sm:$0xf]
      %s284 = scalar_lea.vmem %s247, 32
      %v285 = vld [vmem:[%s284] sm:$0xff]
      %v286 = vld [vmem:[%s284 + $0x8] sm:$0xf]
      %v287 = vld [vmem:[%s284 + $0x10] sm:$0xff]
      %v288 = vld [vmem:[%s284 + $0x18] sm:$0xf]
      %v289 = vld [vmem:[%s247 + $0x8] sm:$0xff]
      %v290 = vld [vmem:[%s247 + $0x18] sm:$0xff]
      %s291 = scalar_lea.vmem %s247, 64
      %v292 = vld [vmem:[%s291] sm:$0xff]
      %v293 = vld [vmem:[%s291 + $0x8] sm:$0xf]
      %v294 = vld [vmem:[%s291 + $0x10] sm:$0xff]
      %v295 = vld [vmem:[%s291 + $0x18] sm:$0xf]
      %s296 = scalar_lea.vmem %s247, 96
      %v297 = vld [vmem:[%s296] sm:$0xff]
      %v298 = vld [vmem:[%s296 + $0x8] sm:$0xf]
      %v299 = vld [vmem:[%s296 + $0x10] sm:$0xff]
      %v300 = vld [vmem:[%s296 + $0x18] sm:$0xf]
      %v301 = vld [vmem:[%s291 + $0x8] sm:$0xff]
      %v302 = vld [vmem:[%s291 + $0x18] sm:$0xff]
      %v303 = vld [vmem:[%s284 + $0x8] sm:$0xff]
      %v304 = vld [vmem:[%s284 + $0x18] sm:$0xff]
      %v309 = vunpack.c.l.b16 %v280
      %v310 = vunpack.c.h.b16 %v280
      %v311 = vunpack.c.l.b16 %v281
      %v312 = vunpack.c.l.b16 %v282
      %v313 = vunpack.c.h.b16 %v282
      %v314 = vunpack.c.l.b16 %v283
      %v315 = vpack.c.b16 %v312, %v309
      %v316 = vpack.c.b16 %v313, %v310
      %v317 = vpack.c.b16 %v314, %v311
      %v325 = vunpack.c.l.b16 %v285
      %v326 = vunpack.c.h.b16 %v285
      %v327 = vunpack.c.l.b16 %v286
      %v328 = vunpack.c.l.b16 %v287
      %v329 = vunpack.c.h.b16 %v287
      %v330 = vunpack.c.l.b16 %v288
      %v331 = vpack.c.b16 %v328, %v325
      %v332 = vpack.c.b16 %v329, %v326
      %v333 = vpack.c.b16 %v330, %v327
      %v339 = vunpack.c.l.b16 %v289
      %v340 = vunpack.c.h.b16 %v289
      %v341 = vunpack.c.l.b16 %v290
      %v342 = vunpack.c.h.b16 %v290
      %v343 = vpack.c.b16 %v341, %v339
      %v344 = vpack.c.b16 %v342, %v340
      %345 = vrot.lane.b32.xlu0 %v315, 127
      %v346 = vpop.permute.xlu0 %345
      %347 = vrot.lane.b32.xlu0 %v316, 127
      %v348 = vpop.permute.xlu0 %347
      %349 = vrot.lane.b32.xlu0 %v343, 127
      %v350 = vpop.permute.xlu0 %349
      %351 = vrot.lane.b32.xlu0 %v344, 127
      %v352 = vpop.permute.xlu0 %351
      %vm353 = vcmask 1039360
      %v354 = vsel %vm353, %v346, %v348
      %v355 = vsel %vm353, %v348, %v350
      %v356 = vsel %vm353, %v350, %v352
      %v364 = vunpack.c.l.b16 %v292
      %v365 = vunpack.c.h.b16 %v292
      %v366 = vunpack.c.l.b16 %v293
      %v367 = vunpack.c.l.b16 %v294
      %v368 = vunpack.c.h.b16 %v294
      %v369 = vunpack.c.l.b16 %v295
      %v370 = vpack.c.b16 %v367, %v364
      %v371 = vpack.c.b16 %v368, %v365
      %v372 = vpack.c.b16 %v369, %v366
      %v380 = vunpack.c.l.b16 %v297
      %v381 = vunpack.c.h.b16 %v297
      %v382 = vunpack.c.l.b16 %v298
      %v383 = vunpack.c.l.b16 %v299
      %v384 = vunpack.c.h.b16 %v299
      %v385 = vunpack.c.l.b16 %v300
      %v386 = vpack.c.b16 %v383, %v380
      %v387 = vpack.c.b16 %v384, %v381
      %v388 = vpack.c.b16 %v385, %v382
      %v394 = vunpack.c.l.b16 %v301
      %v395 = vunpack.c.h.b16 %v301
      %v396 = vunpack.c.l.b16 %v302
      %v397 = vunpack.c.h.b16 %v302
      %v398 = vpack.c.b16 %v396, %v394
      %v399 = vpack.c.b16 %v397, %v395
      %400 = vrot.lane.b32.xlu0 %v370, 127
      %v401 = vpop.permute.xlu0 %400
      %402 = vrot.lane.b32.xlu0 %v371, 127
      %v403 = vpop.permute.xlu0 %402
      %404 = vrot.lane.b32.xlu0 %v398, 127
      %v405 = vpop.permute.xlu0 %404
      %406 = vrot.lane.b32.xlu0 %v399, 127
      %v407 = vpop.permute.xlu0 %406
      %v408 = vsel %vm353, %v401, %v403
      %v409 = vsel %vm353, %v403, %v405
      %v410 = vsel %vm353, %v405, %v407
      %414 = vrot.lane.b32.xlu0 %v315, 111
      %v415 = vpop.permute.xlu0 %414
      %416 = vrot.lane.b32.xlu0 %v316, 111
      %v417 = vpop.permute.xlu0 %416
      %418 = vrot.lane.b32.xlu0 %v343, 111
      %v419 = vpop.permute.xlu0 %418
      %420 = vrot.lane.b32.xlu0 %v344, 111
      %v421 = vpop.permute.xlu0 %420
      %vm422 = vcmask 908288
      %v423 = vsel %vm422, %v415, %v417
      %v424 = vsel %vm422, %v417, %v419
      %v425 = vsel %vm422, %v419, %v421
      %v431 = vunpack.c.l.b16 %v303
      %v432 = vunpack.c.h.b16 %v303
      %v433 = vunpack.c.l.b16 %v304
      %v434 = vunpack.c.h.b16 %v304
      %v435 = vpack.c.b16 %v433, %v431
      %v436 = vpack.c.b16 %v434, %v432
      %437 = vrot.lane.b32.xlu0 %v331, 111
      %v438 = vpop.permute.xlu0 %437
      %439 = vrot.lane.b32.xlu0 %v332, 111
      %v440 = vpop.permute.xlu0 %439
      %441 = vrot.lane.b32.xlu0 %v435, 111
      %v442 = vpop.permute.xlu0 %441
      %443 = vrot.lane.b32.xlu0 %v436, 111
      %v444 = vpop.permute.xlu0 %443
      %v445 = vsel %vm422, %v438, %v440
      %v446 = vsel %vm422, %v440, %v442
      %v447 = vsel %vm422, %v442, %v444
      %451 = vrot.lane.b32.xlu0 %v315, 110
      %v452 = vpop.permute.xlu0 %451
      %453 = vrot.lane.b32.xlu0 %v316, 110
      %v454 = vpop.permute.xlu0 %453
      %455 = vrot.lane.b32.xlu0 %v343, 110
      %v456 = vpop.permute.xlu0 %455
      %457 = vrot.lane.b32.xlu0 %v344, 110
      %v458 = vpop.permute.xlu0 %457
      %vm459 = vcmask 900096
      %v460 = vsel %vm459, %v452, %v454
      %v461 = vsel %vm459, %v454, %v456
      %v462 = vsel %vm459, %v456, %v458
      %v466 = vld [vmem:[%s253] sm:$0xff]
      %v467 = vld [vmem:[%s253 + $0x8] sm:$0xff]
      %v470 = vunpack.c.l.b16 %v466
      %v471 = vunpack.c.h.b16 %v466
      %v472 = vunpack.c.l.b16 %v467
      %v473 = vunpack.c.h.b16 %v467
      %v474 = vpack.c.b16 %v472, %v470
      %v475 = vpack.c.b16 %v473, %v471
      %vm477 = vcmask 130048
      %v479 = vsel %vm477, %v475, 0
      %481 = vmatprep.subr.bf16.mxu0 %v316
      %482 = vmatpush1.bf16.msra.mxu0 %v315
      %483 = vmatprep.subr.bf16.mxu0 %v332
      %484 = vmatpush1.bf16.msra.mxu0 %v331
      %485 = vmatprep.subr.bf16.mxu0 %v355
      %486 = vmatpush1.bf16.msra.mxu0 %v354
      %487 = vmatprep.subr.bf16.mxu0 %v371
      %488 = vmatpush1.bf16.msra.mxu0 %v370
      %489 = vmatprep.subr.bf16.mxu0 %v387
      %490 = vmatpush1.bf16.msra.mxu0 %v386
      %491 = vmatprep.subr.bf16.mxu0 %v409
      %492 = vmatpush1.bf16.msra.mxu0 %v408
      %493 = vmatprep.subr.bf16.mxu0 %v424
      %494 = vmatpush1.bf16.msra.mxu0 %v423
      %495 = vmatprep.subr.bf16.mxu0 %v446
      %496 = vmatpush1.bf16.msra.mxu0 %v445
      %497 = vmatprep.subr.bf16.mxu0 %v461
      %498 = vmatpush1.bf16.msra.mxu0 %v460
      %499 = vmatprep.subr.bf16.mxu0 0
      %500 = vmatpush1.bf16.msra.mxu0 0
      %501 = vmatprep.subr.bf16.mxu0 0
      %502 = vmatpush1.bf16.msra.mxu0 0
      %503 = vmatprep.subr.bf16.mxu0 0
      %504 = vmatpush1.bf16.msra.mxu0 0
      %505 = vmatprep.subr.bf16.mxu0 0
      %506 = vmatpush1.bf16.msra.mxu0 0
      %507 = vmatprep.subr.bf16.mxu0 0
      %508 = vmatpush1.bf16.msra.mxu0 0
      %509 = vmatprep.subr.bf16.mxu0 0
      %510 = vmatpush1.bf16.msra.mxu0 0
      %511 = vmatprep.subr.bf16.mxu0 0
      %512 = vmatpush1.bf16.msra.mxu0 0
      %513 = vmatprep.mubr.bf16.mxu0 %v479
      %514 = vmatmul.mubr.bf16.gmra.mrb[0].mxu0 %v474
      %v515 = vpop.f32.mrb[0].mxu0
      %v516 = vadd.f32 0.0, %v515
      %v517 = vpop.f32.mrb[0].mxu0
      %v518 = vadd.f32 0.0, %v517
      %v519 = vpop.f32.mrb[0].mxu0
      %v520 = vadd.f32 0.0, %v519
      %v521 = vpop.f32.mrb[0].mxu0
      %v522 = vadd.f32 0.0, %v521
      %523 = vdwg.mxu0
      %524 = vmatprep.subr.bf16.mxu0 0
      %525 = vmatpush1.bf16.msra.mxu0 %v317
      %526 = vmatprep.subr.bf16.mxu0 0
      %527 = vmatpush1.bf16.msra.mxu0 %v333
      %528 = vmatprep.subr.bf16.mxu0 0
      %529 = vmatpush1.bf16.msra.mxu0 %v356
      %530 = vmatprep.subr.bf16.mxu0 0
      %531 = vmatpush1.bf16.msra.mxu0 %v372
      %532 = vmatprep.subr.bf16.mxu0 0
      %533 = vmatpush1.bf16.msra.mxu0 %v388
      %534 = vmatprep.subr.bf16.mxu0 0
      %535 = vmatpush1.bf16.msra.mxu0 %v410
      %536 = vmatprep.subr.bf16.mxu0 0
      %537 = vmatpush1.bf16.msra.mxu0 %v425
      %538 = vmatprep.subr.bf16.mxu0 0
      %539 = vmatpush1.bf16.msra.mxu0 %v447
      %540 = vmatprep.subr.bf16.mxu0 0
      %541 = vmatpush1.bf16.msra.mxu0 %v462
      %542 = vmatprep.subr.bf16.mxu0 0
      %543 = vmatpush1.bf16.msra.mxu0 0
      %544 = vmatprep.subr.bf16.mxu0 0
      %545 = vmatpush1.bf16.msra.mxu0 0
      %546 = vmatprep.subr.bf16.mxu0 0
      %547 = vmatpush1.bf16.msra.mxu0 0
      %548 = vmatprep.subr.bf16.mxu0 0
      %549 = vmatpush1.bf16.msra.mxu0 0
      %550 = vmatprep.subr.bf16.mxu0 0
      %551 = vmatpush1.bf16.msra.mxu0 0
      %552 = vmatprep.subr.bf16.mxu0 0
      %553 = vmatpush1.bf16.msra.mxu0 0
      %554 = vmatprep.subr.bf16.mxu0 0
      %555 = vmatpush1.bf16.msra.mxu0 0
      %556 = vmatprep.mubr.bf16.mxu0 %v479
      %557 = vmatmul.mubr.bf16.gmra.mrb[0].mxu0 %v474
      %v558 = vpop.f32.mrb[0].mxu0
      %v559 = vadd.f32 0.0, %v558
      %v560 = vpop.f32.mrb[0].mxu0
      %v561 = vpop.f32.mrb[0].mxu0
      %v562 = vadd.f32 0.0, %v561
      %v563 = vpop.f32.mrb[0].mxu0
      %564 = vdwg.mxu0
      %v565 = vadd.f32 %v274, %v516
      %v566 = vadd.f32 %v275, %v518
      %v567 = vadd.f32 %v276, %v559
      %v568 = vadd.f32 %v277, %v520
      %v569 = vadd.f32 %v278, %v522
      %v570 = vadd.f32 %v279, %v562
      %v571 = vld [vmem:[%s3] sm:$0x7]
      %v573 = vlaneseq
      %v574 = vshrl.u32 %v573, 7
      %v575 = vsub.s32 0, %v574
      %v576 = vrot.slane %v571, %v575
      %v577 = vlaneseq
      %v578 = vshrl.u32 %v577, 7
      %v579 = vsub.s32 1, %v578
      %v580 = vrot.slane %v571, %v579
      %v581 = vlaneseq
      %v582 = vshrl.u32 %v581, 7
      %v583 = vsub.s32 2, %v582
      %v584 = vrot.slane %v571, %v583
      %v588 = vmul.f32 %v565, %v576
      %v589 = vmul.f32 %v566, %v580
      %v590 = vmul.f32 %v567, %v584
      %v591 = vmul.f32 %v568, %v576
      %v592 = vmul.f32 %v569, %v580
      %v593 = vmul.f32 %v570, %v584
      %v594 = vadd.f32 %v588, %v589
      %v595 = vadd.f32 %v594, %v590
      %596 = vadd.xlane.f32.xlu0 %v595
      %v597 = vpop.xlane.xlu0 %596
      %v598 = vadd.f32 %v591, %v592
      %v599 = vadd.f32 %v598, %v593
      %600 = vadd.xlane.f32.xlu0 %v599
      %v601 = vpop.xlane.xlu0 %600
      %v602 = vmul.f32 %v588, %v565
      %v603 = vmul.f32 %v589, %v566
      %v604 = vmul.f32 %v590, %v567
      %v605 = vmul.f32 %v591, %v568
      %v606 = vmul.f32 %v592, %v569
      %v607 = vmul.f32 %v593, %v570
      %v608 = vadd.f32 %v602, %v603
      %v609 = vadd.f32 %v608, %v604
      %610 = vadd.xlane.f32.xlu0 %v609
      %v611 = vpop.xlane.xlu0 %610
      %v612 = vadd.f32 %v605, %v606
      %v613 = vadd.f32 %v612, %v607
      %614 = vadd.xlane.f32.xlu0 %v613
      %v615 = vpop.xlane.xlu0 %614
      %v616 = vmul.f32 %v597, 0.00390625
      %v617 = vmul.f32 %v601, 0.00390625
      %v618 = vmul.f32 %v611, 0.00390625
      %v619 = vmul.f32 %v615, 0.00390625
      %v620 = vmul.f32 %v616, %v616
      %v621 = vmul.f32 %v617, %v617
      %v622 = vsub.f32 %v618, %v620
      %v623 = vsub.f32 %v619, %v621
      %v624 = vmax.f32 %v622, 0.0
      %v625 = vmax.f32 %v623, 0.0
      %v626 = vsub.f32 %v565, %v616
      %v627 = vsub.f32 %v566, %v616
      %v628 = vsub.f32 %v567, %v616
      %v629 = vsub.f32 %v568, %v617
      %v630 = vsub.f32 %v569, %v617
      %v631 = vsub.f32 %v570, %v617
      %v632 = vadd.f32 %v624, 1e-05
      %v633 = vadd.f32 %v625, 1e-05
      %v634 = vrsqrt.pop %v632
      %v635 = vrsqrt.pop %v633
      %v636 = vmul.f32 %v626, %v634
      %v637 = vmul.f32 %v627, %v634
      %v638 = vmul.f32 %v628, %v634
      %v639 = vmul.f32 %v629, %v635
      %v640 = vmul.f32 %v630, %v635
      %v641 = vmul.f32 %v631, %v635
      %v642 = vmax.f32 %v636, 0.0
      %v643 = vmax.f32 %v637, 0.0
      %v644 = vmax.f32 %v638, 0.0
      %v645 = vmax.f32 %v639, 0.0
      %v646 = vmax.f32 %v640, 0.0
      %v647 = vmax.f32 %v641, 0.0
      %v648 = vpack.c.bf16 %v645, %v642
      %v649 = vpack.c.bf16 %v646, %v643
      %v650 = vpack.c.bf16 %v647, %v644
      %v654 = vunpack.c.l.b16 %v648
      %v655 = vunpack.c.l.b16 %v649
      %v656 = vunpack.c.l.b16 %v650
      %v657 = vunpack.c.h.b16 %v648
      %v658 = vunpack.c.h.b16 %v649
      %v659 = vunpack.c.h.b16 %v650
      %v660 = vpack.c.b16 %v655, %v654
      %v661 = vpack.c.b16 %v656, %v656
      %v662 = vpack.c.b16 %v658, %v657
      %v663 = vpack.c.b16 %v659, %v659
      %668 = vst [vmem:[%s271] sm:$0xff] %v660
      %669 = vst [vmem:[%s271 + $0x8] sm:$0xf] %v661
      %670 = vst [vmem:[%s271 + $0xc] sm:$0xff] %v662
      %671 = vst [vmem:[%s271 + $0x14] sm:$0xf] %v663
      %s672 = smul.u32 2, %s20
      %p673 = scmp.lt.s32.totalorder %s19, 1
      %s674 = scalar_select %p673, %s19, 1
      %p675 = scmp.lt.s32.totalorder %s672, 1
      %s676 = scalar_select %p675, %s672, 1
      %s677 = smul.addr %s676, 3
      %s678 = smul.addr %s674, 6
      %s679 = sadd.s32 %s677, %s678
      %s680 = smul.addr %s679, 4
      %s681 = scalar_lea.vmem %s4, %s680
      // Predicated region
      $region37: #{_lambda_.6} parent=35 // pred_check
        %p682 = pneg %p146
      $region38: #{_lambda_.6} parent=35 // pred_check_branch
        %684 = sbr.rel (%p682) target = $region40
      $region39: #{_lambda_.6} parent=35 // pred_region
        %s685 = smul.u32 2, %s20
      $region40: #{_lambda_.6} parent=35 // pred_fallthru
        _
    $region36: #{_lambda_.6} parent=5 // pred_fallthru
      _
    %p686 = scmp.le.s32.totalorder 2, %s10
    // Predicated region
    $region41: #{_lambda_.6} parent=5 // pred_check
      %p687 = pneg %p686
    $region42: #{_lambda_.6} parent=5 // pred_check_branch
      %689 = sbr.rel (%p687) target = $region44
    $region43: #{_lambda_.6} parent=5 // pred_region
      %s690 = ssub.s32 %s10, 2
      // Predicated region
      $region45: #{_lambda_.6} parent=43 // pred_check
        %p691 = pneg %p152
      $region46: #{_lambda_.6} parent=43 // pred_check_branch
        %693 = sbr.rel (%p691) target = $region48
      $region47: #{_lambda_.6} parent=43 // pred_region
        %s694 = smul.u32 2, %s22
        %p695 = scmp.lt.s32.totalorder %s21, 1
        %s696 = scalar_select %p695, %s21, 1
        %p697 = scmp.lt.s32.totalorder %s694, 1
        %s698 = scalar_select %p697, %s694, 1
        %s699 = smul.addr %s698, 3
        %s700 = smul.addr %s696, 6
        %s701 = sadd.s32 %s699, %s700
        %s702 = smul.addr %s701, 4
        %s703 = scalar_lea.vmem %s4, %s702
      $region48: #{_lambda_.6} parent=43 // pred_fallthru
        _
    $region44: #{_lambda_.6} parent=5 // pred_fallthru
      _
  $region6: #{_lambda_.6} parent=0 // loop_footer
    %s14 = sadd.s32 1, %s10
  $region7: #{_lambda_.6} parent=0 // loop_footer_branch
    %9 = sbr.rel target = $region3
  $region8: #{_lambda_.6} parent=0 // loop_exit
    _

// kernel: _lambda_.7
$region0: #{_lambda_.7}
  #allocation0 [shape = 'u32[]', space=smem, size = 0x4, offset = 0x4, fixed_abs, tag = 'smem constant byte address 0x4 - core index']
  #allocation1 [shape = 'u32[144,128]{1,0:T(1,128)}', space=vmem, size = 0x12000, scoped, tag = 'internal scratch']
  %s0 = inlined_call_operand.vmem [shape: bf16[2,4,16,256], index: 0, kind: input, shape index: {}]
  %s1 = inlined_call_operand.vmem [shape: bf16[1,32,144], index: 1, kind: input, shape index: {}]
  %s2 = inlined_call_operand.vmem [shape: f32[32,128], index: 2, kind: input, shape index: {}]
  %s3 = inlined_call_operand.vmem [shape: f32[1,128], index: 3, kind: input, shape index: {}]
  %s4 = inlined_call_operand.vmem [shape: bf16[2,32,128], index: 4, kind: output, shape index: {}]
  %s5 = sld [smem:[#allocation0]]
  $region49: #{_lambda_.7} parent=0
    _
  %s7 = ssub.s32 1, %s5
  %s8 = scalar_select 0, %s7, %s5
  loop: start=0, step=1, limit=4
  $region2: #{_lambda_.7} parent=0 // loop_pre_header
    _
  $region3: #{_lambda_.7} parent=0 // loop_header
    %s10 = sphi 0, %s14
    %p11 = scmp.ge.s32.totalorder %s10, 4
    %s17 = sphi 0, %s29
    %s18 = sphi 0, %s25
    %s19 = sphi 0, %s17
    %s20 = sphi 0, %s18
    %s21 = sphi 0, %s19
    %s22 = sphi 0, %s20
    %s32 = sphi 0, %s34
    %s35 = sphi 0, %s32
    %s36 = sphi 0, %s35
    %s52 = sphi 0, %s36
    %s58 = sphi 0, %s60
    %s61 = sphi 0, %s58
    %s62 = sphi 0, %s61
    %s78 = sphi 0, %s62
    %s84 = sphi 0, %s86
    %s87 = sphi 0, %s84
    %s88 = sphi 0, %s87
    %s104 = sphi 0, %s88
    %s108 = sphi 0, %s108
    %s110 = sphi 0, %s108
    %s111 = sphi 0, %s110
    %s125 = sphi 0, %s111
    %s133 = sphi 0, %s135
    %s136 = sphi 0, %s133
    %s137 = sphi 0, %s136
    %s153 = sphi 0, %s137
  $region4: #{_lambda_.7} parent=0 // loop_header_branch
    %13 = sbr.rel (%p11) target = $region8
  $region5: #{_lambda_.7} parent=0 // loop_body
    %s15 = ssub.s32 %s10, 1
    %s16 = ssub.s32 %s10, 2
    %s23 = sadd.s32 1, %s18
    %p24 = scmp.ge.s32.totalorder %s23, 1
    %s25 = scalar_select %p24, 0, %s23
    %s26 = sadd.s32 1, %s17
    %s27 = scalar_select %p24, %s26, %s17
    %p28 = scmp.ge.s32.totalorder %s27, 2
    %s29 = scalar_select %p28, 0, %s27
    %s30 = ssub.s32 %s17, %s29
    %p31 = scmp.eq.s32.totalorder %s30, 0
    %s33 = sadd.s32 %s32, 1
    %s34 = scalar_select %p31, %s32, %s33
    %p37 = pneg %p31
    %p38 = scmp.eq.s32.totalorder %s10, 1
    %p39 = por %p37, %p38
    %p40 = scmp.ne.s32.totalorder %s32, %s35
    %p41 = scmp.eq.s32.totalorder %s10, 0
    %p42 = por %p40, %p41
    %p43 = scmp.ne.s32.totalorder %s32, %s35
    %p44 = scmp.eq.s32.totalorder %s15, 1
    %p45 = por %p43, %p44
    %p46 = scmp.ne.s32.totalorder %s35, %s36
    %p47 = scmp.eq.s32.totalorder %s15, 0
    %p48 = por %p46, %p47
    %p49 = scmp.ne.s32.totalorder %s35, %s36
    %p50 = scmp.eq.s32.totalorder %s16, 1
    %p51 = por %p49, %p50
    %p53 = scmp.ne.s32.totalorder %s36, %s52
    %p54 = scmp.eq.s32.totalorder %s16, 0
    %p55 = por %p53, %p54
    %s56 = ssub.s32 %s18, %s25
    %p57 = scmp.eq.s32.totalorder %s56, 0
    %s59 = sadd.s32 %s58, 1
    %s60 = scalar_select %p57, %s58, %s59
    %p63 = pneg %p57
    %p64 = scmp.eq.s32.totalorder %s10, 1
    %p65 = por %p63, %p64
    %p66 = scmp.ne.s32.totalorder %s58, %s61
    %p67 = scmp.eq.s32.totalorder %s10, 0
    %p68 = por %p66, %p67
    %p69 = scmp.ne.s32.totalorder %s58, %s61
    %p70 = scmp.eq.s32.totalorder %s15, 1
    %p71 = por %p69, %p70
    %p72 = scmp.ne.s32.totalorder %s61, %s62
    %p73 = scmp.eq.s32.totalorder %s15, 0
    %p74 = por %p72, %p73
    %p75 = scmp.ne.s32.totalorder %s61, %s62
    %p76 = scmp.eq.s32.totalorder %s16, 1
    %p77 = por %p75, %p76
    %p79 = scmp.ne.s32.totalorder %s62, %s78
    %p80 = scmp.eq.s32.totalorder %s16, 0
    %p81 = por %p79, %p80
    %s82 = ssub.s32 %s18, %s25
    %p83 = scmp.eq.s32.totalorder %s82, 0
    %s85 = sadd.s32 %s84, 1
    %s86 = scalar_select %p83, %s84, %s85
    %p89 = pneg %p83
    %p90 = scmp.eq.s32.totalorder %s10, 1
    %p91 = por %p89, %p90
    %p92 = scmp.ne.s32.totalorder %s84, %s87
    %p93 = scmp.eq.s32.totalorder %s10, 0
    %p94 = por %p92, %p93
    %p95 = scmp.ne.s32.totalorder %s84, %s87
    %p96 = scmp.eq.s32.totalorder %s15, 1
    %p97 = por %p95, %p96
    %p98 = scmp.ne.s32.totalorder %s87, %s88
    %p99 = scmp.eq.s32.totalorder %s15, 0
    %p100 = por %p98, %p99
    %p101 = scmp.ne.s32.totalorder %s87, %s88
    %p102 = scmp.eq.s32.totalorder %s16, 1
    %p103 = por %p101, %p102
    %p105 = scmp.ne.s32.totalorder %s88, %s104
    %p106 = scmp.eq.s32.totalorder %s16, 0
    %p107 = por %p105, %p106
    %s109 = sadd.s32 %s108, 1
    %p112 = scmp.eq.s32.totalorder %s10, 1
    %p113 = scmp.ne.s32.totalorder %s108, %s110
    %p114 = scmp.eq.s32.totalorder %s10, 0
    %p115 = por %p113, %p114
    %p116 = scmp.ne.s32.totalorder %s108, %s110
    %p117 = scmp.eq.s32.totalorder %s15, 1
    %p118 = por %p116, %p117
    %p119 = scmp.ne.s32.totalorder %s110, %s111
    %p120 = scmp.eq.s32.totalorder %s15, 0
    %p121 = por %p119, %p120
    %p122 = scmp.ne.s32.totalorder %s110, %s111
    %p123 = scmp.eq.s32.totalorder %s16, 1
    %p124 = por %p122, %p123
    %p126 = scmp.ne.s32.totalorder %s111, %s125
    %p127 = scmp.eq.s32.totalorder %s16, 0
    %p128 = por %p126, %p127
    %s129 = ssub.s32 %s17, %s29
    %s130 = ssub.s32 %s18, %s25
    %s131 = sor.u32 %s129, %s130
    %p132 = scmp.eq.s32.totalorder %s131, 0
    %s134 = sadd.s32 %s133, 1
    %s135 = scalar_select %p132, %s133, %s134
    %p138 = pneg %p132
    %p139 = scmp.eq.s32.totalorder %s10, 1
    %p140 = por %p138, %p139
    %p141 = scmp.ne.s32.totalorder %s133, %s136
    %p142 = scmp.eq.s32.totalorder %s10, 0
    %p143 = por %p141, %p142
    %p144 = scmp.ne.s32.totalorder %s133, %s136
    %p145 = scmp.eq.s32.totalorder %s15, 1
    %p146 = por %p144, %p145
    %p147 = scmp.ne.s32.totalorder %s136, %s137
    %p148 = scmp.eq.s32.totalorder %s15, 0
    %p149 = por %p147, %p148
    %p150 = scmp.ne.s32.totalorder %s136, %s137
    %p151 = scmp.eq.s32.totalorder %s16, 1
    %p152 = por %p150, %p151
    %p154 = scmp.ne.s32.totalorder %s137, %s153
    %p155 = scmp.eq.s32.totalorder %s16, 0
    %p156 = por %p154, %p155
    %p157 = scmp.le.s32.totalorder 1, %s10
    %p158 = scmp.lt.s32.totalorder %s10, 3
    %p159 = pnand %p157, %p158
    %p160 = pneg %p159
    // Predicated region
    $region9: #{_lambda_.7} parent=5 // pred_check
      _
    $region10: #{_lambda_.7} parent=5 // pred_check_branch
      %162 = sbr.rel (%p159) target = $region12
    $region11: #{_lambda_.7} parent=5 // pred_region
      %s163 = ssub.s32 %s10, 1
      // Predicated region
      $region13: #{_lambda_.7} parent=11 // pred_check
        %p164 = pneg %p74
      $region14: #{_lambda_.7} parent=11 // pred_check_branch
        %166 = sbr.rel (%p164) target = $region16
      $region15: #{_lambda_.7} parent=11 // pred_region
        %s167 = smul.u32 4, %s20
        %p168 = scmp.lt.s32.totalorder %s167, 3
        %s169 = scalar_select %p168, %s167, 3
        %s170 = smul.addr %s169, 2
        %s171 = smul.addr %s170, 4
        %s172 = scalar_lea.vmem %s1, %s171
        %s173 = smul.u32 4, %s20
      $region16: #{_lambda_.7} parent=11 // pred_fallthru
        _
      // Predicated region
      $region17: #{_lambda_.7} parent=11 // pred_check
        %p174 = pneg %p100
      $region18: #{_lambda_.7} parent=11 // pred_check_branch
        %176 = sbr.rel (%p174) target = $region20
      $region19: #{_lambda_.7} parent=11 // pred_region
        %s177 = smul.u32 4, %s20
        %p178 = scmp.lt.s32.totalorder %s177, 3
        %s179 = scalar_select %p178, %s177, 3
        %s180 = smul.addr %s179, 8
        %s181 = scalar_lea.vmem %s2, %s180
        %s182 = smul.u32 4, %s20
      $region20: #{_lambda_.7} parent=11 // pred_fallthru
        _
      // Predicated region
      $region21: #{_lambda_.7} parent=11 // pred_check
        %p183 = pneg %p121
      $region22: #{_lambda_.7} parent=11 // pred_check_branch
        %185 = sbr.rel (%p183) target = $region24
      $region23: #{_lambda_.7} parent=11 // pred_region
        _
      $region24: #{_lambda_.7} parent=11 // pred_fallthru
        _
    $region12: #{_lambda_.7} parent=5 // pred_fallthru
      _
    %p186 = scmp.lt.s32.totalorder %s10, 2
    // Predicated region
    $region25: #{_lambda_.7} parent=5 // pred_check
      %p187 = pneg %p186
    $region26: #{_lambda_.7} parent=5 // pred_check_branch
      %189 = sbr.rel (%p187) target = $region28
    $region27: #{_lambda_.7} parent=5 // pred_region
      // Predicated region
      $region29: #{_lambda_.7} parent=27 // pred_check
        %p190 = pneg %p42
      $region30: #{_lambda_.7} parent=27 // pred_check_branch
        %192 = sbr.rel (%p190) target = $region32
      $region31: #{_lambda_.7} parent=27 // pred_region
        %p193 = scmp.lt.s32.totalorder %s17, 1
        %s194 = scalar_select %p193, %s17, 1
        %s195 = smul.addr %s194, 16
        %s196 = smul.addr %s195, 4
        %s197 = scalar_lea.vmem %s0, %s196
      $region32: #{_lambda_.7} parent=27 // pred_fallthru
        _
    $region28: #{_lambda_.7} parent=5 // pred_fallthru
      _
    %p198 = scmp.le.s32.totalorder 1, %s10
    %p199 = scmp.lt.s32.totalorder %s10, 3
    %p200 = pnand %p198, %p199
    %p201 = pneg %p200
    // Predicated region
    $region33: #{_lambda_.7} parent=5 // pred_check
      _
    $region34: #{_lambda_.7} parent=5 // pred_check_branch
      %203 = sbr.rel (%p200) target = $region36
    $region35: #{_lambda_.7} parent=5 // pred_region
      %s204 = ssub.s32 %s10, 1
      %p205 = scmp.lt.s32.totalorder %s19, 1
      %s206 = scalar_select %p205, %s19, 1
      %s207 = smul.addr %s206, 16
      %s208 = smul.addr %s207, 4
      %s209 = scalar_lea.vmem %s0, %s208
      %p210 = pneg %p48
      %p211 = pneg %p45
      %s212 = smul.u32 4, %s20
      %p213 = scmp.lt.s32.totalorder %s212, 3
      %s214 = scalar_select %p213, %s212, 3
      %s215 = smul.addr %s214, 2
      %s216 = smul.addr %s215, 4
      %s217 = scalar_lea.vmem %s1, %s216
      %p218 = pneg %p74
      %p219 = pneg %p71
      %s220 = smul.u32 4, %s20
      %p221 = scmp.lt.s32.totalorder %s220, 3
      %s222 = scalar_select %p221, %s220, 3
      %s223 = smul.addr %s222, 8
      %s224 = scalar_lea.vmem %s2, %s223
      %p225 = pneg %p100
      %p226 = pneg %p97
      %p227 = pneg %p121
      %p228 = pneg %p118
      %p229 = pneg %p149
      %p230 = pneg %p146
      %s231 = smul.u32 4, %s20
      %p232 = scmp.lt.s32.totalorder %s19, 1
      %s233 = scalar_select %p232, %s19, 1
      %p234 = scmp.lt.s32.totalorder %s231, 3
      %s235 = scalar_select %p234, %s231, 3
      %s236 = smul.addr %s233, 4
      %s237 = sadd.s32 %s235, %s236
      %s238 = smul.addr %s237, 4
      %s239 = scalar_lea.vmem %s4, %s238
      %p240 = scmp.lt.s32.totalorder %s19, 1
      %s241 = scalar_select %p240, %s19, 1
      %s242 = smul.addr %s241, 16
      %s243 = smul.addr %s242, 4
      %s244 = scalar_lea.vmem %s0, %s243
      %s245 = smul.u32 4, %s20
      %p246 = scmp.lt.s32.totalorder %s245, 3
      %s247 = scalar_select %p246, %s245, 3
      %s248 = smul.addr %s247, 2
      %s249 = smul.addr %s248, 4
      %s250 = scalar_lea.vmem %s1, %s249
      %s251 = smul.u32 4, %s20
      %s252 = smul.u32 4, %s20
      %p253 = scmp.lt.s32.totalorder %s252, 3
      %s254 = scalar_select %p253, %s252, 3
      %s255 = smul.addr %s254, 8
      %s256 = scalar_lea.vmem %s2, %s255
      %s257 = smul.u32 4, %s20
      %s258 = smul.u32 4, %s20
      %p259 = scmp.lt.s32.totalorder %s19, 1
      %s260 = scalar_select %p259, %s19, 1
      %p261 = scmp.lt.s32.totalorder %s258, 3
      %s262 = scalar_select %p261, %s258, 3
      %s263 = smul.addr %s260, 4
      %s264 = sadd.s32 %s262, %s263
      %s265 = smul.addr %s264, 4
      %s266 = scalar_lea.vmem %s4, %s265
      %s267 = smul.u32 4, %s20
      %v269 = vld [vmem:[%s256] sm:$0xff]
      %v270 = vld [vmem:[%s256 + $0x8] sm:$0xff]
      %v271 = vld [vmem:[%s256 + $0x10] sm:$0xff]
      %v272 = vld [vmem:[%s256 + $0x18] sm:$0xff]
      %v273 = vld [vmem:[%s244] sm:$0xf]
      %v274 = vld [vmem:[%s244 + $0x8] sm:$0xf]
      %s275 = scalar_lea.vmem %s244, 16
      %v276 = vld [vmem:[%s275] sm:$0xf]
      %v277 = vld [vmem:[%s275 + $0x8] sm:$0xf]
      %v278 = vld [vmem:[%s244] sm:$0xff]
      %v279 = vld [vmem:[%s244 + $0x8] sm:$0xff]
      %s280 = scalar_lea.vmem %s244, 32
      %v281 = vld [vmem:[%s280] sm:$0xf]
      %v282 = vld [vmem:[%s280 + $0x8] sm:$0xf]
      %s283 = scalar_lea.vmem %s244, 48
      %v284 = vld [vmem:[%s283] sm:$0xf]
      %v285 = vld [vmem:[%s283 + $0x8] sm:$0xf]
      %v286 = vld [vmem:[%s280] sm:$0xff]
      %v287 = vld [vmem:[%s280 + $0x8] sm:$0xff]
      %v288 = vld [vmem:[%s275] sm:$0xff]
      %v289 = vld [vmem:[%s275 + $0x8] sm:$0xff]
      %v292 = vunpack.c.l.b16 %v273
      %v293 = vunpack.c.l.b16 %v274
      %v294 = vpack.c.b16 %v293, %v292
      %v298 = vunpack.c.l.b16 %v276
      %v299 = vunpack.c.l.b16 %v277
      %v300 = vpack.c.b16 %v299, %v298
      %v304 = vunpack.c.l.b16 %v278
      %v305 = vunpack.c.h.b16 %v278
      %v306 = vunpack.c.l.b16 %v279
      %v307 = vunpack.c.h.b16 %v279
      %v308 = vpack.c.b16 %v306, %v304
      %v309 = vpack.c.b16 %v307, %v305
      %310 = vrot.lane.b32.xlu0 %v308, 127
      %v311 = vpop.permute.xlu0 %310
      %312 = vrot.lane.b32.xlu0 %v309, 127
      %v313 = vpop.permute.xlu0 %312
      %vm314 = vcmask 1039360
      %v315 = vsel %vm314, %v311, %v313
      %v319 = vunpack.c.l.b16 %v281
      %v320 = vunpack.c.l.b16 %v282
      %v321 = vpack.c.b16 %v320, %v319
      %v325 = vunpack.c.l.b16 %v284
      %v326 = vunpack.c.l.b16 %v285
      %v327 = vpack.c.b16 %v326, %v325
      %v331 = vunpack.c.l.b16 %v286
      %v332 = vunpack.c.h.b16 %v286
      %v333 = vunpack.c.l.b16 %v287
      %v334 = vunpack.c.h.b16 %v287
      %v335 = vpack.c.b16 %v333, %v331
      %v336 = vpack.c.b16 %v334, %v332
      %337 = vrot.lane.b32.xlu0 %v335, 127
      %v338 = vpop.permute.xlu0 %337
      %339 = vrot.lane.b32.xlu0 %v336, 127
      %v340 = vpop.permute.xlu0 %339
      %v341 = vsel %vm314, %v338, %v340
      %343 = vrot.lane.b32.xlu0 %v308, 119
      %v344 = vpop.permute.xlu0 %343
      %345 = vrot.lane.b32.xlu0 %v309, 119
      %v346 = vpop.permute.xlu0 %345
      %vm347 = vcmask 973824
      %v348 = vsel %vm347, %v344, %v346
      %v352 = vunpack.c.l.b16 %v288
      %v353 = vunpack.c.h.b16 %v288
      %v354 = vunpack.c.l.b16 %v289
      %v355 = vunpack.c.h.b16 %v289
      %v356 = vpack.c.b16 %v354, %v352
      %v357 = vpack.c.b16 %v355, %v353
      %358 = vrot.lane.b32.xlu0 %v356, 119
      %v359 = vpop.permute.xlu0 %358
      %360 = vrot.lane.b32.xlu0 %v357, 119
      %v361 = vpop.permute.xlu0 %360
      %v362 = vsel %vm347, %v359, %v361
      %364 = vrot.lane.b32.xlu0 %v308, 118
      %v365 = vpop.permute.xlu0 %364
      %366 = vrot.lane.b32.xlu0 %v309, 118
      %v367 = vpop.permute.xlu0 %366
      %vm368 = vcmask 965632
      %v369 = vsel %vm368, %v365, %v367
      %v371 = vld [vmem:[%s250] sm:$0xff]
      %v372 = vld [vmem:[%s250 + $0x8] sm:$0xff]
      %v373 = vld [vmem:[%s250 + $0x10] sm:$0xff]
      %v374 = vld [vmem:[%s250 + $0x18] sm:$0xff]
      %v379 = vunpack.c.l.b16 %v371
      %v380 = vunpack.c.h.b16 %v371
      %v381 = vunpack.c.l.b16 %v372
      %v382 = vunpack.c.h.b16 %v372
      %v383 = vunpack.c.l.b16 %v373
      %v384 = vunpack.c.h.b16 %v373
      %v385 = vunpack.c.l.b16 %v374
      %v386 = vunpack.c.h.b16 %v374
      %v387 = vpack.c.b16 %v381, %v379
      %v388 = vpack.c.b16 %v382, %v380
      %v389 = vpack.c.b16 %v385, %v383
      %v390 = vpack.c.b16 %v386, %v384
      %vm393 = vcmask 130048
      %v395 = vsel %vm393, %v388, 0
      %v398 = vsel %vm393, %v390, 0
      %400 = vmatprep.subr.bf16.mxu0 0
      %401 = vmatpush1.bf16.msra.mxu0 %v294
      %402 = vmatprep.subr.bf16.mxu0 0
      %403 = vmatpush1.bf16.msra.mxu0 %v300
      %404 = vmatprep.subr.bf16.mxu0 0
      %405 = vmatpush1.bf16.msra.mxu0 %v315
      %406 = vmatprep.subr.bf16.mxu0 0
      %407 = vmatpush1.bf16.msra.mxu0 %v321
      %408 = vmatprep.subr.bf16.mxu0 0
      %409 = vmatpush1.bf16.msra.mxu0 %v327
      %410 = vmatprep.subr.bf16.mxu0 0
      %411 = vmatpush1.bf16.msra.mxu0 %v341
      %412 = vmatprep.subr.bf16.mxu0 0
      %413 = vmatpush1.bf16.msra.mxu0 %v348
      %414 = vmatprep.subr.bf16.mxu0 0
      %415 = vmatpush1.bf16.msra.mxu0 %v362
      %416 = vmatprep.subr.bf16.mxu0 0
      %417 = vmatpush1.bf16.msra.mxu0 %v369
      %418 = vmatprep.subr.bf16.mxu0 0
      %419 = vmatpush1.bf16.msra.mxu0 0
      %420 = vmatprep.subr.bf16.mxu0 0
      %421 = vmatpush1.bf16.msra.mxu0 0
      %422 = vmatprep.subr.bf16.mxu0 0
      %423 = vmatpush1.bf16.msra.mxu0 0
      %424 = vmatprep.subr.bf16.mxu0 0
      %425 = vmatpush1.bf16.msra.mxu0 0
      %426 = vmatprep.subr.bf16.mxu0 0
      %427 = vmatpush1.bf16.msra.mxu0 0
      %428 = vmatprep.subr.bf16.mxu0 0
      %429 = vmatpush1.bf16.msra.mxu0 0
      %430 = vmatprep.subr.bf16.mxu0 0
      %431 = vmatpush1.bf16.msra.mxu0 0
      %432 = vmatprep.mubr.bf16.mxu0 %v395
      %433 = vmatmul.mubr.bf16.gmra.mrb[0].mxu0 %v387
      %v434 = vpop.f32.mrb[0].mxu0
      %v435 = vadd.f32 0.0, %v434
      %v436 = vpop.f32.mrb[0].mxu0
      %v437 = vpop.f32.mrb[0].mxu0
      %v438 = vadd.f32 0.0, %v437
      %v439 = vpop.f32.mrb[0].mxu0
      %440 = vmatprep.mubr.bf16.mxu0 %v398
      %441 = vmatmul.mubr.bf16.gmra.mrb[0].mxu0 %v389
      %v442 = vpop.f32.mrb[0].mxu0
      %v443 = vadd.f32 0.0, %v442
      %v444 = vpop.f32.mrb[0].mxu0
      %v445 = vpop.f32.mrb[0].mxu0
      %v446 = vadd.f32 0.0, %v445
      %v447 = vpop.f32.mrb[0].mxu0
      %448 = vdwg.mxu0
      %v449 = vadd.f32 %v269, %v435
      %v450 = vadd.f32 %v270, %v438
      %v451 = vadd.f32 %v271, %v443
      %v452 = vadd.f32 %v272, %v446
      %v453 = vld [vmem:[%s3] sm:$0x1]
      %v455 = vlaneseq
      %v456 = vshrl.u32 %v455, 7
      %v457 = vsub.s32 0, %v456
      %v458 = vrot.slane %v453, %v457
      %v460 = vmul.f32 %v449, %v458
      %v461 = vmul.f32 %v450, %v458
      %v462 = vmul.f32 %v451, %v458
      %v463 = vmul.f32 %v452, %v458
      %464 = vadd.xlane.f32.xlu0 %v460
      %v465 = vpop.xlane.xlu0 %464
      %466 = vadd.xlane.f32.xlu0 %v461
      %v467 = vpop.xlane.xlu0 %466
      %468 = vadd.xlane.f32.xlu0 %v462
      %v469 = vpop.xlane.xlu0 %468
      %470 = vadd.xlane.f32.xlu0 %v463
      %v471 = vpop.xlane.xlu0 %470
      %v472 = vmul.f32 %v460, %v449
      %v473 = vmul.f32 %v461, %v450
      %v474 = vmul.f32 %v462, %v451
      %v475 = vmul.f32 %v463, %v452
      %476 = vadd.xlane.f32.xlu0 %v472
      %v477 = vpop.xlane.xlu0 %476
      %478 = vadd.xlane.f32.xlu0 %v473
      %v479 = vpop.xlane.xlu0 %478
      %480 = vadd.xlane.f32.xlu0 %v474
      %v481 = vpop.xlane.xlu0 %480
      %482 = vadd.xlane.f32.xlu0 %v475
      %v483 = vpop.xlane.xlu0 %482
      %v484 = vmul.f32 %v465, 0.015625
      %v485 = vmul.f32 %v467, 0.015625
      %v486 = vmul.f32 %v469, 0.015625
      %v487 = vmul.f32 %v471, 0.015625
      %v488 = vmul.f32 %v477, 0.015625
      %v489 = vmul.f32 %v479, 0.015625
      %v490 = vmul.f32 %v481, 0.015625
      %v491 = vmul.f32 %v483, 0.015625
      %v492 = vmul.f32 %v484, %v484
      %v493 = vmul.f32 %v485, %v485
      %v494 = vmul.f32 %v486, %v486
      %v495 = vmul.f32 %v487, %v487
      %v496 = vsub.f32 %v488, %v492
      %v497 = vsub.f32 %v489, %v493
      %v498 = vsub.f32 %v490, %v494
      %v499 = vsub.f32 %v491, %v495
      %v500 = vmax.f32 %v496, 0.0
      %v501 = vmax.f32 %v497, 0.0
      %v502 = vmax.f32 %v498, 0.0
      %v503 = vmax.f32 %v499, 0.0
      %v504 = vsub.f32 %v449, %v484
      %v505 = vsub.f32 %v450, %v485
      %v506 = vsub.f32 %v451, %v486
      %v507 = vsub.f32 %v452, %v487
      %v508 = vadd.f32 %v500, 1e-05
      %v509 = vadd.f32 %v501, 1e-05
      %v510 = vadd.f32 %v502, 1e-05
      %v511 = vadd.f32 %v503, 1e-05
      %v512 = vrsqrt.pop %v508
      %v513 = vrsqrt.pop %v509
      %v514 = vrsqrt.pop %v510
      %v515 = vrsqrt.pop %v511
      %v516 = vmul.f32 %v504, %v512
      %v517 = vmul.f32 %v505, %v513
      %v518 = vmul.f32 %v506, %v514
      %v519 = vmul.f32 %v507, %v515
      %v520 = vmax.f32 %v516, 0.0
      %v521 = vmax.f32 %v517, 0.0
      %v522 = vmax.f32 %v518, 0.0
      %v523 = vmax.f32 %v519, 0.0
      %v524 = vpack.c.bf16 %v521, %v520
      %v525 = vpack.c.bf16 %v523, %v522
      %v528 = vunpack.c.l.b16 %v524
      %v529 = vunpack.c.h.b16 %v524
      %v530 = vunpack.c.l.b16 %v525
      %v531 = vunpack.c.h.b16 %v525
      %v532 = vpack.c.b16 %v528, %v528
      %v533 = vpack.c.b16 %v529, %v529
      %v534 = vpack.c.b16 %v530, %v530
      %v535 = vpack.c.b16 %v531, %v531
      %540 = vst [vmem:[%s266] sm:$0xf] %v532
      %541 = vst [vmem:[%s266 + $0x4] sm:$0xf] %v533
      %542 = vst [vmem:[%s266 + $0x8] sm:$0xf] %v534
      %543 = vst [vmem:[%s266 + $0xc] sm:$0xf] %v535
      %s544 = smul.u32 4, %s20
      %p545 = scmp.lt.s32.totalorder %s19, 1
      %s546 = scalar_select %p545, %s19, 1
      %p547 = scmp.lt.s32.totalorder %s544, 3
      %s548 = scalar_select %p547, %s544, 3
      %s549 = smul.addr %s546, 4
      %s550 = sadd.s32 %s548, %s549
      %s551 = smul.addr %s550, 4
      %s552 = scalar_lea.vmem %s4, %s551
      // Predicated region
      $region37: #{_lambda_.7} parent=35 // pred_check
        %p553 = pneg %p146
      $region38: #{_lambda_.7} parent=35 // pred_check_branch
        %555 = sbr.rel (%p553) target = $region40
      $region39: #{_lambda_.7} parent=35 // pred_region
        %s556 = smul.u32 4, %s20
      $region40: #{_lambda_.7} parent=35 // pred_fallthru
        _
    $region36: #{_lambda_.7} parent=5 // pred_fallthru
      _
    %p557 = scmp.le.s32.totalorder 2, %s10
    // Predicated region
    $region41: #{_lambda_.7} parent=5 // pred_check
      %p558 = pneg %p557
    $region42: #{_lambda_.7} parent=5 // pred_check_branch
      %560 = sbr.rel (%p558) target = $region44
    $region43: #{_lambda_.7} parent=5 // pred_region
      %s561 = ssub.s32 %s10, 2
      // Predicated region
      $region45: #{_lambda_.7} parent=43 // pred_check
        %p562 = pneg %p152
      $region46: #{_lambda_.7} parent=43 // pred_check_branch
        %564 = sbr.rel (%p562) target = $region48
      $region47: #{_lambda_.7} parent=43 // pred_region
        %s565 = smul.u32 4, %s22
        %p566 = scmp.lt.s32.totalorder %s21, 1
        %s567 = scalar_select %p566, %s21, 1
        %p568 = scmp.lt.s32.totalorder %s565, 3
        %s569 = scalar_select %p568, %s565, 3
        %s570 = smul.addr %s567, 4
        %s571 = sadd.s32 %s569, %s570
        %s572 = smul.addr %s571, 4
        %s573 = scalar_lea.vmem %s4, %s572
      $region48: #{_lambda_.7} parent=43 // pred_fallthru
        _
    $region44: #{_lambda_.7} parent=5 // pred_fallthru
      _
  $region6: #{_lambda_.7} parent=0 // loop_footer
    %s14 = sadd.s32 1, %s10
  $region7: #{_lambda_.7} parent=0 // loop_footer_branch
    %9 = sbr.rel target = $region3
  $region8: #{_lambda_.7} parent=0 // loop_exit
    _

// kernel: _lambda_.8
$region0: #{_lambda_.8}
  #allocation0 [shape = 'u32[]', space=smem, size = 0x4, offset = 0x4, fixed_abs, tag = 'smem constant byte address 0x4 - core index']
  #allocation1 [shape = 'u32[144,128]{1,0:T(1,128)}', space=vmem, size = 0x12000, scoped, tag = 'internal scratch']
  %s0 = inlined_call_operand.vmem [shape: bf16[2,4,32,256], index: 0, kind: input, shape index: {}]
  %s1 = inlined_call_operand.vmem [shape: bf16[2,64,160], index: 1, kind: input, shape index: {}]
  %s2 = inlined_call_operand.vmem [shape: f32[64,128], index: 2, kind: input, shape index: {}]
  %s3 = inlined_call_operand.vmem [shape: f32[1,128], index: 3, kind: input, shape index: {}]
  %s4 = inlined_call_operand.vmem [shape: bf16[2,64,128], index: 4, kind: output, shape index: {}]
  %s5 = sld [smem:[#allocation0]]
  $region49: #{_lambda_.8} parent=0
    _
  %s7 = ssub.s32 1, %s5
  %s8 = scalar_select 0, %s7, %s5
  loop: start=0, step=1, limit=4
  $region2: #{_lambda_.8} parent=0 // loop_pre_header
    _
  $region3: #{_lambda_.8} parent=0 // loop_header
    %s10 = sphi 0, %s14
    %p11 = scmp.ge.s32.totalorder %s10, 4
    %s17 = sphi 0, %s29
    %s18 = sphi 0, %s25
    %s19 = sphi 0, %s17
    %s20 = sphi 0, %s18
    %s21 = sphi 0, %s19
    %s22 = sphi 0, %s20
    %s32 = sphi 0, %s34
    %s35 = sphi 0, %s32
    %s36 = sphi 0, %s35
    %s52 = sphi 0, %s36
    %s58 = sphi 0, %s60
    %s61 = sphi 0, %s58
    %s62 = sphi 0, %s61
    %s78 = sphi 0, %s62
    %s84 = sphi 0, %s86
    %s87 = sphi 0, %s84
    %s88 = sphi 0, %s87
    %s104 = sphi 0, %s88
    %s108 = sphi 0, %s108
    %s110 = sphi 0, %s108
    %s111 = sphi 0, %s110
    %s125 = sphi 0, %s111
    %s133 = sphi 0, %s135
    %s136 = sphi 0, %s133
    %s137 = sphi 0, %s136
    %s153 = sphi 0, %s137
  $region4: #{_lambda_.8} parent=0 // loop_header_branch
    %13 = sbr.rel (%p11) target = $region8
  $region5: #{_lambda_.8} parent=0 // loop_body
    %s15 = ssub.s32 %s10, 1
    %s16 = ssub.s32 %s10, 2
    %s23 = sadd.s32 1, %s18
    %p24 = scmp.ge.s32.totalorder %s23, 1
    %s25 = scalar_select %p24, 0, %s23
    %s26 = sadd.s32 1, %s17
    %s27 = scalar_select %p24, %s26, %s17
    %p28 = scmp.ge.s32.totalorder %s27, 2
    %s29 = scalar_select %p28, 0, %s27
    %s30 = ssub.s32 %s17, %s29
    %p31 = scmp.eq.s32.totalorder %s30, 0
    %s33 = sadd.s32 %s32, 1
    %s34 = scalar_select %p31, %s32, %s33
    %p37 = pneg %p31
    %p38 = scmp.eq.s32.totalorder %s10, 1
    %p39 = por %p37, %p38
    %p40 = scmp.ne.s32.totalorder %s32, %s35
    %p41 = scmp.eq.s32.totalorder %s10, 0
    %p42 = por %p40, %p41
    %p43 = scmp.ne.s32.totalorder %s32, %s35
    %p44 = scmp.eq.s32.totalorder %s15, 1
    %p45 = por %p43, %p44
    %p46 = scmp.ne.s32.totalorder %s35, %s36
    %p47 = scmp.eq.s32.totalorder %s15, 0
    %p48 = por %p46, %p47
    %p49 = scmp.ne.s32.totalorder %s35, %s36
    %p50 = scmp.eq.s32.totalorder %s16, 1
    %p51 = por %p49, %p50
    %p53 = scmp.ne.s32.totalorder %s36, %s52
    %p54 = scmp.eq.s32.totalorder %s16, 0
    %p55 = por %p53, %p54
    %s56 = ssub.s32 %s18, %s25
    %p57 = scmp.eq.s32.totalorder %s56, 0
    %s59 = sadd.s32 %s58, 1
    %s60 = scalar_select %p57, %s58, %s59
    %p63 = pneg %p57
    %p64 = scmp.eq.s32.totalorder %s10, 1
    %p65 = por %p63, %p64
    %p66 = scmp.ne.s32.totalorder %s58, %s61
    %p67 = scmp.eq.s32.totalorder %s10, 0
    %p68 = por %p66, %p67
    %p69 = scmp.ne.s32.totalorder %s58, %s61
    %p70 = scmp.eq.s32.totalorder %s15, 1
    %p71 = por %p69, %p70
    %p72 = scmp.ne.s32.totalorder %s61, %s62
    %p73 = scmp.eq.s32.totalorder %s15, 0
    %p74 = por %p72, %p73
    %p75 = scmp.ne.s32.totalorder %s61, %s62
    %p76 = scmp.eq.s32.totalorder %s16, 1
    %p77 = por %p75, %p76
    %p79 = scmp.ne.s32.totalorder %s62, %s78
    %p80 = scmp.eq.s32.totalorder %s16, 0
    %p81 = por %p79, %p80
    %s82 = ssub.s32 %s18, %s25
    %p83 = scmp.eq.s32.totalorder %s82, 0
    %s85 = sadd.s32 %s84, 1
    %s86 = scalar_select %p83, %s84, %s85
    %p89 = pneg %p83
    %p90 = scmp.eq.s32.totalorder %s10, 1
    %p91 = por %p89, %p90
    %p92 = scmp.ne.s32.totalorder %s84, %s87
    %p93 = scmp.eq.s32.totalorder %s10, 0
    %p94 = por %p92, %p93
    %p95 = scmp.ne.s32.totalorder %s84, %s87
    %p96 = scmp.eq.s32.totalorder %s15, 1
    %p97 = por %p95, %p96
    %p98 = scmp.ne.s32.totalorder %s87, %s88
    %p99 = scmp.eq.s32.totalorder %s15, 0
    %p100 = por %p98, %p99
    %p101 = scmp.ne.s32.totalorder %s87, %s88
    %p102 = scmp.eq.s32.totalorder %s16, 1
    %p103 = por %p101, %p102
    %p105 = scmp.ne.s32.totalorder %s88, %s104
    %p106 = scmp.eq.s32.totalorder %s16, 0
    %p107 = por %p105, %p106
    %s109 = sadd.s32 %s108, 1
    %p112 = scmp.eq.s32.totalorder %s10, 1
    %p113 = scmp.ne.s32.totalorder %s108, %s110
    %p114 = scmp.eq.s32.totalorder %s10, 0
    %p115 = por %p113, %p114
    %p116 = scmp.ne.s32.totalorder %s108, %s110
    %p117 = scmp.eq.s32.totalorder %s15, 1
    %p118 = por %p116, %p117
    %p119 = scmp.ne.s32.totalorder %s110, %s111
    %p120 = scmp.eq.s32.totalorder %s15, 0
    %p121 = por %p119, %p120
    %p122 = scmp.ne.s32.totalorder %s110, %s111
    %p123 = scmp.eq.s32.totalorder %s16, 1
    %p124 = por %p122, %p123
    %p126 = scmp.ne.s32.totalorder %s111, %s125
    %p127 = scmp.eq.s32.totalorder %s16, 0
    %p128 = por %p126, %p127
    %s129 = ssub.s32 %s17, %s29
    %s130 = ssub.s32 %s18, %s25
    %s131 = sor.u32 %s129, %s130
    %p132 = scmp.eq.s32.totalorder %s131, 0
    %s134 = sadd.s32 %s133, 1
    %s135 = scalar_select %p132, %s133, %s134
    %p138 = pneg %p132
    %p139 = scmp.eq.s32.totalorder %s10, 1
    %p140 = por %p138, %p139
    %p141 = scmp.ne.s32.totalorder %s133, %s136
    %p142 = scmp.eq.s32.totalorder %s10, 0
    %p143 = por %p141, %p142
    %p144 = scmp.ne.s32.totalorder %s133, %s136
    %p145 = scmp.eq.s32.totalorder %s15, 1
    %p146 = por %p144, %p145
    %p147 = scmp.ne.s32.totalorder %s136, %s137
    %p148 = scmp.eq.s32.totalorder %s15, 0
    %p149 = por %p147, %p148
    %p150 = scmp.ne.s32.totalorder %s136, %s137
    %p151 = scmp.eq.s32.totalorder %s16, 1
    %p152 = por %p150, %p151
    %p154 = scmp.ne.s32.totalorder %s137, %s153
    %p155 = scmp.eq.s32.totalorder %s16, 0
    %p156 = por %p154, %p155
    %p157 = scmp.le.s32.totalorder 1, %s10
    %p158 = scmp.lt.s32.totalorder %s10, 3
    %p159 = pnand %p157, %p158
    %p160 = pneg %p159
    // Predicated region
    $region9: #{_lambda_.8} parent=5 // pred_check
      _
    $region10: #{_lambda_.8} parent=5 // pred_check_branch
      %162 = sbr.rel (%p159) target = $region12
    $region11: #{_lambda_.8} parent=5 // pred_region
      %s163 = ssub.s32 %s10, 1
      // Predicated region
      $region13: #{_lambda_.8} parent=11 // pred_check
        %p164 = pneg %p74
      $region14: #{_lambda_.8} parent=11 // pred_check_branch
        %166 = sbr.rel (%p164) target = $region16
      $region15: #{_lambda_.8} parent=11 // pred_region
        %s167 = smul.u32 8, %s20
        %p168 = scmp.lt.s32.totalorder %s167, 7
        %s169 = scalar_select %p168, %s167, 7
        %s170 = smul.addr %s169, 2
        %s171 = smul.addr %s170, 4
        %s172 = scalar_lea.vmem %s1, %s171
        %s173 = smul.u32 8, %s20
      $region16: #{_lambda_.8} parent=11 // pred_fallthru
        _
      // Predicated region
      $region17: #{_lambda_.8} parent=11 // pred_check
        %p174 = pneg %p100
      $region18: #{_lambda_.8} parent=11 // pred_check_branch
        %176 = sbr.rel (%p174) target = $region20
      $region19: #{_lambda_.8} parent=11 // pred_region
        %s177 = smul.u32 8, %s20
        %p178 = scmp.lt.s32.totalorder %s177, 7
        %s179 = scalar_select %p178, %s177, 7
        %s180 = smul.addr %s179, 8
        %s181 = scalar_lea.vmem %s2, %s180
        %s182 = smul.u32 8, %s20
      $region20: #{_lambda_.8} parent=11 // pred_fallthru
        _
      // Predicated region
      $region21: #{_lambda_.8} parent=11 // pred_check
        %p183 = pneg %p121
      $region22: #{_lambda_.8} parent=11 // pred_check_branch
        %185 = sbr.rel (%p183) target = $region24
      $region23: #{_lambda_.8} parent=11 // pred_region
        _
      $region24: #{_lambda_.8} parent=11 // pred_fallthru
        _
    $region12: #{_lambda_.8} parent=5 // pred_fallthru
      _
    %p186 = scmp.lt.s32.totalorder %s10, 2
    // Predicated region
    $region25: #{_lambda_.8} parent=5 // pred_check
      %p187 = pneg %p186
    $region26: #{_lambda_.8} parent=5 // pred_check_branch
      %189 = sbr.rel (%p187) target = $region28
    $region27: #{_lambda_.8} parent=5 // pred_region
      // Predicated region
      $region29: #{_lambda_.8} parent=27 // pred_check
        %p190 = pneg %p42
      $region30: #{_lambda_.8} parent=27 // pred_check_branch
        %192 = sbr.rel (%p190) target = $region32
      $region31: #{_lambda_.8} parent=27 // pred_region
        %p193 = scmp.lt.s32.totalorder %s17, 1
        %s194 = scalar_select %p193, %s17, 1
        %s195 = smul.addr %s194, 32
        %s196 = smul.addr %s195, 4
        %s197 = scalar_lea.vmem %s0, %s196
      $region32: #{_lambda_.8} parent=27 // pred_fallthru
        _
    $region28: #{_lambda_.8} parent=5 // pred_fallthru
      _
    %p198 = scmp.le.s32.totalorder 1, %s10
    %p199 = scmp.lt.s32.totalorder %s10, 3
    %p200 = pnand %p198, %p199
    %p201 = pneg %p200
    // Predicated region
    $region33: #{_lambda_.8} parent=5 // pred_check
      _
    $region34: #{_lambda_.8} parent=5 // pred_check_branch
      %203 = sbr.rel (%p200) target = $region36
    $region35: #{_lambda_.8} parent=5 // pred_region
      %s204 = ssub.s32 %s10, 1
      %p205 = scmp.lt.s32.totalorder %s19, 1
      %s206 = scalar_select %p205, %s19, 1
      %s207 = smul.addr %s206, 32
      %s208 = smul.addr %s207, 4
      %s209 = scalar_lea.vmem %s0, %s208
      %p210 = pneg %p48
      %p211 = pneg %p45
      %s212 = smul.u32 8, %s20
      %p213 = scmp.lt.s32.totalorder %s212, 7
      %s214 = scalar_select %p213, %s212, 7
      %s215 = smul.addr %s214, 2
      %s216 = smul.addr %s215, 4
      %s217 = scalar_lea.vmem %s1, %s216
      %p218 = pneg %p74
      %p219 = pneg %p71
      %s220 = smul.u32 8, %s20
      %p221 = scmp.lt.s32.totalorder %s220, 7
      %s222 = scalar_select %p221, %s220, 7
      %s223 = smul.addr %s222, 8
      %s224 = scalar_lea.vmem %s2, %s223
      %p225 = pneg %p100
      %p226 = pneg %p97
      %p227 = pneg %p121
      %p228 = pneg %p118
      %p229 = pneg %p149
      %p230 = pneg %p146
      %s231 = smul.u32 8, %s20
      %p232 = scmp.lt.s32.totalorder %s19, 1
      %s233 = scalar_select %p232, %s19, 1
      %p234 = scmp.lt.s32.totalorder %s231, 7
      %s235 = scalar_select %p234, %s231, 7
      %s236 = smul.addr %s233, 8
      %s237 = sadd.s32 %s235, %s236
      %s238 = smul.addr %s237, 4
      %s239 = scalar_lea.vmem %s4, %s238
      %p240 = scmp.lt.s32.totalorder %s19, 1
      %s241 = scalar_select %p240, %s19, 1
      %s242 = smul.addr %s241, 32
      %s243 = smul.addr %s242, 4
      %s244 = scalar_lea.vmem %s0, %s243
      %s245 = smul.u32 8, %s20
      %p246 = scmp.lt.s32.totalorder %s245, 7
      %s247 = scalar_select %p246, %s245, 7
      %s248 = smul.addr %s247, 2
      %s249 = smul.addr %s248, 4
      %s250 = scalar_lea.vmem %s1, %s249
      %s251 = smul.u32 8, %s20
      %s252 = smul.u32 8, %s20
      %p253 = scmp.lt.s32.totalorder %s252, 7
      %s254 = scalar_select %p253, %s252, 7
      %s255 = smul.addr %s254, 8
      %s256 = scalar_lea.vmem %s2, %s255
      %s257 = smul.u32 8, %s20
      %s258 = smul.u32 8, %s20
      %p259 = scmp.lt.s32.totalorder %s19, 1
      %s260 = scalar_select %p259, %s19, 1
      %p261 = scmp.lt.s32.totalorder %s258, 7
      %s262 = scalar_select %p261, %s258, 7
      %s263 = smul.addr %s260, 8
      %s264 = sadd.s32 %s262, %s263
      %s265 = smul.addr %s264, 4
      %s266 = scalar_lea.vmem %s4, %s265
      %s267 = smul.u32 8, %s20
      %v269 = vld [vmem:[%s256] sm:$0xff]
      %v270 = vld [vmem:[%s256 + $0x8] sm:$0xff]
      %v271 = vld [vmem:[%s256 + $0x10] sm:$0xff]
      %v272 = vld [vmem:[%s256 + $0x18] sm:$0xff]
      %v273 = vld [vmem:[%s256 + $0x20] sm:$0xff]
      %v274 = vld [vmem:[%s256 + $0x28] sm:$0xff]
      %v275 = vld [vmem:[%s256 + $0x30] sm:$0xff]
      %v276 = vld [vmem:[%s256 + $0x38] sm:$0xff]
      %v277 = vld [vmem:[%s244] sm:$0xf]
      %v278 = vld [vmem:[%s244 + $0x8] sm:$0xf]
      %v279 = vld [vmem:[%s244 + $0x10] sm:$0xf]
      %v280 = vld [vmem:[%s244 + $0x18] sm:$0xf]
      %s281 = scalar_lea.vmem %s244, 32
      %v282 = vld [vmem:[%s281] sm:$0xf]
      %v283 = vld [vmem:[%s281 + $0x8] sm:$0xf]
      %v284 = vld [vmem:[%s281 + $0x10] sm:$0xf]
      %v285 = vld [vmem:[%s281 + $0x18] sm:$0xf]
      %v286 = vld [vmem:[%s244] sm:$0xff]
      %v287 = vld [vmem:[%s244 + $0x8] sm:$0xff]
      %v288 = vld [vmem:[%s244 + $0x10] sm:$0xff]
      %v289 = vld [vmem:[%s244 + $0x18] sm:$0xff]
      %s290 = scalar_lea.vmem %s244, 64
      %v291 = vld [vmem:[%s290] sm:$0xf]
      %v292 = vld [vmem:[%s290 + $0x8] sm:$0xf]
      %v293 = vld [vmem:[%s290 + $0x10] sm:$0xf]
      %v294 = vld [vmem:[%s290 + $0x18] sm:$0xf]
      %s295 = scalar_lea.vmem %s244, 96
      %v296 = vld [vmem:[%s295] sm:$0xf]
      %v297 = vld [vmem:[%s295 + $0x8] sm:$0xf]
      %v298 = vld [vmem:[%s295 + $0x10] sm:$0xf]
      %v299 = vld [vmem:[%s295 + $0x18] sm:$0xf]
      %v304 = vunpack.c.l.b16 %v277
      %v305 = vunpack.c.l.b16 %v278
      %v306 = vunpack.c.l.b16 %v279
      %v307 = vunpack.c.l.b16 %v280
      %v308 = vpack.c.b16 %v305, %v304
      %v309 = vpack.c.b16 %v307, %v306
      %v316 = vunpack.c.l.b16 %v282
      %v317 = vunpack.c.l.b16 %v283
      %v318 = vunpack.c.l.b16 %v284
      %v319 = vunpack.c.l.b16 %v285
      %v320 = vpack.c.b16 %v317, %v316
      %v321 = vpack.c.b16 %v319, %v318
      %v328 = vunpack.c.l.b16 %v286
      %v329 = vunpack.c.h.b16 %v286
      %v330 = vunpack.c.l.b16 %v287
      %v331 = vunpack.c.h.b16 %v287
      %v332 = vunpack.c.l.b16 %v288
      %v333 = vunpack.c.h.b16 %v288
      %v334 = vunpack.c.l.b16 %v289
      %v335 = vunpack.c.h.b16 %v289
      %v336 = vpack.c.b16 %v330, %v328
      %v337 = vpack.c.b16 %v331, %v329
      %v338 = vpack.c.b16 %v334, %v332
      %v339 = vpack.c.b16 %v335, %v333
      %340 = vrot.lane.b32.xlu0 %v336, 127
      %v341 = vpop.permute.xlu0 %340
      %342 = vrot.lane.b32.xlu0 %v337, 127
      %v343 = vpop.permute.xlu0 %342
      %344 = vrot.lane.b32.xlu0 %v338, 127
      %v345 = vpop.permute.xlu0 %344
      %346 = vrot.lane.b32.xlu0 %v339, 127
      %v347 = vpop.permute.xlu0 %346
      %vm348 = vcmask 1039360
      %v349 = vsel %vm348, %v341, %v343
      %v350 = vsel %vm348, %v345, %v347
      %v357 = vunpack.c.l.b16 %v291
      %v358 = vunpack.c.l.b16 %v292
      %v359 = vunpack.c.l.b16 %v293
      %v360 = vunpack.c.l.b16 %v294
      %v361 = vpack.c.b16 %v358, %v357
      %v362 = vpack.c.b16 %v360, %v359
      %v369 = vunpack.c.l.b16 %v296
      %v370 = vunpack.c.l.b16 %v297
      %v371 = vunpack.c.l.b16 %v298
      %v372 = vunpack.c.l.b16 %v299
      %v373 = vpack.c.b16 %v370, %v369
      %v374 = vpack.c.b16 %v372, %v371
      %v377 = vld [vmem:[%s250] sm:$0xff]
      %v378 = vld [vmem:[%s250 + $0x8] sm:$0xff]
      %v379 = vld [vmem:[%s250 + $0x10] sm:$0xff]
      %v380 = vld [vmem:[%s250 + $0x18] sm:$0xff]
      %v381 = vld [vmem:[%s250 + $0x20] sm:$0xff]
      %v382 = vld [vmem:[%s250 + $0x28] sm:$0xff]
      %v383 = vld [vmem:[%s250 + $0x30] sm:$0xff]
      %v384 = vld [vmem:[%s250 + $0x38] sm:$0xff]
      %v393 = vunpack.c.l.b16 %v377
      %v394 = vunpack.c.h.b16 %v377
      %v395 = vunpack.c.l.b16 %v378
      %v396 = vunpack.c.h.b16 %v378
      %v397 = vunpack.c.l.b16 %v379
      %v398 = vunpack.c.h.b16 %v379
      %v399 = vunpack.c.l.b16 %v380
      %v400 = vunpack.c.h.b16 %v380
      %v401 = vunpack.c.l.b16 %v381
      %v402 = vunpack.c.h.b16 %v381
      %v403 = vunpack.c.l.b16 %v382
      %v404 = vunpack.c.h.b16 %v382
      %v405 = vunpack.c.l.b16 %v383
      %v406 = vunpack.c.h.b16 %v383
      %v407 = vunpack.c.l.b16 %v384
      %v408 = vunpack.c.h.b16 %v384
      %v409 = vpack.c.b16 %v395, %v393
      %v410 = vpack.c.b16 %v396, %v394
      %v411 = vpack.c.b16 %v399, %v397
      %v412 = vpack.c.b16 %v400, %v398
      %v413 = vpack.c.b16 %v403, %v401
      %v414 = vpack.c.b16 %v404, %v402
      %v415 = vpack.c.b16 %v407, %v405
      %v416 = vpack.c.b16 %v408, %v406
      %vm421 = vcmask 261120
      %v423 = vsel %vm421, %v410, 0
      %v426 = vsel %vm421, %v412, 0
      %v429 = vsel %vm421, %v414, 0
      %v432 = vsel %vm421, %v416, 0
      %434 = vmatprep.subr.bf16.mxu0 0
      %435 = vmatpush1.bf16.msra.mxu0 %v308
      %436 = vmatprep.subr.bf16.mxu0 0
      %437 = vmatpush1.bf16.msra.mxu0 %v309
      %438 = vmatprep.subr.bf16.mxu0 0
      %439 = vmatpush1.bf16.msra.mxu0 %v320
      %440 = vmatprep.subr.bf16.mxu0 0
      %441 = vmatpush1.bf16.msra.mxu0 %v321
      %442 = vmatprep.subr.bf16.mxu0 0
      %443 = vmatpush1.bf16.msra.mxu0 %v349
      %444 = vmatprep.subr.bf16.mxu0 0
      %445 = vmatpush1.bf16.msra.mxu0 %v350
      %446 = vmatprep.subr.bf16.mxu0 0
      %447 = vmatpush1.bf16.msra.mxu0 %v361
      %448 = vmatprep.subr.bf16.mxu0 0
      %449 = vmatpush1.bf16.msra.mxu0 %v362
      %450 = vmatprep.subr.bf16.mxu0 0
      %451 = vmatpush1.bf16.msra.mxu0 %v373
      %452 = vmatprep.subr.bf16.mxu0 0
      %453 = vmatpush1.bf16.msra.mxu0 %v374
      %454 = vmatprep.subr.bf16.mxu0 0
      %455 = vmatpush1.bf16.msra.mxu0 0
      %456 = vmatprep.subr.bf16.mxu0 0
      %457 = vmatpush1.bf16.msra.mxu0 0
      %458 = vmatprep.subr.bf16.mxu0 0
      %459 = vmatpush1.bf16.msra.mxu0 0
      %460 = vmatprep.subr.bf16.mxu0 0
      %461 = vmatpush1.bf16.msra.mxu0 0
      %462 = vmatprep.subr.bf16.mxu0 0
      %463 = vmatpush1.bf16.msra.mxu0 0
      %464 = vmatprep.subr.bf16.mxu0 0
      %465 = vmatpush1.bf16.msra.mxu0 0
      %466 = vmatprep.mubr.bf16.mxu0 %v423
      %467 = vmatmul.mubr.bf16.gmra.mrb[0].mxu0 %v409
      %v468 = vpop.f32.mrb[0].mxu0
      %v469 = vadd.f32 0.0, %v468
      %v470 = vpop.f32.mrb[0].mxu0
      %v471 = vpop.f32.mrb[0].mxu0
      %v472 = vadd.f32 0.0, %v471
      %v473 = vpop.f32.mrb[0].mxu0
      %474 = vmatprep.mubr.bf16.mxu0 %v426
      %475 = vmatmul.mubr.bf16.gmra.mrb[0].mxu0 %v411
      %v476 = vpop.f32.mrb[0].mxu0
      %v477 = vadd.f32 0.0, %v476
      %v478 = vpop.f32.mrb[0].mxu0
      %v479 = vpop.f32.mrb[0].mxu0
      %v480 = vadd.f32 0.0, %v479
      %v481 = vpop.f32.mrb[0].mxu0
      %482 = vmatprep.mubr.bf16.mxu0 %v429
      %483 = vmatmul.mubr.bf16.gmra.mrb[0].mxu0 %v413
      %v484 = vpop.f32.mrb[0].mxu0
      %v485 = vadd.f32 0.0, %v484
      %v486 = vpop.f32.mrb[0].mxu0
      %v487 = vpop.f32.mrb[0].mxu0
      %v488 = vadd.f32 0.0, %v487
      %v489 = vpop.f32.mrb[0].mxu0
      %490 = vmatprep.mubr.bf16.mxu0 %v432
      %491 = vmatmul.mubr.bf16.gmra.mrb[0].mxu0 %v415
      %v492 = vpop.f32.mrb[0].mxu0
      %v493 = vadd.f32 0.0, %v492
      %v494 = vpop.f32.mrb[0].mxu0
      %v495 = vpop.f32.mrb[0].mxu0
      %v496 = vadd.f32 0.0, %v495
      %v497 = vpop.f32.mrb[0].mxu0
      %498 = vdwg.mxu0
      %v499 = vadd.f32 %v269, %v469
      %v500 = vadd.f32 %v270, %v472
      %v501 = vadd.f32 %v271, %v477
      %v502 = vadd.f32 %v272, %v480
      %v503 = vadd.f32 %v273, %v485
      %v504 = vadd.f32 %v274, %v488
      %v505 = vadd.f32 %v275, %v493
      %v506 = vadd.f32 %v276, %v496
      %v507 = vld [vmem:[%s290] sm:$0xff]
      %v508 = vld [vmem:[%s290 + $0x8] sm:$0xff]
      %v509 = vld [vmem:[%s290 + $0x10] sm:$0xff]
      %v510 = vld [vmem:[%s290 + $0x18] sm:$0xff]
      %v511 = vld [vmem:[%s281] sm:$0xff]
      %v512 = vld [vmem:[%s281 + $0x8] sm:$0xff]
      %v513 = vld [vmem:[%s281 + $0x10] sm:$0xff]
      %v514 = vld [vmem:[%s281 + $0x18] sm:$0xff]
      %v519 = vunpack.c.l.b16 %v507
      %v520 = vunpack.c.h.b16 %v507
      %v521 = vunpack.c.l.b16 %v508
      %v522 = vunpack.c.h.b16 %v508
      %v523 = vunpack.c.l.b16 %v509
      %v524 = vunpack.c.h.b16 %v509
      %v525 = vunpack.c.l.b16 %v510
      %v526 = vunpack.c.h.b16 %v510
      %v527 = vpack.c.b16 %v521, %v519
      %v528 = vpack.c.b16 %v522, %v520
      %v529 = vpack.c.b16 %v525, %v523
      %v530 = vpack.c.b16 %v526, %v524
      %531 = vrot.lane.b32.xlu0 %v336, 124
      %v532 = vpop.permute.xlu0 %531
      %533 = vrot.lane.b32.xlu0 %v337, 124
      %v534 = vpop.permute.xlu0 %533
      %535 = vrot.lane.b32.xlu0 %v338, 124
      %v536 = vpop.permute.xlu0 %535
      %537 = vrot.lane.b32.xlu0 %v339, 124
      %v538 = vpop.permute.xlu0 %537
      %vm539 = vcmask 1014784
      %v540 = vsel %vm539, %v532, %v534
      %v541 = vsel %vm539, %v536, %v538
      %v546 = vunpack.c.l.b16 %v511
      %v547 = vunpack.c.h.b16 %v511
      %v548 = vunpack.c.l.b16 %v512
      %v549 = vunpack.c.h.b16 %v512
      %v550 = vunpack.c.l.b16 %v513
      %v551 = vunpack.c.h.b16 %v513
      %v552 = vunpack.c.l.b16 %v514
      %v553 = vunpack.c.h.b16 %v514
      %v554 = vpack.c.b16 %v548, %v546
      %v555 = vpack.c.b16 %v549, %v547
      %v556 = vpack.c.b16 %v552, %v550
      %v557 = vpack.c.b16 %v553, %v551
      %558 = vrot.lane.b32.xlu0 %v554, 124
      %v559 = vpop.permute.xlu0 %558
      %560 = vrot.lane.b32.xlu0 %v555, 124
      %v561 = vpop.permute.xlu0 %560
      %562 = vrot.lane.b32.xlu0 %v556, 124
      %v563 = vpop.permute.xlu0 %562
      %564 = vrot.lane.b32.xlu0 %v557, 124
      %v565 = vpop.permute.xlu0 %564
      %v566 = vsel %vm539, %v559, %v561
      %v567 = vsel %vm539, %v563, %v565
      %568 = vrot.lane.b32.xlu0 %v336, 123
      %v569 = vpop.permute.xlu0 %568
      %570 = vrot.lane.b32.xlu0 %v337, 123
      %v571 = vpop.permute.xlu0 %570
      %572 = vrot.lane.b32.xlu0 %v338, 123
      %v573 = vpop.permute.xlu0 %572
      %574 = vrot.lane.b32.xlu0 %v339, 123
      %v575 = vpop.permute.xlu0 %574
      %vm576 = vcmask 1006592
      %v577 = vsel %vm576, %v569, %v571
      %v578 = vsel %vm576, %v573, %v575
      %579 = vrot.lane.b32.xlu0 %v308, 1
      %v580 = vpop.permute.xlu0 %579
      %581 = vrot.lane.b32.xlu0 %v309, 1
      %v582 = vpop.permute.xlu0 %581
      %s583 = scalar_lea.vmem %s250, 64
      %v584 = vld [vmem:[%s583] sm:$0xff]
      %v585 = vld [vmem:[%s583 + $0x8] sm:$0xff]
      %v586 = vld [vmem:[%s583 + $0x10] sm:$0xff]
      %v587 = vld [vmem:[%s583 + $0x18] sm:$0xff]
      %v588 = vld [vmem:[%s583 + $0x20] sm:$0xff]
      %v589 = vld [vmem:[%s583 + $0x28] sm:$0xff]
      %v590 = vld [vmem:[%s583 + $0x30] sm:$0xff]
      %v591 = vld [vmem:[%s583 + $0x38] sm:$0xff]
      %v600 = vunpack.c.l.b16 %v584
      %v601 = vunpack.c.h.b16 %v584
      %v602 = vunpack.c.l.b16 %v585
      %v603 = vunpack.c.h.b16 %v585
      %v604 = vunpack.c.l.b16 %v586
      %v605 = vunpack.c.h.b16 %v586
      %v606 = vunpack.c.l.b16 %v587
      %v607 = vunpack.c.h.b16 %v587
      %v608 = vunpack.c.l.b16 %v588
      %v609 = vunpack.c.h.b16 %v588
      %v610 = vunpack.c.l.b16 %v589
      %v611 = vunpack.c.h.b16 %v589
      %v612 = vunpack.c.l.b16 %v590
      %v613 = vunpack.c.h.b16 %v590
      %v614 = vunpack.c.l.b16 %v591
      %v615 = vunpack.c.h.b16 %v591
      %v616 = vpack.c.b16 %v602, %v600
      %v617 = vpack.c.b16 %v603, %v601
      %v618 = vpack.c.b16 %v606, %v604
      %v619 = vpack.c.b16 %v607, %v605
      %v620 = vpack.c.b16 %v610, %v608
      %v621 = vpack.c.b16 %v611, %v609
      %v622 = vpack.c.b16 %v614, %v612
      %v623 = vpack.c.b16 %v615, %v613
      %628 = vrot.lane.b32.xlu0 %v527, 127
      %v629 = vpop.permute.xlu0 %628
      %630 = vrot.lane.b32.xlu0 %v528, 127
      %v631 = vpop.permute.xlu0 %630
      %632 = vrot.lane.b32.xlu0 %v529, 127
      %v633 = vpop.permute.xlu0 %632
      %634 = vrot.lane.b32.xlu0 %v530, 127
      %v635 = vpop.permute.xlu0 %634
      %636 = vrot.lane.b32.xlu0 %v540, 127
      %v637 = vpop.permute.xlu0 %636
      %638 = vrot.lane.b32.xlu0 %v534, 127
      %v639 = vpop.permute.xlu0 %638
      %640 = vrot.lane.b32.xlu0 %v541, 127
      %v641 = vpop.permute.xlu0 %640
      %642 = vrot.lane.b32.xlu0 %v538, 127
      %v643 = vpop.permute.xlu0 %642
      %644 = vrot.lane.b32.xlu0 %v566, 127
      %v645 = vpop.permute.xlu0 %644
      %646 = vrot.lane.b32.xlu0 %v561, 127
      %v647 = vpop.permute.xlu0 %646
      %648 = vrot.lane.b32.xlu0 %v567, 127
      %v649 = vpop.permute.xlu0 %648
      %650 = vrot.lane.b32.xlu0 %v565, 127
      %v651 = vpop.permute.xlu0 %650
      %652 = vrot.lane.b32.xlu0 %v577, 127
      %v653 = vpop.permute.xlu0 %652
      %654 = vrot.lane.b32.xlu0 %v571, 127
      %v655 = vpop.permute.xlu0 %654
      %656 = vrot.lane.b32.xlu0 %v578, 127
      %v657 = vpop.permute.xlu0 %656
      %658 = vrot.lane.b32.xlu0 %v575, 127
      %v659 = vpop.permute.xlu0 %658
      %660 = vrot.lane.b32.xlu0 %v580, 127
      %v661 = vpop.permute.xlu0 %660
      %662 = vrot.lane.b32.xlu0 %v582, 127
      %v663 = vpop.permute.xlu0 %662
      %v664 = vsel %vm348, %v629, %v631
      %v665 = vsel %vm348, %v633, %v635
      %v666 = vsel %vm348, %v637, %v639
      %v667 = vsel %vm348, %v641, %v643
      %v668 = vsel %vm348, %v645, %v647
      %v669 = vsel %vm348, %v649, %v651
      %v670 = vsel %vm348, %v653, %v655
      %v671 = vsel %vm348, %v657, %v659
      %v683 = vsel %vm421, %v617, 0
      %v686 = vsel %vm421, %v619, 0
      %v689 = vsel %vm421, %v621, 0
      %v692 = vsel %vm421, %v623, 0
      %694 = vmatprep.subr.bf16.mxu0 0
      %695 = vmatpush1.bf16.msra.mxu0 %v664
      %696 = vmatprep.subr.bf16.mxu0 0
      %697 = vmatpush1.bf16.msra.mxu0 %v665
      %698 = vmatprep.subr.bf16.mxu0 0
      %699 = vmatpush1.bf16.msra.mxu0 %v666
      %700 = vmatprep.subr.bf16.mxu0 0
      %701 = vmatpush1.bf16.msra.mxu0 %v667
      %702 = vmatprep.subr.bf16.mxu0 0
      %703 = vmatpush1.bf16.msra.mxu0 %v668
      %704 = vmatprep.subr.bf16.mxu0 0
      %705 = vmatpush1.bf16.msra.mxu0 %v669
      %706 = vmatprep.subr.bf16.mxu0 0
      %707 = vmatpush1.bf16.msra.mxu0 %v670
      %708 = vmatprep.subr.bf16.mxu0 0
      %709 = vmatpush1.bf16.msra.mxu0 %v671
      %710 = vmatprep.subr.bf16.mxu0 0
      %711 = vmatpush1.bf16.msra.mxu0 %v661
      %712 = vmatprep.subr.bf16.mxu0 0
      %713 = vmatpush1.bf16.msra.mxu0 %v663
      %714 = vmatprep.subr.bf16.mxu0 0
      %715 = vmatpush1.bf16.msra.mxu0 0
      %716 = vmatprep.subr.bf16.mxu0 0
      %717 = vmatpush1.bf16.msra.mxu0 0
      %718 = vmatprep.subr.bf16.mxu0 0
      %719 = vmatpush1.bf16.msra.mxu0 0
      %720 = vmatprep.subr.bf16.mxu0 0
      %721 = vmatpush1.bf16.msra.mxu0 0
      %722 = vmatprep.subr.bf16.mxu0 0
      %723 = vmatpush1.bf16.msra.mxu0 0
      %724 = vmatprep.subr.bf16.mxu0 0
      %725 = vmatpush1.bf16.msra.mxu0 0
      %726 = vmatprep.mubr.bf16.mxu0 %v683
      %727 = vmatmul.mubr.bf16.gmra.mrb[0].mxu0 %v616
      %v728 = vpop.f32.mrb[0].mxu0
      %v729 = vadd.f32 0.0, %v728
      %v730 = vpop.f32.mrb[0].mxu0
      %v731 = vpop.f32.mrb[0].mxu0
      %v732 = vadd.f32 0.0, %v731
      %v733 = vpop.f32.mrb[0].mxu0
      %734 = vmatprep.mubr.bf16.mxu0 %v686
      %735 = vmatmul.mubr.bf16.gmra.mrb[0].mxu0 %v618
      %v736 = vpop.f32.mrb[0].mxu0
      %v737 = vadd.f32 0.0, %v736
      %v738 = vpop.f32.mrb[0].mxu0
      %v739 = vpop.f32.mrb[0].mxu0
      %v740 = vadd.f32 0.0, %v739
      %v741 = vpop.f32.mrb[0].mxu0
      %742 = vmatprep.mubr.bf16.mxu0 %v689
      %743 = vmatmul.mubr.bf16.gmra.mrb[0].mxu0 %v620
      %v744 = vpop.f32.mrb[0].mxu0
      %v745 = vadd.f32 0.0, %v744
      %v746 = vpop.f32.mrb[0].mxu0
      %v747 = vpop.f32.mrb[0].mxu0
      %v748 = vadd.f32 0.0, %v747
      %v749 = vpop.f32.mrb[0].mxu0
      %750 = vmatprep.mubr.bf16.mxu0 %v692
      %751 = vmatmul.mubr.bf16.gmra.mrb[0].mxu0 %v622
      %v752 = vpop.f32.mrb[0].mxu0
      %v753 = vadd.f32 0.0, %v752
      %v754 = vpop.f32.mrb[0].mxu0
      %v755 = vpop.f32.mrb[0].mxu0
      %v756 = vadd.f32 0.0, %v755
      %v757 = vpop.f32.mrb[0].mxu0
      %758 = vdwg.mxu0
      %v759 = vadd.f32 %v499, %v729
      %v760 = vadd.f32 %v500, %v732
      %v761 = vadd.f32 %v501, %v737
      %v762 = vadd.f32 %v502, %v740
      %v763 = vadd.f32 %v503, %v745
      %v764 = vadd.f32 %v504, %v748
      %v765 = vadd.f32 %v505, %v753
      %v766 = vadd.f32 %v506, %v756
      %v767 = vld [vmem:[%s3] sm:$0x1]
      %v769 = vlaneseq
      %v770 = vshrl.u32 %v769, 7
      %v771 = vsub.s32 0, %v770
      %v772 = vrot.slane %v767, %v771
      %v774 = vmul.f32 %v759, %v772
      %v775 = vmul.f32 %v760, %v772
      %v776 = vmul.f32 %v761, %v772
      %v777 = vmul.f32 %v762, %v772
      %v778 = vmul.f32 %v763, %v772
      %v779 = vmul.f32 %v764, %v772
      %v780 = vmul.f32 %v765, %v772
      %v781 = vmul.f32 %v766, %v772
      %782 = vadd.xlane.f32.xlu0 %v774
      %v783 = vpop.xlane.xlu0 %782
      %784 = vadd.xlane.f32.xlu0 %v775
      %v785 = vpop.xlane.xlu0 %784
      %786 = vadd.xlane.f32.xlu0 %v776
      %v787 = vpop.xlane.xlu0 %786
      %788 = vadd.xlane.f32.xlu0 %v777
      %v789 = vpop.xlane.xlu0 %788
      %790 = vadd.xlane.f32.xlu0 %v778
      %v791 = vpop.xlane.xlu0 %790
      %792 = vadd.xlane.f32.xlu0 %v779
      %v793 = vpop.xlane.xlu0 %792
      %794 = vadd.xlane.f32.xlu0 %v780
      %v795 = vpop.xlane.xlu0 %794
      %796 = vadd.xlane.f32.xlu0 %v781
      %v797 = vpop.xlane.xlu0 %796
      %v798 = vmul.f32 %v774, %v759
      %v799 = vmul.f32 %v775, %v760
      %v800 = vmul.f32 %v776, %v761
      %v801 = vmul.f32 %v777, %v762
      %v802 = vmul.f32 %v778, %v763
      %v803 = vmul.f32 %v779, %v764
      %v804 = vmul.f32 %v780, %v765
      %v805 = vmul.f32 %v781, %v766
      %806 = vadd.xlane.f32.xlu0 %v798
      %v807 = vpop.xlane.xlu0 %806
      %808 = vadd.xlane.f32.xlu0 %v799
      %v809 = vpop.xlane.xlu0 %808
      %810 = vadd.xlane.f32.xlu0 %v800
      %v811 = vpop.xlane.xlu0 %810
      %812 = vadd.xlane.f32.xlu0 %v801
      %v813 = vpop.xlane.xlu0 %812
      %814 = vadd.xlane.f32.xlu0 %v802
      %v815 = vpop.xlane.xlu0 %814
      %816 = vadd.xlane.f32.xlu0 %v803
      %v817 = vpop.xlane.xlu0 %816
      %818 = vadd.xlane.f32.xlu0 %v804
      %v819 = vpop.xlane.xlu0 %818
      %820 = vadd.xlane.f32.xlu0 %v805
      %v821 = vpop.xlane.xlu0 %820
      %v822 = vmul.f32 %v783, 0.0625
      %v823 = vmul.f32 %v785, 0.0625
      %v824 = vmul.f32 %v787, 0.0625
      %v825 = vmul.f32 %v789, 0.0625
      %v826 = vmul.f32 %v791, 0.0625
      %v827 = vmul.f32 %v793, 0.0625
      %v828 = vmul.f32 %v795, 0.0625
      %v829 = vmul.f32 %v797, 0.0625
      %v830 = vmul.f32 %v807, 0.0625
      %v831 = vmul.f32 %v809, 0.0625
      %v832 = vmul.f32 %v811, 0.0625
      %v833 = vmul.f32 %v813, 0.0625
      %v834 = vmul.f32 %v815, 0.0625
      %v835 = vmul.f32 %v817, 0.0625
      %v836 = vmul.f32 %v819, 0.0625
      %v837 = vmul.f32 %v821, 0.0625
      %v838 = vmul.f32 %v822, %v822
      %v839 = vmul.f32 %v823, %v823
      %v840 = vmul.f32 %v824, %v824
      %v841 = vmul.f32 %v825, %v825
      %v842 = vmul.f32 %v826, %v826
      %v843 = vmul.f32 %v827, %v827
      %v844 = vmul.f32 %v828, %v828
      %v845 = vmul.f32 %v829, %v829
      %v846 = vsub.f32 %v830, %v838
      %v847 = vsub.f32 %v831, %v839
      %v848 = vsub.f32 %v832, %v840
      %v849 = vsub.f32 %v833, %v841
      %v850 = vsub.f32 %v834, %v842
      %v851 = vsub.f32 %v835, %v843
      %v852 = vsub.f32 %v836, %v844
      %v853 = vsub.f32 %v837, %v845
      %v854 = vmax.f32 %v846, 0.0
      %v855 = vmax.f32 %v847, 0.0
      %v856 = vmax.f32 %v848, 0.0
      %v857 = vmax.f32 %v849, 0.0
      %v858 = vmax.f32 %v850, 0.0
      %v859 = vmax.f32 %v851, 0.0
      %v860 = vmax.f32 %v852, 0.0
      %v861 = vmax.f32 %v853, 0.0
      %v862 = vsub.f32 %v759, %v822
      %v863 = vsub.f32 %v760, %v823
      %v864 = vsub.f32 %v761, %v824
      %v865 = vsub.f32 %v762, %v825
      %v866 = vsub.f32 %v763, %v826
      %v867 = vsub.f32 %v764, %v827
      %v868 = vsub.f32 %v765, %v828
      %v869 = vsub.f32 %v766, %v829
      %v870 = vadd.f32 %v854, 1e-05
      %v871 = vadd.f32 %v855, 1e-05
      %v872 = vadd.f32 %v856, 1e-05
      %v873 = vadd.f32 %v857, 1e-05
      %v874 = vadd.f32 %v858, 1e-05
      %v875 = vadd.f32 %v859, 1e-05
      %v876 = vadd.f32 %v860, 1e-05
      %v877 = vadd.f32 %v861, 1e-05
      %v878 = vrsqrt.pop %v870
      %v879 = vrsqrt.pop %v871
      %v880 = vrsqrt.pop %v872
      %v881 = vrsqrt.pop %v873
      %v882 = vrsqrt.pop %v874
      %v883 = vrsqrt.pop %v875
      %v884 = vrsqrt.pop %v876
      %v885 = vrsqrt.pop %v877
      %v886 = vmul.f32 %v862, %v878
      %v887 = vmul.f32 %v863, %v879
      %v888 = vmul.f32 %v864, %v880
      %v889 = vmul.f32 %v865, %v881
      %v890 = vmul.f32 %v866, %v882
      %v891 = vmul.f32 %v867, %v883
      %v892 = vmul.f32 %v868, %v884
      %v893 = vmul.f32 %v869, %v885
      %v894 = vmax.f32 %v886, 0.0
      %v895 = vmax.f32 %v887, 0.0
      %v896 = vmax.f32 %v888, 0.0
      %v897 = vmax.f32 %v889, 0.0
      %v898 = vmax.f32 %v890, 0.0
      %v899 = vmax.f32 %v891, 0.0
      %v900 = vmax.f32 %v892, 0.0
      %v901 = vmax.f32 %v893, 0.0
      %v902 = vpack.c.bf16 %v895, %v894
      %v903 = vpack.c.bf16 %v897, %v896
      %v904 = vpack.c.bf16 %v899, %v898
      %v905 = vpack.c.bf16 %v901, %v900
      %v910 = vunpack.c.l.b16 %v902
      %v911 = vunpack.c.h.b16 %v902
      %v912 = vunpack.c.l.b16 %v903
      %v913 = vunpack.c.h.b16 %v903
      %v914 = vunpack.c.l.b16 %v904
      %v915 = vunpack.c.h.b16 %v904
      %v916 = vunpack.c.l.b16 %v905
      %v917 = vunpack.c.h.b16 %v905
      %v918 = vpack.c.b16 %v910, %v910
      %v919 = vpack.c.b16 %v911, %v911
      %v920 = vpack.c.b16 %v912, %v912
      %v921 = vpack.c.b16 %v913, %v913
      %v922 = vpack.c.b16 %v914, %v914
      %v923 = vpack.c.b16 %v915, %v915
      %v924 = vpack.c.b16 %v916, %v916
      %v925 = vpack.c.b16 %v917, %v917
      %934 = vst [vmem:[%s266] sm:$0xf] %v918
      %935 = vst [vmem:[%s266 + $0x4] sm:$0xf] %v919
      %936 = vst [vmem:[%s266 + $0x8] sm:$0xf] %v920
      %937 = vst [vmem:[%s266 + $0xc] sm:$0xf] %v921
      %938 = vst [vmem:[%s266 + $0x10] sm:$0xf] %v922
      %939 = vst [vmem:[%s266 + $0x14] sm:$0xf] %v923
      %940 = vst [vmem:[%s266 + $0x18] sm:$0xf] %v924
      %941 = vst [vmem:[%s266 + $0x1c] sm:$0xf] %v925
      %s942 = smul.u32 8, %s20
      %p943 = scmp.lt.s32.totalorder %s19, 1
      %s944 = scalar_select %p943, %s19, 1
      %p945 = scmp.lt.s32.totalorder %s942, 7
      %s946 = scalar_select %p945, %s942, 7
      %s947 = smul.addr %s944, 8
      %s948 = sadd.s32 %s946, %s947
      %s949 = smul.addr %s948, 4
      %s950 = scalar_lea.vmem %s4, %s949
      // Predicated region
      $region37: #{_lambda_.8} parent=35 // pred_check
        %p951 = pneg %p146
      $region38: #{_lambda_.8} parent=35 // pred_check_branch
        %953 = sbr.rel (%p951) target = $region40
      $region39: #{_lambda_.8} parent=35 // pred_region
        %s954 = smul.u32 8, %s20
      $region40: #{_lambda_.8} parent=35 // pred_fallthru
        _
    $region36: #{_lambda_.8} parent=5 // pred_fallthru
      _
    %p955 = scmp.le.s32.totalorder 2, %s10
    // Predicated region
    $region41: #{_lambda_.8} parent=5 // pred_check
      %p956 = pneg %p955
    $region42: #{_lambda_.8} parent=5 // pred_check_branch
      %958 = sbr.rel (%p956) target = $region44
    $region43: #{_lambda_.8} parent=5 // pred_region
      %s959 = ssub.s32 %s10, 2
      // Predicated region
      $region45: #{_lambda_.8} parent=43 // pred_check
        %p960 = pneg %p152
      $region46: #{_lambda_.8} parent=43 // pred_check_branch
        %962 = sbr.rel (%p960) target = $region48
      $region47: #{_lambda_.8} parent=43 // pred_region
        %s963 = smul.u32 8, %s22
        %p964 = scmp.lt.s32.totalorder %s21, 1
        %s965 = scalar_select %p964, %s21, 1
        %p966 = scmp.lt.s32.totalorder %s963, 7
        %s967 = scalar_select %p966, %s963, 7
        %s968 = smul.addr %s965, 8
        %s969 = sadd.s32 %s967, %s968
        %s970 = smul.addr %s969, 4
        %s971 = scalar_lea.vmem %s4, %s970
      $region48: #{_lambda_.8} parent=43 // pred_fallthru
        _
    $region44: #{_lambda_.8} parent=5 // pred_fallthru
      _
  $region6: #{_lambda_.8} parent=0 // loop_footer
    %s14 = sadd.s32 1, %s10
  $region7: #{_lambda_.8} parent=0 // loop_footer_branch
    %9 = sbr.rel target = $region3
  $region8: #{_lambda_.8} parent=0 // loop_exit
    _

// kernel: _lambda_.9
$region0: #{_lambda_.9}
  #allocation0 [shape = 'u32[]', space=smem, size = 0x4, offset = 0x4, fixed_abs, tag = 'smem constant byte address 0x4 - core index']
  #allocation1 [shape = 'u32[144,128]{1,0:T(1,128)}', space=vmem, size = 0x12000, scoped, tag = 'internal scratch']
  %s0 = inlined_call_operand.vmem [shape: bf16[2,4,64,256], index: 0, kind: input, shape index: {}]
  %s1 = inlined_call_operand.vmem [shape: bf16[3,128,192], index: 1, kind: input, shape index: {}]
  %s2 = inlined_call_operand.vmem [shape: f32[128,128], index: 2, kind: input, shape index: {}]
  %s3 = inlined_call_operand.vmem [shape: f32[1,128], index: 3, kind: input, shape index: {}]
  %s4 = inlined_call_operand.vmem [shape: bf16[2,128,128], index: 4, kind: output, shape index: {}]
  %s5 = sld [smem:[#allocation0]]
  $region49: #{_lambda_.9} parent=0
    _
  %s7 = ssub.s32 1, %s5
  %s8 = scalar_select 0, %s7, %s5
  loop: start=0, step=1, limit=4
  $region2: #{_lambda_.9} parent=0 // loop_pre_header
    _
  $region3: #{_lambda_.9} parent=0 // loop_header
    %s10 = sphi 0, %s14
    %p11 = scmp.ge.s32.totalorder %s10, 4
    %s17 = sphi 0, %s29
    %s18 = sphi 0, %s25
    %s19 = sphi 0, %s17
    %s20 = sphi 0, %s18
    %s21 = sphi 0, %s19
    %s22 = sphi 0, %s20
    %s32 = sphi 0, %s34
    %s35 = sphi 0, %s32
    %s36 = sphi 0, %s35
    %s52 = sphi 0, %s36
    %s58 = sphi 0, %s60
    %s61 = sphi 0, %s58
    %s62 = sphi 0, %s61
    %s78 = sphi 0, %s62
    %s84 = sphi 0, %s86
    %s87 = sphi 0, %s84
    %s88 = sphi 0, %s87
    %s104 = sphi 0, %s88
    %s108 = sphi 0, %s108
    %s110 = sphi 0, %s108
    %s111 = sphi 0, %s110
    %s125 = sphi 0, %s111
    %s133 = sphi 0, %s135
    %s136 = sphi 0, %s133
    %s137 = sphi 0, %s136
    %s153 = sphi 0, %s137
  $region4: #{_lambda_.9} parent=0 // loop_header_branch
    %13 = sbr.rel (%p11) target = $region8
  $region5: #{_lambda_.9} parent=0 // loop_body
    %s15 = ssub.s32 %s10, 1
    %s16 = ssub.s32 %s10, 2
    %s23 = sadd.s32 1, %s18
    %p24 = scmp.ge.s32.totalorder %s23, 1
    %s25 = scalar_select %p24, 0, %s23
    %s26 = sadd.s32 1, %s17
    %s27 = scalar_select %p24, %s26, %s17
    %p28 = scmp.ge.s32.totalorder %s27, 2
    %s29 = scalar_select %p28, 0, %s27
    %s30 = ssub.s32 %s17, %s29
    %p31 = scmp.eq.s32.totalorder %s30, 0
    %s33 = sadd.s32 %s32, 1
    %s34 = scalar_select %p31, %s32, %s33
    %p37 = pneg %p31
    %p38 = scmp.eq.s32.totalorder %s10, 1
    %p39 = por %p37, %p38
    %p40 = scmp.ne.s32.totalorder %s32, %s35
    %p41 = scmp.eq.s32.totalorder %s10, 0
    %p42 = por %p40, %p41
    %p43 = scmp.ne.s32.totalorder %s32, %s35
    %p44 = scmp.eq.s32.totalorder %s15, 1
    %p45 = por %p43, %p44
    %p46 = scmp.ne.s32.totalorder %s35, %s36
    %p47 = scmp.eq.s32.totalorder %s15, 0
    %p48 = por %p46, %p47
    %p49 = scmp.ne.s32.totalorder %s35, %s36
    %p50 = scmp.eq.s32.totalorder %s16, 1
    %p51 = por %p49, %p50
    %p53 = scmp.ne.s32.totalorder %s36, %s52
    %p54 = scmp.eq.s32.totalorder %s16, 0
    %p55 = por %p53, %p54
    %s56 = ssub.s32 %s18, %s25
    %p57 = scmp.eq.s32.totalorder %s56, 0
    %s59 = sadd.s32 %s58, 1
    %s60 = scalar_select %p57, %s58, %s59
    %p63 = pneg %p57
    %p64 = scmp.eq.s32.totalorder %s10, 1
    %p65 = por %p63, %p64
    %p66 = scmp.ne.s32.totalorder %s58, %s61
    %p67 = scmp.eq.s32.totalorder %s10, 0
    %p68 = por %p66, %p67
    %p69 = scmp.ne.s32.totalorder %s58, %s61
    %p70 = scmp.eq.s32.totalorder %s15, 1
    %p71 = por %p69, %p70
    %p72 = scmp.ne.s32.totalorder %s61, %s62
    %p73 = scmp.eq.s32.totalorder %s15, 0
    %p74 = por %p72, %p73
    %p75 = scmp.ne.s32.totalorder %s61, %s62
    %p76 = scmp.eq.s32.totalorder %s16, 1
    %p77 = por %p75, %p76
    %p79 = scmp.ne.s32.totalorder %s62, %s78
    %p80 = scmp.eq.s32.totalorder %s16, 0
    %p81 = por %p79, %p80
    %s82 = ssub.s32 %s18, %s25
    %p83 = scmp.eq.s32.totalorder %s82, 0
    %s85 = sadd.s32 %s84, 1
    %s86 = scalar_select %p83, %s84, %s85
    %p89 = pneg %p83
    %p90 = scmp.eq.s32.totalorder %s10, 1
    %p91 = por %p89, %p90
    %p92 = scmp.ne.s32.totalorder %s84, %s87
    %p93 = scmp.eq.s32.totalorder %s10, 0
    %p94 = por %p92, %p93
    %p95 = scmp.ne.s32.totalorder %s84, %s87
    %p96 = scmp.eq.s32.totalorder %s15, 1
    %p97 = por %p95, %p96
    %p98 = scmp.ne.s32.totalorder %s87, %s88
    %p99 = scmp.eq.s32.totalorder %s15, 0
    %p100 = por %p98, %p99
    %p101 = scmp.ne.s32.totalorder %s87, %s88
    %p102 = scmp.eq.s32.totalorder %s16, 1
    %p103 = por %p101, %p102
    %p105 = scmp.ne.s32.totalorder %s88, %s104
    %p106 = scmp.eq.s32.totalorder %s16, 0
    %p107 = por %p105, %p106
    %s109 = sadd.s32 %s108, 1
    %p112 = scmp.eq.s32.totalorder %s10, 1
    %p113 = scmp.ne.s32.totalorder %s108, %s110
    %p114 = scmp.eq.s32.totalorder %s10, 0
    %p115 = por %p113, %p114
    %p116 = scmp.ne.s32.totalorder %s108, %s110
    %p117 = scmp.eq.s32.totalorder %s15, 1
    %p118 = por %p116, %p117
    %p119 = scmp.ne.s32.totalorder %s110, %s111
    %p120 = scmp.eq.s32.totalorder %s15, 0
    %p121 = por %p119, %p120
    %p122 = scmp.ne.s32.totalorder %s110, %s111
    %p123 = scmp.eq.s32.totalorder %s16, 1
    %p124 = por %p122, %p123
    %p126 = scmp.ne.s32.totalorder %s111, %s125
    %p127 = scmp.eq.s32.totalorder %s16, 0
    %p128 = por %p126, %p127
    %s129 = ssub.s32 %s17, %s29
    %s130 = ssub.s32 %s18, %s25
    %s131 = sor.u32 %s129, %s130
    %p132 = scmp.eq.s32.totalorder %s131, 0
    %s134 = sadd.s32 %s133, 1
    %s135 = scalar_select %p132, %s133, %s134
    %p138 = pneg %p132
    %p139 = scmp.eq.s32.totalorder %s10, 1
    %p140 = por %p138, %p139
    %p141 = scmp.ne.s32.totalorder %s133, %s136
    %p142 = scmp.eq.s32.totalorder %s10, 0
    %p143 = por %p141, %p142
    %p144 = scmp.ne.s32.totalorder %s133, %s136
    %p145 = scmp.eq.s32.totalorder %s15, 1
    %p146 = por %p144, %p145
    %p147 = scmp.ne.s32.totalorder %s136, %s137
    %p148 = scmp.eq.s32.totalorder %s15, 0
    %p149 = por %p147, %p148
    %p150 = scmp.ne.s32.totalorder %s136, %s137
    %p151 = scmp.eq.s32.totalorder %s16, 1
    %p152 = por %p150, %p151
    %p154 = scmp.ne.s32.totalorder %s137, %s153
    %p155 = scmp.eq.s32.totalorder %s16, 0
    %p156 = por %p154, %p155
    %p157 = scmp.le.s32.totalorder 1, %s10
    %p158 = scmp.lt.s32.totalorder %s10, 3
    %p159 = pnand %p157, %p158
    %p160 = pneg %p159
    // Predicated region
    $region9: #{_lambda_.9} parent=5 // pred_check
      _
    $region10: #{_lambda_.9} parent=5 // pred_check_branch
      %162 = sbr.rel (%p159) target = $region12
    $region11: #{_lambda_.9} parent=5 // pred_region
      %s163 = ssub.s32 %s10, 1
      // Predicated region
      $region13: #{_lambda_.9} parent=11 // pred_check
        %p164 = pneg %p74
      $region14: #{_lambda_.9} parent=11 // pred_check_branch
        %166 = sbr.rel (%p164) target = $region16
      $region15: #{_lambda_.9} parent=11 // pred_region
        %s167 = smul.u32 16, %s20
        %p168 = scmp.lt.s32.totalorder %s167, 15
        %s169 = scalar_select %p168, %s167, 15
        %s170 = smul.addr %s169, 2
        %s171 = smul.addr %s170, 4
        %s172 = scalar_lea.vmem %s1, %s171
        %s173 = smul.u32 16, %s20
      $region16: #{_lambda_.9} parent=11 // pred_fallthru
        _
      // Predicated region
      $region17: #{_lambda_.9} parent=11 // pred_check
        %p174 = pneg %p100
      $region18: #{_lambda_.9} parent=11 // pred_check_branch
        %176 = sbr.rel (%p174) target = $region20
      $region19: #{_lambda_.9} parent=11 // pred_region
        %s177 = smul.u32 16, %s20
        %p178 = scmp.lt.s32.totalorder %s177, 15
        %s179 = scalar_select %p178, %s177, 15
        %s180 = smul.addr %s179, 8
        %s181 = scalar_lea.vmem %s2, %s180
        %s182 = smul.u32 16, %s20
      $region20: #{_lambda_.9} parent=11 // pred_fallthru
        _
      // Predicated region
      $region21: #{_lambda_.9} parent=11 // pred_check
        %p183 = pneg %p121
      $region22: #{_lambda_.9} parent=11 // pred_check_branch
        %185 = sbr.rel (%p183) target = $region24
      $region23: #{_lambda_.9} parent=11 // pred_region
        _
      $region24: #{_lambda_.9} parent=11 // pred_fallthru
        _
    $region12: #{_lambda_.9} parent=5 // pred_fallthru
      _
    %p186 = scmp.lt.s32.totalorder %s10, 2
    // Predicated region
    $region25: #{_lambda_.9} parent=5 // pred_check
      %p187 = pneg %p186
    $region26: #{_lambda_.9} parent=5 // pred_check_branch
      %189 = sbr.rel (%p187) target = $region28
    $region27: #{_lambda_.9} parent=5 // pred_region
      // Predicated region
      $region29: #{_lambda_.9} parent=27 // pred_check
        %p190 = pneg %p42
      $region30: #{_lambda_.9} parent=27 // pred_check_branch
        %192 = sbr.rel (%p190) target = $region32
      $region31: #{_lambda_.9} parent=27 // pred_region
        %p193 = scmp.lt.s32.totalorder %s17, 1
        %s194 = scalar_select %p193, %s17, 1
        %s195 = smul.addr %s194, 64
        %s196 = smul.addr %s195, 4
        %s197 = scalar_lea.vmem %s0, %s196
      $region32: #{_lambda_.9} parent=27 // pred_fallthru
        _
    $region28: #{_lambda_.9} parent=5 // pred_fallthru
      _
    %p198 = scmp.le.s32.totalorder 1, %s10
    %p199 = scmp.lt.s32.totalorder %s10, 3
    %p200 = pnand %p198, %p199
    %p201 = pneg %p200
    // Predicated region
    $region33: #{_lambda_.9} parent=5 // pred_check
      _
    $region34: #{_lambda_.9} parent=5 // pred_check_branch
      %203 = sbr.rel (%p200) target = $region36
    $region35: #{_lambda_.9} parent=5 // pred_region
      %s204 = ssub.s32 %s10, 1
      %p205 = scmp.lt.s32.totalorder %s19, 1
      %s206 = scalar_select %p205, %s19, 1
      %s207 = smul.addr %s206, 64
      %s208 = smul.addr %s207, 4
      %s209 = scalar_lea.vmem %s0, %s208
      %p210 = pneg %p48
      %p211 = pneg %p45
      %s212 = smul.u32 16, %s20
      %p213 = scmp.lt.s32.totalorder %s212, 15
      %s214 = scalar_select %p213, %s212, 15
      %s215 = smul.addr %s214, 2
      %s216 = smul.addr %s215, 4
      %s217 = scalar_lea.vmem %s1, %s216
      %p218 = pneg %p74
      %p219 = pneg %p71
      %s220 = smul.u32 16, %s20
      %p221 = scmp.lt.s32.totalorder %s220, 15
      %s222 = scalar_select %p221, %s220, 15
      %s223 = smul.addr %s222, 8
      %s224 = scalar_lea.vmem %s2, %s223
      %p225 = pneg %p100
      %p226 = pneg %p97
      %p227 = pneg %p121
      %p228 = pneg %p118
      %p229 = pneg %p149
      %p230 = pneg %p146
      %s231 = smul.u32 16, %s20
      %p232 = scmp.lt.s32.totalorder %s19, 1
      %s233 = scalar_select %p232, %s19, 1
      %p234 = scmp.lt.s32.totalorder %s231, 15
      %s235 = scalar_select %p234, %s231, 15
      %s236 = smul.addr %s233, 16
      %s237 = sadd.s32 %s235, %s236
      %s238 = smul.addr %s237, 4
      %s239 = scalar_lea.vmem %s4, %s238
      %p240 = scmp.lt.s32.totalorder %s19, 1
      %s241 = scalar_select %p240, %s19, 1
      %s242 = smul.addr %s241, 64
      %s243 = smul.addr %s242, 4
      %s244 = scalar_lea.vmem %s0, %s243
      %s245 = smul.u32 16, %s20
      %p246 = scmp.lt.s32.totalorder %s245, 15
      %s247 = scalar_select %p246, %s245, 15
      %s248 = smul.addr %s247, 2
      %s249 = smul.addr %s248, 4
      %s250 = scalar_lea.vmem %s1, %s249
      %s251 = smul.u32 16, %s20
      %s252 = smul.u32 16, %s20
      %p253 = scmp.lt.s32.totalorder %s252, 15
      %s254 = scalar_select %p253, %s252, 15
      %s255 = smul.addr %s254, 8
      %s256 = scalar_lea.vmem %s2, %s255
      %s257 = smul.u32 16, %s20
      %s258 = smul.u32 16, %s20
      %p259 = scmp.lt.s32.totalorder %s19, 1
      %s260 = scalar_select %p259, %s19, 1
      %p261 = scmp.lt.s32.totalorder %s258, 15
      %s262 = scalar_select %p261, %s258, 15
      %s263 = smul.addr %s260, 16
      %s264 = sadd.s32 %s262, %s263
      %s265 = smul.addr %s264, 4
      %s266 = scalar_lea.vmem %s4, %s265
      %s267 = smul.u32 16, %s20
      %v269 = vld [vmem:[%s256] sm:$0xff]
      %v270 = vld [vmem:[%s256 + $0x8] sm:$0xff]
      %v271 = vld [vmem:[%s256 + $0x10] sm:$0xff]
      %v272 = vld [vmem:[%s256 + $0x18] sm:$0xff]
      %v273 = vld [vmem:[%s256 + $0x20] sm:$0xff]
      %v274 = vld [vmem:[%s256 + $0x28] sm:$0xff]
      %v275 = vld [vmem:[%s256 + $0x30] sm:$0xff]
      %v276 = vld [vmem:[%s256 + $0x38] sm:$0xff]
      %v277 = vld [vmem:[%s256 + $0x40] sm:$0xff]
      %v278 = vld [vmem:[%s256 + $0x48] sm:$0xff]
      %v279 = vld [vmem:[%s256 + $0x50] sm:$0xff]
      %v280 = vld [vmem:[%s256 + $0x58] sm:$0xff]
      %v281 = vld [vmem:[%s256 + $0x60] sm:$0xff]
      %v282 = vld [vmem:[%s256 + $0x68] sm:$0xff]
      %v283 = vld [vmem:[%s256 + $0x70] sm:$0xff]
      %v284 = vld [vmem:[%s256 + $0x78] sm:$0xff]
      %v285 = vld [vmem:[%s244] sm:$0xf]
      %v286 = vld [vmem:[%s244 + $0x8] sm:$0xf]
      %v287 = vld [vmem:[%s244 + $0x10] sm:$0xf]
      %v288 = vld [vmem:[%s244 + $0x18] sm:$0xf]
      %v289 = vld [vmem:[%s244 + $0x20] sm:$0xf]
      %v290 = vld [vmem:[%s244 + $0x28] sm:$0xf]
      %v291 = vld [vmem:[%s244 + $0x30] sm:$0xf]
      %v292 = vld [vmem:[%s244 + $0x38] sm:$0xf]
      %s293 = scalar_lea.vmem %s244, 64
      %v294 = vld [vmem:[%s293] sm:$0xf]
      %v295 = vld [vmem:[%s293 + $0x8] sm:$0xf]
      %v296 = vld [vmem:[%s293 + $0x10] sm:$0xf]
      %v297 = vld [vmem:[%s293 + $0x18] sm:$0xf]
      %v298 = vld [vmem:[%s293 + $0x20] sm:$0xf]
      %v299 = vld [vmem:[%s293 + $0x28] sm:$0xf]
      %v300 = vld [vmem:[%s293 + $0x30] sm:$0xf]
      %v301 = vld [vmem:[%s293 + $0x38] sm:$0xf]
      %v302 = vld [vmem:[%s244] sm:$0xff]
      %v303 = vld [vmem:[%s244 + $0x8] sm:$0xff]
      %v304 = vld [vmem:[%s244 + $0x10] sm:$0xff]
      %v305 = vld [vmem:[%s244 + $0x18] sm:$0xff]
      %v306 = vld [vmem:[%s244 + $0x20] sm:$0xff]
      %v307 = vld [vmem:[%s244 + $0x28] sm:$0xff]
      %v308 = vld [vmem:[%s244 + $0x30] sm:$0xff]
      %v309 = vld [vmem:[%s244 + $0x38] sm:$0xff]
      %v318 = vunpack.c.l.b16 %v285
      %v319 = vunpack.c.l.b16 %v286
      %v320 = vunpack.c.l.b16 %v287
      %v321 = vunpack.c.l.b16 %v288
      %v322 = vunpack.c.l.b16 %v289
      %v323 = vunpack.c.l.b16 %v290
      %v324 = vunpack.c.l.b16 %v291
      %v325 = vunpack.c.l.b16 %v292
      %v326 = vpack.c.b16 %v319, %v318
      %v327 = vpack.c.b16 %v321, %v320
      %v328 = vpack.c.b16 %v323, %v322
      %v329 = vpack.c.b16 %v325, %v324
      %v342 = vunpack.c.l.b16 %v294
      %v343 = vunpack.c.l.b16 %v295
      %v344 = vunpack.c.l.b16 %v296
      %v345 = vunpack.c.l.b16 %v297
      %v346 = vunpack.c.l.b16 %v298
      %v347 = vunpack.c.l.b16 %v299
      %v348 = vunpack.c.l.b16 %v300
      %v349 = vunpack.c.l.b16 %v301
      %v350 = vpack.c.b16 %v343, %v342
      %v351 = vpack.c.b16 %v345, %v344
      %v352 = vpack.c.b16 %v347, %v346
      %v353 = vpack.c.b16 %v349, %v348
      %v366 = vunpack.c.l.b16 %v302
      %v367 = vunpack.c.h.b16 %v302
      %v368 = vunpack.c.l.b16 %v303
      %v369 = vunpack.c.h.b16 %v303
      %v370 = vunpack.c.l.b16 %v304
      %v371 = vunpack.c.h.b16 %v304
      %v372 = vunpack.c.l.b16 %v305
      %v373 = vunpack.c.h.b16 %v305
      %v374 = vunpack.c.l.b16 %v306
      %v375 = vunpack.c.h.b16 %v306
      %v376 = vunpack.c.l.b16 %v307
      %v377 = vunpack.c.h.b16 %v307
      %v378 = vunpack.c.l.b16 %v308
      %v379 = vunpack.c.h.b16 %v308
      %v380 = vunpack.c.l.b16 %v309
      %v381 = vunpack.c.h.b16 %v309
      %v382 = vpack.c.b16 %v368, %v366
      %v383 = vpack.c.b16 %v369, %v367
      %v384 = vpack.c.b16 %v372, %v370
      %v385 = vpack.c.b16 %v373, %v371
      %v386 = vpack.c.b16 %v376, %v374
      %v387 = vpack.c.b16 %v377, %v375
      %v388 = vpack.c.b16 %v380, %v378
      %v389 = vpack.c.b16 %v381, %v379
      %390 = vrot.lane.b32.xlu0 %v382, 127
      %v391 = vpop.permute.xlu0 %390
      %392 = vrot.lane.b32.xlu0 %v383, 127
      %v393 = vpop.permute.xlu0 %392
      %394 = vrot.lane.b32.xlu0 %v384, 127
      %v395 = vpop.permute.xlu0 %394
      %396 = vrot.lane.b32.xlu0 %v385, 127
      %v397 = vpop.permute.xlu0 %396
      %398 = vrot.lane.b32.xlu0 %v386, 127
      %v399 = vpop.permute.xlu0 %398
      %400 = vrot.lane.b32.xlu0 %v387, 127
      %v401 = vpop.permute.xlu0 %400
      %402 = vrot.lane.b32.xlu0 %v388, 127
      %v403 = vpop.permute.xlu0 %402
      %404 = vrot.lane.b32.xlu0 %v389, 127
      %v405 = vpop.permute.xlu0 %404
      %vm406 = vcmask 1039360
      %v407 = vsel %vm406, %v391, %v393
      %v408 = vsel %vm406, %v395, %v397
      %v409 = vsel %vm406, %v399, %v401
      %v410 = vsel %vm406, %v403, %v405
      %v415 = vld [vmem:[%s250] sm:$0xff]
      %v416 = vld [vmem:[%s250 + $0x8] sm:$0xff]
      %v417 = vld [vmem:[%s250 + $0x10] sm:$0xff]
      %v418 = vld [vmem:[%s250 + $0x18] sm:$0xff]
      %v419 = vld [vmem:[%s250 + $0x20] sm:$0xff]
      %v420 = vld [vmem:[%s250 + $0x28] sm:$0xff]
      %v421 = vld [vmem:[%s250 + $0x30] sm:$0xff]
      %v422 = vld [vmem:[%s250 + $0x38] sm:$0xff]
      %v423 = vld [vmem:[%s250 + $0x40] sm:$0xff]
      %v424 = vld [vmem:[%s250 + $0x48] sm:$0xff]
      %v425 = vld [vmem:[%s250 + $0x50] sm:$0xff]
      %v426 = vld [vmem:[%s250 + $0x58] sm:$0xff]
      %v427 = vld [vmem:[%s250 + $0x60] sm:$0xff]
      %v428 = vld [vmem:[%s250 + $0x68] sm:$0xff]
      %v429 = vld [vmem:[%s250 + $0x70] sm:$0xff]
      %v430 = vld [vmem:[%s250 + $0x78] sm:$0xff]
      %v447 = vunpack.c.l.b16 %v415
      %v448 = vunpack.c.h.b16 %v415
      %v449 = vunpack.c.l.b16 %v416
      %v450 = vunpack.c.h.b16 %v416
      %v451 = vunpack.c.l.b16 %v417
      %v452 = vunpack.c.h.b16 %v417
      %v453 = vunpack.c.l.b16 %v418
      %v454 = vunpack.c.h.b16 %v418
      %v455 = vunpack.c.l.b16 %v419
      %v456 = vunpack.c.h.b16 %v419
      %v457 = vunpack.c.l.b16 %v420
      %v458 = vunpack.c.h.b16 %v420
      %v459 = vunpack.c.l.b16 %v421
      %v460 = vunpack.c.h.b16 %v421
      %v461 = vunpack.c.l.b16 %v422
      %v462 = vunpack.c.h.b16 %v422
      %v463 = vunpack.c.l.b16 %v423
      %v464 = vunpack.c.h.b16 %v423
      %v465 = vunpack.c.l.b16 %v424
      %v466 = vunpack.c.h.b16 %v424
      %v467 = vunpack.c.l.b16 %v425
      %v468 = vunpack.c.h.b16 %v425
      %v469 = vunpack.c.l.b16 %v426
      %v470 = vunpack.c.h.b16 %v426
      %v471 = vunpack.c.l.b16 %v427
      %v472 = vunpack.c.h.b16 %v427
      %v473 = vunpack.c.l.b16 %v428
      %v474 = vunpack.c.h.b16 %v428
      %v475 = vunpack.c.l.b16 %v429
      %v476 = vunpack.c.h.b16 %v429
      %v477 = vunpack.c.l.b16 %v430
      %v478 = vunpack.c.h.b16 %v430
      %v479 = vpack.c.b16 %v449, %v447
      %v480 = vpack.c.b16 %v450, %v448
      %v481 = vpack.c.b16 %v453, %v451
      %v482 = vpack.c.b16 %v454, %v452
      %v483 = vpack.c.b16 %v457, %v455
      %v484 = vpack.c.b16 %v458, %v456
      %v485 = vpack.c.b16 %v461, %v459
      %v486 = vpack.c.b16 %v462, %v460
      %v487 = vpack.c.b16 %v465, %v463
      %v488 = vpack.c.b16 %v466, %v464
      %v489 = vpack.c.b16 %v469, %v467
      %v490 = vpack.c.b16 %v470, %v468
      %v491 = vpack.c.b16 %v473, %v471
      %v492 = vpack.c.b16 %v474, %v472
      %v493 = vpack.c.b16 %v477, %v475
      %v494 = vpack.c.b16 %v478, %v476
      %vm503 = vcmask 523264
      %v505 = vsel %vm503, %v480, 0
      %v508 = vsel %vm503, %v482, 0
      %v511 = vsel %vm503, %v484, 0
      %v514 = vsel %vm503, %v486, 0
      %v517 = vsel %vm503, %v488, 0
      %v520 = vsel %vm503, %v490, 0
      %v523 = vsel %vm503, %v492, 0
      %v526 = vsel %vm503, %v494, 0
      %528 = vmatprep.subr.bf16.mxu0 0
      %529 = vmatpush1.bf16.msra.mxu0 %v326
      %530 = vmatprep.subr.bf16.mxu0 0
      %531 = vmatpush1.bf16.msra.mxu0 %v327
      %532 = vmatprep.subr.bf16.mxu0 0
      %533 = vmatpush1.bf16.msra.mxu0 %v328
      %534 = vmatprep.subr.bf16.mxu0 0
      %535 = vmatpush1.bf16.msra.mxu0 %v329
      %536 = vmatprep.subr.bf16.mxu0 0
      %537 = vmatpush1.bf16.msra.mxu0 %v350
      %538 = vmatprep.subr.bf16.mxu0 0
      %539 = vmatpush1.bf16.msra.mxu0 %v351
      %540 = vmatprep.subr.bf16.mxu0 0
      %541 = vmatpush1.bf16.msra.mxu0 %v352
      %542 = vmatprep.subr.bf16.mxu0 0
      %543 = vmatpush1.bf16.msra.mxu0 %v353
      %544 = vmatprep.subr.bf16.mxu0 0
      %545 = vmatpush1.bf16.msra.mxu0 %v407
      %546 = vmatprep.subr.bf16.mxu0 0
      %547 = vmatpush1.bf16.msra.mxu0 %v408
      %548 = vmatprep.subr.bf16.mxu0 0
      %549 = vmatpush1.bf16.msra.mxu0 %v409
      %550 = vmatprep.subr.bf16.mxu0 0
      %551 = vmatpush1.bf16.msra.mxu0 %v410
      %552 = vmatprep.subr.bf16.mxu0 0
      %553 = vmatpush1.bf16.msra.mxu0 0
      %554 = vmatprep.subr.bf16.mxu0 0
      %555 = vmatpush1.bf16.msra.mxu0 0
      %556 = vmatprep.subr.bf16.mxu0 0
      %557 = vmatpush1.bf16.msra.mxu0 0
      %558 = vmatprep.subr.bf16.mxu0 0
      %559 = vmatpush1.bf16.msra.mxu0 0
      %560 = vmatprep.mubr.bf16.mxu0 %v505
      %561 = vmatmul.mubr.bf16.gmra.mrb[0].mxu0 %v479
      %v562 = vpop.f32.mrb[0].mxu0
      %v563 = vadd.f32 0.0, %v562
      %v564 = vpop.f32.mrb[0].mxu0
      %v565 = vpop.f32.mrb[0].mxu0
      %v566 = vadd.f32 0.0, %v565
      %v567 = vpop.f32.mrb[0].mxu0
      %568 = vmatprep.mubr.bf16.mxu0 %v508
      %569 = vmatmul.mubr.bf16.gmra.mrb[0].mxu0 %v481
      %v570 = vpop.f32.mrb[0].mxu0
      %v571 = vadd.f32 0.0, %v570
      %v572 = vpop.f32.mrb[0].mxu0
      %v573 = vpop.f32.mrb[0].mxu0
      %v574 = vadd.f32 0.0, %v573
      %v575 = vpop.f32.mrb[0].mxu0
      %576 = vmatprep.mubr.bf16.mxu0 %v511
      %577 = vmatmul.mubr.bf16.gmra.mrb[0].mxu0 %v483
      %v578 = vpop.f32.mrb[0].mxu0
      %v579 = vadd.f32 0.0, %v578
      %v580 = vpop.f32.mrb[0].mxu0
      %v581 = vpop.f32.mrb[0].mxu0
      %v582 = vadd.f32 0.0, %v581
      %v583 = vpop.f32.mrb[0].mxu0
      %584 = vmatprep.mubr.bf16.mxu0 %v514
      %585 = vmatmul.mubr.bf16.gmra.mrb[0].mxu0 %v485
      %v586 = vpop.f32.mrb[0].mxu0
      %v587 = vadd.f32 0.0, %v586
      %v588 = vpop.f32.mrb[0].mxu0
      %v589 = vpop.f32.mrb[0].mxu0
      %v590 = vadd.f32 0.0, %v589
      %v591 = vpop.f32.mrb[0].mxu0
      %592 = vmatprep.mubr.bf16.mxu0 %v517
      %593 = vmatmul.mubr.bf16.gmra.mrb[0].mxu0 %v487
      %v594 = vpop.f32.mrb[0].mxu0
      %v595 = vadd.f32 0.0, %v594
      %v596 = vpop.f32.mrb[0].mxu0
      %v597 = vpop.f32.mrb[0].mxu0
      %v598 = vadd.f32 0.0, %v597
      %v599 = vpop.f32.mrb[0].mxu0
      %600 = vmatprep.mubr.bf16.mxu0 %v520
      %601 = vmatmul.mubr.bf16.gmra.mrb[0].mxu0 %v489
      %v602 = vpop.f32.mrb[0].mxu0
      %v603 = vadd.f32 0.0, %v602
      %v604 = vpop.f32.mrb[0].mxu0
      %v605 = vpop.f32.mrb[0].mxu0
      %v606 = vadd.f32 0.0, %v605
      %v607 = vpop.f32.mrb[0].mxu0
      %608 = vmatprep.mubr.bf16.mxu0 %v523
      %609 = vmatmul.mubr.bf16.gmra.mrb[0].mxu0 %v491
      %v610 = vpop.f32.mrb[0].mxu0
      %v611 = vadd.f32 0.0, %v610
      %v612 = vpop.f32.mrb[0].mxu0
      %v613 = vpop.f32.mrb[0].mxu0
      %v614 = vadd.f32 0.0, %v613
      %v615 = vpop.f32.mrb[0].mxu0
      %616 = vmatprep.mubr.bf16.mxu0 %v526
      %617 = vmatmul.mubr.bf16.gmra.mrb[0].mxu0 %v493
      %v618 = vpop.f32.mrb[0].mxu0
      %v619 = vadd.f32 0.0, %v618
      %v620 = vpop.f32.mrb[0].mxu0
      %v621 = vpop.f32.mrb[0].mxu0
      %v622 = vadd.f32 0.0, %v621
      %v623 = vpop.f32.mrb[0].mxu0
      %624 = vdwg.mxu0
      %v625 = vadd.f32 %v269, %v563
      %v626 = vadd.f32 %v270, %v566
      %v627 = vadd.f32 %v271, %v571
      %v628 = vadd.f32 %v272, %v574
      %v629 = vadd.f32 %v273, %v579
      %v630 = vadd.f32 %v274, %v582
      %v631 = vadd.f32 %v275, %v587
      %v632 = vadd.f32 %v276, %v590
      %v633 = vadd.f32 %v277, %v595
      %v634 = vadd.f32 %v278, %v598
      %v635 = vadd.f32 %v279, %v603
      %v636 = vadd.f32 %v280, %v606
      %v637 = vadd.f32 %v281, %v611
      %v638 = vadd.f32 %v282, %v614
      %v639 = vadd.f32 %v283, %v619
      %v640 = vadd.f32 %v284, %v622
      %s641 = scalar_lea.vmem %s244, 128
      %v642 = vld [vmem:[%s641] sm:$0xf]
      %v643 = vld [vmem:[%s641 + $0x8] sm:$0xf]
      %v644 = vld [vmem:[%s641 + $0x10] sm:$0xf]
      %v645 = vld [vmem:[%s641 + $0x18] sm:$0xf]
      %v646 = vld [vmem:[%s641 + $0x20] sm:$0xf]
      %v647 = vld [vmem:[%s641 + $0x28] sm:$0xf]
      %v648 = vld [vmem:[%s641 + $0x30] sm:$0xf]
      %v649 = vld [vmem:[%s641 + $0x38] sm:$0xf]
      %s650 = scalar_lea.vmem %s244, 192
      %v651 = vld [vmem:[%s650] sm:$0xf]
      %v652 = vld [vmem:[%s650 + $0x8] sm:$0xf]
      %v653 = vld [vmem:[%s650 + $0x10] sm:$0xf]
      %v654 = vld [vmem:[%s650 + $0x18] sm:$0xf]
      %v655 = vld [vmem:[%s650 + $0x20] sm:$0xf]
      %v656 = vld [vmem:[%s650 + $0x28] sm:$0xf]
      %v657 = vld [vmem:[%s650 + $0x30] sm:$0xf]
      %v658 = vld [vmem:[%s650 + $0x38] sm:$0xf]
      %v659 = vld [vmem:[%s641] sm:$0xff]
      %v660 = vld [vmem:[%s641 + $0x8] sm:$0xff]
      %v661 = vld [vmem:[%s641 + $0x10] sm:$0xff]
      %v662 = vld [vmem:[%s641 + $0x18] sm:$0xff]
      %v663 = vld [vmem:[%s641 + $0x20] sm:$0xff]
      %v664 = vld [vmem:[%s641 + $0x28] sm:$0xff]
      %v665 = vld [vmem:[%s641 + $0x30] sm:$0xff]
      %v666 = vld [vmem:[%s641 + $0x38] sm:$0xff]
      %v675 = vunpack.c.l.b16 %v642
      %v676 = vunpack.c.l.b16 %v643
      %v677 = vunpack.c.l.b16 %v644
      %v678 = vunpack.c.l.b16 %v645
      %v679 = vunpack.c.l.b16 %v646
      %v680 = vunpack.c.l.b16 %v647
      %v681 = vunpack.c.l.b16 %v648
      %v682 = vunpack.c.l.b16 %v649
      %v683 = vpack.c.b16 %v676, %v675
      %v684 = vpack.c.b16 %v678, %v677
      %v685 = vpack.c.b16 %v680, %v679
      %v686 = vpack.c.b16 %v682, %v681
      %v699 = vunpack.c.l.b16 %v651
      %v700 = vunpack.c.l.b16 %v652
      %v701 = vunpack.c.l.b16 %v653
      %v702 = vunpack.c.l.b16 %v654
      %v703 = vunpack.c.l.b16 %v655
      %v704 = vunpack.c.l.b16 %v656
      %v705 = vunpack.c.l.b16 %v657
      %v706 = vunpack.c.l.b16 %v658
      %v707 = vpack.c.b16 %v700, %v699
      %v708 = vpack.c.b16 %v702, %v701
      %v709 = vpack.c.b16 %v704, %v703
      %v710 = vpack.c.b16 %v706, %v705
      %v723 = vunpack.c.l.b16 %v659
      %v724 = vunpack.c.h.b16 %v659
      %v725 = vunpack.c.l.b16 %v660
      %v726 = vunpack.c.h.b16 %v660
      %v727 = vunpack.c.l.b16 %v661
      %v728 = vunpack.c.h.b16 %v661
      %v729 = vunpack.c.l.b16 %v662
      %v730 = vunpack.c.h.b16 %v662
      %v731 = vunpack.c.l.b16 %v663
      %v732 = vunpack.c.h.b16 %v663
      %v733 = vunpack.c.l.b16 %v664
      %v734 = vunpack.c.h.b16 %v664
      %v735 = vunpack.c.l.b16 %v665
      %v736 = vunpack.c.h.b16 %v665
      %v737 = vunpack.c.l.b16 %v666
      %v738 = vunpack.c.h.b16 %v666
      %v739 = vpack.c.b16 %v725, %v723
      %v740 = vpack.c.b16 %v726, %v724
      %v741 = vpack.c.b16 %v729, %v727
      %v742 = vpack.c.b16 %v730, %v728
      %v743 = vpack.c.b16 %v733, %v731
      %v744 = vpack.c.b16 %v734, %v732
      %v745 = vpack.c.b16 %v737, %v735
      %v746 = vpack.c.b16 %v738, %v736
      %747 = vrot.lane.b32.xlu0 %v739, 127
      %v748 = vpop.permute.xlu0 %747
      %749 = vrot.lane.b32.xlu0 %v740, 127
      %v750 = vpop.permute.xlu0 %749
      %751 = vrot.lane.b32.xlu0 %v741, 127
      %v752 = vpop.permute.xlu0 %751
      %753 = vrot.lane.b32.xlu0 %v742, 127
      %v754 = vpop.permute.xlu0 %753
      %755 = vrot.lane.b32.xlu0 %v743, 127
      %v756 = vpop.permute.xlu0 %755
      %757 = vrot.lane.b32.xlu0 %v744, 127
      %v758 = vpop.permute.xlu0 %757
      %759 = vrot.lane.b32.xlu0 %v745, 127
      %v760 = vpop.permute.xlu0 %759
      %761 = vrot.lane.b32.xlu0 %v746, 127
      %v762 = vpop.permute.xlu0 %761
      %v763 = vsel %vm406, %v748, %v750
      %v764 = vsel %vm406, %v752, %v754
      %v765 = vsel %vm406, %v756, %v758
      %v766 = vsel %vm406, %v760, %v762
      %s771 = scalar_lea.vmem %s250, 128
      %v772 = vld [vmem:[%s771] sm:$0xff]
      %v773 = vld [vmem:[%s771 + $0x8] sm:$0xff]
      %v774 = vld [vmem:[%s771 + $0x10] sm:$0xff]
      %v775 = vld [vmem:[%s771 + $0x18] sm:$0xff]
      %v776 = vld [vmem:[%s771 + $0x20] sm:$0xff]
      %v777 = vld [vmem:[%s771 + $0x28] sm:$0xff]
      %v778 = vld [vmem:[%s771 + $0x30] sm:$0xff]
      %v779 = vld [vmem:[%s771 + $0x38] sm:$0xff]
      %v780 = vld [vmem:[%s771 + $0x40] sm:$0xff]
      %v781 = vld [vmem:[%s771 + $0x48] sm:$0xff]
      %v782 = vld [vmem:[%s771 + $0x50] sm:$0xff]
      %v783 = vld [vmem:[%s771 + $0x58] sm:$0xff]
      %v784 = vld [vmem:[%s771 + $0x60] sm:$0xff]
      %v785 = vld [vmem:[%s771 + $0x68] sm:$0xff]
      %v786 = vld [vmem:[%s771 + $0x70] sm:$0xff]
      %v787 = vld [vmem:[%s771 + $0x78] sm:$0xff]
      %v804 = vunpack.c.l.b16 %v772
      %v805 = vunpack.c.h.b16 %v772
      %v806 = vunpack.c.l.b16 %v773
      %v807 = vunpack.c.h.b16 %v773
      %v808 = vunpack.c.l.b16 %v774
      %v809 = vunpack.c.h.b16 %v774
      %v810 = vunpack.c.l.b16 %v775
      %v811 = vunpack.c.h.b16 %v775
      %v812 = vunpack.c.l.b16 %v776
      %v813 = vunpack.c.h.b16 %v776
      %v814 = vunpack.c.l.b16 %v777
      %v815 = vunpack.c.h.b16 %v777
      %v816 = vunpack.c.l.b16 %v778
      %v817 = vunpack.c.h.b16 %v778
      %v818 = vunpack.c.l.b16 %v779
      %v819 = vunpack.c.h.b16 %v779
      %v820 = vunpack.c.l.b16 %v780
      %v821 = vunpack.c.h.b16 %v780
      %v822 = vunpack.c.l.b16 %v781
      %v823 = vunpack.c.h.b16 %v781
      %v824 = vunpack.c.l.b16 %v782
      %v825 = vunpack.c.h.b16 %v782
      %v826 = vunpack.c.l.b16 %v783
      %v827 = vunpack.c.h.b16 %v783
      %v828 = vunpack.c.l.b16 %v784
      %v829 = vunpack.c.h.b16 %v784
      %v830 = vunpack.c.l.b16 %v785
      %v831 = vunpack.c.h.b16 %v785
      %v832 = vunpack.c.l.b16 %v786
      %v833 = vunpack.c.h.b16 %v786
      %v834 = vunpack.c.l.b16 %v787
      %v835 = vunpack.c.h.b16 %v787
      %v836 = vpack.c.b16 %v806, %v804
      %v837 = vpack.c.b16 %v807, %v805
      %v838 = vpack.c.b16 %v810, %v808
      %v839 = vpack.c.b16 %v811, %v809
      %v840 = vpack.c.b16 %v814, %v812
      %v841 = vpack.c.b16 %v815, %v813
      %v842 = vpack.c.b16 %v818, %v816
      %v843 = vpack.c.b16 %v819, %v817
      %v844 = vpack.c.b16 %v822, %v820
      %v845 = vpack.c.b16 %v823, %v821
      %v846 = vpack.c.b16 %v826, %v824
      %v847 = vpack.c.b16 %v827, %v825
      %v848 = vpack.c.b16 %v830, %v828
      %v849 = vpack.c.b16 %v831, %v829
      %v850 = vpack.c.b16 %v834, %v832
      %v851 = vpack.c.b16 %v835, %v833
      %v861 = vsel %vm503, %v837, 0
      %v864 = vsel %vm503, %v839, 0
      %v867 = vsel %vm503, %v841, 0
      %v870 = vsel %vm503, %v843, 0
      %v873 = vsel %vm503, %v845, 0
      %v876 = vsel %vm503, %v847, 0
      %v879 = vsel %vm503, %v849, 0
      %v882 = vsel %vm503, %v851, 0
      %884 = vmatprep.subr.bf16.mxu0 0
      %885 = vmatpush1.bf16.msra.mxu0 %v683
      %886 = vmatprep.subr.bf16.mxu0 0
      %887 = vmatpush1.bf16.msra.mxu0 %v684
      %888 = vmatprep.subr.bf16.mxu0 0
      %889 = vmatpush1.bf16.msra.mxu0 %v685
      %890 = vmatprep.subr.bf16.mxu0 0
      %891 = vmatpush1.bf16.msra.mxu0 %v686
      %892 = vmatprep.subr.bf16.mxu0 0
      %893 = vmatpush1.bf16.msra.mxu0 %v707
      %894 = vmatprep.subr.bf16.mxu0 0
      %895 = vmatpush1.bf16.msra.mxu0 %v708
      %896 = vmatprep.subr.bf16.mxu0 0
      %897 = vmatpush1.bf16.msra.mxu0 %v709
      %898 = vmatprep.subr.bf16.mxu0 0
      %899 = vmatpush1.bf16.msra.mxu0 %v710
      %900 = vmatprep.subr.bf16.mxu0 0
      %901 = vmatpush1.bf16.msra.mxu0 %v763
      %902 = vmatprep.subr.bf16.mxu0 0
      %903 = vmatpush1.bf16.msra.mxu0 %v764
      %904 = vmatprep.subr.bf16.mxu0 0
      %905 = vmatpush1.bf16.msra.mxu0 %v765
      %906 = vmatprep.subr.bf16.mxu0 0
      %907 = vmatpush1.bf16.msra.mxu0 %v766
      %908 = vmatprep.subr.bf16.mxu0 0
      %909 = vmatpush1.bf16.msra.mxu0 0
      %910 = vmatprep.subr.bf16.mxu0 0
      %911 = vmatpush1.bf16.msra.mxu0 0
      %912 = vmatprep.subr.bf16.mxu0 0
      %913 = vmatpush1.bf16.msra.mxu0 0
      %914 = vmatprep.subr.bf16.mxu0 0
      %915 = vmatpush1.bf16.msra.mxu0 0
      %916 = vmatprep.mubr.bf16.mxu0 %v861
      %917 = vmatmul.mubr.bf16.gmra.mrb[0].mxu0 %v836
      %v918 = vpop.f32.mrb[0].mxu0
      %v919 = vadd.f32 0.0, %v918
      %v920 = vpop.f32.mrb[0].mxu0
      %v921 = vpop.f32.mrb[0].mxu0
      %v922 = vadd.f32 0.0, %v921
      %v923 = vpop.f32.mrb[0].mxu0
      %924 = vmatprep.mubr.bf16.mxu0 %v864
      %925 = vmatmul.mubr.bf16.gmra.mrb[0].mxu0 %v838
      %v926 = vpop.f32.mrb[0].mxu0
      %v927 = vadd.f32 0.0, %v926
      %v928 = vpop.f32.mrb[0].mxu0
      %v929 = vpop.f32.mrb[0].mxu0
      %v930 = vadd.f32 0.0, %v929
      %v931 = vpop.f32.mrb[0].mxu0
      %932 = vmatprep.mubr.bf16.mxu0 %v867
      %933 = vmatmul.mubr.bf16.gmra.mrb[0].mxu0 %v840
      %v934 = vpop.f32.mrb[0].mxu0
      %v935 = vadd.f32 0.0, %v934
      %v936 = vpop.f32.mrb[0].mxu0
      %v937 = vpop.f32.mrb[0].mxu0
      %v938 = vadd.f32 0.0, %v937
      %v939 = vpop.f32.mrb[0].mxu0
      %940 = vmatprep.mubr.bf16.mxu0 %v870
      %941 = vmatmul.mubr.bf16.gmra.mrb[0].mxu0 %v842
      %v942 = vpop.f32.mrb[0].mxu0
      %v943 = vadd.f32 0.0, %v942
      %v944 = vpop.f32.mrb[0].mxu0
      %v945 = vpop.f32.mrb[0].mxu0
      %v946 = vadd.f32 0.0, %v945
      %v947 = vpop.f32.mrb[0].mxu0
      %948 = vmatprep.mubr.bf16.mxu0 %v873
      %949 = vmatmul.mubr.bf16.gmra.mrb[0].mxu0 %v844
      %v950 = vpop.f32.mrb[0].mxu0
      %v951 = vadd.f32 0.0, %v950
      %v952 = vpop.f32.mrb[0].mxu0
      %v953 = vpop.f32.mrb[0].mxu0
      %v954 = vadd.f32 0.0, %v953
      %v955 = vpop.f32.mrb[0].mxu0
      %956 = vmatprep.mubr.bf16.mxu0 %v876
      %957 = vmatmul.mubr.bf16.gmra.mrb[0].mxu0 %v846
      %v958 = vpop.f32.mrb[0].mxu0
      %v959 = vadd.f32 0.0, %v958
      %v960 = vpop.f32.mrb[0].mxu0
      %v961 = vpop.f32.mrb[0].mxu0
      %v962 = vadd.f32 0.0, %v961
      %v963 = vpop.f32.mrb[0].mxu0
      %964 = vmatprep.mubr.bf16.mxu0 %v879
      %965 = vmatmul.mubr.bf16.gmra.mrb[0].mxu0 %v848
      %v966 = vpop.f32.mrb[0].mxu0
      %v967 = vadd.f32 0.0, %v966
      %v968 = vpop.f32.mrb[0].mxu0
      %v969 = vpop.f32.mrb[0].mxu0
      %v970 = vadd.f32 0.0, %v969
      %v971 = vpop.f32.mrb[0].mxu0
      %972 = vmatprep.mubr.bf16.mxu0 %v882
      %973 = vmatmul.mubr.bf16.gmra.mrb[0].mxu0 %v850
      %v974 = vpop.f32.mrb[0].mxu0
      %v975 = vadd.f32 0.0, %v974
      %v976 = vpop.f32.mrb[0].mxu0
      %v977 = vpop.f32.mrb[0].mxu0
      %v978 = vadd.f32 0.0, %v977
      %v979 = vpop.f32.mrb[0].mxu0
      %980 = vdwg.mxu0
      %v981 = vadd.f32 %v625, %v919
      %v982 = vadd.f32 %v626, %v922
      %v983 = vadd.f32 %v627, %v927
      %v984 = vadd.f32 %v628, %v930
      %v985 = vadd.f32 %v629, %v935
      %v986 = vadd.f32 %v630, %v938
      %v987 = vadd.f32 %v631, %v943
      %v988 = vadd.f32 %v632, %v946
      %v989 = vadd.f32 %v633, %v951
      %v990 = vadd.f32 %v634, %v954
      %v991 = vadd.f32 %v635, %v959
      %v992 = vadd.f32 %v636, %v962
      %v993 = vadd.f32 %v637, %v967
      %v994 = vadd.f32 %v638, %v970
      %v995 = vadd.f32 %v639, %v975
      %v996 = vadd.f32 %v640, %v978
      %v997 = vld [vmem:[%s293] sm:$0xff]
      %v998 = vld [vmem:[%s293 + $0x8] sm:$0xff]
      %v999 = vld [vmem:[%s293 + $0x10] sm:$0xff]
      %v1000 = vld [vmem:[%s293 + $0x18] sm:$0xff]
      %v1001 = vld [vmem:[%s293 + $0x20] sm:$0xff]
      %v1002 = vld [vmem:[%s293 + $0x28] sm:$0xff]
      %v1003 = vld [vmem:[%s293 + $0x30] sm:$0xff]
      %v1004 = vld [vmem:[%s293 + $0x38] sm:$0xff]
      %v1013 = vunpack.c.l.b16 %v997
      %v1014 = vunpack.c.h.b16 %v997
      %v1015 = vunpack.c.l.b16 %v998
      %v1016 = vunpack.c.h.b16 %v998
      %v1017 = vunpack.c.l.b16 %v999
      %v1018 = vunpack.c.h.b16 %v999
      %v1019 = vunpack.c.l.b16 %v1000
      %v1020 = vunpack.c.h.b16 %v1000
      %v1021 = vunpack.c.l.b16 %v1001
      %v1022 = vunpack.c.h.b16 %v1001
      %v1023 = vunpack.c.l.b16 %v1002
      %v1024 = vunpack.c.h.b16 %v1002
      %v1025 = vunpack.c.l.b16 %v1003
      %v1026 = vunpack.c.h.b16 %v1003
      %v1027 = vunpack.c.l.b16 %v1004
      %v1028 = vunpack.c.h.b16 %v1004
      %v1029 = vpack.c.b16 %v1015, %v1013
      %v1030 = vpack.c.b16 %v1016, %v1014
      %v1031 = vpack.c.b16 %v1019, %v1017
      %v1032 = vpack.c.b16 %v1020, %v1018
      %v1033 = vpack.c.b16 %v1023, %v1021
      %v1034 = vpack.c.b16 %v1024, %v1022
      %v1035 = vpack.c.b16 %v1027, %v1025
      %v1036 = vpack.c.b16 %v1028, %v1026
      %s1037 = scalar_lea.vmem %s250, 256
      %v1038 = vld [vmem:[%s1037] sm:$0xff]
      %v1039 = vld [vmem:[%s1037 + $0x8] sm:$0xff]
      %v1040 = vld [vmem:[%s1037 + $0x10] sm:$0xff]
      %v1041 = vld [vmem:[%s1037 + $0x18] sm:$0xff]
      %v1042 = vld [vmem:[%s1037 + $0x20] sm:$0xff]
      %v1043 = vld [vmem:[%s1037 + $0x28] sm:$0xff]
      %v1044 = vld [vmem:[%s1037 + $0x30] sm:$0xff]
      %v1045 = vld [vmem:[%s1037 + $0x38] sm:$0xff]
      %v1046 = vld [vmem:[%s1037 + $0x40] sm:$0xff]
      %v1047 = vld [vmem:[%s1037 + $0x48] sm:$0xff]
      %v1048 = vld [vmem:[%s1037 + $0x50] sm:$0xff]
      %v1049 = vld [vmem:[%s1037 + $0x58] sm:$0xff]
      %v1050 = vld [vmem:[%s1037 + $0x60] sm:$0xff]
      %v1051 = vld [vmem:[%s1037 + $0x68] sm:$0xff]
      %v1052 = vld [vmem:[%s1037 + $0x70] sm:$0xff]
      %v1053 = vld [vmem:[%s1037 + $0x78] sm:$0xff]
      %v1070 = vunpack.c.l.b16 %v1038
      %v1071 = vunpack.c.h.b16 %v1038
      %v1072 = vunpack.c.l.b16 %v1039
      %v1073 = vunpack.c.h.b16 %v1039
      %v1074 = vunpack.c.l.b16 %v1040
      %v1075 = vunpack.c.h.b16 %v1040
      %v1076 = vunpack.c.l.b16 %v1041
      %v1077 = vunpack.c.h.b16 %v1041
      %v1078 = vunpack.c.l.b16 %v1042
      %v1079 = vunpack.c.h.b16 %v1042
      %v1080 = vunpack.c.l.b16 %v1043
      %v1081 = vunpack.c.h.b16 %v1043
      %v1082 = vunpack.c.l.b16 %v1044
      %v1083 = vunpack.c.h.b16 %v1044
      %v1084 = vunpack.c.l.b16 %v1045
      %v1085 = vunpack.c.h.b16 %v1045
      %v1086 = vunpack.c.l.b16 %v1046
      %v1087 = vunpack.c.h.b16 %v1046
      %v1088 = vunpack.c.l.b16 %v1047
      %v1089 = vunpack.c.h.b16 %v1047
      %v1090 = vunpack.c.l.b16 %v1048
      %v1091 = vunpack.c.h.b16 %v1048
      %v1092 = vunpack.c.l.b16 %v1049
      %v1093 = vunpack.c.h.b16 %v1049
      %v1094 = vunpack.c.l.b16 %v1050
      %v1095 = vunpack.c.h.b16 %v1050
      %v1096 = vunpack.c.l.b16 %v1051
      %v1097 = vunpack.c.h.b16 %v1051
      %v1098 = vunpack.c.l.b16 %v1052
      %v1099 = vunpack.c.h.b16 %v1052
      %v1100 = vunpack.c.l.b16 %v1053
      %v1101 = vunpack.c.h.b16 %v1053
      %v1102 = vpack.c.b16 %v1072, %v1070
      %v1103 = vpack.c.b16 %v1073, %v1071
      %v1104 = vpack.c.b16 %v1076, %v1074
      %v1105 = vpack.c.b16 %v1077, %v1075
      %v1106 = vpack.c.b16 %v1080, %v1078
      %v1107 = vpack.c.b16 %v1081, %v1079
      %v1108 = vpack.c.b16 %v1084, %v1082
      %v1109 = vpack.c.b16 %v1085, %v1083
      %v1110 = vpack.c.b16 %v1088, %v1086
      %v1111 = vpack.c.b16 %v1089, %v1087
      %v1112 = vpack.c.b16 %v1092, %v1090
      %v1113 = vpack.c.b16 %v1093, %v1091
      %v1114 = vpack.c.b16 %v1096, %v1094
      %v1115 = vpack.c.b16 %v1097, %v1095
      %v1116 = vpack.c.b16 %v1100, %v1098
      %v1117 = vpack.c.b16 %v1101, %v1099
      %1126 = vrot.lane.b32.xlu0 %v382, 125
      %v1127 = vpop.permute.xlu0 %1126
      %1128 = vrot.lane.b32.xlu0 %v383, 125
      %v1129 = vpop.permute.xlu0 %1128
      %1130 = vrot.lane.b32.xlu0 %v384, 125
      %v1131 = vpop.permute.xlu0 %1130
      %1132 = vrot.lane.b32.xlu0 %v385, 125
      %v1133 = vpop.permute.xlu0 %1132
      %1134 = vrot.lane.b32.xlu0 %v386, 125
      %v1135 = vpop.permute.xlu0 %1134
      %1136 = vrot.lane.b32.xlu0 %v387, 125
      %v1137 = vpop.permute.xlu0 %1136
      %1138 = vrot.lane.b32.xlu0 %v388, 125
      %v1139 = vpop.permute.xlu0 %1138
      %1140 = vrot.lane.b32.xlu0 %v389, 125
      %v1141 = vpop.permute.xlu0 %1140
      %1142 = vrot.lane.b32.xlu0 %v1029, 125
      %v1143 = vpop.permute.xlu0 %1142
      %1144 = vrot.lane.b32.xlu0 %v1030, 125
      %v1145 = vpop.permute.xlu0 %1144
      %1146 = vrot.lane.b32.xlu0 %v1031, 125
      %v1147 = vpop.permute.xlu0 %1146
      %1148 = vrot.lane.b32.xlu0 %v1032, 125
      %v1149 = vpop.permute.xlu0 %1148
      %1150 = vrot.lane.b32.xlu0 %v1033, 125
      %v1151 = vpop.permute.xlu0 %1150
      %1152 = vrot.lane.b32.xlu0 %v1034, 125
      %v1153 = vpop.permute.xlu0 %1152
      %1154 = vrot.lane.b32.xlu0 %v1035, 125
      %v1155 = vpop.permute.xlu0 %1154
      %1156 = vrot.lane.b32.xlu0 %v1036, 125
      %v1157 = vpop.permute.xlu0 %1156
      %1158 = vrot.lane.b32.xlu0 %v407, 125
      %v1159 = vpop.permute.xlu0 %1158
      %1160 = vrot.lane.b32.xlu0 %v393, 125
      %v1161 = vpop.permute.xlu0 %1160
      %1162 = vrot.lane.b32.xlu0 %v408, 125
      %v1163 = vpop.permute.xlu0 %1162
      %1164 = vrot.lane.b32.xlu0 %v397, 125
      %v1165 = vpop.permute.xlu0 %1164
      %1166 = vrot.lane.b32.xlu0 %v409, 125
      %v1167 = vpop.permute.xlu0 %1166
      %1168 = vrot.lane.b32.xlu0 %v401, 125
      %v1169 = vpop.permute.xlu0 %1168
      %1170 = vrot.lane.b32.xlu0 %v410, 125
      %v1171 = vpop.permute.xlu0 %1170
      %1172 = vrot.lane.b32.xlu0 %v405, 125
      %v1173 = vpop.permute.xlu0 %1172
      %vm1174 = vcmask 1022976
      %v1175 = vsel %vm1174, %v1127, %v1129
      %v1176 = vsel %vm1174, %v1131, %v1133
      %v1177 = vsel %vm1174, %v1135, %v1137
      %v1178 = vsel %vm1174, %v1139, %v1141
      %v1179 = vsel %vm1174, %v1143, %v1145
      %v1180 = vsel %vm1174, %v1147, %v1149
      %v1181 = vsel %vm1174, %v1151, %v1153
      %v1182 = vsel %vm1174, %v1155, %v1157
      %v1183 = vsel %vm1174, %v1159, %v1161
      %v1184 = vsel %vm1174, %v1163, %v1165
      %v1185 = vsel %vm1174, %v1167, %v1169
      %v1186 = vsel %vm1174, %v1171, %v1173
      %v1200 = vsel %vm503, %v1103, 0
      %v1203 = vsel %vm503, %v1105, 0
      %v1206 = vsel %vm503, %v1107, 0
      %v1209 = vsel %vm503, %v1109, 0
      %v1212 = vsel %vm503, %v1111, 0
      %v1215 = vsel %vm503, %v1113, 0
      %v1218 = vsel %vm503, %v1115, 0
      %v1221 = vsel %vm503, %v1117, 0
      %1223 = vmatprep.subr.bf16.mxu0 0
      %1224 = vmatpush1.bf16.msra.mxu0 %v1175
      %1225 = vmatprep.subr.bf16.mxu0 0
      %1226 = vmatpush1.bf16.msra.mxu0 %v1176
      %1227 = vmatprep.subr.bf16.mxu0 0
      %1228 = vmatpush1.bf16.msra.mxu0 %v1177
      %1229 = vmatprep.subr.bf16.mxu0 0
      %1230 = vmatpush1.bf16.msra.mxu0 %v1178
      %1231 = vmatprep.subr.bf16.mxu0 0
      %1232 = vmatpush1.bf16.msra.mxu0 %v1179
      %1233 = vmatprep.subr.bf16.mxu0 0
      %1234 = vmatpush1.bf16.msra.mxu0 %v1180
      %1235 = vmatprep.subr.bf16.mxu0 0
      %1236 = vmatpush1.bf16.msra.mxu0 %v1181
      %1237 = vmatprep.subr.bf16.mxu0 0
      %1238 = vmatpush1.bf16.msra.mxu0 %v1182
      %1239 = vmatprep.subr.bf16.mxu0 0
      %1240 = vmatpush1.bf16.msra.mxu0 %v1183
      %1241 = vmatprep.subr.bf16.mxu0 0
      %1242 = vmatpush1.bf16.msra.mxu0 %v1184
      %1243 = vmatprep.subr.bf16.mxu0 0
      %1244 = vmatpush1.bf16.msra.mxu0 %v1185
      %1245 = vmatprep.subr.bf16.mxu0 0
      %1246 = vmatpush1.bf16.msra.mxu0 %v1186
      %1247 = vmatprep.subr.bf16.mxu0 0
      %1248 = vmatpush1.bf16.msra.mxu0 0
      %1249 = vmatprep.subr.bf16.mxu0 0
      %1250 = vmatpush1.bf16.msra.mxu0 0
      %1251 = vmatprep.subr.bf16.mxu0 0
      %1252 = vmatpush1.bf16.msra.mxu0 0
      %1253 = vmatprep.subr.bf16.mxu0 0
      %1254 = vmatpush1.bf16.msra.mxu0 0
      %1255 = vmatprep.mubr.bf16.mxu0 %v1200
      %1256 = vmatmul.mubr.bf16.gmra.mrb[0].mxu0 %v1102
      %v1257 = vpop.f32.mrb[0].mxu0
      %v1258 = vadd.f32 0.0, %v1257
      %v1259 = vpop.f32.mrb[0].mxu0
      %v1260 = vpop.f32.mrb[0].mxu0
      %v1261 = vadd.f32 0.0, %v1260
      %v1262 = vpop.f32.mrb[0].mxu0
      %1263 = vmatprep.mubr.bf16.mxu0 %v1203
      %1264 = vmatmul.mubr.bf16.gmra.mrb[0].mxu0 %v1104
      %v1265 = vpop.f32.mrb[0].mxu0
      %v1266 = vadd.f32 0.0, %v1265
      %v1267 = vpop.f32.mrb[0].mxu0
      %v1268 = vpop.f32.mrb[0].mxu0
      %v1269 = vadd.f32 0.0, %v1268
      %v1270 = vpop.f32.mrb[0].mxu0
      %1271 = vmatprep.mubr.bf16.mxu0 %v1206
      %1272 = vmatmul.mubr.bf16.gmra.mrb[0].mxu0 %v1106
      %v1273 = vpop.f32.mrb[0].mxu0
      %v1274 = vadd.f32 0.0, %v1273
      %v1275 = vpop.f32.mrb[0].mxu0
      %v1276 = vpop.f32.mrb[0].mxu0
      %v1277 = vadd.f32 0.0, %v1276
      %v1278 = vpop.f32.mrb[0].mxu0
      %1279 = vmatprep.mubr.bf16.mxu0 %v1209
      %1280 = vmatmul.mubr.bf16.gmra.mrb[0].mxu0 %v1108
      %v1281 = vpop.f32.mrb[0].mxu0
      %v1282 = vadd.f32 0.0, %v1281
      %v1283 = vpop.f32.mrb[0].mxu0
      %v1284 = vpop.f32.mrb[0].mxu0
      %v1285 = vadd.f32 0.0, %v1284
      %v1286 = vpop.f32.mrb[0].mxu0
      %1287 = vmatprep.mubr.bf16.mxu0 %v1212
      %1288 = vmatmul.mubr.bf16.gmra.mrb[0].mxu0 %v1110
      %v1289 = vpop.f32.mrb[0].mxu0
      %v1290 = vadd.f32 0.0, %v1289
      %v1291 = vpop.f32.mrb[0].mxu0
      %v1292 = vpop.f32.mrb[0].mxu0
      %v1293 = vadd.f32 0.0, %v1292
      %v1294 = vpop.f32.mrb[0].mxu0
      %1295 = vmatprep.mubr.bf16.mxu0 %v1215
      %1296 = vmatmul.mubr.bf16.gmra.mrb[0].mxu0 %v1112
      %v1297 = vpop.f32.mrb[0].mxu0
      %v1298 = vadd.f32 0.0, %v1297
      %v1299 = vpop.f32.mrb[0].mxu0
      %v1300 = vpop.f32.mrb[0].mxu0
      %v1301 = vadd.f32 0.0, %v1300
      %v1302 = vpop.f32.mrb[0].mxu0
      %1303 = vmatprep.mubr.bf16.mxu0 %v1218
      %1304 = vmatmul.mubr.bf16.gmra.mrb[0].mxu0 %v1114
      %v1305 = vpop.f32.mrb[0].mxu0
      %v1306 = vadd.f32 0.0, %v1305
      %v1307 = vpop.f32.mrb[0].mxu0
      %v1308 = vpop.f32.mrb[0].mxu0
      %v1309 = vadd.f32 0.0, %v1308
      %v1310 = vpop.f32.mrb[0].mxu0
      %1311 = vmatprep.mubr.bf16.mxu0 %v1221
      %1312 = vmatmul.mubr.bf16.gmra.mrb[0].mxu0 %v1116
      %v1313 = vpop.f32.mrb[0].mxu0
      %v1314 = vadd.f32 0.0, %v1313
      %v1315 = vpop.f32.mrb[0].mxu0
      %v1316 = vpop.f32.mrb[0].mxu0
      %v1317 = vadd.f32 0.0, %v1316
      %v1318 = vpop.f32.mrb[0].mxu0
      %1319 = vdwg.mxu0
      %v1320 = vadd.f32 %v981, %v1258
      %v1321 = vadd.f32 %v982, %v1261
      %v1322 = vadd.f32 %v983, %v1266
      %v1323 = vadd.f32 %v984, %v1269
      %v1324 = vadd.f32 %v985, %v1274
      %v1325 = vadd.f32 %v986, %v1277
      %v1326 = vadd.f32 %v987, %v1282
      %v1327 = vadd.f32 %v988, %v1285
      %v1328 = vadd.f32 %v989, %v1290
      %v1329 = vadd.f32 %v990, %v1293
      %v1330 = vadd.f32 %v991, %v1298
      %v1331 = vadd.f32 %v992, %v1301
      %v1332 = vadd.f32 %v993, %v1306
      %v1333 = vadd.f32 %v994, %v1309
      %v1334 = vadd.f32 %v995, %v1314
      %v1335 = vadd.f32 %v996, %v1317
      %v1336 = vld [vmem:[%s3] sm:$0x1]
      %v1338 = vlaneseq
      %v1339 = vshrl.u32 %v1338, 7
      %v1340 = vsub.s32 0, %v1339
      %v1341 = vrot.slane %v1336, %v1340
      %v1343 = vmul.f32 %v1320, %v1341
      %v1344 = vmul.f32 %v1321, %v1341
      %v1345 = vmul.f32 %v1322, %v1341
      %v1346 = vmul.f32 %v1323, %v1341
      %v1347 = vmul.f32 %v1324, %v1341
      %v1348 = vmul.f32 %v1325, %v1341
      %v1349 = vmul.f32 %v1326, %v1341
      %v1350 = vmul.f32 %v1327, %v1341
      %v1351 = vmul.f32 %v1328, %v1341
      %v1352 = vmul.f32 %v1329, %v1341
      %v1353 = vmul.f32 %v1330, %v1341
      %v1354 = vmul.f32 %v1331, %v1341
      %v1355 = vmul.f32 %v1332, %v1341
      %v1356 = vmul.f32 %v1333, %v1341
      %v1357 = vmul.f32 %v1334, %v1341
      %v1358 = vmul.f32 %v1335, %v1341
      %1359 = vadd.xlane.f32.xlu0 %v1343
      %v1360 = vpop.xlane.xlu0 %1359
      %1361 = vadd.xlane.f32.xlu0 %v1344
      %v1362 = vpop.xlane.xlu0 %1361
      %1363 = vadd.xlane.f32.xlu0 %v1345
      %v1364 = vpop.xlane.xlu0 %1363
      %1365 = vadd.xlane.f32.xlu0 %v1346
      %v1366 = vpop.xlane.xlu0 %1365
      %1367 = vadd.xlane.f32.xlu0 %v1347
      %v1368 = vpop.xlane.xlu0 %1367
      %1369 = vadd.xlane.f32.xlu0 %v1348
      %v1370 = vpop.xlane.xlu0 %1369
      %1371 = vadd.xlane.f32.xlu0 %v1349
      %v1372 = vpop.xlane.xlu0 %1371
      %1373 = vadd.xlane.f32.xlu0 %v1350
      %v1374 = vpop.xlane.xlu0 %1373
      %1375 = vadd.xlane.f32.xlu0 %v1351
      %v1376 = vpop.xlane.xlu0 %1375
      %1377 = vadd.xlane.f32.xlu0 %v1352
      %v1378 = vpop.xlane.xlu0 %1377
      %1379 = vadd.xlane.f32.xlu0 %v1353
      %v1380 = vpop.xlane.xlu0 %1379
      %1381 = vadd.xlane.f32.xlu0 %v1354
      %v1382 = vpop.xlane.xlu0 %1381
      %1383 = vadd.xlane.f32.xlu0 %v1355
      %v1384 = vpop.xlane.xlu0 %1383
      %1385 = vadd.xlane.f32.xlu0 %v1356
      %v1386 = vpop.xlane.xlu0 %1385
      %1387 = vadd.xlane.f32.xlu0 %v1357
      %v1388 = vpop.xlane.xlu0 %1387
      %1389 = vadd.xlane.f32.xlu0 %v1358
      %v1390 = vpop.xlane.xlu0 %1389
      %v1391 = vmul.f32 %v1343, %v1320
      %v1392 = vmul.f32 %v1344, %v1321
      %v1393 = vmul.f32 %v1345, %v1322
      %v1394 = vmul.f32 %v1346, %v1323
      %v1395 = vmul.f32 %v1347, %v1324
      %v1396 = vmul.f32 %v1348, %v1325
      %v1397 = vmul.f32 %v1349, %v1326
      %v1398 = vmul.f32 %v1350, %v1327
      %v1399 = vmul.f32 %v1351, %v1328
      %v1400 = vmul.f32 %v1352, %v1329
      %v1401 = vmul.f32 %v1353, %v1330
      %v1402 = vmul.f32 %v1354, %v1331
      %v1403 = vmul.f32 %v1355, %v1332
      %v1404 = vmul.f32 %v1356, %v1333
      %v1405 = vmul.f32 %v1357, %v1334
      %v1406 = vmul.f32 %v1358, %v1335
      %1407 = vadd.xlane.f32.xlu0 %v1391
      %v1408 = vpop.xlane.xlu0 %1407
      %1409 = vadd.xlane.f32.xlu0 %v1392
      %v1410 = vpop.xlane.xlu0 %1409
      %1411 = vadd.xlane.f32.xlu0 %v1393
      %v1412 = vpop.xlane.xlu0 %1411
      %1413 = vadd.xlane.f32.xlu0 %v1394
      %v1414 = vpop.xlane.xlu0 %1413
      %1415 = vadd.xlane.f32.xlu0 %v1395
      %v1416 = vpop.xlane.xlu0 %1415
      %1417 = vadd.xlane.f32.xlu0 %v1396
      %v1418 = vpop.xlane.xlu0 %1417
      %1419 = vadd.xlane.f32.xlu0 %v1397
      %v1420 = vpop.xlane.xlu0 %1419
      %1421 = vadd.xlane.f32.xlu0 %v1398
      %v1422 = vpop.xlane.xlu0 %1421
      %1423 = vadd.xlane.f32.xlu0 %v1399
      %v1424 = vpop.xlane.xlu0 %1423
      %1425 = vadd.xlane.f32.xlu0 %v1400
      %v1426 = vpop.xlane.xlu0 %1425
      %1427 = vadd.xlane.f32.xlu0 %v1401
      %v1428 = vpop.xlane.xlu0 %1427
      %1429 = vadd.xlane.f32.xlu0 %v1402
      %v1430 = vpop.xlane.xlu0 %1429
      %1431 = vadd.xlane.f32.xlu0 %v1403
      %v1432 = vpop.xlane.xlu0 %1431
      %1433 = vadd.xlane.f32.xlu0 %v1404
      %v1434 = vpop.xlane.xlu0 %1433
      %1435 = vadd.xlane.f32.xlu0 %v1405
      %v1436 = vpop.xlane.xlu0 %1435
      %1437 = vadd.xlane.f32.xlu0 %v1406
      %v1438 = vpop.xlane.xlu0 %1437
      %v1439 = vmul.f32 %v1360, 0.25
      %v1440 = vmul.f32 %v1362, 0.25
      %v1441 = vmul.f32 %v1364, 0.25
      %v1442 = vmul.f32 %v1366, 0.25
      %v1443 = vmul.f32 %v1368, 0.25
      %v1444 = vmul.f32 %v1370, 0.25
      %v1445 = vmul.f32 %v1372, 0.25
      %v1446 = vmul.f32 %v1374, 0.25
      %v1447 = vmul.f32 %v1376, 0.25
      %v1448 = vmul.f32 %v1378, 0.25
      %v1449 = vmul.f32 %v1380, 0.25
      %v1450 = vmul.f32 %v1382, 0.25
      %v1451 = vmul.f32 %v1384, 0.25
      %v1452 = vmul.f32 %v1386, 0.25
      %v1453 = vmul.f32 %v1388, 0.25
      %v1454 = vmul.f32 %v1390, 0.25
      %v1455 = vmul.f32 %v1408, 0.25
      %v1456 = vmul.f32 %v1410, 0.25
      %v1457 = vmul.f32 %v1412, 0.25
      %v1458 = vmul.f32 %v1414, 0.25
      %v1459 = vmul.f32 %v1416, 0.25
      %v1460 = vmul.f32 %v1418, 0.25
      %v1461 = vmul.f32 %v1420, 0.25
      %v1462 = vmul.f32 %v1422, 0.25
      %v1463 = vmul.f32 %v1424, 0.25
      %v1464 = vmul.f32 %v1426, 0.25
      %v1465 = vmul.f32 %v1428, 0.25
      %v1466 = vmul.f32 %v1430, 0.25
      %v1467 = vmul.f32 %v1432, 0.25
      %v1468 = vmul.f32 %v1434, 0.25
      %v1469 = vmul.f32 %v1436, 0.25
      %v1470 = vmul.f32 %v1438, 0.25
      %v1471 = vmul.f32 %v1439, %v1439
      %v1472 = vmul.f32 %v1440, %v1440
      %v1473 = vmul.f32 %v1441, %v1441
      %v1474 = vmul.f32 %v1442, %v1442
      %v1475 = vmul.f32 %v1443, %v1443
      %v1476 = vmul.f32 %v1444, %v1444
      %v1477 = vmul.f32 %v1445, %v1445
      %v1478 = vmul.f32 %v1446, %v1446
      %v1479 = vmul.f32 %v1447, %v1447
      %v1480 = vmul.f32 %v1448, %v1448
      %v1481 = vmul.f32 %v1449, %v1449
      %v1482 = vmul.f32 %v1450, %v1450
      %v1483 = vmul.f32 %v1451, %v1451
      %v1484 = vmul.f32 %v1452, %v1452
      %v1485 = vmul.f32 %v1453, %v1453
      %v1486 = vmul.f32 %v1454, %v1454
      %v1487 = vsub.f32 %v1455, %v1471
      %v1488 = vsub.f32 %v1456, %v1472
      %v1489 = vsub.f32 %v1457, %v1473
      %v1490 = vsub.f32 %v1458, %v1474
      %v1491 = vsub.f32 %v1459, %v1475
      %v1492 = vsub.f32 %v1460, %v1476
      %v1493 = vsub.f32 %v1461, %v1477
      %v1494 = vsub.f32 %v1462, %v1478
      %v1495 = vsub.f32 %v1463, %v1479
      %v1496 = vsub.f32 %v1464, %v1480
      %v1497 = vsub.f32 %v1465, %v1481
      %v1498 = vsub.f32 %v1466, %v1482
      %v1499 = vsub.f32 %v1467, %v1483
      %v1500 = vsub.f32 %v1468, %v1484
      %v1501 = vsub.f32 %v1469, %v1485
      %v1502 = vsub.f32 %v1470, %v1486
      %v1503 = vmax.f32 %v1487, 0.0
      %v1504 = vmax.f32 %v1488, 0.0
      %v1505 = vmax.f32 %v1489, 0.0
      %v1506 = vmax.f32 %v1490, 0.0
      %v1507 = vmax.f32 %v1491, 0.0
      %v1508 = vmax.f32 %v1492, 0.0
      %v1509 = vmax.f32 %v1493, 0.0
      %v1510 = vmax.f32 %v1494, 0.0
      %v1511 = vmax.f32 %v1495, 0.0
      %v1512 = vmax.f32 %v1496, 0.0
      %v1513 = vmax.f32 %v1497, 0.0
      %v1514 = vmax.f32 %v1498, 0.0
      %v1515 = vmax.f32 %v1499, 0.0
      %v1516 = vmax.f32 %v1500, 0.0
      %v1517 = vmax.f32 %v1501, 0.0
      %v1518 = vmax.f32 %v1502, 0.0
      %v1519 = vsub.f32 %v1320, %v1439
      %v1520 = vsub.f32 %v1321, %v1440
      %v1521 = vsub.f32 %v1322, %v1441
      %v1522 = vsub.f32 %v1323, %v1442
      %v1523 = vsub.f32 %v1324, %v1443
      %v1524 = vsub.f32 %v1325, %v1444
      %v1525 = vsub.f32 %v1326, %v1445
      %v1526 = vsub.f32 %v1327, %v1446
      %v1527 = vsub.f32 %v1328, %v1447
      %v1528 = vsub.f32 %v1329, %v1448
      %v1529 = vsub.f32 %v1330, %v1449
      %v1530 = vsub.f32 %v1331, %v1450
      %v1531 = vsub.f32 %v1332, %v1451
      %v1532 = vsub.f32 %v1333, %v1452
      %v1533 = vsub.f32 %v1334, %v1453
      %v1534 = vsub.f32 %v1335, %v1454
      %v1535 = vadd.f32 %v1503, 1e-05
      %v1536 = vadd.f32 %v1504, 1e-05
      %v1537 = vadd.f32 %v1505, 1e-05
      %v1538 = vadd.f32 %v1506, 1e-05
      %v1539 = vadd.f32 %v1507, 1e-05
      %v1540 = vadd.f32 %v1508, 1e-05
      %v1541 = vadd.f32 %v1509, 1e-05
      %v1542 = vadd.f32 %v1510, 1e-05
      %v1543 = vadd.f32 %v1511, 1e-05
      %v1544 = vadd.f32 %v1512, 1e-05
      %v1545 = vadd.f32 %v1513, 1e-05
      %v1546 = vadd.f32 %v1514, 1e-05
      %v1547 = vadd.f32 %v1515, 1e-05
      %v1548 = vadd.f32 %v1516, 1e-05
      %v1549 = vadd.f32 %v1517, 1e-05
      %v1550 = vadd.f32 %v1518, 1e-05
      %v1551 = vrsqrt.pop %v1535
      %v1552 = vrsqrt.pop %v1536
      %v1553 = vrsqrt.pop %v1537
      %v1554 = vrsqrt.pop %v1538
      %v1555 = vrsqrt.pop %v1539
      %v1556 = vrsqrt.pop %v1540
      %v1557 = vrsqrt.pop %v1541
      %v1558 = vrsqrt.pop %v1542
      %v1559 = vrsqrt.pop %v1543
      %v1560 = vrsqrt.pop %v1544
      %v1561 = vrsqrt.pop %v1545
      %v1562 = vrsqrt.pop %v1546
      %v1563 = vrsqrt.pop %v1547
      %v1564 = vrsqrt.pop %v1548
      %v1565 = vrsqrt.pop %v1549
      %v1566 = vrsqrt.pop %v1550
      %v1567 = vmul.f32 %v1519, %v1551
      %v1568 = vmul.f32 %v1520, %v1552
      %v1569 = vmul.f32 %v1521, %v1553
      %v1570 = vmul.f32 %v1522, %v1554
      %v1571 = vmul.f32 %v1523, %v1555
      %v1572 = vmul.f32 %v1524, %v1556
      %v1573 = vmul.f32 %v1525, %v1557
      %v1574 = vmul.f32 %v1526, %v1558
      %v1575 = vmul.f32 %v1527, %v1559
      %v1576 = vmul.f32 %v1528, %v1560
      %v1577 = vmul.f32 %v1529, %v1561
      %v1578 = vmul.f32 %v1530, %v1562
      %v1579 = vmul.f32 %v1531, %v1563
      %v1580 = vmul.f32 %v1532, %v1564
      %v1581 = vmul.f32 %v1533, %v1565
      %v1582 = vmul.f32 %v1534, %v1566
      %v1583 = vmax.f32 %v1567, 0.0
      %v1584 = vmax.f32 %v1568, 0.0
      %v1585 = vmax.f32 %v1569, 0.0
      %v1586 = vmax.f32 %v1570, 0.0
      %v1587 = vmax.f32 %v1571, 0.0
      %v1588 = vmax.f32 %v1572, 0.0
      %v1589 = vmax.f32 %v1573, 0.0
      %v1590 = vmax.f32 %v1574, 0.0
      %v1591 = vmax.f32 %v1575, 0.0
      %v1592 = vmax.f32 %v1576, 0.0
      %v1593 = vmax.f32 %v1577, 0.0
      %v1594 = vmax.f32 %v1578, 0.0
      %v1595 = vmax.f32 %v1579, 0.0
      %v1596 = vmax.f32 %v1580, 0.0
      %v1597 = vmax.f32 %v1581, 0.0
      %v1598 = vmax.f32 %v1582, 0.0
      %v1599 = vpack.c.bf16 %v1584, %v1583
      %v1600 = vpack.c.bf16 %v1586, %v1585
      %v1601 = vpack.c.bf16 %v1588, %v1587
      %v1602 = vpack.c.bf16 %v1590, %v1589
      %v1603 = vpack.c.bf16 %v1592, %v1591
      %v1604 = vpack.c.bf16 %v1594, %v1593
      %v1605 = vpack.c.bf16 %v1596, %v1595
      %v1606 = vpack.c.bf16 %v1598, %v1597
      %v1615 = vunpack.c.l.b16 %v1599
      %v1616 = vunpack.c.h.b16 %v1599
      %v1617 = vunpack.c.l.b16 %v1600
      %v1618 = vunpack.c.h.b16 %v1600
      %v1619 = vunpack.c.l.b16 %v1601
      %v1620 = vunpack.c.h.b16 %v1601
      %v1621 = vunpack.c.l.b16 %v1602
      %v1622 = vunpack.c.h.b16 %v1602
      %v1623 = vunpack.c.l.b16 %v1603
      %v1624 = vunpack.c.h.b16 %v1603
      %v1625 = vunpack.c.l.b16 %v1604
      %v1626 = vunpack.c.h.b16 %v1604
      %v1627 = vunpack.c.l.b16 %v1605
      %v1628 = vunpack.c.h.b16 %v1605
      %v1629 = vunpack.c.l.b16 %v1606
      %v1630 = vunpack.c.h.b16 %v1606
      %v1631 = vpack.c.b16 %v1615, %v1615
      %v1632 = vpack.c.b16 %v1616, %v1616
      %v1633 = vpack.c.b16 %v1617, %v1617
      %v1634 = vpack.c.b16 %v1618, %v1618
      %v1635 = vpack.c.b16 %v1619, %v1619
      %v1636 = vpack.c.b16 %v1620, %v1620
      %v1637 = vpack.c.b16 %v1621, %v1621
      %v1638 = vpack.c.b16 %v1622, %v1622
      %v1639 = vpack.c.b16 %v1623, %v1623
      %v1640 = vpack.c.b16 %v1624, %v1624
      %v1641 = vpack.c.b16 %v1625, %v1625
      %v1642 = vpack.c.b16 %v1626, %v1626
      %v1643 = vpack.c.b16 %v1627, %v1627
      %v1644 = vpack.c.b16 %v1628, %v1628
      %v1645 = vpack.c.b16 %v1629, %v1629
      %v1646 = vpack.c.b16 %v1630, %v1630
      %1663 = vst [vmem:[%s266] sm:$0xf] %v1631
      %1664 = vst [vmem:[%s266 + $0x4] sm:$0xf] %v1632
      %1665 = vst [vmem:[%s266 + $0x8] sm:$0xf] %v1633
      %1666 = vst [vmem:[%s266 + $0xc] sm:$0xf] %v1634
      %1667 = vst [vmem:[%s266 + $0x10] sm:$0xf] %v1635
      %1668 = vst [vmem:[%s266 + $0x14] sm:$0xf] %v1636
      %1669 = vst [vmem:[%s266 + $0x18] sm:$0xf] %v1637
      %1670 = vst [vmem:[%s266 + $0x1c] sm:$0xf] %v1638
      %1671 = vst [vmem:[%s266 + $0x20] sm:$0xf] %v1639
      %1672 = vst [vmem:[%s266 + $0x24] sm:$0xf] %v1640
      %1673 = vst [vmem:[%s266 + $0x28] sm:$0xf] %v1641
      %1674 = vst [vmem:[%s266 + $0x2c] sm:$0xf] %v1642
      %1675 = vst [vmem:[%s266 + $0x30] sm:$0xf] %v1643
      %1676 = vst [vmem:[%s266 + $0x34] sm:$0xf] %v1644
      %1677 = vst [vmem:[%s266 + $0x38] sm:$0xf] %v1645
      %1678 = vst [vmem:[%s266 + $0x3c] sm:$0xf] %v1646
      %s1679 = smul.u32 16, %s20
      %p1680 = scmp.lt.s32.totalorder %s19, 1
      %s1681 = scalar_select %p1680, %s19, 1
      %p1682 = scmp.lt.s32.totalorder %s1679, 15
      %s1683 = scalar_select %p1682, %s1679, 15
      %s1684 = smul.addr %s1681, 16
      %s1685 = sadd.s32 %s1683, %s1684
      %s1686 = smul.addr %s1685, 4
      %s1687 = scalar_lea.vmem %s4, %s1686
      // Predicated region
      $region37: #{_lambda_.9} parent=35 // pred_check
        %p1688 = pneg %p146
      $region38: #{_lambda_.9} parent=35 // pred_check_branch
        %1690 = sbr.rel (%p1688) target = $region40
      $region39: #{_lambda_.9} parent=35 // pred_region
        %s1691 = smul.u32 16, %s20
      $region40: #{_lambda_.9} parent=35 // pred_fallthru
        _
    $region36: #{_lambda_.9} parent=5 // pred_fallthru
      _
    %p1692 = scmp.le.s32.totalorder 2, %s10
    // Predicated region
    $region41: #{_lambda_.9} parent=5 // pred_check
      %p1693 = pneg %p1692
    $region42: #{_lambda_.9} parent=5 // pred_check_branch
      %1695 = sbr.rel (%p1693) target = $region44
    $region43: #{_lambda_.9} parent=5 // pred_region
      %s1696 = ssub.s32 %s10, 2
      // Predicated region
      $region45: #{_lambda_.9} parent=43 // pred_check
        %p1697 = pneg %p152
      $region46: #{_lambda_.9} parent=43 // pred_check_branch
        %1699 = sbr.rel (%p1697) target = $region48
      $region47: #{_lambda_.9} parent=43 // pred_region
        %s1700 = smul.u32 16, %s22
        %p1701 = scmp.lt.s32.totalorder %s21, 1
        %s1702 = scalar_select %p1701, %s21, 1
        %p1703 = scmp.lt.s32.totalorder %s1700, 15
        %s1704 = scalar_select %p1703, %s1700, 15
        %s1705 = smul.addr %s1702, 16
        %s1706 = sadd.s32 %s1704, %s1705
        %s1707 = smul.addr %s1706, 4
        %s1708 = scalar_lea.vmem %s4, %s1707
      $region48: #{_lambda_.9} parent=43 // pred_fallthru
        _
    $region44: #{_lambda_.9} parent=5 // pred_fallthru
      _
  $region6: #{_lambda_.9} parent=0 // loop_footer
    %s14 = sadd.s32 1, %s10
  $region7: #{_lambda_.9} parent=0 // loop_footer_branch
    %9 = sbr.rel target = $region3
  $region8: #{_lambda_.9} parent=0 // loop_exit
    _

</llo_original>
